<compile_context>
chip_gen: v6e
topology: v6e:2x2x1
jax: 0.10.0
libtpu: 0.0.40
codegen_flags: <defaults>
</compile_context>

<pallas_src>
import math
import numpy as np
import jax
import jax.numpy as jnp
from jax.experimental import pallas as pl
from jax.experimental.pallas import tpu as pltpu

LEAK_MEM = 0.95
THRESHOLD = 1.0
GN_EPS = 1e-4
# Set to jnp.bfloat16 on v6e / v7x for ~2x MXU throughput.  float32 (default)
# keeps the PyTorch module's forward numerics exactly.
MXU_DTYPE = jnp.float32


def _pad8(c):
    return ((c + 7) // 8) * 8


# ---------------------------------------------------------------------------
# Host-built constants (tiny: masks, per-sample indicators, stride-2 selectors)
# ---------------------------------------------------------------------------
def build_tap_masks(B, H, W, lanes):
    """(9, 1, lanes) 0/1 validity masks for the 9 taps of a pad-1 3x3 conv in the
    flattened (b, y, x) lane layout; zero on padding / out-of-image / cross-sample."""
    m = np.zeros((9, 1, lanes), np.float32)
    for ky in range(3):
        for kx in range(3):
            k = ky * 3 + kx
            dy, dx = ky - 1, kx - 1
            for b in range(B):
                for y in range(H):
                    for x in range(W):
                        if 0 <= y + dy < H and 0 <= x + dx < W:
                            m[k, 0, b * H * W + y * W + x] = 1.0
    return m


def build_indicators(B, HW, lanes):
    """ps (B, lanes): per-sample lane indicator; pbT = ps.T (lanes, B)."""
    ps = np.zeros((B, lanes), np.float32)
    for b in range(B):
        ps[b, b * HW:(b + 1) * HW] = 1.0
    return ps, np.ascontiguousarray(ps.T)


def build_dsel(B, H, lanes):
    """(lanes, lanes) 0/1 selector mapping resolution HxH lanes at even positions
    to (H/2)x(H/2) lanes (stride-2 pick; also the 1x1 stride-2 conv gather)."""
    Ho = H // 2
    D = np.zeros((lanes, lanes), np.float32)
    for b in range(B):
        for oy in range(Ho):
            for ox in range(Ho):
                D[b * H * H + 2 * oy * H + 2 * ox,
                  b * Ho * Ho + oy * Ho + ox] = 1.0
    return D


# ---------------------------------------------------------------------------
# Model configuration / parameters
# ---------------------------------------------------------------------------
def layer_configs(n, nFilters, img_size, num_channels):
    cfgs = [(num_channels, nFilters, 1, img_size)]            # (cin, cout, stride, hin)
    cur = img_size
    for block in range(3):
        for layer in range(2 * n):
            if block != 0 and layer == 0:
                stride, cin = 2, nFilters * 2 ** (block - 1)
            else:
                stride, cin = 1, nFilters * 2 ** block
            cout = nFilters * 2 ** block
            cfgs.append((cin, cout, stride, cur))
            cur //= stride
    return cfgs


def build_metas(cfgs, lanes):
    h_list, metas = [], []
    for (cin, cout, stride, h_in) in cfgs:
        h_out = h_in // stride
        if h_in not in h_list:
            h_list.append(h_in)
        if h_out not in h_list:
            h_list.append(h_out)
        # lane-roll amounts for the 9 taps: roll by -(dy*W+dx) mod lanes
        shifts = [(-((ky - 1) * h_in + (kx - 1))) % lanes
                  for ky in range(3) for kx in range(3)]
        metas.append(dict(
            cin=cin, cout=cout, stride=stride,
            cpad_in=_pad8(cin), cpad_out=_pad8(cout),
            hw_out=h_out * h_out,
            g_in=h_list.index(h_in), g_out=h_list.index(h_out),
            dsel=(h_list.index(h_in) if stride == 2 else -1),
            shifts=shifts))
    return metas, h_list


def init_params(key, cfgs, metas, nFilters, num_steps, num_cls):
    params = {'conv_w': [], 'gn_w': [], 'res_w': [], 'res_gn_w': [], 'res_gn_b': []}
    keys = jax.random.split(key, len(cfgs) + 3)
    for idx, ((cin, cout, _, _), m) in enumerate(zip(cfgs, metas)):
        # torch xavier_uniform_(gain=2) on a (Cout, Cin, 3, 3) conv weight
        bound = 2.0 * math.sqrt(6.0 / (9 * cin + 9 * cout))
        w9 = jax.random.uniform(keys[idx], (9, cin, cout), jnp.float32, -bound, bound)
        w9p = jnp.zeros((9, m['cpad_in'], m['cpad_out']), jnp.float32)
        w9p = w9p.at[:, :cin, :cout].set(w9)
        # repack to (cpad_out, 9*cpad_in): conv = W2 @ patch (tap-major K axis)
        params['conv_w'].append(
            jnp.transpose(w9p, (2, 0, 1)).reshape(m['cpad_out'], 9 * m['cpad_in']))
        # GroupNorm(1, Cout, eps=1e-4) per timestep; bntt bias is effectively zero.
        gw = jnp.zeros((num_steps, m['cpad_out'], 1), jnp.float32)
        params['gn_w'].append(gw.at[:, :cout, :].set(1.0))
    res_cfg = [(nFilters, nFilters * 2), (nFilters * 2, nFilters * 4)]
    for j, (cin, cout) in enumerate(res_cfg):
        bound = 2.0 * math.sqrt(6.0 / (cin + cout))
        w = jax.random.uniform(keys[len(cfgs) + j], (cout, cin), jnp.float32,
                               -bound, bound)
        wp = jnp.zeros((_pad8(cout), _pad8(cin)), jnp.float32).at[:cout, :cin].set(w)
        params['res_w'].append(wp)
        params['res_gn_w'].append(jnp.ones((num_steps, cout, 1), jnp.float32))
        params['res_gn_b'].append(jnp.zeros((num_steps, cout, 1), jnp.float32))
    fin = nFilters * 4
    bound = 2.0 * math.sqrt(6.0 / (fin + num_cls))
    params['fc_w'] = jax.random.uniform(keys[-1], (num_cls, fin), jnp.float32,
                                        -bound, bound)
    return params


def build_constants(h_list, B, lanes):
    masks, ps_list, pbT_list = [], [], []
    for h in h_list:
        masks.append(jnp.asarray(build_tap_masks(B, h, h, lanes)))
        ps, pbT = build_indicators(B, h * h, lanes)
        ps_list.append(jnp.asarray(ps))
        pbT_list.append(jnp.asarray(pbT))
    dsel = [jnp.asarray(build_dsel(B, h, lanes)) for h in h_list[:-1]]
    return dict(masks=masks, ps=ps_list, pbT=pbT_list, dsel=dsel)


# ---------------------------------------------------------------------------
# Fused Pallas kernel (whole network per timestep; grid = timesteps)
# ---------------------------------------------------------------------------
def make_fused_kernel(metas, *, n, num_steps, n_groups, n_dsel):
    n_layers = len(metas)
    inv_steps = 1.0 / float(num_steps)
    last_g = metas[-1]['g_out']
    inv_pool = 1.0 / float(metas[-1]['hw_out'])

    def mdot(a, b):
        return jnp.dot(a.astype(MXU_DTYPE), b.astype(MXU_DTYPE),
                       preferred_element_type=jnp.float32)

    def kernel(*refs):
        it = iter(refs)
        x_ref = next(it)
        w_refs = [next(it) for _ in range(n_layers)]
        gw_refs = [next(it) for _ in range(n_layers)]
        mask_refs = [next(it) for _ in range(n_groups)]
        ps_refs = [next(it) for _ in range(n_groups)]
        pbT_refs = [next(it) for _ in range(n_groups)]
        dsel_refs = [next(it) for _ in range(n_dsel)]
        res_w_refs = [next(it) for _ in range(2)]
        res_gw_refs = [next(it) for _ in range(2)]
        res_gb_refs = [next(it) for _ in range(2)]
        fc_ref = next(it)
        out_ref = next(it)
        mem_refs = [next(it) for _ in range(n_layers)]
        patch_ref = next(it)

        t = pl.program_id(0)

        @pl.when(t == 0)
        def _init():
            for m_ref in mem_refs:
                m_ref[...] = jnp.zeros_like(m_ref)
            out_ref[...] = jnp.zeros_like(out_ref)

        def group_norm(y, g, c_real, c_pad, hw_real, gamma, beta=None):
            """GroupNorm(num_groups=1, eps=GN_EPS) per sample over (C, HW); two-pass
            (mean, then centered variance) f32 stats on the channel-major tile."""
            inv_n = 1.0 / float(c_real * hw_real)
            ps = ps_refs[g][...]                                    # (B, lanes)
            pbT = pbT_refs[g][...]                                  # (lanes, B)
            s_rows = jnp.sum(y, axis=0, keepdims=True)              # (1, lanes)
            mu_b = jnp.dot(s_rows, pbT, preferred_element_type=jnp.float32) * inv_n
            mu_rows = jnp.dot(mu_b, ps, preferred_element_type=jnp.float32)
            yc = y - mu_rows
            yv = yc if c_real == c_pad else yc[:c_real, :]          # exclude pad chans
            v_rows = jnp.sum(yv * yv, axis=0, keepdims=True)
            var_b = jnp.dot(v_rows, pbT, preferred_element_type=jnp.float32) * inv_n
            rstd_rows = jnp.dot(jax.lax.rsqrt(var_b + GN_EPS), ps,
                                preferred_element_type=jnp.float32)
            out = yc * rstd_rows * gamma                            # gamma (c_pad, 1)
            if beta is not None:
                out = out + beta
            return out

        def conv3x3(act, li):
            """3x3 pad-1 conv: 9 lane rolls (XLU) * masks (VPU) build the im2col
            patch in VMEM scratch, then ONE MXU matmul with K = 9*cpad_in; stride-2
            output positions are selected with a small 0/1 matmul."""
            m = metas[li]
            cpi = m['cpad_in']
            mref = mask_refs[m['g_in']]
            for k in range(9):
                sh = m['shifts'][k]
                if sh == 0:                       # centre tap: no roll / mask needed
                    tap = act
                else:
                    tap = pltpu.roll(act, sh, axis=1) * mref[k]
                patch_ref[k * cpi:(k + 1) * cpi, :] = tap
            conv = mdot(w_refs[li][...], patch_ref[:9 * cpi, :])    # (cpad_out, lanes)
            if m['stride'] == 2:
                conv = mdot(conv, dsel_refs[m['dsel']][...])
            return conv

        act = x_ref[...]                                            # (cpad0, lanes)
        skip = None
        res_idx = 0
        for i, m in enumerate(metas):
            conv = conv3x3(act, i)
            gn = group_norm(conv, m['g_out'], m['cout'], m['cpad_out'],
                            m['hw_out'], gw_refs[i][t])
            # Leaky membrane, Heaviside spike (strict >), soft reset (pre-skip spike)
            mem = LEAK_MEM * mem_refs[i][...] + gn
            if THRESHOLD == 1.0:
                mem_thr = mem - 1.0
            else:
                mem_thr = mem * (1.0 / THRESHOLD) - 1.0
            spike = (mem_thr > 0.0).astype(jnp.float32)
            mem_refs[i][...] = mem - spike * THRESHOLD
            out = spike
            if i > 0 and i % 2 == 0:
                if i == 2 + 2 * n or i == 2 + 4 * n:
                    # 1x1 stride-2 resize conv + GN on the VMEM-resident skip
                    ds = mdot(skip, dsel_refs[res_idx][...])
                    sc = mdot(res_w_refs[res_idx][...], ds)
                    skip = group_norm(sc, m['g_out'], m['cout'], m['cpad_out'],
                                      m['hw_out'], res_gw_refs[res_idx][t],
                                      res_gb_refs[res_idx][t])
                    res_idx += 1
                out = out + skip
                skip = out
            elif i == 0:
                skip = out
            act = out

        # AdaptiveAvgPool2d((1,1)) + Linear(bias=False); FC membrane accumulates
        # into the resident output block with the final /num_steps folded in.
        pooled = mdot(act, pbT_refs[last_g][...]) * inv_pool        # (cpad_last, B)
        logits = mdot(fc_ref[...], pooled)                          # (num_cls, B)
        out_ref[...] = out_ref[...] + logits * inv_steps

    return kernel


# ---------------------------------------------------------------------------
# Forward wrapper: one pallas_call for the whole network and all timesteps
# ---------------------------------------------------------------------------
def forward(x_nhwc, params, consts, metas, *, n, num_steps, num_cls, lanes):
    B, H, W, C = x_nhwc.shape
    cpad0 = metas[0]['cpad_in']
    # channel-major, spatial-on-lanes input tile (C_pad, lanes)
    x_cm = jnp.transpose(x_nhwc.reshape(B * H * W, C))
    x_pad = jnp.zeros((cpad0, lanes), jnp.float32).at[:C, :B * H * W].set(x_cm)

    inputs, in_specs = [], []

    def add(arr):
        arr = jnp.asarray(arr)
        inputs.append(arr)
        nd = arr.ndim
        # Grid-invariant whole-array block: resident in VMEM, no per-step DMA.
        in_specs.append(pl.BlockSpec(tuple(arr.shape), lambda t, _nd=nd: (0,) * _nd))

    add(x_pad)
    for w in params['conv_w']:
        add(w)
    for gw in params['gn_w']:                 # full (T, C, 1); indexed by t in-kernel
        add(gw)
    for mk in consts['masks']:
        add(mk)
    for ps in consts['ps']:
        add(ps)
    for pbT in consts['pbT']:
        add(pbT)
    for d in consts['dsel']:
        add(d)
    for w in params['res_w']:
        add(w)
    for gw in params['res_gn_w']:
        add(gw)
    for gb in params['res_gn_b']:
        add(gb)
    add(params['fc_w'])

    kernel = make_fused_kernel(metas, n=n, num_steps=num_steps,
                               n_groups=len(consts['masks']),
                               n_dsel=len(consts['dsel']))

    max_cpi = max(m['cpad_in'] for m in metas)
    out_t = pl.pallas_call(
        kernel,
        out_shape=jax.ShapeDtypeStruct((num_cls, B), jnp.float32),
        grid=(num_steps,),
        in_specs=in_specs,
        out_specs=pl.BlockSpec((num_cls, B), lambda t: (0, 0)),
        scratch_shapes=[pltpu.VMEM((m['cpad_out'], lanes), jnp.float32)
                        for m in metas]                      # membranes (VMEM resident)
                       + [pltpu.VMEM((9 * max_cpi, lanes), jnp.float32)],  # im2col patch
        compiler_params=pltpu.CompilerParams(
            dimension_semantics=("arbitrary",)),             # membranes carry across t
    )(*inputs)
    return out_t.T                                           # (B, num_cls)


if __name__ == "__main__":
    # Small config consistent with the module: n=1, nFilters=4, 2 timesteps,
    # 8x8 RGB input, 10 classes, batch 2.
    n, nFilters, num_steps = 1, 4, 2
    img_size, num_cls, num_channels = 8, 10, 3
    batch = 2

    key = jax.random.PRNGKey(0)
    k_inp, k_par = jax.random.split(key)
    x = jax.random.normal(k_inp, (batch, img_size, img_size, num_channels),
                          jnp.float32)

    lanes = -(-(batch * img_size * img_size) // 128) * 128   # 128 here
    cfgs = layer_configs(n, nFilters, img_size, num_channels)
    metas, h_list = build_metas(cfgs, lanes)
    params = init_params(k_par, cfgs, metas, nFilters, num_steps, num_cls)
    consts = build_constants(h_list, batch, lanes)

    # TODO(synk): poisson_gen spike encoding (module default poisson_gen=False);
    #             the raw input is fed every timestep, matching the default path.
    # TODO(synk): SurrogateBPFunction backward (surrogate gradient) not implemented;
    #             forward-only hard Heaviside.
    # TODO(synk): boosting=True head (AvgPool1d over FC outputs) not implemented;
    #             boosting=False path only.
    out = forward(x, params, consts, metas, n=n, num_steps=num_steps,
                  num_cls=num_cls, lanes=lanes)
    out = jax.block_until_ready(out)
    assert out.shape == (batch, num_cls)
    assert bool(jnp.all(jnp.isfinite(out)))
    print("KERNEL_OK")
</pallas_src>

<mosaic_0001>
module attributes {stable_mosaic.version = 11 : i64} {
  func.func @kernel(%arg0: i32, %arg1: memref<8x128xf32, #tpu.memory_space<vmem>>, %arg2: memref<8x72xf32, #tpu.memory_space<vmem>>, %arg3: memref<8x72xf32, #tpu.memory_space<vmem>>, %arg4: memref<8x72xf32, #tpu.memory_space<vmem>>, %arg5: memref<8x72xf32, #tpu.memory_space<vmem>>, %arg6: memref<8x72xf32, #tpu.memory_space<vmem>>, %arg7: memref<16x72xf32, #tpu.memory_space<vmem>>, %arg8: memref<16x144xf32, #tpu.memory_space<vmem>>, %arg9: memref<2x8x1xf32, #tpu.memory_space<vmem>>, %arg10: memref<2x8x1xf32, #tpu.memory_space<vmem>>, %arg11: memref<2x8x1xf32, #tpu.memory_space<vmem>>, %arg12: memref<2x8x1xf32, #tpu.memory_space<vmem>>, %arg13: memref<2x8x1xf32, #tpu.memory_space<vmem>>, %arg14: memref<2x16x1xf32, #tpu.memory_space<vmem>>, %arg15: memref<2x16x1xf32, #tpu.memory_space<vmem>>, %arg16: memref<9x1x128xf32, #tpu.memory_space<vmem>>, %arg17: memref<9x1x128xf32, #tpu.memory_space<vmem>>, %arg18: memref<9x1x128xf32, #tpu.memory_space<vmem>>, %arg19: memref<2x128xf32, #tpu.memory_space<vmem>>, %arg20: memref<2x128xf32, #tpu.memory_space<vmem>>, %arg21: memref<2x128xf32, #tpu.memory_space<vmem>>, %arg22: memref<128x2xf32, #tpu.memory_space<vmem>>, %arg23: memref<128x2xf32, #tpu.memory_space<vmem>>, %arg24: memref<128x2xf32, #tpu.memory_space<vmem>>, %arg25: memref<128x128xf32, #tpu.memory_space<vmem>>, %arg26: memref<128x128xf32, #tpu.memory_space<vmem>>, %arg27: memref<8x8xf32, #tpu.memory_space<vmem>>, %arg28: memref<16x8xf32, #tpu.memory_space<vmem>>, %arg29: memref<2x8x1xf32, #tpu.memory_space<vmem>>, %arg30: memref<2x16x1xf32, #tpu.memory_space<vmem>>, %arg31: memref<2x8x1xf32, #tpu.memory_space<vmem>>, %arg32: memref<2x16x1xf32, #tpu.memory_space<vmem>>, %arg33: memref<10x16xf32, #tpu.memory_space<vmem>>, %arg34: memref<10x2xf32, #tpu.memory_space<vmem>>, %arg35: memref<8x128xf32, #tpu.memory_space<vmem>>, %arg36: memref<8x128xf32, #tpu.memory_space<vmem>>, %arg37: memref<8x128xf32, #tpu.memory_space<vmem>>, %arg38: memref<8x128xf32, #tpu.memory_space<vmem>>, %arg39: memref<8x128xf32, #tpu.memory_space<vmem>>, %arg40: memref<16x128xf32, #tpu.memory_space<vmem>>, %arg41: memref<16x128xf32, #tpu.memory_space<vmem>>, %arg42: memref<144x128xf32, #tpu.memory_space<vmem>>) attributes {dimension_semantics = [#tpu.dimension_semantics<arbitrary>], iteration_bounds = array<i64: 2>, scalar_prefetch = 0 : i64, scratch_operands = 8 : i64, tpu.core_type = #tpu.core_type<tc>, window_params = [{pipeline_mode = #tpu.pipeline_mode<synchronous>, transform_indices = @transform_0, window_bounds = array<i64: 8, 128>}, {pipeline_mode = #tpu.pipeline_mode<synchronous>, transform_indices = @transform_1, window_bounds = array<i64: 8, 72>}, {pipeline_mode = #tpu.pipeline_mode<synchronous>, transform_indices = @transform_2, window_bounds = array<i64: 8, 72>}, {pipeline_mode = #tpu.pipeline_mode<synchronous>, transform_indices = @transform_3, window_bounds = array<i64: 8, 72>}, {pipeline_mode = #tpu.pipeline_mode<synchronous>, transform_indices = @transform_4, window_bounds = array<i64: 8, 72>}, {pipeline_mode = #tpu.pipeline_mode<synchronous>, transform_indices = @transform_5, window_bounds = array<i64: 8, 72>}, {pipeline_mode = #tpu.pipeline_mode<synchronous>, transform_indices = @transform_6, window_bounds = array<i64: 16, 72>}, {pipeline_mode = #tpu.pipeline_mode<synchronous>, transform_indices = @transform_7, window_bounds = array<i64: 16, 144>}, {pipeline_mode = #tpu.pipeline_mode<synchronous>, transform_indices = @transform_8, window_bounds = array<i64: 2, 8, 1>}, {pipeline_mode = #tpu.pipeline_mode<synchronous>, transform_indices = @transform_9, window_bounds = array<i64: 2, 8, 1>}, {pipeline_mode = #tpu.pipeline_mode<synchronous>, transform_indices = @transform_10, window_bounds = array<i64: 2, 8, 1>}, {pipeline_mode = #tpu.pipeline_mode<synchronous>, transform_indices = @transform_11, window_bounds = array<i64: 2, 8, 1>}, {pipeline_mode = #tpu.pipeline_mode<synchronous>, transform_indices = @transform_12, window_bounds = array<i64: 2, 8, 1>}, {pipeline_mode = #tpu.pipeline_mode<synchronous>, transform_indices = @transform_13, window_bounds = array<i64: 2, 16, 1>}, {pipeline_mode = #tpu.pipeline_mode<synchronous>, transform_indices = @transform_14, window_bounds = array<i64: 2, 16, 1>}, {pipeline_mode = #tpu.pipeline_mode<synchronous>, transform_indices = @transform_15, window_bounds = array<i64: 9, 1, 128>}, {pipeline_mode = #tpu.pipeline_mode<synchronous>, transform_indices = @transform_16, window_bounds = array<i64: 9, 1, 128>}, {pipeline_mode = #tpu.pipeline_mode<synchronous>, transform_indices = @transform_17, window_bounds = array<i64: 9, 1, 128>}, {pipeline_mode = #tpu.pipeline_mode<synchronous>, transform_indices = @transform_18, window_bounds = array<i64: 2, 128>}, {pipeline_mode = #tpu.pipeline_mode<synchronous>, transform_indices = @transform_19, window_bounds = array<i64: 2, 128>}, {pipeline_mode = #tpu.pipeline_mode<synchronous>, transform_indices = @transform_20, window_bounds = array<i64: 2, 128>}, {pipeline_mode = #tpu.pipeline_mode<synchronous>, transform_indices = @transform_21, window_bounds = array<i64: 128, 2>}, {pipeline_mode = #tpu.pipeline_mode<synchronous>, transform_indices = @transform_22, window_bounds = array<i64: 128, 2>}, {pipeline_mode = #tpu.pipeline_mode<synchronous>, transform_indices = @transform_23, window_bounds = array<i64: 128, 2>}, {pipeline_mode = #tpu.pipeline_mode<synchronous>, transform_indices = @transform_24, window_bounds = array<i64: 128, 128>}, {pipeline_mode = #tpu.pipeline_mode<synchronous>, transform_indices = @transform_25, window_bounds = array<i64: 128, 128>}, {pipeline_mode = #tpu.pipeline_mode<synchronous>, transform_indices = @transform_26, window_bounds = array<i64: 8, 8>}, {pipeline_mode = #tpu.pipeline_mode<synchronous>, transform_indices = @transform_27, window_bounds = array<i64: 16, 8>}, {pipeline_mode = #tpu.pipeline_mode<synchronous>, transform_indices = @transform_28, window_bounds = array<i64: 2, 8, 1>}, {pipeline_mode = #tpu.pipeline_mode<synchronous>, transform_indices = @transform_29, window_bounds = array<i64: 2, 16, 1>}, {pipeline_mode = #tpu.pipeline_mode<synchronous>, transform_indices = @transform_30, window_bounds = array<i64: 2, 8, 1>}, {pipeline_mode = #tpu.pipeline_mode<synchronous>, transform_indices = @transform_31, window_bounds = array<i64: 2, 16, 1>}, {pipeline_mode = #tpu.pipeline_mode<synchronous>, transform_indices = @transform_32, window_bounds = array<i64: 10, 16>}, {pipeline_mode = #tpu.pipeline_mode<synchronous>, transform_indices = @transform_33, window_bounds = array<i64: 10, 2>}]} {
    %c0_i32 = arith.constant 0 : i32
    %0 = arith.cmpi eq, %arg0, %c0_i32 : i32
    %1 = arith.extui %0 : i1 to i32
    %c0_i32_0 = arith.constant 0 : i32
    %2 = arith.cmpi ne, %1, %c0_i32_0 : i32
    scf.if %2 {
      %cst_577 = arith.constant 0.000000e+00 : f32
      %748 = vector.broadcast %cst_577 : f32 to vector<8x128xf32>
      %c0_578 = arith.constant 0 : index
      %c0_579 = arith.constant 0 : index
      %749 = vector.load %arg35[%c0_578, %c0_579] : memref<8x128xf32, #tpu.memory_space<vmem>>, vector<8x128xf32>
      tpu.vector_store %arg35[%c0_578, %c0_579], %748 {strides = array<i32>} : memref<8x128xf32, #tpu.memory_space<vmem>>, vector<8x128xf32>,
      %cst_580 = arith.constant 0.000000e+00 : f32
      %750 = vector.broadcast %cst_580 : f32 to vector<8x128xf32>
      %c0_581 = arith.constant 0 : index
      %c0_582 = arith.constant 0 : index
      %751 = vector.load %arg36[%c0_581, %c0_582] : memref<8x128xf32, #tpu.memory_space<vmem>>, vector<8x128xf32>
      tpu.vector_store %arg36[%c0_581, %c0_582], %750 {strides = array<i32>} : memref<8x128xf32, #tpu.memory_space<vmem>>, vector<8x128xf32>,
      %cst_583 = arith.constant 0.000000e+00 : f32
      %752 = vector.broadcast %cst_583 : f32 to vector<8x128xf32>
      %c0_584 = arith.constant 0 : index
      %c0_585 = arith.constant 0 : index
      %753 = vector.load %arg37[%c0_584, %c0_585] : memref<8x128xf32, #tpu.memory_space<vmem>>, vector<8x128xf32>
      tpu.vector_store %arg37[%c0_584, %c0_585], %752 {strides = array<i32>} : memref<8x128xf32, #tpu.memory_space<vmem>>, vector<8x128xf32>,
      %cst_586 = arith.constant 0.000000e+00 : f32
      %754 = vector.broadcast %cst_586 : f32 to vector<8x128xf32>
      %c0_587 = arith.constant 0 : index
      %c0_588 = arith.constant 0 : index
      %755 = vector.load %arg38[%c0_587, %c0_588] : memref<8x128xf32, #tpu.memory_space<vmem>>, vector<8x128xf32>
      tpu.vector_store %arg38[%c0_587, %c0_588], %754 {strides = array<i32>} : memref<8x128xf32, #tpu.memory_space<vmem>>, vector<8x128xf32>,
      %cst_589 = arith.constant 0.000000e+00 : f32
      %756 = vector.broadcast %cst_589 : f32 to vector<8x128xf32>
      %c0_590 = arith.constant 0 : index
      %c0_591 = arith.constant 0 : index
      %757 = vector.load %arg39[%c0_590, %c0_591] : memref<8x128xf32, #tpu.memory_space<vmem>>, vector<8x128xf32>
      tpu.vector_store %arg39[%c0_590, %c0_591], %756 {strides = array<i32>} : memref<8x128xf32, #tpu.memory_space<vmem>>, vector<8x128xf32>,
      %cst_592 = arith.constant 0.000000e+00 : f32
      %758 = vector.broadcast %cst_592 : f32 to vector<16x128xf32>
      %c0_593 = arith.constant 0 : index
      %c0_594 = arith.constant 0 : index
      %759 = vector.load %arg40[%c0_593, %c0_594] : memref<16x128xf32, #tpu.memory_space<vmem>>, vector<16x128xf32>
      tpu.vector_store %arg40[%c0_593, %c0_594], %758 {strides = array<i32>} : memref<16x128xf32, #tpu.memory_space<vmem>>, vector<16x128xf32>,
      %cst_595 = arith.constant 0.000000e+00 : f32
      %760 = vector.broadcast %cst_595 : f32 to vector<16x128xf32>
      %c0_596 = arith.constant 0 : index
      %c0_597 = arith.constant 0 : index
      %761 = vector.load %arg41[%c0_596, %c0_597] : memref<16x128xf32, #tpu.memory_space<vmem>>, vector<16x128xf32>
      tpu.vector_store %arg41[%c0_596, %c0_597], %760 {strides = array<i32>} : memref<16x128xf32, #tpu.memory_space<vmem>>, vector<16x128xf32>,
      %cst_598 = arith.constant 0.000000e+00 : f32
      %762 = vector.broadcast %cst_598 : f32 to vector<10x2xf32>
      %c0_599 = arith.constant 0 : index
      %c0_600 = arith.constant 0 : index
      %763 = vector.load %arg34[%c0_599, %c0_600] : memref<10x2xf32, #tpu.memory_space<vmem>>, vector<10x2xf32>
      tpu.vector_store %arg34[%c0_599, %c0_600], %762 {strides = array<i32>} : memref<10x2xf32, #tpu.memory_space<vmem>>, vector<10x2xf32>,
    } else {
    }
    %c0 = arith.constant 0 : index
    %c0_1 = arith.constant 0 : index
    %3 = vector.load %arg1[%c0, %c0_1] : memref<8x128xf32, #tpu.memory_space<vmem>>, vector<8x128xf32>
    %c9_i32 = arith.constant 9 : i32
    %4 = tpu.dynamic_rotate %3 by %c9_i32 dim 1 : vector<8x128xf32>, i32 -> vector<8x128xf32>
    %c0_2 = arith.constant 0 : index
    %c0_3 = arith.constant 0 : index
    %c0_4 = arith.constant 0 : index
    %5 = vector.load %arg16[%c0_2, %c0_3, %c0_4] : memref<9x1x128xf32, #tpu.memory_space<vmem>>, vector<1x1x128xf32>
    %6 = vector.shape_cast %5 : vector<1x1x128xf32> to vector<1x128xf32>
    %7 = vector.broadcast %6 : vector<1x128xf32> to vector<8x128xf32>
    %8 = arith.mulf %4, %7 : vector<8x128xf32>
    %c0_5 = arith.constant 0 : index
    %c0_6 = arith.constant 0 : index
    %9 = vector.load %arg42[%c0_5, %c0_6] : memref<144x128xf32, #tpu.memory_space<vmem>>, vector<8x128xf32>
    tpu.vector_store %arg42[%c0_5, %c0_6], %8 {strides = array<i32>} : memref<144x128xf32, #tpu.memory_space<vmem>>, vector<8x128xf32>,
    %c8_i32 = arith.constant 8 : i32
    %10 = tpu.dynamic_rotate %3 by %c8_i32 dim 1 : vector<8x128xf32>, i32 -> vector<8x128xf32>
    %c1 = arith.constant 1 : index
    %c0_7 = arith.constant 0 : index
    %c0_8 = arith.constant 0 : index
    %11 = vector.load %arg16[%c1, %c0_7, %c0_8] : memref<9x1x128xf32, #tpu.memory_space<vmem>>, vector<1x1x128xf32>
    %12 = vector.shape_cast %11 : vector<1x1x128xf32> to vector<1x128xf32>
    %13 = vector.broadcast %12 : vector<1x128xf32> to vector<8x128xf32>
    %14 = arith.mulf %10, %13 : vector<8x128xf32>
    %c8 = arith.constant 8 : index
    %c0_9 = arith.constant 0 : index
    %15 = vector.load %arg42[%c8, %c0_9] : memref<144x128xf32, #tpu.memory_space<vmem>>, vector<8x128xf32>
    tpu.vector_store %arg42[%c8, %c0_9], %14 {strides = array<i32>} : memref<144x128xf32, #tpu.memory_space<vmem>>, vector<8x128xf32>,
    %c7_i32 = arith.constant 7 : i32
    %16 = tpu.dynamic_rotate %3 by %c7_i32 dim 1 : vector<8x128xf32>, i32 -> vector<8x128xf32>
    %c2 = arith.constant 2 : index
    %c0_10 = arith.constant 0 : index
    %c0_11 = arith.constant 0 : index
    %17 = vector.load %arg16[%c2, %c0_10, %c0_11] : memref<9x1x128xf32, #tpu.memory_space<vmem>>, vector<1x1x128xf32>
    %18 = vector.shape_cast %17 : vector<1x1x128xf32> to vector<1x128xf32>
    %19 = vector.broadcast %18 : vector<1x128xf32> to vector<8x128xf32>
    %20 = arith.mulf %16, %19 : vector<8x128xf32>
    %c16 = arith.constant 16 : index
    %c0_12 = arith.constant 0 : index
    %21 = vector.load %arg42[%c16, %c0_12] : memref<144x128xf32, #tpu.memory_space<vmem>>, vector<8x128xf32>
    tpu.vector_store %arg42[%c16, %c0_12], %20 {strides = array<i32>} : memref<144x128xf32, #tpu.memory_space<vmem>>, vector<8x128xf32>,
    %c1_i32 = arith.constant 1 : i32
    %22 = tpu.dynamic_rotate %3 by %c1_i32 dim 1 : vector<8x128xf32>, i32 -> vector<8x128xf32>
    %c3 = arith.constant 3 : index
    %c0_13 = arith.constant 0 : index
    %c0_14 = arith.constant 0 : index
    %23 = vector.load %arg16[%c3, %c0_13, %c0_14] : memref<9x1x128xf32, #tpu.memory_space<vmem>>, vector<1x1x128xf32>
    %24 = vector.shape_cast %23 : vector<1x1x128xf32> to vector<1x128xf32>
    %25 = vector.broadcast %24 : vector<1x128xf32> to vector<8x128xf32>
    %26 = arith.mulf %22, %25 : vector<8x128xf32>
    %c24 = arith.constant 24 : index
    %c0_15 = arith.constant 0 : index
    %27 = vector.load %arg42[%c24, %c0_15] : memref<144x128xf32, #tpu.memory_space<vmem>>, vector<8x128xf32>
    tpu.vector_store %arg42[%c24, %c0_15], %26 {strides = array<i32>} : memref<144x128xf32, #tpu.memory_space<vmem>>, vector<8x128xf32>,
    %c32 = arith.constant 32 : index
    %c0_16 = arith.constant 0 : index
    %28 = vector.load %arg42[%c32, %c0_16] : memref<144x128xf32, #tpu.memory_space<vmem>>, vector<8x128xf32>
    tpu.vector_store %arg42[%c32, %c0_16], %3 {strides = array<i32>} : memref<144x128xf32, #tpu.memory_space<vmem>>, vector<8x128xf32>,
    %c127_i32 = arith.constant 127 : i32
    %29 = tpu.dynamic_rotate %3 by %c127_i32 dim 1 : vector<8x128xf32>, i32 -> vector<8x128xf32>
    %c5 = arith.constant 5 : index
    %c0_17 = arith.constant 0 : index
    %c0_18 = arith.constant 0 : index
    %30 = vector.load %arg16[%c5, %c0_17, %c0_18] : memref<9x1x128xf32, #tpu.memory_space<vmem>>, vector<1x1x128xf32>
    %31 = vector.shape_cast %30 : vector<1x1x128xf32> to vector<1x128xf32>
    %32 = vector.broadcast %31 : vector<1x128xf32> to vector<8x128xf32>
    %33 = arith.mulf %29, %32 : vector<8x128xf32>
    %c40 = arith.constant 40 : index
    %c0_19 = arith.constant 0 : index
    %34 = vector.load %arg42[%c40, %c0_19] : memref<144x128xf32, #tpu.memory_space<vmem>>, vector<8x128xf32>
    tpu.vector_store %arg42[%c40, %c0_19], %33 {strides = array<i32>} : memref<144x128xf32, #tpu.memory_space<vmem>>, vector<8x128xf32>,
    %c121_i32 = arith.constant 121 : i32
    %35 = tpu.dynamic_rotate %3 by %c121_i32 dim 1 : vector<8x128xf32>, i32 -> vector<8x128xf32>
    %c6 = arith.constant 6 : index
    %c0_20 = arith.constant 0 : index
    %c0_21 = arith.constant 0 : index
    %36 = vector.load %arg16[%c6, %c0_20, %c0_21] : memref<9x1x128xf32, #tpu.memory_space<vmem>>, vector<1x1x128xf32>
    %37 = vector.shape_cast %36 : vector<1x1x128xf32> to vector<1x128xf32>
    %38 = vector.broadcast %37 : vector<1x128xf32> to vector<8x128xf32>
    %39 = arith.mulf %35, %38 : vector<8x128xf32>
    %c48 = arith.constant 48 : index
    %c0_22 = arith.constant 0 : index
    %40 = vector.load %arg42[%c48, %c0_22] : memref<144x128xf32, #tpu.memory_space<vmem>>, vector<8x128xf32>
    tpu.vector_store %arg42[%c48, %c0_22], %39 {strides = array<i32>} : memref<144x128xf32, #tpu.memory_space<vmem>>, vector<8x128xf32>,
    %c120_i32 = arith.constant 120 : i32
    %41 = tpu.dynamic_rotate %3 by %c120_i32 dim 1 : vector<8x128xf32>, i32 -> vector<8x128xf32>
    %c7 = arith.constant 7 : index
    %c0_23 = arith.constant 0 : index
    %c0_24 = arith.constant 0 : index
    %42 = vector.load %arg16[%c7, %c0_23, %c0_24] : memref<9x1x128xf32, #tpu.memory_space<vmem>>, vector<1x1x128xf32>
    %43 = vector.shape_cast %42 : vector<1x1x128xf32> to vector<1x128xf32>
    %44 = vector.broadcast %43 : vector<1x128xf32> to vector<8x128xf32>
    %45 = arith.mulf %41, %44 : vector<8x128xf32>
    %c56 = arith.constant 56 : index
    %c0_25 = arith.constant 0 : index
    %46 = vector.load %arg42[%c56, %c0_25] : memref<144x128xf32, #tpu.memory_space<vmem>>, vector<8x128xf32>
    tpu.vector_store %arg42[%c56, %c0_25], %45 {strides = array<i32>} : memref<144x128xf32, #tpu.memory_space<vmem>>, vector<8x128xf32>,
    %c119_i32 = arith.constant 119 : i32
    %47 = tpu.dynamic_rotate %3 by %c119_i32 dim 1 : vector<8x128xf32>, i32 -> vector<8x128xf32>
    %c8_26 = arith.constant 8 : index
    %c0_27 = arith.constant 0 : index
    %c0_28 = arith.constant 0 : index
    %48 = vector.load %arg16[%c8_26, %c0_27, %c0_28] : memref<9x1x128xf32, #tpu.memory_space<vmem>>, vector<1x1x128xf32>
    %49 = vector.shape_cast %48 : vector<1x1x128xf32> to vector<1x128xf32>
    %50 = vector.broadcast %49 : vector<1x128xf32> to vector<8x128xf32>
    %51 = arith.mulf %47, %50 : vector<8x128xf32>
    %c64 = arith.constant 64 : index
    %c0_29 = arith.constant 0 : index
    %52 = vector.load %arg42[%c64, %c0_29] : memref<144x128xf32, #tpu.memory_space<vmem>>, vector<8x128xf32>
    tpu.vector_store %arg42[%c64, %c0_29], %51 {strides = array<i32>} : memref<144x128xf32, #tpu.memory_space<vmem>>, vector<8x128xf32>,
    %c0_30 = arith.constant 0 : index
    %c0_31 = arith.constant 0 : index
    %53 = vector.load %arg2[%c0_30, %c0_31] : memref<8x72xf32, #tpu.memory_space<vmem>>, vector<8x72xf32>
    %c0_32 = arith.constant 0 : index
    %c0_33 = arith.constant 0 : index
    %54 = vector.load %arg42[%c0_32, %c0_33] : memref<144x128xf32, #tpu.memory_space<vmem>>, vector<72x128xf32>
    %cst = arith.constant dense<0.000000e+00> : vector<8x128xf32>
    %55 = tpu.matmul %53, %54, %cst {dimension_numbers = #tpu.dot_dimension_numbers<[1], [0], [0], [1], [0, 0, 1, 1], [], []>} : vector<8x72xf32>, vector<72x128xf32>, vector<8x128xf32> -> vector<8x128xf32>
    %56 = arith.index_cast %arg0 : i32 to index
    %c0_34 = arith.constant 0 : index
    %c0_35 = arith.constant 0 : index
    %57 = vector.load %arg9[%56, %c0_34, %c0_35] : memref<2x8x1xf32, #tpu.memory_space<vmem>>, vector<1x8x1xf32>
    %58 = vector.shape_cast %57 : vector<1x8x1xf32> to vector<8x1xf32>
    %c0_36 = arith.constant 0 : index
    %c0_37 = arith.constant 0 : index
    %59 = vector.load %arg19[%c0_36, %c0_37] : memref<2x128xf32, #tpu.memory_space<vmem>>, vector<2x128xf32>
    %c0_38 = arith.constant 0 : index
    %c0_39 = arith.constant 0 : index
    %60 = vector.load %arg22[%c0_38, %c0_39] : memref<128x2xf32, #tpu.memory_space<vmem>>, vector<128x2xf32>
    %cst_40 = arith.constant dense<0.000000e+00> : vector<128xf32>
    %61 = vector.multi_reduction <add>, %55, %cst_40 [0] : vector<8x128xf32> to vector<128xf32>
    %62 = vector.shape_cast %61 : vector<128xf32> to vector<1x128xf32>
    %cst_41 = arith.constant dense<0.000000e+00> : vector<1x2xf32>
    %63 = tpu.matmul %62, %60, %cst_41 {dimension_numbers = #tpu.dot_dimension_numbers<[1], [0], [0], [1], [0, 0, 1, 1], [], []>} : vector<1x128xf32>, vector<128x2xf32>, vector<1x2xf32> -> vector<1x2xf32>
    %cst_42 = arith.constant 3.906250e-03 : f32
    %64 = vector.broadcast %cst_42 : f32 to vector<1x2xf32>
    %65 = arith.mulf %63, %64 : vector<1x2xf32>
    %cst_43 = arith.constant dense<0.000000e+00> : vector<1x128xf32>
    %66 = tpu.matmul %65, %59, %cst_43 {dimension_numbers = #tpu.dot_dimension_numbers<[1], [0], [0], [1], [0, 0, 1, 1], [], []>} : vector<1x2xf32>, vector<2x128xf32>, vector<1x128xf32> -> vector<1x128xf32>
    %67 = vector.broadcast %66 : vector<1x128xf32> to vector<8x128xf32>
    %68 = arith.subf %55, %67 : vector<8x128xf32>
    %69 = vector.extract_strided_slice %68 {offsets = [0, 0], sizes = [4, 128], strides = [1, 1]} : vector<8x128xf32> to vector<4x128xf32>
    %70 = arith.mulf %69, %69 : vector<4x128xf32>
    %cst_44 = arith.constant dense<0.000000e+00> : vector<128xf32>
    %71 = vector.multi_reduction <add>, %70, %cst_44 [0] : vector<4x128xf32> to vector<128xf32>
    %72 = vector.shape_cast %71 : vector<128xf32> to vector<1x128xf32>
    %cst_45 = arith.constant dense<0.000000e+00> : vector<1x2xf32>
    %73 = tpu.matmul %72, %60, %cst_45 {dimension_numbers = #tpu.dot_dimension_numbers<[1], [0], [0], [1], [0, 0, 1, 1], [], []>} : vector<1x128xf32>, vector<128x2xf32>, vector<1x2xf32> -> vector<1x2xf32>
    %cst_46 = arith.constant 3.906250e-03 : f32
    %74 = vector.broadcast %cst_46 : f32 to vector<1x2xf32>
    %75 = arith.mulf %73, %74 : vector<1x2xf32>
    %cst_47 = arith.constant 9.99999974E-5 : f32
    %76 = vector.broadcast %cst_47 : f32 to vector<1x2xf32>
    %77 = arith.addf %75, %76 : vector<1x2xf32>
    %78 = math.rsqrt %77 : vector<1x2xf32>
    %cst_48 = arith.constant dense<0.000000e+00> : vector<1x128xf32>
    %79 = tpu.matmul %78, %59, %cst_48 {dimension_numbers = #tpu.dot_dimension_numbers<[1], [0], [0], [1], [0, 0, 1, 1], [], []>} : vector<1x2xf32>, vector<2x128xf32>, vector<1x128xf32> -> vector<1x128xf32>
    %80 = vector.broadcast %79 : vector<1x128xf32> to vector<8x128xf32>
    %81 = arith.mulf %68, %80 : vector<8x128xf32>
    %82 = vector.broadcast %58 : vector<8x1xf32> to vector<8x128xf32>
    %83 = arith.mulf %81, %82 : vector<8x128xf32>
    %c0_49 = arith.constant 0 : index
    %c0_50 = arith.constant 0 : index
    %84 = vector.load %arg35[%c0_49, %c0_50] : memref<8x128xf32, #tpu.memory_space<vmem>>, vector<8x128xf32>
    %cst_51 = arith.constant 0.949999988 : f32
    %85 = vector.broadcast %cst_51 : f32 to vector<8x128xf32>
    %86 = arith.mulf %85, %84 : vector<8x128xf32>
    %87 = arith.addf %86, %83 : vector<8x128xf32>
    %cst_52 = arith.constant 1.000000e+00 : f32
    %88 = vector.broadcast %cst_52 : f32 to vector<8x128xf32>
    %89 = arith.subf %87, %88 : vector<8x128xf32>
    %cst_53 = arith.constant 0.000000e+00 : f32
    %90 = vector.broadcast %cst_53 : f32 to vector<8x128xf32>
    %91 = arith.cmpf ogt, %89, %90 : vector<8x128xf32>
    %92 = arith.extui %91 : vector<8x128xi1> to vector<8x128xi32>
    %93 = arith.sitofp %92 : vector<8x128xi32> to vector<8x128xf32>
    %cst_54 = arith.constant 1.000000e+00 : f32
    %94 = vector.broadcast %cst_54 : f32 to vector<8x128xf32>
    %95 = arith.mulf %93, %94 : vector<8x128xf32>
    %96 = arith.subf %87, %95 : vector<8x128xf32>
    %c0_55 = arith.constant 0 : index
    %c0_56 = arith.constant 0 : index
    %97 = vector.load %arg35[%c0_55, %c0_56] : memref<8x128xf32, #tpu.memory_space<vmem>>, vector<8x128xf32>
    tpu.vector_store %arg35[%c0_55, %c0_56], %96 {strides = array<i32>} : memref<8x128xf32, #tpu.memory_space<vmem>>, vector<8x128xf32>,
    %c9_i32_57 = arith.constant 9 : i32
    %98 = tpu.dynamic_rotate %93 by %c9_i32_57 dim 1 : vector<8x128xf32>, i32 -> vector<8x128xf32>
    %c0_58 = arith.constant 0 : index
    %c0_59 = arith.constant 0 : index
    %c0_60 = arith.constant 0 : index
    %99 = vector.load %arg16[%c0_58, %c0_59, %c0_60] : memref<9x1x128xf32, #tpu.memory_space<vmem>>, vector<1x1x128xf32>
    %100 = vector.shape_cast %99 : vector<1x1x128xf32> to vector<1x128xf32>
    %101 = vector.broadcast %100 : vector<1x128xf32> to vector<8x128xf32>
    %102 = arith.mulf %98, %101 : vector<8x128xf32>
    %c0_61 = arith.constant 0 : index
    %c0_62 = arith.constant 0 : index
    %103 = vector.load %arg42[%c0_61, %c0_62] : memref<144x128xf32, #tpu.memory_space<vmem>>, vector<8x128xf32>
    tpu.vector_store %arg42[%c0_61, %c0_62], %102 {strides = array<i32>} : memref<144x128xf32, #tpu.memory_space<vmem>>, vector<8x128xf32>,
    %c8_i32_63 = arith.constant 8 : i32
    %104 = tpu.dynamic_rotate %93 by %c8_i32_63 dim 1 : vector<8x128xf32>, i32 -> vector<8x128xf32>
    %c1_64 = arith.constant 1 : index
    %c0_65 = arith.constant 0 : index
    %c0_66 = arith.constant 0 : index
    %105 = vector.load %arg16[%c1_64, %c0_65, %c0_66] : memref<9x1x128xf32, #tpu.memory_space<vmem>>, vector<1x1x128xf32>
    %106 = vector.shape_cast %105 : vector<1x1x128xf32> to vector<1x128xf32>
    %107 = vector.broadcast %106 : vector<1x128xf32> to vector<8x128xf32>
    %108 = arith.mulf %104, %107 : vector<8x128xf32>
    %c8_67 = arith.constant 8 : index
    %c0_68 = arith.constant 0 : index
    %109 = vector.load %arg42[%c8_67, %c0_68] : memref<144x128xf32, #tpu.memory_space<vmem>>, vector<8x128xf32>
    tpu.vector_store %arg42[%c8_67, %c0_68], %108 {strides = array<i32>} : memref<144x128xf32, #tpu.memory_space<vmem>>, vector<8x128xf32>,
    %c7_i32_69 = arith.constant 7 : i32
    %110 = tpu.dynamic_rotate %93 by %c7_i32_69 dim 1 : vector<8x128xf32>, i32 -> vector<8x128xf32>
    %c2_70 = arith.constant 2 : index
    %c0_71 = arith.constant 0 : index
    %c0_72 = arith.constant 0 : index
    %111 = vector.load %arg16[%c2_70, %c0_71, %c0_72] : memref<9x1x128xf32, #tpu.memory_space<vmem>>, vector<1x1x128xf32>
    %112 = vector.shape_cast %111 : vector<1x1x128xf32> to vector<1x128xf32>
    %113 = vector.broadcast %112 : vector<1x128xf32> to vector<8x128xf32>
    %114 = arith.mulf %110, %113 : vector<8x128xf32>
    %c16_73 = arith.constant 16 : index
    %c0_74 = arith.constant 0 : index
    %115 = vector.load %arg42[%c16_73, %c0_74] : memref<144x128xf32, #tpu.memory_space<vmem>>, vector<8x128xf32>
    tpu.vector_store %arg42[%c16_73, %c0_74], %114 {strides = array<i32>} : memref<144x128xf32, #tpu.memory_space<vmem>>, vector<8x128xf32>,
    %c1_i32_75 = arith.constant 1 : i32
    %116 = tpu.dynamic_rotate %93 by %c1_i32_75 dim 1 : vector<8x128xf32>, i32 -> vector<8x128xf32>
    %c3_76 = arith.constant 3 : index
    %c0_77 = arith.constant 0 : index
    %c0_78 = arith.constant 0 : index
    %117 = vector.load %arg16[%c3_76, %c0_77, %c0_78] : memref<9x1x128xf32, #tpu.memory_space<vmem>>, vector<1x1x128xf32>
    %118 = vector.shape_cast %117 : vector<1x1x128xf32> to vector<1x128xf32>
    %119 = vector.broadcast %118 : vector<1x128xf32> to vector<8x128xf32>
    %120 = arith.mulf %116, %119 : vector<8x128xf32>
    %c24_79 = arith.constant 24 : index
    %c0_80 = arith.constant 0 : index
    %121 = vector.load %arg42[%c24_79, %c0_80] : memref<144x128xf32, #tpu.memory_space<vmem>>, vector<8x128xf32>
    tpu.vector_store %arg42[%c24_79, %c0_80], %120 {strides = array<i32>} : memref<144x128xf32, #tpu.memory_space<vmem>>, vector<8x128xf32>,
    %c32_81 = arith.constant 32 : index
    %c0_82 = arith.constant 0 : index
    %122 = vector.load %arg42[%c32_81, %c0_82] : memref<144x128xf32, #tpu.memory_space<vmem>>, vector<8x128xf32>
    tpu.vector_store %arg42[%c32_81, %c0_82], %93 {strides = array<i32>} : memref<144x128xf32, #tpu.memory_space<vmem>>, vector<8x128xf32>,
    %c127_i32_83 = arith.constant 127 : i32
    %123 = tpu.dynamic_rotate %93 by %c127_i32_83 dim 1 : vector<8x128xf32>, i32 -> vector<8x128xf32>
    %c5_84 = arith.constant 5 : index
    %c0_85 = arith.constant 0 : index
    %c0_86 = arith.constant 0 : index
    %124 = vector.load %arg16[%c5_84, %c0_85, %c0_86] : memref<9x1x128xf32, #tpu.memory_space<vmem>>, vector<1x1x128xf32>
    %125 = vector.shape_cast %124 : vector<1x1x128xf32> to vector<1x128xf32>
    %126 = vector.broadcast %125 : vector<1x128xf32> to vector<8x128xf32>
    %127 = arith.mulf %123, %126 : vector<8x128xf32>
    %c40_87 = arith.constant 40 : index
    %c0_88 = arith.constant 0 : index
    %128 = vector.load %arg42[%c40_87, %c0_88] : memref<144x128xf32, #tpu.memory_space<vmem>>, vector<8x128xf32>
    tpu.vector_store %arg42[%c40_87, %c0_88], %127 {strides = array<i32>} : memref<144x128xf32, #tpu.memory_space<vmem>>, vector<8x128xf32>,
    %c121_i32_89 = arith.constant 121 : i32
    %129 = tpu.dynamic_rotate %93 by %c121_i32_89 dim 1 : vector<8x128xf32>, i32 -> vector<8x128xf32>
    %c6_90 = arith.constant 6 : index
    %c0_91 = arith.constant 0 : index
    %c0_92 = arith.constant 0 : index
    %130 = vector.load %arg16[%c6_90, %c0_91, %c0_92] : memref<9x1x128xf32, #tpu.memory_space<vmem>>, vector<1x1x128xf32>
    %131 = vector.shape_cast %130 : vector<1x1x128xf32> to vector<1x128xf32>
    %132 = vector.broadcast %131 : vector<1x128xf32> to vector<8x128xf32>
    %133 = arith.mulf %129, %132 : vector<8x128xf32>
    %c48_93 = arith.constant 48 : index
    %c0_94 = arith.constant 0 : index
    %134 = vector.load %arg42[%c48_93, %c0_94] : memref<144x128xf32, #tpu.memory_space<vmem>>, vector<8x128xf32>
    tpu.vector_store %arg42[%c48_93, %c0_94], %133 {strides = array<i32>} : memref<144x128xf32, #tpu.memory_space<vmem>>, vector<8x128xf32>,
    %c120_i32_95 = arith.constant 120 : i32
    %135 = tpu.dynamic_rotate %93 by %c120_i32_95 dim 1 : vector<8x128xf32>, i32 -> vector<8x128xf32>
    %c7_96 = arith.constant 7 : index
    %c0_97 = arith.constant 0 : index
    %c0_98 = arith.constant 0 : index
    %136 = vector.load %arg16[%c7_96, %c0_97, %c0_98] : memref<9x1x128xf32, #tpu.memory_space<vmem>>, vector<1x1x128xf32>
    %137 = vector.shape_cast %136 : vector<1x1x128xf32> to vector<1x128xf32>
    %138 = vector.broadcast %137 : vector<1x128xf32> to vector<8x128xf32>
    %139 = arith.mulf %135, %138 : vector<8x128xf32>
    %c56_99 = arith.constant 56 : index
    %c0_100 = arith.constant 0 : index
    %140 = vector.load %arg42[%c56_99, %c0_100] : memref<144x128xf32, #tpu.memory_space<vmem>>, vector<8x128xf32>
    tpu.vector_store %arg42[%c56_99, %c0_100], %139 {strides = array<i32>} : memref<144x128xf32, #tpu.memory_space<vmem>>, vector<8x128xf32>,
    %c119_i32_101 = arith.constant 119 : i32
    %141 = tpu.dynamic_rotate %93 by %c119_i32_101 dim 1 : vector<8x128xf32>, i32 -> vector<8x128xf32>
    %c8_102 = arith.constant 8 : index
    %c0_103 = arith.constant 0 : index
    %c0_104 = arith.constant 0 : index
    %142 = vector.load %arg16[%c8_102, %c0_103, %c0_104] : memref<9x1x128xf32, #tpu.memory_space<vmem>>, vector<1x1x128xf32>
    %143 = vector.shape_cast %142 : vector<1x1x128xf32> to vector<1x128xf32>
    %144 = vector.broadcast %143 : vector<1x128xf32> to vector<8x128xf32>
    %145 = arith.mulf %141, %144 : vector<8x128xf32>
    %c64_105 = arith.constant 64 : index
    %c0_106 = arith.constant 0 : index
    %146 = vector.load %arg42[%c64_105, %c0_106] : memref<144x128xf32, #tpu.memory_space<vmem>>, vector<8x128xf32>
    tpu.vector_store %arg42[%c64_105, %c0_106], %145 {strides = array<i32>} : memref<144x128xf32, #tpu.memory_space<vmem>>, vector<8x128xf32>,
    %c0_107 = arith.constant 0 : index
    %c0_108 = arith.constant 0 : index
    %147 = vector.load %arg3[%c0_107, %c0_108] : memref<8x72xf32, #tpu.memory_space<vmem>>, vector<8x72xf32>
    %c0_109 = arith.constant 0 : index
    %c0_110 = arith.constant 0 : index
    %148 = vector.load %arg42[%c0_109, %c0_110] : memref<144x128xf32, #tpu.memory_space<vmem>>, vector<72x128xf32>
    %cst_111 = arith.constant dense<0.000000e+00> : vector<8x128xf32>
    %149 = tpu.matmul %147, %148, %cst_111 {dimension_numbers = #tpu.dot_dimension_numbers<[1], [0], [0], [1], [0, 0, 1, 1], [], []>} : vector<8x72xf32>, vector<72x128xf32>, vector<8x128xf32> -> vector<8x128xf32>
    %150 = arith.index_cast %arg0 : i32 to index
    %c0_112 = arith.constant 0 : index
    %c0_113 = arith.constant 0 : index
    %151 = vector.load %arg10[%150, %c0_112, %c0_113] : memref<2x8x1xf32, #tpu.memory_space<vmem>>, vector<1x8x1xf32>
    %152 = vector.shape_cast %151 : vector<1x8x1xf32> to vector<8x1xf32>
    %c0_114 = arith.constant 0 : index
    %c0_115 = arith.constant 0 : index
    %153 = vector.load %arg19[%c0_114, %c0_115] : memref<2x128xf32, #tpu.memory_space<vmem>>, vector<2x128xf32>
    %c0_116 = arith.constant 0 : index
    %c0_117 = arith.constant 0 : index
    %154 = vector.load %arg22[%c0_116, %c0_117] : memref<128x2xf32, #tpu.memory_space<vmem>>, vector<128x2xf32>
    %cst_118 = arith.constant dense<0.000000e+00> : vector<128xf32>
    %155 = vector.multi_reduction <add>, %149, %cst_118 [0] : vector<8x128xf32> to vector<128xf32>
    %156 = vector.shape_cast %155 : vector<128xf32> to vector<1x128xf32>
    %cst_119 = arith.constant dense<0.000000e+00> : vector<1x2xf32>
    %157 = tpu.matmul %156, %154, %cst_119 {dimension_numbers = #tpu.dot_dimension_numbers<[1], [0], [0], [1], [0, 0, 1, 1], [], []>} : vector<1x128xf32>, vector<128x2xf32>, vector<1x2xf32> -> vector<1x2xf32>
    %cst_120 = arith.constant 3.906250e-03 : f32
    %158 = vector.broadcast %cst_120 : f32 to vector<1x2xf32>
    %159 = arith.mulf %157, %158 : vector<1x2xf32>
    %cst_121 = arith.constant dense<0.000000e+00> : vector<1x128xf32>
    %160 = tpu.matmul %159, %153, %cst_121 {dimension_numbers = #tpu.dot_dimension_numbers<[1], [0], [0], [1], [0, 0, 1, 1], [], []>} : vector<1x2xf32>, vector<2x128xf32>, vector<1x128xf32> -> vector<1x128xf32>
    %161 = vector.broadcast %160 : vector<1x128xf32> to vector<8x128xf32>
    %162 = arith.subf %149, %161 : vector<8x128xf32>
    %163 = vector.extract_strided_slice %162 {offsets = [0, 0], sizes = [4, 128], strides = [1, 1]} : vector<8x128xf32> to vector<4x128xf32>
    %164 = arith.mulf %163, %163 : vector<4x128xf32>
    %cst_122 = arith.constant dense<0.000000e+00> : vector<128xf32>
    %165 = vector.multi_reduction <add>, %164, %cst_122 [0] : vector<4x128xf32> to vector<128xf32>
    %166 = vector.shape_cast %165 : vector<128xf32> to vector<1x128xf32>
    %cst_123 = arith.constant dense<0.000000e+00> : vector<1x2xf32>
    %167 = tpu.matmul %166, %154, %cst_123 {dimension_numbers = #tpu.dot_dimension_numbers<[1], [0], [0], [1], [0, 0, 1, 1], [], []>} : vector<1x128xf32>, vector<128x2xf32>, vector<1x2xf32> -> vector<1x2xf32>
    %cst_124 = arith.constant 3.906250e-03 : f32
    %168 = vector.broadcast %cst_124 : f32 to vector<1x2xf32>
    %169 = arith.mulf %167, %168 : vector<1x2xf32>
    %cst_125 = arith.constant 9.99999974E-5 : f32
    %170 = vector.broadcast %cst_125 : f32 to vector<1x2xf32>
    %171 = arith.addf %169, %170 : vector<1x2xf32>
    %172 = math.rsqrt %171 : vector<1x2xf32>
    %cst_126 = arith.constant dense<0.000000e+00> : vector<1x128xf32>
    %173 = tpu.matmul %172, %153, %cst_126 {dimension_numbers = #tpu.dot_dimension_numbers<[1], [0], [0], [1], [0, 0, 1, 1], [], []>} : vector<1x2xf32>, vector<2x128xf32>, vector<1x128xf32> -> vector<1x128xf32>
    %174 = vector.broadcast %173 : vector<1x128xf32> to vector<8x128xf32>
    %175 = arith.mulf %162, %174 : vector<8x128xf32>
    %176 = vector.broadcast %152 : vector<8x1xf32> to vector<8x128xf32>
    %177 = arith.mulf %175, %176 : vector<8x128xf32>
    %c0_127 = arith.constant 0 : index
    %c0_128 = arith.constant 0 : index
    %178 = vector.load %arg36[%c0_127, %c0_128] : memref<8x128xf32, #tpu.memory_space<vmem>>, vector<8x128xf32>
    %cst_129 = arith.constant 0.949999988 : f32
    %179 = vector.broadcast %cst_129 : f32 to vector<8x128xf32>
    %180 = arith.mulf %179, %178 : vector<8x128xf32>
    %181 = arith.addf %180, %177 : vector<8x128xf32>
    %cst_130 = arith.constant 1.000000e+00 : f32
    %182 = vector.broadcast %cst_130 : f32 to vector<8x128xf32>
    %183 = arith.subf %181, %182 : vector<8x128xf32>
    %cst_131 = arith.constant 0.000000e+00 : f32
    %184 = vector.broadcast %cst_131 : f32 to vector<8x128xf32>
    %185 = arith.cmpf ogt, %183, %184 : vector<8x128xf32>
    %186 = arith.extui %185 : vector<8x128xi1> to vector<8x128xi32>
    %187 = arith.sitofp %186 : vector<8x128xi32> to vector<8x128xf32>
    %cst_132 = arith.constant 1.000000e+00 : f32
    %188 = vector.broadcast %cst_132 : f32 to vector<8x128xf32>
    %189 = arith.mulf %187, %188 : vector<8x128xf32>
    %190 = arith.subf %181, %189 : vector<8x128xf32>
    %c0_133 = arith.constant 0 : index
    %c0_134 = arith.constant 0 : index
    %191 = vector.load %arg36[%c0_133, %c0_134] : memref<8x128xf32, #tpu.memory_space<vmem>>, vector<8x128xf32>
    tpu.vector_store %arg36[%c0_133, %c0_134], %190 {strides = array<i32>} : memref<8x128xf32, #tpu.memory_space<vmem>>, vector<8x128xf32>,
    %c9_i32_135 = arith.constant 9 : i32
    %192 = tpu.dynamic_rotate %187 by %c9_i32_135 dim 1 : vector<8x128xf32>, i32 -> vector<8x128xf32>
    %c0_136 = arith.constant 0 : index
    %c0_137 = arith.constant 0 : index
    %c0_138 = arith.constant 0 : index
    %193 = vector.load %arg16[%c0_136, %c0_137, %c0_138] : memref<9x1x128xf32, #tpu.memory_space<vmem>>, vector<1x1x128xf32>
    %194 = vector.shape_cast %193 : vector<1x1x128xf32> to vector<1x128xf32>
    %195 = vector.broadcast %194 : vector<1x128xf32> to vector<8x128xf32>
    %196 = arith.mulf %192, %195 : vector<8x128xf32>
    %c0_139 = arith.constant 0 : index
    %c0_140 = arith.constant 0 : index
    %197 = vector.load %arg42[%c0_139, %c0_140] : memref<144x128xf32, #tpu.memory_space<vmem>>, vector<8x128xf32>
    tpu.vector_store %arg42[%c0_139, %c0_140], %196 {strides = array<i32>} : memref<144x128xf32, #tpu.memory_space<vmem>>, vector<8x128xf32>,
    %c8_i32_141 = arith.constant 8 : i32
    %198 = tpu.dynamic_rotate %187 by %c8_i32_141 dim 1 : vector<8x128xf32>, i32 -> vector<8x128xf32>
    %c1_142 = arith.constant 1 : index
    %c0_143 = arith.constant 0 : index
    %c0_144 = arith.constant 0 : index
    %199 = vector.load %arg16[%c1_142, %c0_143, %c0_144] : memref<9x1x128xf32, #tpu.memory_space<vmem>>, vector<1x1x128xf32>
    %200 = vector.shape_cast %199 : vector<1x1x128xf32> to vector<1x128xf32>
    %201 = vector.broadcast %200 : vector<1x128xf32> to vector<8x128xf32>
    %202 = arith.mulf %198, %201 : vector<8x128xf32>
    %c8_145 = arith.constant 8 : index
    %c0_146 = arith.constant 0 : index
    %203 = vector.load %arg42[%c8_145, %c0_146] : memref<144x128xf32, #tpu.memory_space<vmem>>, vector<8x128xf32>
    tpu.vector_store %arg42[%c8_145, %c0_146], %202 {strides = array<i32>} : memref<144x128xf32, #tpu.memory_space<vmem>>, vector<8x128xf32>,
    %c7_i32_147 = arith.constant 7 : i32
    %204 = tpu.dynamic_rotate %187 by %c7_i32_147 dim 1 : vector<8x128xf32>, i32 -> vector<8x128xf32>
    %c2_148 = arith.constant 2 : index
    %c0_149 = arith.constant 0 : index
    %c0_150 = arith.constant 0 : index
    %205 = vector.load %arg16[%c2_148, %c0_149, %c0_150] : memref<9x1x128xf32, #tpu.memory_space<vmem>>, vector<1x1x128xf32>
    %206 = vector.shape_cast %205 : vector<1x1x128xf32> to vector<1x128xf32>
    %207 = vector.broadcast %206 : vector<1x128xf32> to vector<8x128xf32>
    %208 = arith.mulf %204, %207 : vector<8x128xf32>
    %c16_151 = arith.constant 16 : index
    %c0_152 = arith.constant 0 : index
    %209 = vector.load %arg42[%c16_151, %c0_152] : memref<144x128xf32, #tpu.memory_space<vmem>>, vector<8x128xf32>
    tpu.vector_store %arg42[%c16_151, %c0_152], %208 {strides = array<i32>} : memref<144x128xf32, #tpu.memory_space<vmem>>, vector<8x128xf32>,
    %c1_i32_153 = arith.constant 1 : i32
    %210 = tpu.dynamic_rotate %187 by %c1_i32_153 dim 1 : vector<8x128xf32>, i32 -> vector<8x128xf32>
    %c3_154 = arith.constant 3 : index
    %c0_155 = arith.constant 0 : index
    %c0_156 = arith.constant 0 : index
    %211 = vector.load %arg16[%c3_154, %c0_155, %c0_156] : memref<9x1x128xf32, #tpu.memory_space<vmem>>, vector<1x1x128xf32>
    %212 = vector.shape_cast %211 : vector<1x1x128xf32> to vector<1x128xf32>
    %213 = vector.broadcast %212 : vector<1x128xf32> to vector<8x128xf32>
    %214 = arith.mulf %210, %213 : vector<8x128xf32>
    %c24_157 = arith.constant 24 : index
    %c0_158 = arith.constant 0 : index
    %215 = vector.load %arg42[%c24_157, %c0_158] : memref<144x128xf32, #tpu.memory_space<vmem>>, vector<8x128xf32>
    tpu.vector_store %arg42[%c24_157, %c0_158], %214 {strides = array<i32>} : memref<144x128xf32, #tpu.memory_space<vmem>>, vector<8x128xf32>,
    %c32_159 = arith.constant 32 : index
    %c0_160 = arith.constant 0 : index
    %216 = vector.load %arg42[%c32_159, %c0_160] : memref<144x128xf32, #tpu.memory_space<vmem>>, vector<8x128xf32>
    tpu.vector_store %arg42[%c32_159, %c0_160], %187 {strides = array<i32>} : memref<144x128xf32, #tpu.memory_space<vmem>>, vector<8x128xf32>,
    %c127_i32_161 = arith.constant 127 : i32
    %217 = tpu.dynamic_rotate %187 by %c127_i32_161 dim 1 : vector<8x128xf32>, i32 -> vector<8x128xf32>
    %c5_162 = arith.constant 5 : index
    %c0_163 = arith.constant 0 : index
    %c0_164 = arith.constant 0 : index
    %218 = vector.load %arg16[%c5_162, %c0_163, %c0_164] : memref<9x1x128xf32, #tpu.memory_space<vmem>>, vector<1x1x128xf32>
    %219 = vector.shape_cast %218 : vector<1x1x128xf32> to vector<1x128xf32>
    %220 = vector.broadcast %219 : vector<1x128xf32> to vector<8x128xf32>
    %221 = arith.mulf %217, %220 : vector<8x128xf32>
    %c40_165 = arith.constant 40 : index
    %c0_166 = arith.constant 0 : index
    %222 = vector.load %arg42[%c40_165, %c0_166] : memref<144x128xf32, #tpu.memory_space<vmem>>, vector<8x128xf32>
    tpu.vector_store %arg42[%c40_165, %c0_166], %221 {strides = array<i32>} : memref<144x128xf32, #tpu.memory_space<vmem>>, vector<8x128xf32>,
    %c121_i32_167 = arith.constant 121 : i32
    %223 = tpu.dynamic_rotate %187 by %c121_i32_167 dim 1 : vector<8x128xf32>, i32 -> vector<8x128xf32>
    %c6_168 = arith.constant 6 : index
    %c0_169 = arith.constant 0 : index
    %c0_170 = arith.constant 0 : index
    %224 = vector.load %arg16[%c6_168, %c0_169, %c0_170] : memref<9x1x128xf32, #tpu.memory_space<vmem>>, vector<1x1x128xf32>
    %225 = vector.shape_cast %224 : vector<1x1x128xf32> to vector<1x128xf32>
    %226 = vector.broadcast %225 : vector<1x128xf32> to vector<8x128xf32>
    %227 = arith.mulf %223, %226 : vector<8x128xf32>
    %c48_171 = arith.constant 48 : index
    %c0_172 = arith.constant 0 : index
    %228 = vector.load %arg42[%c48_171, %c0_172] : memref<144x128xf32, #tpu.memory_space<vmem>>, vector<8x128xf32>
    tpu.vector_store %arg42[%c48_171, %c0_172], %227 {strides = array<i32>} : memref<144x128xf32, #tpu.memory_space<vmem>>, vector<8x128xf32>,
    %c120_i32_173 = arith.constant 120 : i32
    %229 = tpu.dynamic_rotate %187 by %c120_i32_173 dim 1 : vector<8x128xf32>, i32 -> vector<8x128xf32>
    %c7_174 = arith.constant 7 : index
    %c0_175 = arith.constant 0 : index
    %c0_176 = arith.constant 0 : index
    %230 = vector.load %arg16[%c7_174, %c0_175, %c0_176] : memref<9x1x128xf32, #tpu.memory_space<vmem>>, vector<1x1x128xf32>
    %231 = vector.shape_cast %230 : vector<1x1x128xf32> to vector<1x128xf32>
    %232 = vector.broadcast %231 : vector<1x128xf32> to vector<8x128xf32>
    %233 = arith.mulf %229, %232 : vector<8x128xf32>
    %c56_177 = arith.constant 56 : index
    %c0_178 = arith.constant 0 : index
    %234 = vector.load %arg42[%c56_177, %c0_178] : memref<144x128xf32, #tpu.memory_space<vmem>>, vector<8x128xf32>
    tpu.vector_store %arg42[%c56_177, %c0_178], %233 {strides = array<i32>} : memref<144x128xf32, #tpu.memory_space<vmem>>, vector<8x128xf32>,
    %c119_i32_179 = arith.constant 119 : i32
    %235 = tpu.dynamic_rotate %187 by %c119_i32_179 dim 1 : vector<8x128xf32>, i32 -> vector<8x128xf32>
    %c8_180 = arith.constant 8 : index
    %c0_181 = arith.constant 0 : index
    %c0_182 = arith.constant 0 : index
    %236 = vector.load %arg16[%c8_180, %c0_181, %c0_182] : memref<9x1x128xf32, #tpu.memory_space<vmem>>, vector<1x1x128xf32>
    %237 = vector.shape_cast %236 : vector<1x1x128xf32> to vector<1x128xf32>
    %238 = vector.broadcast %237 : vector<1x128xf32> to vector<8x128xf32>
    %239 = arith.mulf %235, %238 : vector<8x128xf32>
    %c64_183 = arith.constant 64 : index
    %c0_184 = arith.constant 0 : index
    %240 = vector.load %arg42[%c64_183, %c0_184] : memref<144x128xf32, #tpu.memory_space<vmem>>, vector<8x128xf32>
    tpu.vector_store %arg42[%c64_183, %c0_184], %239 {strides = array<i32>} : memref<144x128xf32, #tpu.memory_space<vmem>>, vector<8x128xf32>,
    %c0_185 = arith.constant 0 : index
    %c0_186 = arith.constant 0 : index
    %241 = vector.load %arg4[%c0_185, %c0_186] : memref<8x72xf32, #tpu.memory_space<vmem>>, vector<8x72xf32>
    %c0_187 = arith.constant 0 : index
    %c0_188 = arith.constant 0 : index
    %242 = vector.load %arg42[%c0_187, %c0_188] : memref<144x128xf32, #tpu.memory_space<vmem>>, vector<72x128xf32>
    %cst_189 = arith.constant dense<0.000000e+00> : vector<8x128xf32>
    %243 = tpu.matmul %241, %242, %cst_189 {dimension_numbers = #tpu.dot_dimension_numbers<[1], [0], [0], [1], [0, 0, 1, 1], [], []>} : vector<8x72xf32>, vector<72x128xf32>, vector<8x128xf32> -> vector<8x128xf32>
    %244 = arith.index_cast %arg0 : i32 to index
    %c0_190 = arith.constant 0 : index
    %c0_191 = arith.constant 0 : index
    %245 = vector.load %arg11[%244, %c0_190, %c0_191] : memref<2x8x1xf32, #tpu.memory_space<vmem>>, vector<1x8x1xf32>
    %246 = vector.shape_cast %245 : vector<1x8x1xf32> to vector<8x1xf32>
    %c0_192 = arith.constant 0 : index
    %c0_193 = arith.constant 0 : index
    %247 = vector.load %arg19[%c0_192, %c0_193] : memref<2x128xf32, #tpu.memory_space<vmem>>, vector<2x128xf32>
    %c0_194 = arith.constant 0 : index
    %c0_195 = arith.constant 0 : index
    %248 = vector.load %arg22[%c0_194, %c0_195] : memref<128x2xf32, #tpu.memory_space<vmem>>, vector<128x2xf32>
    %cst_196 = arith.constant dense<0.000000e+00> : vector<128xf32>
    %249 = vector.multi_reduction <add>, %243, %cst_196 [0] : vector<8x128xf32> to vector<128xf32>
    %250 = vector.shape_cast %249 : vector<128xf32> to vector<1x128xf32>
    %cst_197 = arith.constant dense<0.000000e+00> : vector<1x2xf32>
    %251 = tpu.matmul %250, %248, %cst_197 {dimension_numbers = #tpu.dot_dimension_numbers<[1], [0], [0], [1], [0, 0, 1, 1], [], []>} : vector<1x128xf32>, vector<128x2xf32>, vector<1x2xf32> -> vector<1x2xf32>
    %cst_198 = arith.constant 3.906250e-03 : f32
    %252 = vector.broadcast %cst_198 : f32 to vector<1x2xf32>
    %253 = arith.mulf %251, %252 : vector<1x2xf32>
    %cst_199 = arith.constant dense<0.000000e+00> : vector<1x128xf32>
    %254 = tpu.matmul %253, %247, %cst_199 {dimension_numbers = #tpu.dot_dimension_numbers<[1], [0], [0], [1], [0, 0, 1, 1], [], []>} : vector<1x2xf32>, vector<2x128xf32>, vector<1x128xf32> -> vector<1x128xf32>
    %255 = vector.broadcast %254 : vector<1x128xf32> to vector<8x128xf32>
    %256 = arith.subf %243, %255 : vector<8x128xf32>
    %257 = vector.extract_strided_slice %256 {offsets = [0, 0], sizes = [4, 128], strides = [1, 1]} : vector<8x128xf32> to vector<4x128xf32>
    %258 = arith.mulf %257, %257 : vector<4x128xf32>
    %cst_200 = arith.constant dense<0.000000e+00> : vector<128xf32>
    %259 = vector.multi_reduction <add>, %258, %cst_200 [0] : vector<4x128xf32> to vector<128xf32>
    %260 = vector.shape_cast %259 : vector<128xf32> to vector<1x128xf32>
    %cst_201 = arith.constant dense<0.000000e+00> : vector<1x2xf32>
    %261 = tpu.matmul %260, %248, %cst_201 {dimension_numbers = #tpu.dot_dimension_numbers<[1], [0], [0], [1], [0, 0, 1, 1], [], []>} : vector<1x128xf32>, vector<128x2xf32>, vector<1x2xf32> -> vector<1x2xf32>
    %cst_202 = arith.constant 3.906250e-03 : f32
    %262 = vector.broadcast %cst_202 : f32 to vector<1x2xf32>
    %263 = arith.mulf %261, %262 : vector<1x2xf32>
    %cst_203 = arith.constant 9.99999974E-5 : f32
    %264 = vector.broadcast %cst_203 : f32 to vector<1x2xf32>
    %265 = arith.addf %263, %264 : vector<1x2xf32>
    %266 = math.rsqrt %265 : vector<1x2xf32>
    %cst_204 = arith.constant dense<0.000000e+00> : vector<1x128xf32>
    %267 = tpu.matmul %266, %247, %cst_204 {dimension_numbers = #tpu.dot_dimension_numbers<[1], [0], [0], [1], [0, 0, 1, 1], [], []>} : vector<1x2xf32>, vector<2x128xf32>, vector<1x128xf32> -> vector<1x128xf32>
    %268 = vector.broadcast %267 : vector<1x128xf32> to vector<8x128xf32>
    %269 = arith.mulf %256, %268 : vector<8x128xf32>
    %270 = vector.broadcast %246 : vector<8x1xf32> to vector<8x128xf32>
    %271 = arith.mulf %269, %270 : vector<8x128xf32>
    %c0_205 = arith.constant 0 : index
    %c0_206 = arith.constant 0 : index
    %272 = vector.load %arg37[%c0_205, %c0_206] : memref<8x128xf32, #tpu.memory_space<vmem>>, vector<8x128xf32>
    %cst_207 = arith.constant 0.949999988 : f32
    %273 = vector.broadcast %cst_207 : f32 to vector<8x128xf32>
    %274 = arith.mulf %273, %272 : vector<8x128xf32>
    %275 = arith.addf %274, %271 : vector<8x128xf32>
    %cst_208 = arith.constant 1.000000e+00 : f32
    %276 = vector.broadcast %cst_208 : f32 to vector<8x128xf32>
    %277 = arith.subf %275, %276 : vector<8x128xf32>
    %cst_209 = arith.constant 0.000000e+00 : f32
    %278 = vector.broadcast %cst_209 : f32 to vector<8x128xf32>
    %279 = arith.cmpf ogt, %277, %278 : vector<8x128xf32>
    %280 = arith.extui %279 : vector<8x128xi1> to vector<8x128xi32>
    %281 = arith.sitofp %280 : vector<8x128xi32> to vector<8x128xf32>
    %cst_210 = arith.constant 1.000000e+00 : f32
    %282 = vector.broadcast %cst_210 : f32 to vector<8x128xf32>
    %283 = arith.mulf %281, %282 : vector<8x128xf32>
    %284 = arith.subf %275, %283 : vector<8x128xf32>
    %c0_211 = arith.constant 0 : index
    %c0_212 = arith.constant 0 : index
    %285 = vector.load %arg37[%c0_211, %c0_212] : memref<8x128xf32, #tpu.memory_space<vmem>>, vector<8x128xf32>
    tpu.vector_store %arg37[%c0_211, %c0_212], %284 {strides = array<i32>} : memref<8x128xf32, #tpu.memory_space<vmem>>, vector<8x128xf32>,
    %286 = arith.addf %281, %93 : vector<8x128xf32>
    %c9_i32_213 = arith.constant 9 : i32
    %287 = tpu.dynamic_rotate %286 by %c9_i32_213 dim 1 : vector<8x128xf32>, i32 -> vector<8x128xf32>
    %c0_214 = arith.constant 0 : index
    %c0_215 = arith.constant 0 : index
    %c0_216 = arith.constant 0 : index
    %288 = vector.load %arg16[%c0_214, %c0_215, %c0_216] : memref<9x1x128xf32, #tpu.memory_space<vmem>>, vector<1x1x128xf32>
    %289 = vector.shape_cast %288 : vector<1x1x128xf32> to vector<1x128xf32>
    %290 = vector.broadcast %289 : vector<1x128xf32> to vector<8x128xf32>
    %291 = arith.mulf %287, %290 : vector<8x128xf32>
    %c0_217 = arith.constant 0 : index
    %c0_218 = arith.constant 0 : index
    %292 = vector.load %arg42[%c0_217, %c0_218] : memref<144x128xf32, #tpu.memory_space<vmem>>, vector<8x128xf32>
    tpu.vector_store %arg42[%c0_217, %c0_218], %291 {strides = array<i32>} : memref<144x128xf32, #tpu.memory_space<vmem>>, vector<8x128xf32>,
    %c8_i32_219 = arith.constant 8 : i32
    %293 = tpu.dynamic_rotate %286 by %c8_i32_219 dim 1 : vector<8x128xf32>, i32 -> vector<8x128xf32>
    %c1_220 = arith.constant 1 : index
    %c0_221 = arith.constant 0 : index
    %c0_222 = arith.constant 0 : index
    %294 = vector.load %arg16[%c1_220, %c0_221, %c0_222] : memref<9x1x128xf32, #tpu.memory_space<vmem>>, vector<1x1x128xf32>
    %295 = vector.shape_cast %294 : vector<1x1x128xf32> to vector<1x128xf32>
    %296 = vector.broadcast %295 : vector<1x128xf32> to vector<8x128xf32>
    %297 = arith.mulf %293, %296 : vector<8x128xf32>
    %c8_223 = arith.constant 8 : index
    %c0_224 = arith.constant 0 : index
    %298 = vector.load %arg42[%c8_223, %c0_224] : memref<144x128xf32, #tpu.memory_space<vmem>>, vector<8x128xf32>
    tpu.vector_store %arg42[%c8_223, %c0_224], %297 {strides = array<i32>} : memref<144x128xf32, #tpu.memory_space<vmem>>, vector<8x128xf32>,
    %c7_i32_225 = arith.constant 7 : i32
    %299 = tpu.dynamic_rotate %286 by %c7_i32_225 dim 1 : vector<8x128xf32>, i32 -> vector<8x128xf32>
    %c2_226 = arith.constant 2 : index
    %c0_227 = arith.constant 0 : index
    %c0_228 = arith.constant 0 : index
    %300 = vector.load %arg16[%c2_226, %c0_227, %c0_228] : memref<9x1x128xf32, #tpu.memory_space<vmem>>, vector<1x1x128xf32>
    %301 = vector.shape_cast %300 : vector<1x1x128xf32> to vector<1x128xf32>
    %302 = vector.broadcast %301 : vector<1x128xf32> to vector<8x128xf32>
    %303 = arith.mulf %299, %302 : vector<8x128xf32>
    %c16_229 = arith.constant 16 : index
    %c0_230 = arith.constant 0 : index
    %304 = vector.load %arg42[%c16_229, %c0_230] : memref<144x128xf32, #tpu.memory_space<vmem>>, vector<8x128xf32>
    tpu.vector_store %arg42[%c16_229, %c0_230], %303 {strides = array<i32>} : memref<144x128xf32, #tpu.memory_space<vmem>>, vector<8x128xf32>,
    %c1_i32_231 = arith.constant 1 : i32
    %305 = tpu.dynamic_rotate %286 by %c1_i32_231 dim 1 : vector<8x128xf32>, i32 -> vector<8x128xf32>
    %c3_232 = arith.constant 3 : index
    %c0_233 = arith.constant 0 : index
    %c0_234 = arith.constant 0 : index
    %306 = vector.load %arg16[%c3_232, %c0_233, %c0_234] : memref<9x1x128xf32, #tpu.memory_space<vmem>>, vector<1x1x128xf32>
    %307 = vector.shape_cast %306 : vector<1x1x128xf32> to vector<1x128xf32>
    %308 = vector.broadcast %307 : vector<1x128xf32> to vector<8x128xf32>
    %309 = arith.mulf %305, %308 : vector<8x128xf32>
    %c24_235 = arith.constant 24 : index
    %c0_236 = arith.constant 0 : index
    %310 = vector.load %arg42[%c24_235, %c0_236] : memref<144x128xf32, #tpu.memory_space<vmem>>, vector<8x128xf32>
    tpu.vector_store %arg42[%c24_235, %c0_236], %309 {strides = array<i32>} : memref<144x128xf32, #tpu.memory_space<vmem>>, vector<8x128xf32>,
    %c32_237 = arith.constant 32 : index
    %c0_238 = arith.constant 0 : index
    %311 = vector.load %arg42[%c32_237, %c0_238] : memref<144x128xf32, #tpu.memory_space<vmem>>, vector<8x128xf32>
    tpu.vector_store %arg42[%c32_237, %c0_238], %286 {strides = array<i32>} : memref<144x128xf32, #tpu.memory_space<vmem>>, vector<8x128xf32>,
    %c127_i32_239 = arith.constant 127 : i32
    %312 = tpu.dynamic_rotate %286 by %c127_i32_239 dim 1 : vector<8x128xf32>, i32 -> vector<8x128xf32>
    %c5_240 = arith.constant 5 : index
    %c0_241 = arith.constant 0 : index
    %c0_242 = arith.constant 0 : index
    %313 = vector.load %arg16[%c5_240, %c0_241, %c0_242] : memref<9x1x128xf32, #tpu.memory_space<vmem>>, vector<1x1x128xf32>
    %314 = vector.shape_cast %313 : vector<1x1x128xf32> to vector<1x128xf32>
    %315 = vector.broadcast %314 : vector<1x128xf32> to vector<8x128xf32>
    %316 = arith.mulf %312, %315 : vector<8x128xf32>
    %c40_243 = arith.constant 40 : index
    %c0_244 = arith.constant 0 : index
    %317 = vector.load %arg42[%c40_243, %c0_244] : memref<144x128xf32, #tpu.memory_space<vmem>>, vector<8x128xf32>
    tpu.vector_store %arg42[%c40_243, %c0_244], %316 {strides = array<i32>} : memref<144x128xf32, #tpu.memory_space<vmem>>, vector<8x128xf32>,
    %c121_i32_245 = arith.constant 121 : i32
    %318 = tpu.dynamic_rotate %286 by %c121_i32_245 dim 1 : vector<8x128xf32>, i32 -> vector<8x128xf32>
    %c6_246 = arith.constant 6 : index
    %c0_247 = arith.constant 0 : index
    %c0_248 = arith.constant 0 : index
    %319 = vector.load %arg16[%c6_246, %c0_247, %c0_248] : memref<9x1x128xf32, #tpu.memory_space<vmem>>, vector<1x1x128xf32>
    %320 = vector.shape_cast %319 : vector<1x1x128xf32> to vector<1x128xf32>
    %321 = vector.broadcast %320 : vector<1x128xf32> to vector<8x128xf32>
    %322 = arith.mulf %318, %321 : vector<8x128xf32>
    %c48_249 = arith.constant 48 : index
    %c0_250 = arith.constant 0 : index
    %323 = vector.load %arg42[%c48_249, %c0_250] : memref<144x128xf32, #tpu.memory_space<vmem>>, vector<8x128xf32>
    tpu.vector_store %arg42[%c48_249, %c0_250], %322 {strides = array<i32>} : memref<144x128xf32, #tpu.memory_space<vmem>>, vector<8x128xf32>,
    %c120_i32_251 = arith.constant 120 : i32
    %324 = tpu.dynamic_rotate %286 by %c120_i32_251 dim 1 : vector<8x128xf32>, i32 -> vector<8x128xf32>
    %c7_252 = arith.constant 7 : index
    %c0_253 = arith.constant 0 : index
    %c0_254 = arith.constant 0 : index
    %325 = vector.load %arg16[%c7_252, %c0_253, %c0_254] : memref<9x1x128xf32, #tpu.memory_space<vmem>>, vector<1x1x128xf32>
    %326 = vector.shape_cast %325 : vector<1x1x128xf32> to vector<1x128xf32>
    %327 = vector.broadcast %326 : vector<1x128xf32> to vector<8x128xf32>
    %328 = arith.mulf %324, %327 : vector<8x128xf32>
    %c56_255 = arith.constant 56 : index
    %c0_256 = arith.constant 0 : index
    %329 = vector.load %arg42[%c56_255, %c0_256] : memref<144x128xf32, #tpu.memory_space<vmem>>, vector<8x128xf32>
    tpu.vector_store %arg42[%c56_255, %c0_256], %328 {strides = array<i32>} : memref<144x128xf32, #tpu.memory_space<vmem>>, vector<8x128xf32>,
    %c119_i32_257 = arith.constant 119 : i32
    %330 = tpu.dynamic_rotate %286 by %c119_i32_257 dim 1 : vector<8x128xf32>, i32 -> vector<8x128xf32>
    %c8_258 = arith.constant 8 : index
    %c0_259 = arith.constant 0 : index
    %c0_260 = arith.constant 0 : index
    %331 = vector.load %arg16[%c8_258, %c0_259, %c0_260] : memref<9x1x128xf32, #tpu.memory_space<vmem>>, vector<1x1x128xf32>
    %332 = vector.shape_cast %331 : vector<1x1x128xf32> to vector<1x128xf32>
    %333 = vector.broadcast %332 : vector<1x128xf32> to vector<8x128xf32>
    %334 = arith.mulf %330, %333 : vector<8x128xf32>
    %c64_261 = arith.constant 64 : index
    %c0_262 = arith.constant 0 : index
    %335 = vector.load %arg42[%c64_261, %c0_262] : memref<144x128xf32, #tpu.memory_space<vmem>>, vector<8x128xf32>
    tpu.vector_store %arg42[%c64_261, %c0_262], %334 {strides = array<i32>} : memref<144x128xf32, #tpu.memory_space<vmem>>, vector<8x128xf32>,
    %c0_263 = arith.constant 0 : index
    %c0_264 = arith.constant 0 : index
    %336 = vector.load %arg5[%c0_263, %c0_264] : memref<8x72xf32, #tpu.memory_space<vmem>>, vector<8x72xf32>
    %c0_265 = arith.constant 0 : index
    %c0_266 = arith.constant 0 : index
    %337 = vector.load %arg42[%c0_265, %c0_266] : memref<144x128xf32, #tpu.memory_space<vmem>>, vector<72x128xf32>
    %cst_267 = arith.constant dense<0.000000e+00> : vector<8x128xf32>
    %338 = tpu.matmul %336, %337, %cst_267 {dimension_numbers = #tpu.dot_dimension_numbers<[1], [0], [0], [1], [0, 0, 1, 1], [], []>} : vector<8x72xf32>, vector<72x128xf32>, vector<8x128xf32> -> vector<8x128xf32>
    %c0_268 = arith.constant 0 : index
    %c0_269 = arith.constant 0 : index
    %339 = vector.load %arg25[%c0_268, %c0_269] : memref<128x128xf32, #tpu.memory_space<vmem>>, vector<128x128xf32>
    %cst_270 = arith.constant dense<0.000000e+00> : vector<8x128xf32>
    %340 = tpu.matmul %338, %339, %cst_270 {dimension_numbers = #tpu.dot_dimension_numbers<[1], [0], [0], [1], [0, 0, 1, 1], [], []>} : vector<8x128xf32>, vector<128x128xf32>, vector<8x128xf32> -> vector<8x128xf32>
    %341 = arith.index_cast %arg0 : i32 to index
    %c0_271 = arith.constant 0 : index
    %c0_272 = arith.constant 0 : index
    %342 = vector.load %arg12[%341, %c0_271, %c0_272] : memref<2x8x1xf32, #tpu.memory_space<vmem>>, vector<1x8x1xf32>
    %343 = vector.shape_cast %342 : vector<1x8x1xf32> to vector<8x1xf32>
    %c0_273 = arith.constant 0 : index
    %c0_274 = arith.constant 0 : index
    %344 = vector.load %arg20[%c0_273, %c0_274] : memref<2x128xf32, #tpu.memory_space<vmem>>, vector<2x128xf32>
    %c0_275 = arith.constant 0 : index
    %c0_276 = arith.constant 0 : index
    %345 = vector.load %arg23[%c0_275, %c0_276] : memref<128x2xf32, #tpu.memory_space<vmem>>, vector<128x2xf32>
    %cst_277 = arith.constant dense<0.000000e+00> : vector<128xf32>
    %346 = vector.multi_reduction <add>, %340, %cst_277 [0] : vector<8x128xf32> to vector<128xf32>
    %347 = vector.shape_cast %346 : vector<128xf32> to vector<1x128xf32>
    %cst_278 = arith.constant dense<0.000000e+00> : vector<1x2xf32>
    %348 = tpu.matmul %347, %345, %cst_278 {dimension_numbers = #tpu.dot_dimension_numbers<[1], [0], [0], [1], [0, 0, 1, 1], [], []>} : vector<1x128xf32>, vector<128x2xf32>, vector<1x2xf32> -> vector<1x2xf32>
    %cst_279 = arith.constant 7.812500e-03 : f32
    %349 = vector.broadcast %cst_279 : f32 to vector<1x2xf32>
    %350 = arith.mulf %348, %349 : vector<1x2xf32>
    %cst_280 = arith.constant dense<0.000000e+00> : vector<1x128xf32>
    %351 = tpu.matmul %350, %344, %cst_280 {dimension_numbers = #tpu.dot_dimension_numbers<[1], [0], [0], [1], [0, 0, 1, 1], [], []>} : vector<1x2xf32>, vector<2x128xf32>, vector<1x128xf32> -> vector<1x128xf32>
    %352 = vector.broadcast %351 : vector<1x128xf32> to vector<8x128xf32>
    %353 = arith.subf %340, %352 : vector<8x128xf32>
    %354 = arith.mulf %353, %353 : vector<8x128xf32>
    %cst_281 = arith.constant dense<0.000000e+00> : vector<128xf32>
    %355 = vector.multi_reduction <add>, %354, %cst_281 [0] : vector<8x128xf32> to vector<128xf32>
    %356 = vector.shape_cast %355 : vector<128xf32> to vector<1x128xf32>
    %cst_282 = arith.constant dense<0.000000e+00> : vector<1x2xf32>
    %357 = tpu.matmul %356, %345, %cst_282 {dimension_numbers = #tpu.dot_dimension_numbers<[1], [0], [0], [1], [0, 0, 1, 1], [], []>} : vector<1x128xf32>, vector<128x2xf32>, vector<1x2xf32> -> vector<1x2xf32>
    %cst_283 = arith.constant 7.812500e-03 : f32
    %358 = vector.broadcast %cst_283 : f32 to vector<1x2xf32>
    %359 = arith.mulf %357, %358 : vector<1x2xf32>
    %cst_284 = arith.constant 9.99999974E-5 : f32
    %360 = vector.broadcast %cst_284 : f32 to vector<1x2xf32>
    %361 = arith.addf %359, %360 : vector<1x2xf32>
    %362 = math.rsqrt %361 : vector<1x2xf32>
    %cst_285 = arith.constant dense<0.000000e+00> : vector<1x128xf32>
    %363 = tpu.matmul %362, %344, %cst_285 {dimension_numbers = #tpu.dot_dimension_numbers<[1], [0], [0], [1], [0, 0, 1, 1], [], []>} : vector<1x2xf32>, vector<2x128xf32>, vector<1x128xf32> -> vector<1x128xf32>
    %364 = vector.broadcast %363 : vector<1x128xf32> to vector<8x128xf32>
    %365 = arith.mulf %353, %364 : vector<8x128xf32>
    %366 = vector.broadcast %343 : vector<8x1xf32> to vector<8x128xf32>
    %367 = arith.mulf %365, %366 : vector<8x128xf32>
    %c0_286 = arith.constant 0 : index
    %c0_287 = arith.constant 0 : index
    %368 = vector.load %arg38[%c0_286, %c0_287] : memref<8x128xf32, #tpu.memory_space<vmem>>, vector<8x128xf32>
    %cst_288 = arith.constant 0.949999988 : f32
    %369 = vector.broadcast %cst_288 : f32 to vector<8x128xf32>
    %370 = arith.mulf %369, %368 : vector<8x128xf32>
    %371 = arith.addf %370, %367 : vector<8x128xf32>
    %cst_289 = arith.constant 1.000000e+00 : f32
    %372 = vector.broadcast %cst_289 : f32 to vector<8x128xf32>
    %373 = arith.subf %371, %372 : vector<8x128xf32>
    %cst_290 = arith.constant 0.000000e+00 : f32
    %374 = vector.broadcast %cst_290 : f32 to vector<8x128xf32>
    %375 = arith.cmpf ogt, %373, %374 : vector<8x128xf32>
    %376 = arith.extui %375 : vector<8x128xi1> to vector<8x128xi32>
    %377 = arith.sitofp %376 : vector<8x128xi32> to vector<8x128xf32>
    %cst_291 = arith.constant 1.000000e+00 : f32
    %378 = vector.broadcast %cst_291 : f32 to vector<8x128xf32>
    %379 = arith.mulf %377, %378 : vector<8x128xf32>
    %380 = arith.subf %371, %379 : vector<8x128xf32>
    %c0_292 = arith.constant 0 : index
    %c0_293 = arith.constant 0 : index
    %381 = vector.load %arg38[%c0_292, %c0_293] : memref<8x128xf32, #tpu.memory_space<vmem>>, vector<8x128xf32>
    tpu.vector_store %arg38[%c0_292, %c0_293], %380 {strides = array<i32>} : memref<8x128xf32, #tpu.memory_space<vmem>>, vector<8x128xf32>,
    %c5_i32 = arith.constant 5 : i32
    %382 = tpu.dynamic_rotate %377 by %c5_i32 dim 1 : vector<8x128xf32>, i32 -> vector<8x128xf32>
    %c0_294 = arith.constant 0 : index
    %c0_295 = arith.constant 0 : index
    %c0_296 = arith.constant 0 : index
    %383 = vector.load %arg17[%c0_294, %c0_295, %c0_296] : memref<9x1x128xf32, #tpu.memory_space<vmem>>, vector<1x1x128xf32>
    %384 = vector.shape_cast %383 : vector<1x1x128xf32> to vector<1x128xf32>
    %385 = vector.broadcast %384 : vector<1x128xf32> to vector<8x128xf32>
    %386 = arith.mulf %382, %385 : vector<8x128xf32>
    %c0_297 = arith.constant 0 : index
    %c0_298 = arith.constant 0 : index
    %387 = vector.load %arg42[%c0_297, %c0_298] : memref<144x128xf32, #tpu.memory_space<vmem>>, vector<8x128xf32>
    tpu.vector_store %arg42[%c0_297, %c0_298], %386 {strides = array<i32>} : memref<144x128xf32, #tpu.memory_space<vmem>>, vector<8x128xf32>,
    %c4_i32 = arith.constant 4 : i32
    %388 = tpu.dynamic_rotate %377 by %c4_i32 dim 1 : vector<8x128xf32>, i32 -> vector<8x128xf32>
    %c1_299 = arith.constant 1 : index
    %c0_300 = arith.constant 0 : index
    %c0_301 = arith.constant 0 : index
    %389 = vector.load %arg17[%c1_299, %c0_300, %c0_301] : memref<9x1x128xf32, #tpu.memory_space<vmem>>, vector<1x1x128xf32>
    %390 = vector.shape_cast %389 : vector<1x1x128xf32> to vector<1x128xf32>
    %391 = vector.broadcast %390 : vector<1x128xf32> to vector<8x128xf32>
    %392 = arith.mulf %388, %391 : vector<8x128xf32>
    %c8_302 = arith.constant 8 : index
    %c0_303 = arith.constant 0 : index
    %393 = vector.load %arg42[%c8_302, %c0_303] : memref<144x128xf32, #tpu.memory_space<vmem>>, vector<8x128xf32>
    tpu.vector_store %arg42[%c8_302, %c0_303], %392 {strides = array<i32>} : memref<144x128xf32, #tpu.memory_space<vmem>>, vector<8x128xf32>,
    %c3_i32 = arith.constant 3 : i32
    %394 = tpu.dynamic_rotate %377 by %c3_i32 dim 1 : vector<8x128xf32>, i32 -> vector<8x128xf32>
    %c2_304 = arith.constant 2 : index
    %c0_305 = arith.constant 0 : index
    %c0_306 = arith.constant 0 : index
    %395 = vector.load %arg17[%c2_304, %c0_305, %c0_306] : memref<9x1x128xf32, #tpu.memory_space<vmem>>, vector<1x1x128xf32>
    %396 = vector.shape_cast %395 : vector<1x1x128xf32> to vector<1x128xf32>
    %397 = vector.broadcast %396 : vector<1x128xf32> to vector<8x128xf32>
    %398 = arith.mulf %394, %397 : vector<8x128xf32>
    %c16_307 = arith.constant 16 : index
    %c0_308 = arith.constant 0 : index
    %399 = vector.load %arg42[%c16_307, %c0_308] : memref<144x128xf32, #tpu.memory_space<vmem>>, vector<8x128xf32>
    tpu.vector_store %arg42[%c16_307, %c0_308], %398 {strides = array<i32>} : memref<144x128xf32, #tpu.memory_space<vmem>>, vector<8x128xf32>,
    %c1_i32_309 = arith.constant 1 : i32
    %400 = tpu.dynamic_rotate %377 by %c1_i32_309 dim 1 : vector<8x128xf32>, i32 -> vector<8x128xf32>
    %c3_310 = arith.constant 3 : index
    %c0_311 = arith.constant 0 : index
    %c0_312 = arith.constant 0 : index
    %401 = vector.load %arg17[%c3_310, %c0_311, %c0_312] : memref<9x1x128xf32, #tpu.memory_space<vmem>>, vector<1x1x128xf32>
    %402 = vector.shape_cast %401 : vector<1x1x128xf32> to vector<1x128xf32>
    %403 = vector.broadcast %402 : vector<1x128xf32> to vector<8x128xf32>
    %404 = arith.mulf %400, %403 : vector<8x128xf32>
    %c24_313 = arith.constant 24 : index
    %c0_314 = arith.constant 0 : index
    %405 = vector.load %arg42[%c24_313, %c0_314] : memref<144x128xf32, #tpu.memory_space<vmem>>, vector<8x128xf32>
    tpu.vector_store %arg42[%c24_313, %c0_314], %404 {strides = array<i32>} : memref<144x128xf32, #tpu.memory_space<vmem>>, vector<8x128xf32>,
    %c32_315 = arith.constant 32 : index
    %c0_316 = arith.constant 0 : index
    %406 = vector.load %arg42[%c32_315, %c0_316] : memref<144x128xf32, #tpu.memory_space<vmem>>, vector<8x128xf32>
    tpu.vector_store %arg42[%c32_315, %c0_316], %377 {strides = array<i32>} : memref<144x128xf32, #tpu.memory_space<vmem>>, vector<8x128xf32>,
    %c127_i32_317 = arith.constant 127 : i32
    %407 = tpu.dynamic_rotate %377 by %c127_i32_317 dim 1 : vector<8x128xf32>, i32 -> vector<8x128xf32>
    %c5_318 = arith.constant 5 : index
    %c0_319 = arith.constant 0 : index
    %c0_320 = arith.constant 0 : index
    %408 = vector.load %arg17[%c5_318, %c0_319, %c0_320] : memref<9x1x128xf32, #tpu.memory_space<vmem>>, vector<1x1x128xf32>
    %409 = vector.shape_cast %408 : vector<1x1x128xf32> to vector<1x128xf32>
    %410 = vector.broadcast %409 : vector<1x128xf32> to vector<8x128xf32>
    %411 = arith.mulf %407, %410 : vector<8x128xf32>
    %c40_321 = arith.constant 40 : index
    %c0_322 = arith.constant 0 : index
    %412 = vector.load %arg42[%c40_321, %c0_322] : memref<144x128xf32, #tpu.memory_space<vmem>>, vector<8x128xf32>
    tpu.vector_store %arg42[%c40_321, %c0_322], %411 {strides = array<i32>} : memref<144x128xf32, #tpu.memory_space<vmem>>, vector<8x128xf32>,
    %c125_i32 = arith.constant 125 : i32
    %413 = tpu.dynamic_rotate %377 by %c125_i32 dim 1 : vector<8x128xf32>, i32 -> vector<8x128xf32>
    %c6_323 = arith.constant 6 : index
    %c0_324 = arith.constant 0 : index
    %c0_325 = arith.constant 0 : index
    %414 = vector.load %arg17[%c6_323, %c0_324, %c0_325] : memref<9x1x128xf32, #tpu.memory_space<vmem>>, vector<1x1x128xf32>
    %415 = vector.shape_cast %414 : vector<1x1x128xf32> to vector<1x128xf32>
    %416 = vector.broadcast %415 : vector<1x128xf32> to vector<8x128xf32>
    %417 = arith.mulf %413, %416 : vector<8x128xf32>
    %c48_326 = arith.constant 48 : index
    %c0_327 = arith.constant 0 : index
    %418 = vector.load %arg42[%c48_326, %c0_327] : memref<144x128xf32, #tpu.memory_space<vmem>>, vector<8x128xf32>
    tpu.vector_store %arg42[%c48_326, %c0_327], %417 {strides = array<i32>} : memref<144x128xf32, #tpu.memory_space<vmem>>, vector<8x128xf32>,
    %c124_i32 = arith.constant 124 : i32
    %419 = tpu.dynamic_rotate %377 by %c124_i32 dim 1 : vector<8x128xf32>, i32 -> vector<8x128xf32>
    %c7_328 = arith.constant 7 : index
    %c0_329 = arith.constant 0 : index
    %c0_330 = arith.constant 0 : index
    %420 = vector.load %arg17[%c7_328, %c0_329, %c0_330] : memref<9x1x128xf32, #tpu.memory_space<vmem>>, vector<1x1x128xf32>
    %421 = vector.shape_cast %420 : vector<1x1x128xf32> to vector<1x128xf32>
    %422 = vector.broadcast %421 : vector<1x128xf32> to vector<8x128xf32>
    %423 = arith.mulf %419, %422 : vector<8x128xf32>
    %c56_331 = arith.constant 56 : index
    %c0_332 = arith.constant 0 : index
    %424 = vector.load %arg42[%c56_331, %c0_332] : memref<144x128xf32, #tpu.memory_space<vmem>>, vector<8x128xf32>
    tpu.vector_store %arg42[%c56_331, %c0_332], %423 {strides = array<i32>} : memref<144x128xf32, #tpu.memory_space<vmem>>, vector<8x128xf32>,
    %c123_i32 = arith.constant 123 : i32
    %425 = tpu.dynamic_rotate %377 by %c123_i32 dim 1 : vector<8x128xf32>, i32 -> vector<8x128xf32>
    %c8_333 = arith.constant 8 : index
    %c0_334 = arith.constant 0 : index
    %c0_335 = arith.constant 0 : index
    %426 = vector.load %arg17[%c8_333, %c0_334, %c0_335] : memref<9x1x128xf32, #tpu.memory_space<vmem>>, vector<1x1x128xf32>
    %427 = vector.shape_cast %426 : vector<1x1x128xf32> to vector<1x128xf32>
    %428 = vector.broadcast %427 : vector<1x128xf32> to vector<8x128xf32>
    %429 = arith.mulf %425, %428 : vector<8x128xf32>
    %c64_336 = arith.constant 64 : index
    %c0_337 = arith.constant 0 : index
    %430 = vector.load %arg42[%c64_336, %c0_337] : memref<144x128xf32, #tpu.memory_space<vmem>>, vector<8x128xf32>
    tpu.vector_store %arg42[%c64_336, %c0_337], %429 {strides = array<i32>} : memref<144x128xf32, #tpu.memory_space<vmem>>, vector<8x128xf32>,
    %c0_338 = arith.constant 0 : index
    %c0_339 = arith.constant 0 : index
    %431 = vector.load %arg6[%c0_338, %c0_339] : memref<8x72xf32, #tpu.memory_space<vmem>>, vector<8x72xf32>
    %c0_340 = arith.constant 0 : index
    %c0_341 = arith.constant 0 : index
    %432 = vector.load %arg42[%c0_340, %c0_341] : memref<144x128xf32, #tpu.memory_space<vmem>>, vector<72x128xf32>
    %cst_342 = arith.constant dense<0.000000e+00> : vector<8x128xf32>
    %433 = tpu.matmul %431, %432, %cst_342 {dimension_numbers = #tpu.dot_dimension_numbers<[1], [0], [0], [1], [0, 0, 1, 1], [], []>} : vector<8x72xf32>, vector<72x128xf32>, vector<8x128xf32> -> vector<8x128xf32>
    %434 = arith.index_cast %arg0 : i32 to index
    %c0_343 = arith.constant 0 : index
    %c0_344 = arith.constant 0 : index
    %435 = vector.load %arg13[%434, %c0_343, %c0_344] : memref<2x8x1xf32, #tpu.memory_space<vmem>>, vector<1x8x1xf32>
    %436 = vector.shape_cast %435 : vector<1x8x1xf32> to vector<8x1xf32>
    %c0_345 = arith.constant 0 : index
    %c0_346 = arith.constant 0 : index
    %437 = vector.load %arg20[%c0_345, %c0_346] : memref<2x128xf32, #tpu.memory_space<vmem>>, vector<2x128xf32>
    %c0_347 = arith.constant 0 : index
    %c0_348 = arith.constant 0 : index
    %438 = vector.load %arg23[%c0_347, %c0_348] : memref<128x2xf32, #tpu.memory_space<vmem>>, vector<128x2xf32>
    %cst_349 = arith.constant dense<0.000000e+00> : vector<128xf32>
    %439 = vector.multi_reduction <add>, %433, %cst_349 [0] : vector<8x128xf32> to vector<128xf32>
    %440 = vector.shape_cast %439 : vector<128xf32> to vector<1x128xf32>
    %cst_350 = arith.constant dense<0.000000e+00> : vector<1x2xf32>
    %441 = tpu.matmul %440, %438, %cst_350 {dimension_numbers = #tpu.dot_dimension_numbers<[1], [0], [0], [1], [0, 0, 1, 1], [], []>} : vector<1x128xf32>, vector<128x2xf32>, vector<1x2xf32> -> vector<1x2xf32>
    %cst_351 = arith.constant 7.812500e-03 : f32
    %442 = vector.broadcast %cst_351 : f32 to vector<1x2xf32>
    %443 = arith.mulf %441, %442 : vector<1x2xf32>
    %cst_352 = arith.constant dense<0.000000e+00> : vector<1x128xf32>
    %444 = tpu.matmul %443, %437, %cst_352 {dimension_numbers = #tpu.dot_dimension_numbers<[1], [0], [0], [1], [0, 0, 1, 1], [], []>} : vector<1x2xf32>, vector<2x128xf32>, vector<1x128xf32> -> vector<1x128xf32>
    %445 = vector.broadcast %444 : vector<1x128xf32> to vector<8x128xf32>
    %446 = arith.subf %433, %445 : vector<8x128xf32>
    %447 = arith.mulf %446, %446 : vector<8x128xf32>
    %cst_353 = arith.constant dense<0.000000e+00> : vector<128xf32>
    %448 = vector.multi_reduction <add>, %447, %cst_353 [0] : vector<8x128xf32> to vector<128xf32>
    %449 = vector.shape_cast %448 : vector<128xf32> to vector<1x128xf32>
    %cst_354 = arith.constant dense<0.000000e+00> : vector<1x2xf32>
    %450 = tpu.matmul %449, %438, %cst_354 {dimension_numbers = #tpu.dot_dimension_numbers<[1], [0], [0], [1], [0, 0, 1, 1], [], []>} : vector<1x128xf32>, vector<128x2xf32>, vector<1x2xf32> -> vector<1x2xf32>
    %cst_355 = arith.constant 7.812500e-03 : f32
    %451 = vector.broadcast %cst_355 : f32 to vector<1x2xf32>
    %452 = arith.mulf %450, %451 : vector<1x2xf32>
    %cst_356 = arith.constant 9.99999974E-5 : f32
    %453 = vector.broadcast %cst_356 : f32 to vector<1x2xf32>
    %454 = arith.addf %452, %453 : vector<1x2xf32>
    %455 = math.rsqrt %454 : vector<1x2xf32>
    %cst_357 = arith.constant dense<0.000000e+00> : vector<1x128xf32>
    %456 = tpu.matmul %455, %437, %cst_357 {dimension_numbers = #tpu.dot_dimension_numbers<[1], [0], [0], [1], [0, 0, 1, 1], [], []>} : vector<1x2xf32>, vector<2x128xf32>, vector<1x128xf32> -> vector<1x128xf32>
    %457 = vector.broadcast %456 : vector<1x128xf32> to vector<8x128xf32>
    %458 = arith.mulf %446, %457 : vector<8x128xf32>
    %459 = vector.broadcast %436 : vector<8x1xf32> to vector<8x128xf32>
    %460 = arith.mulf %458, %459 : vector<8x128xf32>
    %c0_358 = arith.constant 0 : index
    %c0_359 = arith.constant 0 : index
    %461 = vector.load %arg39[%c0_358, %c0_359] : memref<8x128xf32, #tpu.memory_space<vmem>>, vector<8x128xf32>
    %cst_360 = arith.constant 0.949999988 : f32
    %462 = vector.broadcast %cst_360 : f32 to vector<8x128xf32>
    %463 = arith.mulf %462, %461 : vector<8x128xf32>
    %464 = arith.addf %463, %460 : vector<8x128xf32>
    %cst_361 = arith.constant 1.000000e+00 : f32
    %465 = vector.broadcast %cst_361 : f32 to vector<8x128xf32>
    %466 = arith.subf %464, %465 : vector<8x128xf32>
    %cst_362 = arith.constant 0.000000e+00 : f32
    %467 = vector.broadcast %cst_362 : f32 to vector<8x128xf32>
    %468 = arith.cmpf ogt, %466, %467 : vector<8x128xf32>
    %469 = arith.extui %468 : vector<8x128xi1> to vector<8x128xi32>
    %470 = arith.sitofp %469 : vector<8x128xi32> to vector<8x128xf32>
    %cst_363 = arith.constant 1.000000e+00 : f32
    %471 = vector.broadcast %cst_363 : f32 to vector<8x128xf32>
    %472 = arith.mulf %470, %471 : vector<8x128xf32>
    %473 = arith.subf %464, %472 : vector<8x128xf32>
    %c0_364 = arith.constant 0 : index
    %c0_365 = arith.constant 0 : index
    %474 = vector.load %arg39[%c0_364, %c0_365] : memref<8x128xf32, #tpu.memory_space<vmem>>, vector<8x128xf32>
    tpu.vector_store %arg39[%c0_364, %c0_365], %473 {strides = array<i32>} : memref<8x128xf32, #tpu.memory_space<vmem>>, vector<8x128xf32>,
    %c0_366 = arith.constant 0 : index
    %c0_367 = arith.constant 0 : index
    %475 = vector.load %arg25[%c0_366, %c0_367] : memref<128x128xf32, #tpu.memory_space<vmem>>, vector<128x128xf32>
    %cst_368 = arith.constant dense<0.000000e+00> : vector<8x128xf32>
    %476 = tpu.matmul %286, %475, %cst_368 {dimension_numbers = #tpu.dot_dimension_numbers<[1], [0], [0], [1], [0, 0, 1, 1], [], []>} : vector<8x128xf32>, vector<128x128xf32>, vector<8x128xf32> -> vector<8x128xf32>
    %c0_369 = arith.constant 0 : index
    %c0_370 = arith.constant 0 : index
    %477 = vector.load %arg27[%c0_369, %c0_370] : memref<8x8xf32, #tpu.memory_space<vmem>>, vector<8x8xf32>
    %cst_371 = arith.constant dense<0.000000e+00> : vector<8x128xf32>
    %478 = tpu.matmul %477, %476, %cst_371 {dimension_numbers = #tpu.dot_dimension_numbers<[1], [0], [0], [1], [0, 0, 1, 1], [], []>} : vector<8x8xf32>, vector<8x128xf32>, vector<8x128xf32> -> vector<8x128xf32>
    %479 = arith.index_cast %arg0 : i32 to index
    %c0_372 = arith.constant 0 : index
    %c0_373 = arith.constant 0 : index
    %480 = vector.load %arg29[%479, %c0_372, %c0_373] : memref<2x8x1xf32, #tpu.memory_space<vmem>>, vector<1x8x1xf32>
    %481 = vector.shape_cast %480 : vector<1x8x1xf32> to vector<8x1xf32>
    %482 = arith.index_cast %arg0 : i32 to index
    %c0_374 = arith.constant 0 : index
    %c0_375 = arith.constant 0 : index
    %483 = vector.load %arg31[%482, %c0_374, %c0_375] : memref<2x8x1xf32, #tpu.memory_space<vmem>>, vector<1x8x1xf32>
    %484 = vector.shape_cast %483 : vector<1x8x1xf32> to vector<8x1xf32>
    %c0_376 = arith.constant 0 : index
    %c0_377 = arith.constant 0 : index
    %485 = vector.load %arg20[%c0_376, %c0_377] : memref<2x128xf32, #tpu.memory_space<vmem>>, vector<2x128xf32>
    %c0_378 = arith.constant 0 : index
    %c0_379 = arith.constant 0 : index
    %486 = vector.load %arg23[%c0_378, %c0_379] : memref<128x2xf32, #tpu.memory_space<vmem>>, vector<128x2xf32>
    %cst_380 = arith.constant dense<0.000000e+00> : vector<128xf32>
    %487 = vector.multi_reduction <add>, %478, %cst_380 [0] : vector<8x128xf32> to vector<128xf32>
    %488 = vector.shape_cast %487 : vector<128xf32> to vector<1x128xf32>
    %cst_381 = arith.constant dense<0.000000e+00> : vector<1x2xf32>
    %489 = tpu.matmul %488, %486, %cst_381 {dimension_numbers = #tpu.dot_dimension_numbers<[1], [0], [0], [1], [0, 0, 1, 1], [], []>} : vector<1x128xf32>, vector<128x2xf32>, vector<1x2xf32> -> vector<1x2xf32>
    %cst_382 = arith.constant 7.812500e-03 : f32
    %490 = vector.broadcast %cst_382 : f32 to vector<1x2xf32>
    %491 = arith.mulf %489, %490 : vector<1x2xf32>
    %cst_383 = arith.constant dense<0.000000e+00> : vector<1x128xf32>
    %492 = tpu.matmul %491, %485, %cst_383 {dimension_numbers = #tpu.dot_dimension_numbers<[1], [0], [0], [1], [0, 0, 1, 1], [], []>} : vector<1x2xf32>, vector<2x128xf32>, vector<1x128xf32> -> vector<1x128xf32>
    %493 = vector.broadcast %492 : vector<1x128xf32> to vector<8x128xf32>
    %494 = arith.subf %478, %493 : vector<8x128xf32>
    %495 = arith.mulf %494, %494 : vector<8x128xf32>
    %cst_384 = arith.constant dense<0.000000e+00> : vector<128xf32>
    %496 = vector.multi_reduction <add>, %495, %cst_384 [0] : vector<8x128xf32> to vector<128xf32>
    %497 = vector.shape_cast %496 : vector<128xf32> to vector<1x128xf32>
    %cst_385 = arith.constant dense<0.000000e+00> : vector<1x2xf32>
    %498 = tpu.matmul %497, %486, %cst_385 {dimension_numbers = #tpu.dot_dimension_numbers<[1], [0], [0], [1], [0, 0, 1, 1], [], []>} : vector<1x128xf32>, vector<128x2xf32>, vector<1x2xf32> -> vector<1x2xf32>
    %cst_386 = arith.constant 7.812500e-03 : f32
    %499 = vector.broadcast %cst_386 : f32 to vector<1x2xf32>
    %500 = arith.mulf %498, %499 : vector<1x2xf32>
    %cst_387 = arith.constant 9.99999974E-5 : f32
    %501 = vector.broadcast %cst_387 : f32 to vector<1x2xf32>
    %502 = arith.addf %500, %501 : vector<1x2xf32>
    %503 = math.rsqrt %502 : vector<1x2xf32>
    %cst_388 = arith.constant dense<0.000000e+00> : vector<1x128xf32>
    %504 = tpu.matmul %503, %485, %cst_388 {dimension_numbers = #tpu.dot_dimension_numbers<[1], [0], [0], [1], [0, 0, 1, 1], [], []>} : vector<1x2xf32>, vector<2x128xf32>, vector<1x128xf32> -> vector<1x128xf32>
    %505 = vector.broadcast %504 : vector<1x128xf32> to vector<8x128xf32>
    %506 = arith.mulf %494, %505 : vector<8x128xf32>
    %507 = vector.broadcast %481 : vector<8x1xf32> to vector<8x128xf32>
    %508 = arith.mulf %506, %507 : vector<8x128xf32>
    %509 = vector.broadcast %484 : vector<8x1xf32> to vector<8x128xf32>
    %510 = arith.addf %508, %509 : vector<8x128xf32>
    %511 = arith.addf %470, %510 : vector<8x128xf32>
    %c5_i32_389 = arith.constant 5 : i32
    %512 = tpu.dynamic_rotate %511 by %c5_i32_389 dim 1 : vector<8x128xf32>, i32 -> vector<8x128xf32>
    %c0_390 = arith.constant 0 : index
    %c0_391 = arith.constant 0 : index
    %c0_392 = arith.constant 0 : index
    %513 = vector.load %arg17[%c0_390, %c0_391, %c0_392] : memref<9x1x128xf32, #tpu.memory_space<vmem>>, vector<1x1x128xf32>
    %514 = vector.shape_cast %513 : vector<1x1x128xf32> to vector<1x128xf32>
    %515 = vector.broadcast %514 : vector<1x128xf32> to vector<8x128xf32>
    %516 = arith.mulf %512, %515 : vector<8x128xf32>
    %c0_393 = arith.constant 0 : index
    %c0_394 = arith.constant 0 : index
    %517 = vector.load %arg42[%c0_393, %c0_394] : memref<144x128xf32, #tpu.memory_space<vmem>>, vector<8x128xf32>
    tpu.vector_store %arg42[%c0_393, %c0_394], %516 {strides = array<i32>} : memref<144x128xf32, #tpu.memory_space<vmem>>, vector<8x128xf32>,
    %c4_i32_395 = arith.constant 4 : i32
    %518 = tpu.dynamic_rotate %511 by %c4_i32_395 dim 1 : vector<8x128xf32>, i32 -> vector<8x128xf32>
    %c1_396 = arith.constant 1 : index
    %c0_397 = arith.constant 0 : index
    %c0_398 = arith.constant 0 : index
    %519 = vector.load %arg17[%c1_396, %c0_397, %c0_398] : memref<9x1x128xf32, #tpu.memory_space<vmem>>, vector<1x1x128xf32>
    %520 = vector.shape_cast %519 : vector<1x1x128xf32> to vector<1x128xf32>
    %521 = vector.broadcast %520 : vector<1x128xf32> to vector<8x128xf32>
    %522 = arith.mulf %518, %521 : vector<8x128xf32>
    %c8_399 = arith.constant 8 : index
    %c0_400 = arith.constant 0 : index
    %523 = vector.load %arg42[%c8_399, %c0_400] : memref<144x128xf32, #tpu.memory_space<vmem>>, vector<8x128xf32>
    tpu.vector_store %arg42[%c8_399, %c0_400], %522 {strides = array<i32>} : memref<144x128xf32, #tpu.memory_space<vmem>>, vector<8x128xf32>,
    %c3_i32_401 = arith.constant 3 : i32
    %524 = tpu.dynamic_rotate %511 by %c3_i32_401 dim 1 : vector<8x128xf32>, i32 -> vector<8x128xf32>
    %c2_402 = arith.constant 2 : index
    %c0_403 = arith.constant 0 : index
    %c0_404 = arith.constant 0 : index
    %525 = vector.load %arg17[%c2_402, %c0_403, %c0_404] : memref<9x1x128xf32, #tpu.memory_space<vmem>>, vector<1x1x128xf32>
    %526 = vector.shape_cast %525 : vector<1x1x128xf32> to vector<1x128xf32>
    %527 = vector.broadcast %526 : vector<1x128xf32> to vector<8x128xf32>
    %528 = arith.mulf %524, %527 : vector<8x128xf32>
    %c16_405 = arith.constant 16 : index
    %c0_406 = arith.constant 0 : index
    %529 = vector.load %arg42[%c16_405, %c0_406] : memref<144x128xf32, #tpu.memory_space<vmem>>, vector<8x128xf32>
    tpu.vector_store %arg42[%c16_405, %c0_406], %528 {strides = array<i32>} : memref<144x128xf32, #tpu.memory_space<vmem>>, vector<8x128xf32>,
    %c1_i32_407 = arith.constant 1 : i32
    %530 = tpu.dynamic_rotate %511 by %c1_i32_407 dim 1 : vector<8x128xf32>, i32 -> vector<8x128xf32>
    %c3_408 = arith.constant 3 : index
    %c0_409 = arith.constant 0 : index
    %c0_410 = arith.constant 0 : index
    %531 = vector.load %arg17[%c3_408, %c0_409, %c0_410] : memref<9x1x128xf32, #tpu.memory_space<vmem>>, vector<1x1x128xf32>
    %532 = vector.shape_cast %531 : vector<1x1x128xf32> to vector<1x128xf32>
    %533 = vector.broadcast %532 : vector<1x128xf32> to vector<8x128xf32>
    %534 = arith.mulf %530, %533 : vector<8x128xf32>
    %c24_411 = arith.constant 24 : index
    %c0_412 = arith.constant 0 : index
    %535 = vector.load %arg42[%c24_411, %c0_412] : memref<144x128xf32, #tpu.memory_space<vmem>>, vector<8x128xf32>
    tpu.vector_store %arg42[%c24_411, %c0_412], %534 {strides = array<i32>} : memref<144x128xf32, #tpu.memory_space<vmem>>, vector<8x128xf32>,
    %c32_413 = arith.constant 32 : index
    %c0_414 = arith.constant 0 : index
    %536 = vector.load %arg42[%c32_413, %c0_414] : memref<144x128xf32, #tpu.memory_space<vmem>>, vector<8x128xf32>
    tpu.vector_store %arg42[%c32_413, %c0_414], %511 {strides = array<i32>} : memref<144x128xf32, #tpu.memory_space<vmem>>, vector<8x128xf32>,
    %c127_i32_415 = arith.constant 127 : i32
    %537 = tpu.dynamic_rotate %511 by %c127_i32_415 dim 1 : vector<8x128xf32>, i32 -> vector<8x128xf32>
    %c5_416 = arith.constant 5 : index
    %c0_417 = arith.constant 0 : index
    %c0_418 = arith.constant 0 : index
    %538 = vector.load %arg17[%c5_416, %c0_417, %c0_418] : memref<9x1x128xf32, #tpu.memory_space<vmem>>, vector<1x1x128xf32>
    %539 = vector.shape_cast %538 : vector<1x1x128xf32> to vector<1x128xf32>
    %540 = vector.broadcast %539 : vector<1x128xf32> to vector<8x128xf32>
    %541 = arith.mulf %537, %540 : vector<8x128xf32>
    %c40_419 = arith.constant 40 : index
    %c0_420 = arith.constant 0 : index
    %542 = vector.load %arg42[%c40_419, %c0_420] : memref<144x128xf32, #tpu.memory_space<vmem>>, vector<8x128xf32>
    tpu.vector_store %arg42[%c40_419, %c0_420], %541 {strides = array<i32>} : memref<144x128xf32, #tpu.memory_space<vmem>>, vector<8x128xf32>,
    %c125_i32_421 = arith.constant 125 : i32
    %543 = tpu.dynamic_rotate %511 by %c125_i32_421 dim 1 : vector<8x128xf32>, i32 -> vector<8x128xf32>
    %c6_422 = arith.constant 6 : index
    %c0_423 = arith.constant 0 : index
    %c0_424 = arith.constant 0 : index
    %544 = vector.load %arg17[%c6_422, %c0_423, %c0_424] : memref<9x1x128xf32, #tpu.memory_space<vmem>>, vector<1x1x128xf32>
    %545 = vector.shape_cast %544 : vector<1x1x128xf32> to vector<1x128xf32>
    %546 = vector.broadcast %545 : vector<1x128xf32> to vector<8x128xf32>
    %547 = arith.mulf %543, %546 : vector<8x128xf32>
    %c48_425 = arith.constant 48 : index
    %c0_426 = arith.constant 0 : index
    %548 = vector.load %arg42[%c48_425, %c0_426] : memref<144x128xf32, #tpu.memory_space<vmem>>, vector<8x128xf32>
    tpu.vector_store %arg42[%c48_425, %c0_426], %547 {strides = array<i32>} : memref<144x128xf32, #tpu.memory_space<vmem>>, vector<8x128xf32>,
    %c124_i32_427 = arith.constant 124 : i32
    %549 = tpu.dynamic_rotate %511 by %c124_i32_427 dim 1 : vector<8x128xf32>, i32 -> vector<8x128xf32>
    %c7_428 = arith.constant 7 : index
    %c0_429 = arith.constant 0 : index
    %c0_430 = arith.constant 0 : index
    %550 = vector.load %arg17[%c7_428, %c0_429, %c0_430] : memref<9x1x128xf32, #tpu.memory_space<vmem>>, vector<1x1x128xf32>
    %551 = vector.shape_cast %550 : vector<1x1x128xf32> to vector<1x128xf32>
    %552 = vector.broadcast %551 : vector<1x128xf32> to vector<8x128xf32>
    %553 = arith.mulf %549, %552 : vector<8x128xf32>
    %c56_431 = arith.constant 56 : index
    %c0_432 = arith.constant 0 : index
    %554 = vector.load %arg42[%c56_431, %c0_432] : memref<144x128xf32, #tpu.memory_space<vmem>>, vector<8x128xf32>
    tpu.vector_store %arg42[%c56_431, %c0_432], %553 {strides = array<i32>} : memref<144x128xf32, #tpu.memory_space<vmem>>, vector<8x128xf32>,
    %c123_i32_433 = arith.constant 123 : i32
    %555 = tpu.dynamic_rotate %511 by %c123_i32_433 dim 1 : vector<8x128xf32>, i32 -> vector<8x128xf32>
    %c8_434 = arith.constant 8 : index
    %c0_435 = arith.constant 0 : index
    %c0_436 = arith.constant 0 : index
    %556 = vector.load %arg17[%c8_434, %c0_435, %c0_436] : memref<9x1x128xf32, #tpu.memory_space<vmem>>, vector<1x1x128xf32>
    %557 = vector.shape_cast %556 : vector<1x1x128xf32> to vector<1x128xf32>
    %558 = vector.broadcast %557 : vector<1x128xf32> to vector<8x128xf32>
    %559 = arith.mulf %555, %558 : vector<8x128xf32>
    %c64_437 = arith.constant 64 : index
    %c0_438 = arith.constant 0 : index
    %560 = vector.load %arg42[%c64_437, %c0_438] : memref<144x128xf32, #tpu.memory_space<vmem>>, vector<8x128xf32>
    tpu.vector_store %arg42[%c64_437, %c0_438], %559 {strides = array<i32>} : memref<144x128xf32, #tpu.memory_space<vmem>>, vector<8x128xf32>,
    %c0_439 = arith.constant 0 : index
    %c0_440 = arith.constant 0 : index
    %561 = vector.load %arg7[%c0_439, %c0_440] : memref<16x72xf32, #tpu.memory_space<vmem>>, vector<16x72xf32>
    %c0_441 = arith.constant 0 : index
    %c0_442 = arith.constant 0 : index
    %562 = vector.load %arg42[%c0_441, %c0_442] : memref<144x128xf32, #tpu.memory_space<vmem>>, vector<72x128xf32>
    %cst_443 = arith.constant dense<0.000000e+00> : vector<16x128xf32>
    %563 = tpu.matmul %561, %562, %cst_443 {dimension_numbers = #tpu.dot_dimension_numbers<[1], [0], [0], [1], [0, 0, 1, 1], [], []>} : vector<16x72xf32>, vector<72x128xf32>, vector<16x128xf32> -> vector<16x128xf32>
    %c0_444 = arith.constant 0 : index
    %c0_445 = arith.constant 0 : index
    %564 = vector.load %arg26[%c0_444, %c0_445] : memref<128x128xf32, #tpu.memory_space<vmem>>, vector<128x128xf32>
    %cst_446 = arith.constant dense<0.000000e+00> : vector<16x128xf32>
    %565 = tpu.matmul %563, %564, %cst_446 {dimension_numbers = #tpu.dot_dimension_numbers<[1], [0], [0], [1], [0, 0, 1, 1], [], []>} : vector<16x128xf32>, vector<128x128xf32>, vector<16x128xf32> -> vector<16x128xf32>
    %566 = arith.index_cast %arg0 : i32 to index
    %c0_447 = arith.constant 0 : index
    %c0_448 = arith.constant 0 : index
    %567 = vector.load %arg14[%566, %c0_447, %c0_448] : memref<2x16x1xf32, #tpu.memory_space<vmem>>, vector<1x16x1xf32>
    %568 = vector.shape_cast %567 : vector<1x16x1xf32> to vector<16x1xf32>
    %c0_449 = arith.constant 0 : index
    %c0_450 = arith.constant 0 : index
    %569 = vector.load %arg21[%c0_449, %c0_450] : memref<2x128xf32, #tpu.memory_space<vmem>>, vector<2x128xf32>
    %c0_451 = arith.constant 0 : index
    %c0_452 = arith.constant 0 : index
    %570 = vector.load %arg24[%c0_451, %c0_452] : memref<128x2xf32, #tpu.memory_space<vmem>>, vector<128x2xf32>
    %cst_453 = arith.constant dense<0.000000e+00> : vector<128xf32>
    %571 = vector.multi_reduction <add>, %565, %cst_453 [0] : vector<16x128xf32> to vector<128xf32>
    %572 = vector.shape_cast %571 : vector<128xf32> to vector<1x128xf32>
    %cst_454 = arith.constant dense<0.000000e+00> : vector<1x2xf32>
    %573 = tpu.matmul %572, %570, %cst_454 {dimension_numbers = #tpu.dot_dimension_numbers<[1], [0], [0], [1], [0, 0, 1, 1], [], []>} : vector<1x128xf32>, vector<128x2xf32>, vector<1x2xf32> -> vector<1x2xf32>
    %cst_455 = arith.constant 1.562500e-02 : f32
    %574 = vector.broadcast %cst_455 : f32 to vector<1x2xf32>
    %575 = arith.mulf %573, %574 : vector<1x2xf32>
    %cst_456 = arith.constant dense<0.000000e+00> : vector<1x128xf32>
    %576 = tpu.matmul %575, %569, %cst_456 {dimension_numbers = #tpu.dot_dimension_numbers<[1], [0], [0], [1], [0, 0, 1, 1], [], []>} : vector<1x2xf32>, vector<2x128xf32>, vector<1x128xf32> -> vector<1x128xf32>
    %577 = vector.broadcast %576 : vector<1x128xf32> to vector<16x128xf32>
    %578 = arith.subf %565, %577 : vector<16x128xf32>
    %579 = arith.mulf %578, %578 : vector<16x128xf32>
    %cst_457 = arith.constant dense<0.000000e+00> : vector<128xf32>
    %580 = vector.multi_reduction <add>, %579, %cst_457 [0] : vector<16x128xf32> to vector<128xf32>
    %581 = vector.shape_cast %580 : vector<128xf32> to vector<1x128xf32>
    %cst_458 = arith.constant dense<0.000000e+00> : vector<1x2xf32>
    %582 = tpu.matmul %581, %570, %cst_458 {dimension_numbers = #tpu.dot_dimension_numbers<[1], [0], [0], [1], [0, 0, 1, 1], [], []>} : vector<1x128xf32>, vector<128x2xf32>, vector<1x2xf32> -> vector<1x2xf32>
    %cst_459 = arith.constant 1.562500e-02 : f32
    %583 = vector.broadcast %cst_459 : f32 to vector<1x2xf32>
    %584 = arith.mulf %582, %583 : vector<1x2xf32>
    %cst_460 = arith.constant 9.99999974E-5 : f32
    %585 = vector.broadcast %cst_460 : f32 to vector<1x2xf32>
    %586 = arith.addf %584, %585 : vector<1x2xf32>
    %587 = math.rsqrt %586 : vector<1x2xf32>
    %cst_461 = arith.constant dense<0.000000e+00> : vector<1x128xf32>
    %588 = tpu.matmul %587, %569, %cst_461 {dimension_numbers = #tpu.dot_dimension_numbers<[1], [0], [0], [1], [0, 0, 1, 1], [], []>} : vector<1x2xf32>, vector<2x128xf32>, vector<1x128xf32> -> vector<1x128xf32>
    %589 = vector.broadcast %588 : vector<1x128xf32> to vector<16x128xf32>
    %590 = arith.mulf %578, %589 : vector<16x128xf32>
    %591 = vector.broadcast %568 : vector<16x1xf32> to vector<16x128xf32>
    %592 = arith.mulf %590, %591 : vector<16x128xf32>
    %c0_462 = arith.constant 0 : index
    %c0_463 = arith.constant 0 : index
    %593 = vector.load %arg40[%c0_462, %c0_463] : memref<16x128xf32, #tpu.memory_space<vmem>>, vector<16x128xf32>
    %cst_464 = arith.constant 0.949999988 : f32
    %594 = vector.broadcast %cst_464 : f32 to vector<16x128xf32>
    %595 = arith.mulf %594, %593 : vector<16x128xf32>
    %596 = arith.addf %595, %592 : vector<16x128xf32>
    %cst_465 = arith.constant 1.000000e+00 : f32
    %597 = vector.broadcast %cst_465 : f32 to vector<16x128xf32>
    %598 = arith.subf %596, %597 : vector<16x128xf32>
    %cst_466 = arith.constant 0.000000e+00 : f32
    %599 = vector.broadcast %cst_466 : f32 to vector<16x128xf32>
    %600 = arith.cmpf ogt, %598, %599 : vector<16x128xf32>
    %601 = arith.extui %600 : vector<16x128xi1> to vector<16x128xi32>
    %602 = arith.sitofp %601 : vector<16x128xi32> to vector<16x128xf32>
    %cst_467 = arith.constant 1.000000e+00 : f32
    %603 = vector.broadcast %cst_467 : f32 to vector<16x128xf32>
    %604 = arith.mulf %602, %603 : vector<16x128xf32>
    %605 = arith.subf %596, %604 : vector<16x128xf32>
    %c0_468 = arith.constant 0 : index
    %c0_469 = arith.constant 0 : index
    %606 = vector.load %arg40[%c0_468, %c0_469] : memref<16x128xf32, #tpu.memory_space<vmem>>, vector<16x128xf32>
    tpu.vector_store %arg40[%c0_468, %c0_469], %605 {strides = array<i32>} : memref<16x128xf32, #tpu.memory_space<vmem>>, vector<16x128xf32>,
    %c3_i32_470 = arith.constant 3 : i32
    %607 = tpu.dynamic_rotate %602 by %c3_i32_470 dim 1 : vector<16x128xf32>, i32 -> vector<16x128xf32>
    %c0_471 = arith.constant 0 : index
    %c0_472 = arith.constant 0 : index
    %c0_473 = arith.constant 0 : index
    %608 = vector.load %arg18[%c0_471, %c0_472, %c0_473] : memref<9x1x128xf32, #tpu.memory_space<vmem>>, vector<1x1x128xf32>
    %609 = vector.shape_cast %608 : vector<1x1x128xf32> to vector<1x128xf32>
    %610 = vector.broadcast %609 : vector<1x128xf32> to vector<16x128xf32>
    %611 = arith.mulf %607, %610 : vector<16x128xf32>
    %c0_474 = arith.constant 0 : index
    %c0_475 = arith.constant 0 : index
    %612 = vector.load %arg42[%c0_474, %c0_475] : memref<144x128xf32, #tpu.memory_space<vmem>>, vector<16x128xf32>
    tpu.vector_store %arg42[%c0_474, %c0_475], %611 {strides = array<i32>} : memref<144x128xf32, #tpu.memory_space<vmem>>, vector<16x128xf32>,
    %c2_i32 = arith.constant 2 : i32
    %613 = tpu.dynamic_rotate %602 by %c2_i32 dim 1 : vector<16x128xf32>, i32 -> vector<16x128xf32>
    %c1_476 = arith.constant 1 : index
    %c0_477 = arith.constant 0 : index
    %c0_478 = arith.constant 0 : index
    %614 = vector.load %arg18[%c1_476, %c0_477, %c0_478] : memref<9x1x128xf32, #tpu.memory_space<vmem>>, vector<1x1x128xf32>
    %615 = vector.shape_cast %614 : vector<1x1x128xf32> to vector<1x128xf32>
    %616 = vector.broadcast %615 : vector<1x128xf32> to vector<16x128xf32>
    %617 = arith.mulf %613, %616 : vector<16x128xf32>
    %c16_479 = arith.constant 16 : index
    %c0_480 = arith.constant 0 : index
    %618 = vector.load %arg42[%c16_479, %c0_480] : memref<144x128xf32, #tpu.memory_space<vmem>>, vector<16x128xf32>
    tpu.vector_store %arg42[%c16_479, %c0_480], %617 {strides = array<i32>} : memref<144x128xf32, #tpu.memory_space<vmem>>, vector<16x128xf32>,
    %c1_i32_481 = arith.constant 1 : i32
    %619 = tpu.dynamic_rotate %602 by %c1_i32_481 dim 1 : vector<16x128xf32>, i32 -> vector<16x128xf32>
    %c2_482 = arith.constant 2 : index
    %c0_483 = arith.constant 0 : index
    %c0_484 = arith.constant 0 : index
    %620 = vector.load %arg18[%c2_482, %c0_483, %c0_484] : memref<9x1x128xf32, #tpu.memory_space<vmem>>, vector<1x1x128xf32>
    %621 = vector.shape_cast %620 : vector<1x1x128xf32> to vector<1x128xf32>
    %622 = vector.broadcast %621 : vector<1x128xf32> to vector<16x128xf32>
    %623 = arith.mulf %619, %622 : vector<16x128xf32>
    %c32_485 = arith.constant 32 : index
    %c0_486 = arith.constant 0 : index
    %624 = vector.load %arg42[%c32_485, %c0_486] : memref<144x128xf32, #tpu.memory_space<vmem>>, vector<16x128xf32>
    tpu.vector_store %arg42[%c32_485, %c0_486], %623 {strides = array<i32>} : memref<144x128xf32, #tpu.memory_space<vmem>>, vector<16x128xf32>,
    %c1_i32_487 = arith.constant 1 : i32
    %625 = tpu.dynamic_rotate %602 by %c1_i32_487 dim 1 : vector<16x128xf32>, i32 -> vector<16x128xf32>
    %c3_488 = arith.constant 3 : index
    %c0_489 = arith.constant 0 : index
    %c0_490 = arith.constant 0 : index
    %626 = vector.load %arg18[%c3_488, %c0_489, %c0_490] : memref<9x1x128xf32, #tpu.memory_space<vmem>>, vector<1x1x128xf32>
    %627 = vector.shape_cast %626 : vector<1x1x128xf32> to vector<1x128xf32>
    %628 = vector.broadcast %627 : vector<1x128xf32> to vector<16x128xf32>
    %629 = arith.mulf %625, %628 : vector<16x128xf32>
    %c48_491 = arith.constant 48 : index
    %c0_492 = arith.constant 0 : index
    %630 = vector.load %arg42[%c48_491, %c0_492] : memref<144x128xf32, #tpu.memory_space<vmem>>, vector<16x128xf32>
    tpu.vector_store %arg42[%c48_491, %c0_492], %629 {strides = array<i32>} : memref<144x128xf32, #tpu.memory_space<vmem>>, vector<16x128xf32>,
    %c64_493 = arith.constant 64 : index
    %c0_494 = arith.constant 0 : index
    %631 = vector.load %arg42[%c64_493, %c0_494] : memref<144x128xf32, #tpu.memory_space<vmem>>, vector<16x128xf32>
    tpu.vector_store %arg42[%c64_493, %c0_494], %602 {strides = array<i32>} : memref<144x128xf32, #tpu.memory_space<vmem>>, vector<16x128xf32>,
    %c127_i32_495 = arith.constant 127 : i32
    %632 = tpu.dynamic_rotate %602 by %c127_i32_495 dim 1 : vector<16x128xf32>, i32 -> vector<16x128xf32>
    %c5_496 = arith.constant 5 : index
    %c0_497 = arith.constant 0 : index
    %c0_498 = arith.constant 0 : index
    %633 = vector.load %arg18[%c5_496, %c0_497, %c0_498] : memref<9x1x128xf32, #tpu.memory_space<vmem>>, vector<1x1x128xf32>
    %634 = vector.shape_cast %633 : vector<1x1x128xf32> to vector<1x128xf32>
    %635 = vector.broadcast %634 : vector<1x128xf32> to vector<16x128xf32>
    %636 = arith.mulf %632, %635 : vector<16x128xf32>
    %c80 = arith.constant 80 : index
    %c0_499 = arith.constant 0 : index
    %637 = vector.load %arg42[%c80, %c0_499] : memref<144x128xf32, #tpu.memory_space<vmem>>, vector<16x128xf32>
    tpu.vector_store %arg42[%c80, %c0_499], %636 {strides = array<i32>} : memref<144x128xf32, #tpu.memory_space<vmem>>, vector<16x128xf32>,
    %c127_i32_500 = arith.constant 127 : i32
    %638 = tpu.dynamic_rotate %602 by %c127_i32_500 dim 1 : vector<16x128xf32>, i32 -> vector<16x128xf32>
    %c6_501 = arith.constant 6 : index
    %c0_502 = arith.constant 0 : index
    %c0_503 = arith.constant 0 : index
    %639 = vector.load %arg18[%c6_501, %c0_502, %c0_503] : memref<9x1x128xf32, #tpu.memory_space<vmem>>, vector<1x1x128xf32>
    %640 = vector.shape_cast %639 : vector<1x1x128xf32> to vector<1x128xf32>
    %641 = vector.broadcast %640 : vector<1x128xf32> to vector<16x128xf32>
    %642 = arith.mulf %638, %641 : vector<16x128xf32>
    %c96 = arith.constant 96 : index
    %c0_504 = arith.constant 0 : index
    %643 = vector.load %arg42[%c96, %c0_504] : memref<144x128xf32, #tpu.memory_space<vmem>>, vector<16x128xf32>
    tpu.vector_store %arg42[%c96, %c0_504], %642 {strides = array<i32>} : memref<144x128xf32, #tpu.memory_space<vmem>>, vector<16x128xf32>,
    %c126_i32 = arith.constant 126 : i32
    %644 = tpu.dynamic_rotate %602 by %c126_i32 dim 1 : vector<16x128xf32>, i32 -> vector<16x128xf32>
    %c7_505 = arith.constant 7 : index
    %c0_506 = arith.constant 0 : index
    %c0_507 = arith.constant 0 : index
    %645 = vector.load %arg18[%c7_505, %c0_506, %c0_507] : memref<9x1x128xf32, #tpu.memory_space<vmem>>, vector<1x1x128xf32>
    %646 = vector.shape_cast %645 : vector<1x1x128xf32> to vector<1x128xf32>
    %647 = vector.broadcast %646 : vector<1x128xf32> to vector<16x128xf32>
    %648 = arith.mulf %644, %647 : vector<16x128xf32>
    %c112 = arith.constant 112 : index
    %c0_508 = arith.constant 0 : index
    %649 = vector.load %arg42[%c112, %c0_508] : memref<144x128xf32, #tpu.memory_space<vmem>>, vector<16x128xf32>
    tpu.vector_store %arg42[%c112, %c0_508], %648 {strides = array<i32>} : memref<144x128xf32, #tpu.memory_space<vmem>>, vector<16x128xf32>,
    %c125_i32_509 = arith.constant 125 : i32
    %650 = tpu.dynamic_rotate %602 by %c125_i32_509 dim 1 : vector<16x128xf32>, i32 -> vector<16x128xf32>
    %c8_510 = arith.constant 8 : index
    %c0_511 = arith.constant 0 : index
    %c0_512 = arith.constant 0 : index
    %651 = vector.load %arg18[%c8_510, %c0_511, %c0_512] : memref<9x1x128xf32, #tpu.memory_space<vmem>>, vector<1x1x128xf32>
    %652 = vector.shape_cast %651 : vector<1x1x128xf32> to vector<1x128xf32>
    %653 = vector.broadcast %652 : vector<1x128xf32> to vector<16x128xf32>
    %654 = arith.mulf %650, %653 : vector<16x128xf32>
    %c128 = arith.constant 128 : index
    %c0_513 = arith.constant 0 : index
    %655 = vector.load %arg42[%c128, %c0_513] : memref<144x128xf32, #tpu.memory_space<vmem>>, vector<16x128xf32>
    tpu.vector_store %arg42[%c128, %c0_513], %654 {strides = array<i32>} : memref<144x128xf32, #tpu.memory_space<vmem>>, vector<16x128xf32>,
    %c0_514 = arith.constant 0 : index
    %c0_515 = arith.constant 0 : index
    %656 = vector.load %arg8[%c0_514, %c0_515] : memref<16x144xf32, #tpu.memory_space<vmem>>, vector<16x144xf32>
    %c0_516 = arith.constant 0 : index
    %c0_517 = arith.constant 0 : index
    %657 = vector.load %arg42[%c0_516, %c0_517] : memref<144x128xf32, #tpu.memory_space<vmem>>, vector<144x128xf32>
    %cst_518 = arith.constant dense<0.000000e+00> : vector<16x128xf32>
    %658 = tpu.matmul %656, %657, %cst_518 {dimension_numbers = #tpu.dot_dimension_numbers<[1], [0], [0], [1], [0, 0, 1, 1], [], []>} : vector<16x144xf32>, vector<144x128xf32>, vector<16x128xf32> -> vector<16x128xf32>
    %659 = arith.index_cast %arg0 : i32 to index
    %c0_519 = arith.constant 0 : index
    %c0_520 = arith.constant 0 : index
    %660 = vector.load %arg15[%659, %c0_519, %c0_520] : memref<2x16x1xf32, #tpu.memory_space<vmem>>, vector<1x16x1xf32>
    %661 = vector.shape_cast %660 : vector<1x16x1xf32> to vector<16x1xf32>
    %c0_521 = arith.constant 0 : index
    %c0_522 = arith.constant 0 : index
    %662 = vector.load %arg21[%c0_521, %c0_522] : memref<2x128xf32, #tpu.memory_space<vmem>>, vector<2x128xf32>
    %c0_523 = arith.constant 0 : index
    %c0_524 = arith.constant 0 : index
    %663 = vector.load %arg24[%c0_523, %c0_524] : memref<128x2xf32, #tpu.memory_space<vmem>>, vector<128x2xf32>
    %cst_525 = arith.constant dense<0.000000e+00> : vector<128xf32>
    %664 = vector.multi_reduction <add>, %658, %cst_525 [0] : vector<16x128xf32> to vector<128xf32>
    %665 = vector.shape_cast %664 : vector<128xf32> to vector<1x128xf32>
    %cst_526 = arith.constant dense<0.000000e+00> : vector<1x2xf32>
    %666 = tpu.matmul %665, %663, %cst_526 {dimension_numbers = #tpu.dot_dimension_numbers<[1], [0], [0], [1], [0, 0, 1, 1], [], []>} : vector<1x128xf32>, vector<128x2xf32>, vector<1x2xf32> -> vector<1x2xf32>
    %cst_527 = arith.constant 1.562500e-02 : f32
    %667 = vector.broadcast %cst_527 : f32 to vector<1x2xf32>
    %668 = arith.mulf %666, %667 : vector<1x2xf32>
    %cst_528 = arith.constant dense<0.000000e+00> : vector<1x128xf32>
    %669 = tpu.matmul %668, %662, %cst_528 {dimension_numbers = #tpu.dot_dimension_numbers<[1], [0], [0], [1], [0, 0, 1, 1], [], []>} : vector<1x2xf32>, vector<2x128xf32>, vector<1x128xf32> -> vector<1x128xf32>
    %670 = vector.broadcast %669 : vector<1x128xf32> to vector<16x128xf32>
    %671 = arith.subf %658, %670 : vector<16x128xf32>
    %672 = arith.mulf %671, %671 : vector<16x128xf32>
    %cst_529 = arith.constant dense<0.000000e+00> : vector<128xf32>
    %673 = vector.multi_reduction <add>, %672, %cst_529 [0] : vector<16x128xf32> to vector<128xf32>
    %674 = vector.shape_cast %673 : vector<128xf32> to vector<1x128xf32>
    %cst_530 = arith.constant dense<0.000000e+00> : vector<1x2xf32>
    %675 = tpu.matmul %674, %663, %cst_530 {dimension_numbers = #tpu.dot_dimension_numbers<[1], [0], [0], [1], [0, 0, 1, 1], [], []>} : vector<1x128xf32>, vector<128x2xf32>, vector<1x2xf32> -> vector<1x2xf32>
    %cst_531 = arith.constant 1.562500e-02 : f32
    %676 = vector.broadcast %cst_531 : f32 to vector<1x2xf32>
    %677 = arith.mulf %675, %676 : vector<1x2xf32>
    %cst_532 = arith.constant 9.99999974E-5 : f32
    %678 = vector.broadcast %cst_532 : f32 to vector<1x2xf32>
    %679 = arith.addf %677, %678 : vector<1x2xf32>
    %680 = math.rsqrt %679 : vector<1x2xf32>
    %cst_533 = arith.constant dense<0.000000e+00> : vector<1x128xf32>
    %681 = tpu.matmul %680, %662, %cst_533 {dimension_numbers = #tpu.dot_dimension_numbers<[1], [0], [0], [1], [0, 0, 1, 1], [], []>} : vector<1x2xf32>, vector<2x128xf32>, vector<1x128xf32> -> vector<1x128xf32>
    %682 = vector.broadcast %681 : vector<1x128xf32> to vector<16x128xf32>
    %683 = arith.mulf %671, %682 : vector<16x128xf32>
    %684 = vector.broadcast %661 : vector<16x1xf32> to vector<16x128xf32>
    %685 = arith.mulf %683, %684 : vector<16x128xf32>
    %c0_534 = arith.constant 0 : index
    %c0_535 = arith.constant 0 : index
    %686 = vector.load %arg41[%c0_534, %c0_535] : memref<16x128xf32, #tpu.memory_space<vmem>>, vector<16x128xf32>
    %cst_536 = arith.constant 0.949999988 : f32
    %687 = vector.broadcast %cst_536 : f32 to vector<16x128xf32>
    %688 = arith.mulf %687, %686 : vector<16x128xf32>
    %689 = arith.addf %688, %685 : vector<16x128xf32>
    %cst_537 = arith.constant 1.000000e+00 : f32
    %690 = vector.broadcast %cst_537 : f32 to vector<16x128xf32>
    %691 = arith.subf %689, %690 : vector<16x128xf32>
    %cst_538 = arith.constant 0.000000e+00 : f32
    %692 = vector.broadcast %cst_538 : f32 to vector<16x128xf32>
    %693 = arith.cmpf ogt, %691, %692 : vector<16x128xf32>
    %694 = arith.extui %693 : vector<16x128xi1> to vector<16x128xi32>
    %695 = arith.sitofp %694 : vector<16x128xi32> to vector<16x128xf32>
    %cst_539 = arith.constant 1.000000e+00 : f32
    %696 = vector.broadcast %cst_539 : f32 to vector<16x128xf32>
    %697 = arith.mulf %695, %696 : vector<16x128xf32>
    %698 = arith.subf %689, %697 : vector<16x128xf32>
    %c0_540 = arith.constant 0 : index
    %c0_541 = arith.constant 0 : index
    %699 = vector.load %arg41[%c0_540, %c0_541] : memref<16x128xf32, #tpu.memory_space<vmem>>, vector<16x128xf32>
    tpu.vector_store %arg41[%c0_540, %c0_541], %698 {strides = array<i32>} : memref<16x128xf32, #tpu.memory_space<vmem>>, vector<16x128xf32>,
    %c0_542 = arith.constant 0 : index
    %c0_543 = arith.constant 0 : index
    %700 = vector.load %arg26[%c0_542, %c0_543] : memref<128x128xf32, #tpu.memory_space<vmem>>, vector<128x128xf32>
    %cst_544 = arith.constant dense<0.000000e+00> : vector<8x128xf32>
    %701 = tpu.matmul %511, %700, %cst_544 {dimension_numbers = #tpu.dot_dimension_numbers<[1], [0], [0], [1], [0, 0, 1, 1], [], []>} : vector<8x128xf32>, vector<128x128xf32>, vector<8x128xf32> -> vector<8x128xf32>
    %c0_545 = arith.constant 0 : index
    %c0_546 = arith.constant 0 : index
    %702 = vector.load %arg28[%c0_545, %c0_546] : memref<16x8xf32, #tpu.memory_space<vmem>>, vector<16x8xf32>
    %cst_547 = arith.constant dense<0.000000e+00> : vector<16x128xf32>
    %703 = tpu.matmul %702, %701, %cst_547 {dimension_numbers = #tpu.dot_dimension_numbers<[1], [0], [0], [1], [0, 0, 1, 1], [], []>} : vector<16x8xf32>, vector<8x128xf32>, vector<16x128xf32> -> vector<16x128xf32>
    %704 = arith.index_cast %arg0 : i32 to index
    %c0_548 = arith.constant 0 : index
    %c0_549 = arith.constant 0 : index
    %705 = vector.load %arg30[%704, %c0_548, %c0_549] : memref<2x16x1xf32, #tpu.memory_space<vmem>>, vector<1x16x1xf32>
    %706 = vector.shape_cast %705 : vector<1x16x1xf32> to vector<16x1xf32>
    %707 = arith.index_cast %arg0 : i32 to index
    %c0_550 = arith.constant 0 : index
    %c0_551 = arith.constant 0 : index
    %708 = vector.load %arg32[%707, %c0_550, %c0_551] : memref<2x16x1xf32, #tpu.memory_space<vmem>>, vector<1x16x1xf32>
    %709 = vector.shape_cast %708 : vector<1x16x1xf32> to vector<16x1xf32>
    %c0_552 = arith.constant 0 : index
    %c0_553 = arith.constant 0 : index
    %710 = vector.load %arg21[%c0_552, %c0_553] : memref<2x128xf32, #tpu.memory_space<vmem>>, vector<2x128xf32>
    %c0_554 = arith.constant 0 : index
    %c0_555 = arith.constant 0 : index
    %711 = vector.load %arg24[%c0_554, %c0_555] : memref<128x2xf32, #tpu.memory_space<vmem>>, vector<128x2xf32>
    %cst_556 = arith.constant dense<0.000000e+00> : vector<128xf32>
    %712 = vector.multi_reduction <add>, %703, %cst_556 [0] : vector<16x128xf32> to vector<128xf32>
    %713 = vector.shape_cast %712 : vector<128xf32> to vector<1x128xf32>
    %cst_557 = arith.constant dense<0.000000e+00> : vector<1x2xf32>
    %714 = tpu.matmul %713, %711, %cst_557 {dimension_numbers = #tpu.dot_dimension_numbers<[1], [0], [0], [1], [0, 0, 1, 1], [], []>} : vector<1x128xf32>, vector<128x2xf32>, vector<1x2xf32> -> vector<1x2xf32>
    %cst_558 = arith.constant 1.562500e-02 : f32
    %715 = vector.broadcast %cst_558 : f32 to vector<1x2xf32>
    %716 = arith.mulf %714, %715 : vector<1x2xf32>
    %cst_559 = arith.constant dense<0.000000e+00> : vector<1x128xf32>
    %717 = tpu.matmul %716, %710, %cst_559 {dimension_numbers = #tpu.dot_dimension_numbers<[1], [0], [0], [1], [0, 0, 1, 1], [], []>} : vector<1x2xf32>, vector<2x128xf32>, vector<1x128xf32> -> vector<1x128xf32>
    %718 = vector.broadcast %717 : vector<1x128xf32> to vector<16x128xf32>
    %719 = arith.subf %703, %718 : vector<16x128xf32>
    %720 = arith.mulf %719, %719 : vector<16x128xf32>
    %cst_560 = arith.constant dense<0.000000e+00> : vector<128xf32>
    %721 = vector.multi_reduction <add>, %720, %cst_560 [0] : vector<16x128xf32> to vector<128xf32>
    %722 = vector.shape_cast %721 : vector<128xf32> to vector<1x128xf32>
    %cst_561 = arith.constant dense<0.000000e+00> : vector<1x2xf32>
    %723 = tpu.matmul %722, %711, %cst_561 {dimension_numbers = #tpu.dot_dimension_numbers<[1], [0], [0], [1], [0, 0, 1, 1], [], []>} : vector<1x128xf32>, vector<128x2xf32>, vector<1x2xf32> -> vector<1x2xf32>
    %cst_562 = arith.constant 1.562500e-02 : f32
    %724 = vector.broadcast %cst_562 : f32 to vector<1x2xf32>
    %725 = arith.mulf %723, %724 : vector<1x2xf32>
    %cst_563 = arith.constant 9.99999974E-5 : f32
    %726 = vector.broadcast %cst_563 : f32 to vector<1x2xf32>
    %727 = arith.addf %725, %726 : vector<1x2xf32>
    %728 = math.rsqrt %727 : vector<1x2xf32>
    %cst_564 = arith.constant dense<0.000000e+00> : vector<1x128xf32>
    %729 = tpu.matmul %728, %710, %cst_564 {dimension_numbers = #tpu.dot_dimension_numbers<[1], [0], [0], [1], [0, 0, 1, 1], [], []>} : vector<1x2xf32>, vector<2x128xf32>, vector<1x128xf32> -> vector<1x128xf32>
    %730 = vector.broadcast %729 : vector<1x128xf32> to vector<16x128xf32>
    %731 = arith.mulf %719, %730 : vector<16x128xf32>
    %732 = vector.broadcast %706 : vector<16x1xf32> to vector<16x128xf32>
    %733 = arith.mulf %731, %732 : vector<16x128xf32>
    %734 = vector.broadcast %709 : vector<16x1xf32> to vector<16x128xf32>
    %735 = arith.addf %733, %734 : vector<16x128xf32>
    %736 = arith.addf %695, %735 : vector<16x128xf32>
    %c0_565 = arith.constant 0 : index
    %c0_566 = arith.constant 0 : index
    %737 = vector.load %arg24[%c0_565, %c0_566] : memref<128x2xf32, #tpu.memory_space<vmem>>, vector<128x2xf32>
    %cst_567 = arith.constant dense<0.000000e+00> : vector<16x2xf32>
    %738 = tpu.matmul %736, %737, %cst_567 {dimension_numbers = #tpu.dot_dimension_numbers<[1], [0], [0], [1], [0, 0, 1, 1], [], []>} : vector<16x128xf32>, vector<128x2xf32>, vector<16x2xf32> -> vector<16x2xf32>
    %cst_568 = arith.constant 2.500000e-01 : f32
    %739 = vector.broadcast %cst_568 : f32 to vector<16x2xf32>
    %740 = arith.mulf %738, %739 : vector<16x2xf32>
    %c0_569 = arith.constant 0 : index
    %c0_570 = arith.constant 0 : index
    %741 = vector.load %arg33[%c0_569, %c0_570] : memref<10x16xf32, #tpu.memory_space<vmem>>, vector<10x16xf32>
    %cst_571 = arith.constant dense<0.000000e+00> : vector<10x2xf32>
    %742 = tpu.matmul %741, %740, %cst_571 {dimension_numbers = #tpu.dot_dimension_numbers<[1], [0], [0], [1], [0, 0, 1, 1], [], []>} : vector<10x16xf32>, vector<16x2xf32>, vector<10x2xf32> -> vector<10x2xf32>
    %c0_572 = arith.constant 0 : index
    %c0_573 = arith.constant 0 : index
    %743 = vector.load %arg34[%c0_572, %c0_573] : memref<10x2xf32, #tpu.memory_space<vmem>>, vector<10x2xf32>
    %cst_574 = arith.constant 5.000000e-01 : f32
    %744 = vector.broadcast %cst_574 : f32 to vector<10x2xf32>
    %745 = arith.mulf %742, %744 : vector<10x2xf32>
    %746 = arith.addf %743, %745 : vector<10x2xf32>
    %c0_575 = arith.constant 0 : index
    %c0_576 = arith.constant 0 : index
    %747 = vector.load %arg34[%c0_575, %c0_576] : memref<10x2xf32, #tpu.memory_space<vmem>>, vector<10x2xf32>
    tpu.vector_store %arg34[%c0_575, %c0_576], %746 {strides = array<i32>} : memref<10x2xf32, #tpu.memory_space<vmem>>, vector<10x2xf32>,
    return
  }
  func.func @transform_0(%arg0: i32) -> (i32, i32) {
    %c0_i32 = arith.constant 0 : i32
    %c0_i32_0 = arith.constant 0 : i32
    %c0_i32_1 = arith.constant 0 : i32
    return %c0_i32, %c0_i32_0 : i32, i32
  }
  func.func @transform_1(%arg0: i32) -> (i32, i32) {
    %c0_i32 = arith.constant 0 : i32
    %c0_i32_0 = arith.constant 0 : i32
    %c0_i32_1 = arith.constant 0 : i32
    return %c0_i32, %c0_i32_0 : i32, i32
  }
  func.func @transform_2(%arg0: i32) -> (i32, i32) {
    %c0_i32 = arith.constant 0 : i32
    %c0_i32_0 = arith.constant 0 : i32
    %c0_i32_1 = arith.constant 0 : i32
    return %c0_i32, %c0_i32_0 : i32, i32
  }
  func.func @transform_3(%arg0: i32) -> (i32, i32) {
    %c0_i32 = arith.constant 0 : i32
    %c0_i32_0 = arith.constant 0 : i32
    %c0_i32_1 = arith.constant 0 : i32
    return %c0_i32, %c0_i32_0 : i32, i32
  }
  func.func @transform_4(%arg0: i32) -> (i32, i32) {
    %c0_i32 = arith.constant 0 : i32
    %c0_i32_0 = arith.constant 0 : i32
    %c0_i32_1 = arith.constant 0 : i32
    return %c0_i32, %c0_i32_0 : i32, i32
  }
  func.func @transform_5(%arg0: i32) -> (i32, i32) {
    %c0_i32 = arith.constant 0 : i32
    %c0_i32_0 = arith.constant 0 : i32
    %c0_i32_1 = arith.constant 0 : i32
    return %c0_i32, %c0_i32_0 : i32, i32
  }
  func.func @transform_6(%arg0: i32) -> (i32, i32) {
    %c0_i32 = arith.constant 0 : i32
    %c0_i32_0 = arith.constant 0 : i32
    %c0_i32_1 = arith.constant 0 : i32
    return %c0_i32, %c0_i32_0 : i32, i32
  }
  func.func @transform_7(%arg0: i32) -> (i32, i32) {
    %c0_i32 = arith.constant 0 : i32
    %c0_i32_0 = arith.constant 0 : i32
    %c0_i32_1 = arith.constant 0 : i32
    return %c0_i32, %c0_i32_0 : i32, i32
  }
  func.func @transform_8(%arg0: i32) -> (i32, i32, i32) {
    %c0_i32 = arith.constant 0 : i32
    %c0_i32_0 = arith.constant 0 : i32
    %c0_i32_1 = arith.constant 0 : i32
    %c0_i32_2 = arith.constant 0 : i32
    return %c0_i32, %c0_i32_0, %c0_i32_1 : i32, i32, i32
  }
  func.func @transform_9(%arg0: i32) -> (i32, i32, i32) {
    %c0_i32 = arith.constant 0 : i32
    %c0_i32_0 = arith.constant 0 : i32
    %c0_i32_1 = arith.constant 0 : i32
    %c0_i32_2 = arith.constant 0 : i32
    return %c0_i32, %c0_i32_0, %c0_i32_1 : i32, i32, i32
  }
  func.func @transform_10(%arg0: i32) -> (i32, i32, i32) {
    %c0_i32 = arith.constant 0 : i32
    %c0_i32_0 = arith.constant 0 : i32
    %c0_i32_1 = arith.constant 0 : i32
    %c0_i32_2 = arith.constant 0 : i32
    return %c0_i32, %c0_i32_0, %c0_i32_1 : i32, i32, i32
  }
  func.func @transform_11(%arg0: i32) -> (i32, i32, i32) {
    %c0_i32 = arith.constant 0 : i32
    %c0_i32_0 = arith.constant 0 : i32
    %c0_i32_1 = arith.constant 0 : i32
    %c0_i32_2 = arith.constant 0 : i32
    return %c0_i32, %c0_i32_0, %c0_i32_1 : i32, i32, i32
  }
  func.func @transform_12(%arg0: i32) -> (i32, i32, i32) {
    %c0_i32 = arith.constant 0 : i32
    %c0_i32_0 = arith.constant 0 : i32
    %c0_i32_1 = arith.constant 0 : i32
    %c0_i32_2 = arith.constant 0 : i32
    return %c0_i32, %c0_i32_0, %c0_i32_1 : i32, i32, i32
  }
  func.func @transform_13(%arg0: i32) -> (i32, i32, i32) {
    %c0_i32 = arith.constant 0 : i32
    %c0_i32_0 = arith.constant 0 : i32
    %c0_i32_1 = arith.constant 0 : i32
    %c0_i32_2 = arith.constant 0 : i32
    return %c0_i32, %c0_i32_0, %c0_i32_1 : i32, i32, i32
  }
  func.func @transform_14(%arg0: i32) -> (i32, i32, i32) {
    %c0_i32 = arith.constant 0 : i32
    %c0_i32_0 = arith.constant 0 : i32
    %c0_i32_1 = arith.constant 0 : i32
    %c0_i32_2 = arith.constant 0 : i32
    return %c0_i32, %c0_i32_0, %c0_i32_1 : i32, i32, i32
  }
  func.func @transform_15(%arg0: i32) -> (i32, i32, i32) {
    %c0_i32 = arith.constant 0 : i32
    %c0_i32_0 = arith.constant 0 : i32
    %c0_i32_1 = arith.constant 0 : i32
    %c0_i32_2 = arith.constant 0 : i32
    return %c0_i32, %c0_i32_0, %c0_i32_1 : i32, i32, i32
  }
  func.func @transform_16(%arg0: i32) -> (i32, i32, i32) {
    %c0_i32 = arith.constant 0 : i32
    %c0_i32_0 = arith.constant 0 : i32
    %c0_i32_1 = arith.constant 0 : i32
    %c0_i32_2 = arith.constant 0 : i32
    return %c0_i32, %c0_i32_0, %c0_i32_1 : i32, i32, i32
  }
  func.func @transform_17(%arg0: i32) -> (i32, i32, i32) {
    %c0_i32 = arith.constant 0 : i32
    %c0_i32_0 = arith.constant 0 : i32
    %c0_i32_1 = arith.constant 0 : i32
    %c0_i32_2 = arith.constant 0 : i32
    return %c0_i32, %c0_i32_0, %c0_i32_1 : i32, i32, i32
  }
  func.func @transform_18(%arg0: i32) -> (i32, i32) {
    %c0_i32 = arith.constant 0 : i32
    %c0_i32_0 = arith.constant 0 : i32
    %c0_i32_1 = arith.constant 0 : i32
    return %c0_i32, %c0_i32_0 : i32, i32
  }
  func.func @transform_19(%arg0: i32) -> (i32, i32) {
    %c0_i32 = arith.constant 0 : i32
    %c0_i32_0 = arith.constant 0 : i32
    %c0_i32_1 = arith.constant 0 : i32
    return %c0_i32, %c0_i32_0 : i32, i32
  }
  func.func @transform_20(%arg0: i32) -> (i32, i32) {
    %c0_i32 = arith.constant 0 : i32
    %c0_i32_0 = arith.constant 0 : i32
    %c0_i32_1 = arith.constant 0 : i32
    return %c0_i32, %c0_i32_0 : i32, i32
  }
  func.func @transform_21(%arg0: i32) -> (i32, i32) {
    %c0_i32 = arith.constant 0 : i32
    %c0_i32_0 = arith.constant 0 : i32
    %c0_i32_1 = arith.constant 0 : i32
    return %c0_i32, %c0_i32_0 : i32, i32
  }
  func.func @transform_22(%arg0: i32) -> (i32, i32) {
    %c0_i32 = arith.constant 0 : i32
    %c0_i32_0 = arith.constant 0 : i32
    %c0_i32_1 = arith.constant 0 : i32
    return %c0_i32, %c0_i32_0 : i32, i32
  }
  func.func @transform_23(%arg0: i32) -> (i32, i32) {
    %c0_i32 = arith.constant 0 : i32
    %c0_i32_0 = arith.constant 0 : i32
    %c0_i32_1 = arith.constant 0 : i32
    return %c0_i32, %c0_i32_0 : i32, i32
  }
  func.func @transform_24(%arg0: i32) -> (i32, i32) {
    %c0_i32 = arith.constant 0 : i32
    %c0_i32_0 = arith.constant 0 : i32
    %c0_i32_1 = arith.constant 0 : i32
    return %c0_i32, %c0_i32_0 : i32, i32
  }
  func.func @transform_25(%arg0: i32) -> (i32, i32) {
    %c0_i32 = arith.constant 0 : i32
    %c0_i32_0 = arith.constant 0 : i32
    %c0_i32_1 = arith.constant 0 : i32
    return %c0_i32, %c0_i32_0 : i32, i32
  }
  func.func @transform_26(%arg0: i32) -> (i32, i32) {
    %c0_i32 = arith.constant 0 : i32
    %c0_i32_0 = arith.constant 0 : i32
    %c0_i32_1 = arith.constant 0 : i32
    return %c0_i32, %c0_i32_0 : i32, i32
  }
  func.func @transform_27(%arg0: i32) -> (i32, i32) {
    %c0_i32 = arith.constant 0 : i32
    %c0_i32_0 = arith.constant 0 : i32
    %c0_i32_1 = arith.constant 0 : i32
    return %c0_i32, %c0_i32_0 : i32, i32
  }
  func.func @transform_28(%arg0: i32) -> (i32, i32, i32) {
    %c0_i32 = arith.constant 0 : i32
    %c0_i32_0 = arith.constant 0 : i32
    %c0_i32_1 = arith.constant 0 : i32
    %c0_i32_2 = arith.constant 0 : i32
    return %c0_i32, %c0_i32_0, %c0_i32_1 : i32, i32, i32
  }
  func.func @transform_29(%arg0: i32) -> (i32, i32, i32) {
    %c0_i32 = arith.constant 0 : i32
    %c0_i32_0 = arith.constant 0 : i32
    %c0_i32_1 = arith.constant 0 : i32
    %c0_i32_2 = arith.constant 0 : i32
    return %c0_i32, %c0_i32_0, %c0_i32_1 : i32, i32, i32
  }
  func.func @transform_30(%arg0: i32) -> (i32, i32, i32) {
    %c0_i32 = arith.constant 0 : i32
    %c0_i32_0 = arith.constant 0 : i32
    %c0_i32_1 = arith.constant 0 : i32
    %c0_i32_2 = arith.constant 0 : i32
    return %c0_i32, %c0_i32_0, %c0_i32_1 : i32, i32, i32
  }
  func.func @transform_31(%arg0: i32) -> (i32, i32, i32) {
    %c0_i32 = arith.constant 0 : i32
    %c0_i32_0 = arith.constant 0 : i32
    %c0_i32_1 = arith.constant 0 : i32
    %c0_i32_2 = arith.constant 0 : i32
    return %c0_i32, %c0_i32_0, %c0_i32_1 : i32, i32, i32
  }
  func.func @transform_32(%arg0: i32) -> (i32, i32) {
    %c0_i32 = arith.constant 0 : i32
    %c0_i32_0 = arith.constant 0 : i32
    %c0_i32_1 = arith.constant 0 : i32
    return %c0_i32, %c0_i32_0 : i32, i32
  }
  func.func @transform_33(%arg0: i32) -> (i32, i32) {
    %c0_i32 = arith.constant 0 : i32
    %c0_i32_0 = arith.constant 0 : i32
    %c0_i32_1 = arith.constant 0 : i32
    return %c0_i32, %c0_i32_0 : i32, i32
  }
}

</mosaic_0001>

<llo_original>
// kernel: tpu_custom_call.1
$region0: #{tpu_custom_call.1}
  #allocation0 [shape = 'u32[]', space=smem, size = 0x4, offset = 0x4, fixed_abs, tag = 'smem constant byte address 0x4 - core index']
  #allocation1 [shape = 'u32[144,128]{1,0:T(1,128)}', space=vmem, size = 0x12000, scoped, tag = 'internal scratch']
  #allocation2 [shape = 'f32[8,128]{1,0:T(8,128)}', space=vmem, size = 0x1000, scoped, tag = 'scratch operand']
  #allocation3 [shape = 'f32[8,128]{1,0:T(8,128)}', space=vmem, size = 0x1000, scoped, tag = 'scratch operand']
  #allocation4 [shape = 'f32[8,128]{1,0:T(8,128)}', space=vmem, size = 0x1000, scoped, tag = 'scratch operand']
  #allocation5 [shape = 'f32[8,128]{1,0:T(8,128)}', space=vmem, size = 0x1000, scoped, tag = 'scratch operand']
  #allocation6 [shape = 'f32[8,128]{1,0:T(8,128)}', space=vmem, size = 0x1000, scoped, tag = 'scratch operand']
  #allocation7 [shape = 'f32[16,128]{1,0:T(8,128)}', space=vmem, size = 0x2000, scoped, tag = 'scratch operand']
  #allocation8 [shape = 'f32[16,128]{1,0:T(8,128)}', space=vmem, size = 0x2000, scoped, tag = 'scratch operand']
  #allocation9 [shape = 'f32[144,128]{1,0:T(8,128)}', space=vmem, size = 0x12000, scoped, tag = 'scratch operand']
  %s0 = inlined_call_operand.smem [shape: u32[34], index: -1, kind: input, shape index: {}]
  %s1 = sld [smem:[%s0]]
  %s2 = scalar_lea.smem %s0, 1
  %s3 = sld [smem:[%s2]]
  %s4 = scalar_lea.smem %s0, 2
  %s5 = sld [smem:[%s4]]
  %s6 = scalar_lea.smem %s0, 3
  %s7 = sld [smem:[%s6]]
  %s8 = scalar_lea.smem %s0, 4
  %s9 = sld [smem:[%s8]]
  %s10 = scalar_lea.smem %s0, 5
  %s11 = sld [smem:[%s10]]
  %s12 = scalar_lea.smem %s0, 6
  %s13 = sld [smem:[%s12]]
  %s14 = scalar_lea.smem %s0, 7
  %s15 = sld [smem:[%s14]]
  %s16 = scalar_lea.smem %s0, 8
  %s17 = sld [smem:[%s16]]
  %s18 = scalar_lea.smem %s0, 9
  %s19 = sld [smem:[%s18]]
  %s20 = scalar_lea.smem %s0, 10
  %s21 = sld [smem:[%s20]]
  %s22 = scalar_lea.smem %s0, 11
  %s23 = sld [smem:[%s22]]
  %s24 = scalar_lea.smem %s0, 12
  %s25 = sld [smem:[%s24]]
  %s26 = scalar_lea.smem %s0, 13
  %s27 = sld [smem:[%s26]]
  %s28 = scalar_lea.smem %s0, 14
  %s29 = sld [smem:[%s28]]
  %s30 = scalar_lea.smem %s0, 15
  %s31 = sld [smem:[%s30]]
  %s32 = scalar_lea.smem %s0, 16
  %s33 = sld [smem:[%s32]]
  %s34 = scalar_lea.smem %s0, 17
  %s35 = sld [smem:[%s34]]
  %s36 = scalar_lea.smem %s0, 18
  %s37 = sld [smem:[%s36]]
  %s38 = scalar_lea.smem %s0, 19
  %s39 = sld [smem:[%s38]]
  %s40 = scalar_lea.smem %s0, 20
  %s41 = sld [smem:[%s40]]
  %s42 = scalar_lea.smem %s0, 21
  %s43 = sld [smem:[%s42]]
  %s44 = scalar_lea.smem %s0, 22
  %s45 = sld [smem:[%s44]]
  %s46 = scalar_lea.smem %s0, 23
  %s47 = sld [smem:[%s46]]
  %s48 = scalar_lea.smem %s0, 24
  %s49 = sld [smem:[%s48]]
  %s50 = scalar_lea.smem %s0, 25
  %s51 = sld [smem:[%s50]]
  %s52 = scalar_lea.smem %s0, 26
  %s53 = sld [smem:[%s52]]
  %s54 = scalar_lea.smem %s0, 27
  %s55 = sld [smem:[%s54]]
  %s56 = scalar_lea.smem %s0, 28
  %s57 = sld [smem:[%s56]]
  %s58 = scalar_lea.smem %s0, 29
  %s59 = sld [smem:[%s58]]
  %s60 = scalar_lea.smem %s0, 30
  %s61 = sld [smem:[%s60]]
  %s62 = scalar_lea.smem %s0, 31
  %s63 = sld [smem:[%s62]]
  %s64 = scalar_lea.smem %s0, 32
  %s65 = sld [smem:[%s64]]
  %s66 = scalar_lea.smem %s0, 33
  %s67 = sld [smem:[%s66]]
  %s68 = sld [smem:[#allocation0]]
  $region169: #{tpu_custom_call.1} parent=0
    _
  %s70 = ssub.s32 1, %s68
  %s71 = scalar_select 0, %s70, %s68
  loop: start=0, step=1, limit=4
  $region2: #{tpu_custom_call.1} parent=0 // loop_pre_header
    _
  $region3: #{tpu_custom_call.1} parent=0 // loop_header
    %s73 = sphi 0, %s77
    %p74 = scmp.ge.s32.totalorder %s73, 4
    %s81 = sphi 0, %s81
    %s83 = sphi 0, %s81
    %s84 = sphi 0, %s83
    %s98 = sphi 0, %s84
    %s102 = sphi 0, %s102
    %s104 = sphi 0, %s102
    %s105 = sphi 0, %s104
    %s119 = sphi 0, %s105
    %s123 = sphi 0, %s123
    %s125 = sphi 0, %s123
    %s126 = sphi 0, %s125
    %s140 = sphi 0, %s126
    %s144 = sphi 0, %s144
    %s146 = sphi 0, %s144
    %s147 = sphi 0, %s146
    %s161 = sphi 0, %s147
    %s165 = sphi 0, %s165
    %s167 = sphi 0, %s165
    %s168 = sphi 0, %s167
    %s182 = sphi 0, %s168
    %s186 = sphi 0, %s186
    %s188 = sphi 0, %s186
    %s189 = sphi 0, %s188
    %s203 = sphi 0, %s189
    %s207 = sphi 0, %s207
    %s209 = sphi 0, %s207
    %s210 = sphi 0, %s209
    %s224 = sphi 0, %s210
    %s228 = sphi 0, %s228
    %s230 = sphi 0, %s228
    %s231 = sphi 0, %s230
    %s245 = sphi 0, %s231
    %s249 = sphi 0, %s249
    %s251 = sphi 0, %s249
    %s252 = sphi 0, %s251
    %s266 = sphi 0, %s252
    %s270 = sphi 0, %s270
    %s272 = sphi 0, %s270
    %s273 = sphi 0, %s272
    %s287 = sphi 0, %s273
    %s291 = sphi 0, %s291
    %s293 = sphi 0, %s291
    %s294 = sphi 0, %s293
    %s308 = sphi 0, %s294
    %s312 = sphi 0, %s312
    %s314 = sphi 0, %s312
    %s315 = sphi 0, %s314
    %s329 = sphi 0, %s315
    %s333 = sphi 0, %s333
    %s335 = sphi 0, %s333
    %s336 = sphi 0, %s335
    %s350 = sphi 0, %s336
    %s354 = sphi 0, %s354
    %s356 = sphi 0, %s354
    %s357 = sphi 0, %s356
    %s371 = sphi 0, %s357
    %s375 = sphi 0, %s375
    %s377 = sphi 0, %s375
    %s378 = sphi 0, %s377
    %s392 = sphi 0, %s378
    %s396 = sphi 0, %s396
    %s398 = sphi 0, %s396
    %s399 = sphi 0, %s398
    %s413 = sphi 0, %s399
    %s417 = sphi 0, %s417
    %s419 = sphi 0, %s417
    %s420 = sphi 0, %s419
    %s434 = sphi 0, %s420
    %s438 = sphi 0, %s438
    %s440 = sphi 0, %s438
    %s441 = sphi 0, %s440
    %s455 = sphi 0, %s441
    %s459 = sphi 0, %s459
    %s461 = sphi 0, %s459
    %s462 = sphi 0, %s461
    %s476 = sphi 0, %s462
    %s480 = sphi 0, %s480
    %s482 = sphi 0, %s480
    %s483 = sphi 0, %s482
    %s497 = sphi 0, %s483
    %s501 = sphi 0, %s501
    %s503 = sphi 0, %s501
    %s504 = sphi 0, %s503
    %s518 = sphi 0, %s504
    %s522 = sphi 0, %s522
    %s524 = sphi 0, %s522
    %s525 = sphi 0, %s524
    %s539 = sphi 0, %s525
    %s543 = sphi 0, %s543
    %s545 = sphi 0, %s543
    %s546 = sphi 0, %s545
    %s560 = sphi 0, %s546
    %s564 = sphi 0, %s564
    %s566 = sphi 0, %s564
    %s567 = sphi 0, %s566
    %s581 = sphi 0, %s567
    %s585 = sphi 0, %s585
    %s587 = sphi 0, %s585
    %s588 = sphi 0, %s587
    %s602 = sphi 0, %s588
    %s606 = sphi 0, %s606
    %s608 = sphi 0, %s606
    %s609 = sphi 0, %s608
    %s623 = sphi 0, %s609
    %s627 = sphi 0, %s627
    %s629 = sphi 0, %s627
    %s630 = sphi 0, %s629
    %s644 = sphi 0, %s630
    %s648 = sphi 0, %s648
    %s650 = sphi 0, %s648
    %s651 = sphi 0, %s650
    %s665 = sphi 0, %s651
    %s669 = sphi 0, %s669
    %s671 = sphi 0, %s669
    %s672 = sphi 0, %s671
    %s686 = sphi 0, %s672
    %s690 = sphi 0, %s690
    %s692 = sphi 0, %s690
    %s693 = sphi 0, %s692
    %s707 = sphi 0, %s693
    %s711 = sphi 0, %s711
    %s713 = sphi 0, %s711
    %s714 = sphi 0, %s713
    %s728 = sphi 0, %s714
    %s732 = sphi 0, %s732
    %s734 = sphi 0, %s732
    %s735 = sphi 0, %s734
    %s749 = sphi 0, %s735
    %s753 = sphi 0, %s753
    %s755 = sphi 0, %s753
    %s756 = sphi 0, %s755
    %s770 = sphi 0, %s756
    %s774 = sphi 0, %s774
    %s776 = sphi 0, %s774
    %s777 = sphi 0, %s776
    %s791 = sphi 0, %s777
  $region4: #{tpu_custom_call.1} parent=0 // loop_header_branch
    %76 = sbr.rel (%p74) target = $region8
  $region5: #{tpu_custom_call.1} parent=0 // loop_body
    %s78 = ssub.s32 %s73, 1
    %s79 = ssub.s32 %s73, 2
    %s80 = sadd.s32 %s73, 1
    %s82 = sadd.s32 %s81, 1
    %p85 = scmp.eq.s32.totalorder %s73, 1
    %p86 = scmp.ne.s32.totalorder %s81, %s83
    %p87 = scmp.eq.s32.totalorder %s73, 0
    %p88 = por %p86, %p87
    %p89 = scmp.ne.s32.totalorder %s81, %s83
    %p90 = scmp.eq.s32.totalorder %s78, 1
    %p91 = por %p89, %p90
    %p92 = scmp.ne.s32.totalorder %s83, %s84
    %p93 = scmp.eq.s32.totalorder %s78, 0
    %p94 = por %p92, %p93
    %p95 = scmp.ne.s32.totalorder %s83, %s84
    %p96 = scmp.eq.s32.totalorder %s79, 1
    %p97 = por %p95, %p96
    %p99 = scmp.ne.s32.totalorder %s84, %s98
    %p100 = scmp.eq.s32.totalorder %s79, 0
    %p101 = por %p99, %p100
    %s103 = sadd.s32 %s102, 1
    %p106 = scmp.eq.s32.totalorder %s73, 1
    %p107 = scmp.ne.s32.totalorder %s102, %s104
    %p108 = scmp.eq.s32.totalorder %s73, 0
    %p109 = por %p107, %p108
    %p110 = scmp.ne.s32.totalorder %s102, %s104
    %p111 = scmp.eq.s32.totalorder %s78, 1
    %p112 = por %p110, %p111
    %p113 = scmp.ne.s32.totalorder %s104, %s105
    %p114 = scmp.eq.s32.totalorder %s78, 0
    %p115 = por %p113, %p114
    %p116 = scmp.ne.s32.totalorder %s104, %s105
    %p117 = scmp.eq.s32.totalorder %s79, 1
    %p118 = por %p116, %p117
    %p120 = scmp.ne.s32.totalorder %s105, %s119
    %p121 = scmp.eq.s32.totalorder %s79, 0
    %p122 = por %p120, %p121
    %s124 = sadd.s32 %s123, 1
    %p127 = scmp.eq.s32.totalorder %s73, 1
    %p128 = scmp.ne.s32.totalorder %s123, %s125
    %p129 = scmp.eq.s32.totalorder %s73, 0
    %p130 = por %p128, %p129
    %p131 = scmp.ne.s32.totalorder %s123, %s125
    %p132 = scmp.eq.s32.totalorder %s78, 1
    %p133 = por %p131, %p132
    %p134 = scmp.ne.s32.totalorder %s125, %s126
    %p135 = scmp.eq.s32.totalorder %s78, 0
    %p136 = por %p134, %p135
    %p137 = scmp.ne.s32.totalorder %s125, %s126
    %p138 = scmp.eq.s32.totalorder %s79, 1
    %p139 = por %p137, %p138
    %p141 = scmp.ne.s32.totalorder %s126, %s140
    %p142 = scmp.eq.s32.totalorder %s79, 0
    %p143 = por %p141, %p142
    %s145 = sadd.s32 %s144, 1
    %p148 = scmp.eq.s32.totalorder %s73, 1
    %p149 = scmp.ne.s32.totalorder %s144, %s146
    %p150 = scmp.eq.s32.totalorder %s73, 0
    %p151 = por %p149, %p150
    %p152 = scmp.ne.s32.totalorder %s144, %s146
    %p153 = scmp.eq.s32.totalorder %s78, 1
    %p154 = por %p152, %p153
    %p155 = scmp.ne.s32.totalorder %s146, %s147
    %p156 = scmp.eq.s32.totalorder %s78, 0
    %p157 = por %p155, %p156
    %p158 = scmp.ne.s32.totalorder %s146, %s147
    %p159 = scmp.eq.s32.totalorder %s79, 1
    %p160 = por %p158, %p159
    %p162 = scmp.ne.s32.totalorder %s147, %s161
    %p163 = scmp.eq.s32.totalorder %s79, 0
    %p164 = por %p162, %p163
    %s166 = sadd.s32 %s165, 1
    %p169 = scmp.eq.s32.totalorder %s73, 1
    %p170 = scmp.ne.s32.totalorder %s165, %s167
    %p171 = scmp.eq.s32.totalorder %s73, 0
    %p172 = por %p170, %p171
    %p173 = scmp.ne.s32.totalorder %s165, %s167
    %p174 = scmp.eq.s32.totalorder %s78, 1
    %p175 = por %p173, %p174
    %p176 = scmp.ne.s32.totalorder %s167, %s168
    %p177 = scmp.eq.s32.totalorder %s78, 0
    %p178 = por %p176, %p177
    %p179 = scmp.ne.s32.totalorder %s167, %s168
    %p180 = scmp.eq.s32.totalorder %s79, 1
    %p181 = por %p179, %p180
    %p183 = scmp.ne.s32.totalorder %s168, %s182
    %p184 = scmp.eq.s32.totalorder %s79, 0
    %p185 = por %p183, %p184
    %s187 = sadd.s32 %s186, 1
    %p190 = scmp.eq.s32.totalorder %s73, 1
    %p191 = scmp.ne.s32.totalorder %s186, %s188
    %p192 = scmp.eq.s32.totalorder %s73, 0
    %p193 = por %p191, %p192
    %p194 = scmp.ne.s32.totalorder %s186, %s188
    %p195 = scmp.eq.s32.totalorder %s78, 1
    %p196 = por %p194, %p195
    %p197 = scmp.ne.s32.totalorder %s188, %s189
    %p198 = scmp.eq.s32.totalorder %s78, 0
    %p199 = por %p197, %p198
    %p200 = scmp.ne.s32.totalorder %s188, %s189
    %p201 = scmp.eq.s32.totalorder %s79, 1
    %p202 = por %p200, %p201
    %p204 = scmp.ne.s32.totalorder %s189, %s203
    %p205 = scmp.eq.s32.totalorder %s79, 0
    %p206 = por %p204, %p205
    %s208 = sadd.s32 %s207, 1
    %p211 = scmp.eq.s32.totalorder %s73, 1
    %p212 = scmp.ne.s32.totalorder %s207, %s209
    %p213 = scmp.eq.s32.totalorder %s73, 0
    %p214 = por %p212, %p213
    %p215 = scmp.ne.s32.totalorder %s207, %s209
    %p216 = scmp.eq.s32.totalorder %s78, 1
    %p217 = por %p215, %p216
    %p218 = scmp.ne.s32.totalorder %s209, %s210
    %p219 = scmp.eq.s32.totalorder %s78, 0
    %p220 = por %p218, %p219
    %p221 = scmp.ne.s32.totalorder %s209, %s210
    %p222 = scmp.eq.s32.totalorder %s79, 1
    %p223 = por %p221, %p222
    %p225 = scmp.ne.s32.totalorder %s210, %s224
    %p226 = scmp.eq.s32.totalorder %s79, 0
    %p227 = por %p225, %p226
    %s229 = sadd.s32 %s228, 1
    %p232 = scmp.eq.s32.totalorder %s73, 1
    %p233 = scmp.ne.s32.totalorder %s228, %s230
    %p234 = scmp.eq.s32.totalorder %s73, 0
    %p235 = por %p233, %p234
    %p236 = scmp.ne.s32.totalorder %s228, %s230
    %p237 = scmp.eq.s32.totalorder %s78, 1
    %p238 = por %p236, %p237
    %p239 = scmp.ne.s32.totalorder %s230, %s231
    %p240 = scmp.eq.s32.totalorder %s78, 0
    %p241 = por %p239, %p240
    %p242 = scmp.ne.s32.totalorder %s230, %s231
    %p243 = scmp.eq.s32.totalorder %s79, 1
    %p244 = por %p242, %p243
    %p246 = scmp.ne.s32.totalorder %s231, %s245
    %p247 = scmp.eq.s32.totalorder %s79, 0
    %p248 = por %p246, %p247
    %s250 = sadd.s32 %s249, 1
    %p253 = scmp.eq.s32.totalorder %s73, 1
    %p254 = scmp.ne.s32.totalorder %s249, %s251
    %p255 = scmp.eq.s32.totalorder %s73, 0
    %p256 = por %p254, %p255
    %p257 = scmp.ne.s32.totalorder %s249, %s251
    %p258 = scmp.eq.s32.totalorder %s78, 1
    %p259 = por %p257, %p258
    %p260 = scmp.ne.s32.totalorder %s251, %s252
    %p261 = scmp.eq.s32.totalorder %s78, 0
    %p262 = por %p260, %p261
    %p263 = scmp.ne.s32.totalorder %s251, %s252
    %p264 = scmp.eq.s32.totalorder %s79, 1
    %p265 = por %p263, %p264
    %p267 = scmp.ne.s32.totalorder %s252, %s266
    %p268 = scmp.eq.s32.totalorder %s79, 0
    %p269 = por %p267, %p268
    %s271 = sadd.s32 %s270, 1
    %p274 = scmp.eq.s32.totalorder %s73, 1
    %p275 = scmp.ne.s32.totalorder %s270, %s272
    %p276 = scmp.eq.s32.totalorder %s73, 0
    %p277 = por %p275, %p276
    %p278 = scmp.ne.s32.totalorder %s270, %s272
    %p279 = scmp.eq.s32.totalorder %s78, 1
    %p280 = por %p278, %p279
    %p281 = scmp.ne.s32.totalorder %s272, %s273
    %p282 = scmp.eq.s32.totalorder %s78, 0
    %p283 = por %p281, %p282
    %p284 = scmp.ne.s32.totalorder %s272, %s273
    %p285 = scmp.eq.s32.totalorder %s79, 1
    %p286 = por %p284, %p285
    %p288 = scmp.ne.s32.totalorder %s273, %s287
    %p289 = scmp.eq.s32.totalorder %s79, 0
    %p290 = por %p288, %p289
    %s292 = sadd.s32 %s291, 1
    %p295 = scmp.eq.s32.totalorder %s73, 1
    %p296 = scmp.ne.s32.totalorder %s291, %s293
    %p297 = scmp.eq.s32.totalorder %s73, 0
    %p298 = por %p296, %p297
    %p299 = scmp.ne.s32.totalorder %s291, %s293
    %p300 = scmp.eq.s32.totalorder %s78, 1
    %p301 = por %p299, %p300
    %p302 = scmp.ne.s32.totalorder %s293, %s294
    %p303 = scmp.eq.s32.totalorder %s78, 0
    %p304 = por %p302, %p303
    %p305 = scmp.ne.s32.totalorder %s293, %s294
    %p306 = scmp.eq.s32.totalorder %s79, 1
    %p307 = por %p305, %p306
    %p309 = scmp.ne.s32.totalorder %s294, %s308
    %p310 = scmp.eq.s32.totalorder %s79, 0
    %p311 = por %p309, %p310
    %s313 = sadd.s32 %s312, 1
    %p316 = scmp.eq.s32.totalorder %s73, 1
    %p317 = scmp.ne.s32.totalorder %s312, %s314
    %p318 = scmp.eq.s32.totalorder %s73, 0
    %p319 = por %p317, %p318
    %p320 = scmp.ne.s32.totalorder %s312, %s314
    %p321 = scmp.eq.s32.totalorder %s78, 1
    %p322 = por %p320, %p321
    %p323 = scmp.ne.s32.totalorder %s314, %s315
    %p324 = scmp.eq.s32.totalorder %s78, 0
    %p325 = por %p323, %p324
    %p326 = scmp.ne.s32.totalorder %s314, %s315
    %p327 = scmp.eq.s32.totalorder %s79, 1
    %p328 = por %p326, %p327
    %p330 = scmp.ne.s32.totalorder %s315, %s329
    %p331 = scmp.eq.s32.totalorder %s79, 0
    %p332 = por %p330, %p331
    %s334 = sadd.s32 %s333, 1
    %p337 = scmp.eq.s32.totalorder %s73, 1
    %p338 = scmp.ne.s32.totalorder %s333, %s335
    %p339 = scmp.eq.s32.totalorder %s73, 0
    %p340 = por %p338, %p339
    %p341 = scmp.ne.s32.totalorder %s333, %s335
    %p342 = scmp.eq.s32.totalorder %s78, 1
    %p343 = por %p341, %p342
    %p344 = scmp.ne.s32.totalorder %s335, %s336
    %p345 = scmp.eq.s32.totalorder %s78, 0
    %p346 = por %p344, %p345
    %p347 = scmp.ne.s32.totalorder %s335, %s336
    %p348 = scmp.eq.s32.totalorder %s79, 1
    %p349 = por %p347, %p348
    %p351 = scmp.ne.s32.totalorder %s336, %s350
    %p352 = scmp.eq.s32.totalorder %s79, 0
    %p353 = por %p351, %p352
    %s355 = sadd.s32 %s354, 1
    %p358 = scmp.eq.s32.totalorder %s73, 1
    %p359 = scmp.ne.s32.totalorder %s354, %s356
    %p360 = scmp.eq.s32.totalorder %s73, 0
    %p361 = por %p359, %p360
    %p362 = scmp.ne.s32.totalorder %s354, %s356
    %p363 = scmp.eq.s32.totalorder %s78, 1
    %p364 = por %p362, %p363
    %p365 = scmp.ne.s32.totalorder %s356, %s357
    %p366 = scmp.eq.s32.totalorder %s78, 0
    %p367 = por %p365, %p366
    %p368 = scmp.ne.s32.totalorder %s356, %s357
    %p369 = scmp.eq.s32.totalorder %s79, 1
    %p370 = por %p368, %p369
    %p372 = scmp.ne.s32.totalorder %s357, %s371
    %p373 = scmp.eq.s32.totalorder %s79, 0
    %p374 = por %p372, %p373
    %s376 = sadd.s32 %s375, 1
    %p379 = scmp.eq.s32.totalorder %s73, 1
    %p380 = scmp.ne.s32.totalorder %s375, %s377
    %p381 = scmp.eq.s32.totalorder %s73, 0
    %p382 = por %p380, %p381
    %p383 = scmp.ne.s32.totalorder %s375, %s377
    %p384 = scmp.eq.s32.totalorder %s78, 1
    %p385 = por %p383, %p384
    %p386 = scmp.ne.s32.totalorder %s377, %s378
    %p387 = scmp.eq.s32.totalorder %s78, 0
    %p388 = por %p386, %p387
    %p389 = scmp.ne.s32.totalorder %s377, %s378
    %p390 = scmp.eq.s32.totalorder %s79, 1
    %p391 = por %p389, %p390
    %p393 = scmp.ne.s32.totalorder %s378, %s392
    %p394 = scmp.eq.s32.totalorder %s79, 0
    %p395 = por %p393, %p394
    %s397 = sadd.s32 %s396, 1
    %p400 = scmp.eq.s32.totalorder %s73, 1
    %p401 = scmp.ne.s32.totalorder %s396, %s398
    %p402 = scmp.eq.s32.totalorder %s73, 0
    %p403 = por %p401, %p402
    %p404 = scmp.ne.s32.totalorder %s396, %s398
    %p405 = scmp.eq.s32.totalorder %s78, 1
    %p406 = por %p404, %p405
    %p407 = scmp.ne.s32.totalorder %s398, %s399
    %p408 = scmp.eq.s32.totalorder %s78, 0
    %p409 = por %p407, %p408
    %p410 = scmp.ne.s32.totalorder %s398, %s399
    %p411 = scmp.eq.s32.totalorder %s79, 1
    %p412 = por %p410, %p411
    %p414 = scmp.ne.s32.totalorder %s399, %s413
    %p415 = scmp.eq.s32.totalorder %s79, 0
    %p416 = por %p414, %p415
    %s418 = sadd.s32 %s417, 1
    %p421 = scmp.eq.s32.totalorder %s73, 1
    %p422 = scmp.ne.s32.totalorder %s417, %s419
    %p423 = scmp.eq.s32.totalorder %s73, 0
    %p424 = por %p422, %p423
    %p425 = scmp.ne.s32.totalorder %s417, %s419
    %p426 = scmp.eq.s32.totalorder %s78, 1
    %p427 = por %p425, %p426
    %p428 = scmp.ne.s32.totalorder %s419, %s420
    %p429 = scmp.eq.s32.totalorder %s78, 0
    %p430 = por %p428, %p429
    %p431 = scmp.ne.s32.totalorder %s419, %s420
    %p432 = scmp.eq.s32.totalorder %s79, 1
    %p433 = por %p431, %p432
    %p435 = scmp.ne.s32.totalorder %s420, %s434
    %p436 = scmp.eq.s32.totalorder %s79, 0
    %p437 = por %p435, %p436
    %s439 = sadd.s32 %s438, 1
    %p442 = scmp.eq.s32.totalorder %s73, 1
    %p443 = scmp.ne.s32.totalorder %s438, %s440
    %p444 = scmp.eq.s32.totalorder %s73, 0
    %p445 = por %p443, %p444
    %p446 = scmp.ne.s32.totalorder %s438, %s440
    %p447 = scmp.eq.s32.totalorder %s78, 1
    %p448 = por %p446, %p447
    %p449 = scmp.ne.s32.totalorder %s440, %s441
    %p450 = scmp.eq.s32.totalorder %s78, 0
    %p451 = por %p449, %p450
    %p452 = scmp.ne.s32.totalorder %s440, %s441
    %p453 = scmp.eq.s32.totalorder %s79, 1
    %p454 = por %p452, %p453
    %p456 = scmp.ne.s32.totalorder %s441, %s455
    %p457 = scmp.eq.s32.totalorder %s79, 0
    %p458 = por %p456, %p457
    %s460 = sadd.s32 %s459, 1
    %p463 = scmp.eq.s32.totalorder %s73, 1
    %p464 = scmp.ne.s32.totalorder %s459, %s461
    %p465 = scmp.eq.s32.totalorder %s73, 0
    %p466 = por %p464, %p465
    %p467 = scmp.ne.s32.totalorder %s459, %s461
    %p468 = scmp.eq.s32.totalorder %s78, 1
    %p469 = por %p467, %p468
    %p470 = scmp.ne.s32.totalorder %s461, %s462
    %p471 = scmp.eq.s32.totalorder %s78, 0
    %p472 = por %p470, %p471
    %p473 = scmp.ne.s32.totalorder %s461, %s462
    %p474 = scmp.eq.s32.totalorder %s79, 1
    %p475 = por %p473, %p474
    %p477 = scmp.ne.s32.totalorder %s462, %s476
    %p478 = scmp.eq.s32.totalorder %s79, 0
    %p479 = por %p477, %p478
    %s481 = sadd.s32 %s480, 1
    %p484 = scmp.eq.s32.totalorder %s73, 1
    %p485 = scmp.ne.s32.totalorder %s480, %s482
    %p486 = scmp.eq.s32.totalorder %s73, 0
    %p487 = por %p485, %p486
    %p488 = scmp.ne.s32.totalorder %s480, %s482
    %p489 = scmp.eq.s32.totalorder %s78, 1
    %p490 = por %p488, %p489
    %p491 = scmp.ne.s32.totalorder %s482, %s483
    %p492 = scmp.eq.s32.totalorder %s78, 0
    %p493 = por %p491, %p492
    %p494 = scmp.ne.s32.totalorder %s482, %s483
    %p495 = scmp.eq.s32.totalorder %s79, 1
    %p496 = por %p494, %p495
    %p498 = scmp.ne.s32.totalorder %s483, %s497
    %p499 = scmp.eq.s32.totalorder %s79, 0
    %p500 = por %p498, %p499
    %s502 = sadd.s32 %s501, 1
    %p505 = scmp.eq.s32.totalorder %s73, 1
    %p506 = scmp.ne.s32.totalorder %s501, %s503
    %p507 = scmp.eq.s32.totalorder %s73, 0
    %p508 = por %p506, %p507
    %p509 = scmp.ne.s32.totalorder %s501, %s503
    %p510 = scmp.eq.s32.totalorder %s78, 1
    %p511 = por %p509, %p510
    %p512 = scmp.ne.s32.totalorder %s503, %s504
    %p513 = scmp.eq.s32.totalorder %s78, 0
    %p514 = por %p512, %p513
    %p515 = scmp.ne.s32.totalorder %s503, %s504
    %p516 = scmp.eq.s32.totalorder %s79, 1
    %p517 = por %p515, %p516
    %p519 = scmp.ne.s32.totalorder %s504, %s518
    %p520 = scmp.eq.s32.totalorder %s79, 0
    %p521 = por %p519, %p520
    %s523 = sadd.s32 %s522, 1
    %p526 = scmp.eq.s32.totalorder %s73, 1
    %p527 = scmp.ne.s32.totalorder %s522, %s524
    %p528 = scmp.eq.s32.totalorder %s73, 0
    %p529 = por %p527, %p528
    %p530 = scmp.ne.s32.totalorder %s522, %s524
    %p531 = scmp.eq.s32.totalorder %s78, 1
    %p532 = por %p530, %p531
    %p533 = scmp.ne.s32.totalorder %s524, %s525
    %p534 = scmp.eq.s32.totalorder %s78, 0
    %p535 = por %p533, %p534
    %p536 = scmp.ne.s32.totalorder %s524, %s525
    %p537 = scmp.eq.s32.totalorder %s79, 1
    %p538 = por %p536, %p537
    %p540 = scmp.ne.s32.totalorder %s525, %s539
    %p541 = scmp.eq.s32.totalorder %s79, 0
    %p542 = por %p540, %p541
    %s544 = sadd.s32 %s543, 1
    %p547 = scmp.eq.s32.totalorder %s73, 1
    %p548 = scmp.ne.s32.totalorder %s543, %s545
    %p549 = scmp.eq.s32.totalorder %s73, 0
    %p550 = por %p548, %p549
    %p551 = scmp.ne.s32.totalorder %s543, %s545
    %p552 = scmp.eq.s32.totalorder %s78, 1
    %p553 = por %p551, %p552
    %p554 = scmp.ne.s32.totalorder %s545, %s546
    %p555 = scmp.eq.s32.totalorder %s78, 0
    %p556 = por %p554, %p555
    %p557 = scmp.ne.s32.totalorder %s545, %s546
    %p558 = scmp.eq.s32.totalorder %s79, 1
    %p559 = por %p557, %p558
    %p561 = scmp.ne.s32.totalorder %s546, %s560
    %p562 = scmp.eq.s32.totalorder %s79, 0
    %p563 = por %p561, %p562
    %s565 = sadd.s32 %s564, 1
    %p568 = scmp.eq.s32.totalorder %s73, 1
    %p569 = scmp.ne.s32.totalorder %s564, %s566
    %p570 = scmp.eq.s32.totalorder %s73, 0
    %p571 = por %p569, %p570
    %p572 = scmp.ne.s32.totalorder %s564, %s566
    %p573 = scmp.eq.s32.totalorder %s78, 1
    %p574 = por %p572, %p573
    %p575 = scmp.ne.s32.totalorder %s566, %s567
    %p576 = scmp.eq.s32.totalorder %s78, 0
    %p577 = por %p575, %p576
    %p578 = scmp.ne.s32.totalorder %s566, %s567
    %p579 = scmp.eq.s32.totalorder %s79, 1
    %p580 = por %p578, %p579
    %p582 = scmp.ne.s32.totalorder %s567, %s581
    %p583 = scmp.eq.s32.totalorder %s79, 0
    %p584 = por %p582, %p583
    %s586 = sadd.s32 %s585, 1
    %p589 = scmp.eq.s32.totalorder %s73, 1
    %p590 = scmp.ne.s32.totalorder %s585, %s587
    %p591 = scmp.eq.s32.totalorder %s73, 0
    %p592 = por %p590, %p591
    %p593 = scmp.ne.s32.totalorder %s585, %s587
    %p594 = scmp.eq.s32.totalorder %s78, 1
    %p595 = por %p593, %p594
    %p596 = scmp.ne.s32.totalorder %s587, %s588
    %p597 = scmp.eq.s32.totalorder %s78, 0
    %p598 = por %p596, %p597
    %p599 = scmp.ne.s32.totalorder %s587, %s588
    %p600 = scmp.eq.s32.totalorder %s79, 1
    %p601 = por %p599, %p600
    %p603 = scmp.ne.s32.totalorder %s588, %s602
    %p604 = scmp.eq.s32.totalorder %s79, 0
    %p605 = por %p603, %p604
    %s607 = sadd.s32 %s606, 1
    %p610 = scmp.eq.s32.totalorder %s73, 1
    %p611 = scmp.ne.s32.totalorder %s606, %s608
    %p612 = scmp.eq.s32.totalorder %s73, 0
    %p613 = por %p611, %p612
    %p614 = scmp.ne.s32.totalorder %s606, %s608
    %p615 = scmp.eq.s32.totalorder %s78, 1
    %p616 = por %p614, %p615
    %p617 = scmp.ne.s32.totalorder %s608, %s609
    %p618 = scmp.eq.s32.totalorder %s78, 0
    %p619 = por %p617, %p618
    %p620 = scmp.ne.s32.totalorder %s608, %s609
    %p621 = scmp.eq.s32.totalorder %s79, 1
    %p622 = por %p620, %p621
    %p624 = scmp.ne.s32.totalorder %s609, %s623
    %p625 = scmp.eq.s32.totalorder %s79, 0
    %p626 = por %p624, %p625
    %s628 = sadd.s32 %s627, 1
    %p631 = scmp.eq.s32.totalorder %s73, 1
    %p632 = scmp.ne.s32.totalorder %s627, %s629
    %p633 = scmp.eq.s32.totalorder %s73, 0
    %p634 = por %p632, %p633
    %p635 = scmp.ne.s32.totalorder %s627, %s629
    %p636 = scmp.eq.s32.totalorder %s78, 1
    %p637 = por %p635, %p636
    %p638 = scmp.ne.s32.totalorder %s629, %s630
    %p639 = scmp.eq.s32.totalorder %s78, 0
    %p640 = por %p638, %p639
    %p641 = scmp.ne.s32.totalorder %s629, %s630
    %p642 = scmp.eq.s32.totalorder %s79, 1
    %p643 = por %p641, %p642
    %p645 = scmp.ne.s32.totalorder %s630, %s644
    %p646 = scmp.eq.s32.totalorder %s79, 0
    %p647 = por %p645, %p646
    %s649 = sadd.s32 %s648, 1
    %p652 = scmp.eq.s32.totalorder %s73, 1
    %p653 = scmp.ne.s32.totalorder %s648, %s650
    %p654 = scmp.eq.s32.totalorder %s73, 0
    %p655 = por %p653, %p654
    %p656 = scmp.ne.s32.totalorder %s648, %s650
    %p657 = scmp.eq.s32.totalorder %s78, 1
    %p658 = por %p656, %p657
    %p659 = scmp.ne.s32.totalorder %s650, %s651
    %p660 = scmp.eq.s32.totalorder %s78, 0
    %p661 = por %p659, %p660
    %p662 = scmp.ne.s32.totalorder %s650, %s651
    %p663 = scmp.eq.s32.totalorder %s79, 1
    %p664 = por %p662, %p663
    %p666 = scmp.ne.s32.totalorder %s651, %s665
    %p667 = scmp.eq.s32.totalorder %s79, 0
    %p668 = por %p666, %p667
    %s670 = sadd.s32 %s669, 1
    %p673 = scmp.eq.s32.totalorder %s73, 1
    %p674 = scmp.ne.s32.totalorder %s669, %s671
    %p675 = scmp.eq.s32.totalorder %s73, 0
    %p676 = por %p674, %p675
    %p677 = scmp.ne.s32.totalorder %s669, %s671
    %p678 = scmp.eq.s32.totalorder %s78, 1
    %p679 = por %p677, %p678
    %p680 = scmp.ne.s32.totalorder %s671, %s672
    %p681 = scmp.eq.s32.totalorder %s78, 0
    %p682 = por %p680, %p681
    %p683 = scmp.ne.s32.totalorder %s671, %s672
    %p684 = scmp.eq.s32.totalorder %s79, 1
    %p685 = por %p683, %p684
    %p687 = scmp.ne.s32.totalorder %s672, %s686
    %p688 = scmp.eq.s32.totalorder %s79, 0
    %p689 = por %p687, %p688
    %s691 = sadd.s32 %s690, 1
    %p694 = scmp.eq.s32.totalorder %s73, 1
    %p695 = scmp.ne.s32.totalorder %s690, %s692
    %p696 = scmp.eq.s32.totalorder %s73, 0
    %p697 = por %p695, %p696
    %p698 = scmp.ne.s32.totalorder %s690, %s692
    %p699 = scmp.eq.s32.totalorder %s78, 1
    %p700 = por %p698, %p699
    %p701 = scmp.ne.s32.totalorder %s692, %s693
    %p702 = scmp.eq.s32.totalorder %s78, 0
    %p703 = por %p701, %p702
    %p704 = scmp.ne.s32.totalorder %s692, %s693
    %p705 = scmp.eq.s32.totalorder %s79, 1
    %p706 = por %p704, %p705
    %p708 = scmp.ne.s32.totalorder %s693, %s707
    %p709 = scmp.eq.s32.totalorder %s79, 0
    %p710 = por %p708, %p709
    %s712 = sadd.s32 %s711, 1
    %p715 = scmp.eq.s32.totalorder %s73, 1
    %p716 = scmp.ne.s32.totalorder %s711, %s713
    %p717 = scmp.eq.s32.totalorder %s73, 0
    %p718 = por %p716, %p717
    %p719 = scmp.ne.s32.totalorder %s711, %s713
    %p720 = scmp.eq.s32.totalorder %s78, 1
    %p721 = por %p719, %p720
    %p722 = scmp.ne.s32.totalorder %s713, %s714
    %p723 = scmp.eq.s32.totalorder %s78, 0
    %p724 = por %p722, %p723
    %p725 = scmp.ne.s32.totalorder %s713, %s714
    %p726 = scmp.eq.s32.totalorder %s79, 1
    %p727 = por %p725, %p726
    %p729 = scmp.ne.s32.totalorder %s714, %s728
    %p730 = scmp.eq.s32.totalorder %s79, 0
    %p731 = por %p729, %p730
    %s733 = sadd.s32 %s732, 1
    %p736 = scmp.eq.s32.totalorder %s73, 1
    %p737 = scmp.ne.s32.totalorder %s732, %s734
    %p738 = scmp.eq.s32.totalorder %s73, 0
    %p739 = por %p737, %p738
    %p740 = scmp.ne.s32.totalorder %s732, %s734
    %p741 = scmp.eq.s32.totalorder %s78, 1
    %p742 = por %p740, %p741
    %p743 = scmp.ne.s32.totalorder %s734, %s735
    %p744 = scmp.eq.s32.totalorder %s78, 0
    %p745 = por %p743, %p744
    %p746 = scmp.ne.s32.totalorder %s734, %s735
    %p747 = scmp.eq.s32.totalorder %s79, 1
    %p748 = por %p746, %p747
    %p750 = scmp.ne.s32.totalorder %s735, %s749
    %p751 = scmp.eq.s32.totalorder %s79, 0
    %p752 = por %p750, %p751
    %s754 = sadd.s32 %s753, 1
    %p757 = scmp.eq.s32.totalorder %s73, 1
    %p758 = scmp.ne.s32.totalorder %s753, %s755
    %p759 = scmp.eq.s32.totalorder %s73, 0
    %p760 = por %p758, %p759
    %p761 = scmp.ne.s32.totalorder %s753, %s755
    %p762 = scmp.eq.s32.totalorder %s78, 1
    %p763 = por %p761, %p762
    %p764 = scmp.ne.s32.totalorder %s755, %s756
    %p765 = scmp.eq.s32.totalorder %s78, 0
    %p766 = por %p764, %p765
    %p767 = scmp.ne.s32.totalorder %s755, %s756
    %p768 = scmp.eq.s32.totalorder %s79, 1
    %p769 = por %p767, %p768
    %p771 = scmp.ne.s32.totalorder %s756, %s770
    %p772 = scmp.eq.s32.totalorder %s79, 0
    %p773 = por %p771, %p772
    %s775 = sadd.s32 %s774, 1
    %p778 = scmp.eq.s32.totalorder %s73, 1
    %p779 = scmp.ne.s32.totalorder %s774, %s776
    %p780 = scmp.eq.s32.totalorder %s73, 0
    %p781 = por %p779, %p780
    %p782 = scmp.ne.s32.totalorder %s774, %s776
    %p783 = scmp.eq.s32.totalorder %s78, 1
    %p784 = por %p782, %p783
    %p785 = scmp.ne.s32.totalorder %s776, %s777
    %p786 = scmp.eq.s32.totalorder %s78, 0
    %p787 = por %p785, %p786
    %p788 = scmp.ne.s32.totalorder %s776, %s777
    %p789 = scmp.eq.s32.totalorder %s79, 1
    %p790 = por %p788, %p789
    %p792 = scmp.ne.s32.totalorder %s777, %s791
    %p793 = scmp.eq.s32.totalorder %s79, 0
    %p794 = por %p792, %p793
    %p795 = scmp.le.s32.totalorder 1, %s73
    %p796 = scmp.lt.s32.totalorder %s73, 3
    %p797 = pnand %p795, %p796
    %p798 = pneg %p797
    // Predicated region
    $region9: #{tpu_custom_call.1} parent=5 // pred_check
      _
    $region10: #{tpu_custom_call.1} parent=5 // pred_check_branch
      %800 = sbr.rel (%p797) target = $region12
    $region11: #{tpu_custom_call.1} parent=5 // pred_region
      %s801 = ssub.s32 %s73, 1
      // Predicated region
      $region13: #{tpu_custom_call.1} parent=11 // pred_check
        %p802 = pneg %p94
      $region14: #{tpu_custom_call.1} parent=11 // pred_check_branch
        %804 = sbr.rel (%p802) target = $region16
      $region15: #{tpu_custom_call.1} parent=11 // pred_region
        _
      $region16: #{tpu_custom_call.1} parent=11 // pred_fallthru
        _
      // Predicated region
      $region17: #{tpu_custom_call.1} parent=11 // pred_check
        %p805 = pneg %p115
      $region18: #{tpu_custom_call.1} parent=11 // pred_check_branch
        %807 = sbr.rel (%p805) target = $region20
      $region19: #{tpu_custom_call.1} parent=11 // pred_region
        _
      $region20: #{tpu_custom_call.1} parent=11 // pred_fallthru
        _
      // Predicated region
      $region21: #{tpu_custom_call.1} parent=11 // pred_check
        %p808 = pneg %p136
      $region22: #{tpu_custom_call.1} parent=11 // pred_check_branch
        %810 = sbr.rel (%p808) target = $region24
      $region23: #{tpu_custom_call.1} parent=11 // pred_region
        _
      $region24: #{tpu_custom_call.1} parent=11 // pred_fallthru
        _
      // Predicated region
      $region25: #{tpu_custom_call.1} parent=11 // pred_check
        %p811 = pneg %p157
      $region26: #{tpu_custom_call.1} parent=11 // pred_check_branch
        %813 = sbr.rel (%p811) target = $region28
      $region27: #{tpu_custom_call.1} parent=11 // pred_region
        _
      $region28: #{tpu_custom_call.1} parent=11 // pred_fallthru
        _
      // Predicated region
      $region29: #{tpu_custom_call.1} parent=11 // pred_check
        %p814 = pneg %p178
      $region30: #{tpu_custom_call.1} parent=11 // pred_check_branch
        %816 = sbr.rel (%p814) target = $region32
      $region31: #{tpu_custom_call.1} parent=11 // pred_region
        _
      $region32: #{tpu_custom_call.1} parent=11 // pred_fallthru
        _
      // Predicated region
      $region33: #{tpu_custom_call.1} parent=11 // pred_check
        %p817 = pneg %p199
      $region34: #{tpu_custom_call.1} parent=11 // pred_check_branch
        %819 = sbr.rel (%p817) target = $region36
      $region35: #{tpu_custom_call.1} parent=11 // pred_region
        _
      $region36: #{tpu_custom_call.1} parent=11 // pred_fallthru
        _
      // Predicated region
      $region37: #{tpu_custom_call.1} parent=11 // pred_check
        %p820 = pneg %p220
      $region38: #{tpu_custom_call.1} parent=11 // pred_check_branch
        %822 = sbr.rel (%p820) target = $region40
      $region39: #{tpu_custom_call.1} parent=11 // pred_region
        _
      $region40: #{tpu_custom_call.1} parent=11 // pred_fallthru
        _
      // Predicated region
      $region41: #{tpu_custom_call.1} parent=11 // pred_check
        %p823 = pneg %p241
      $region42: #{tpu_custom_call.1} parent=11 // pred_check_branch
        %825 = sbr.rel (%p823) target = $region44
      $region43: #{tpu_custom_call.1} parent=11 // pred_region
        _
      $region44: #{tpu_custom_call.1} parent=11 // pred_fallthru
        _
      // Predicated region
      $region45: #{tpu_custom_call.1} parent=11 // pred_check
        %p826 = pneg %p262
      $region46: #{tpu_custom_call.1} parent=11 // pred_check_branch
        %828 = sbr.rel (%p826) target = $region48
      $region47: #{tpu_custom_call.1} parent=11 // pred_region
        _
      $region48: #{tpu_custom_call.1} parent=11 // pred_fallthru
        _
      // Predicated region
      $region49: #{tpu_custom_call.1} parent=11 // pred_check
        %p829 = pneg %p283
      $region50: #{tpu_custom_call.1} parent=11 // pred_check_branch
        %831 = sbr.rel (%p829) target = $region52
      $region51: #{tpu_custom_call.1} parent=11 // pred_region
        _
      $region52: #{tpu_custom_call.1} parent=11 // pred_fallthru
        _
      // Predicated region
      $region53: #{tpu_custom_call.1} parent=11 // pred_check
        %p832 = pneg %p304
      $region54: #{tpu_custom_call.1} parent=11 // pred_check_branch
        %834 = sbr.rel (%p832) target = $region56
      $region55: #{tpu_custom_call.1} parent=11 // pred_region
        _
      $region56: #{tpu_custom_call.1} parent=11 // pred_fallthru
        _
      // Predicated region
      $region57: #{tpu_custom_call.1} parent=11 // pred_check
        %p835 = pneg %p325
      $region58: #{tpu_custom_call.1} parent=11 // pred_check_branch
        %837 = sbr.rel (%p835) target = $region60
      $region59: #{tpu_custom_call.1} parent=11 // pred_region
        _
      $region60: #{tpu_custom_call.1} parent=11 // pred_fallthru
        _
      // Predicated region
      $region61: #{tpu_custom_call.1} parent=11 // pred_check
        %p838 = pneg %p346
      $region62: #{tpu_custom_call.1} parent=11 // pred_check_branch
        %840 = sbr.rel (%p838) target = $region64
      $region63: #{tpu_custom_call.1} parent=11 // pred_region
        _
      $region64: #{tpu_custom_call.1} parent=11 // pred_fallthru
        _
      // Predicated region
      $region65: #{tpu_custom_call.1} parent=11 // pred_check
        %p841 = pneg %p367
      $region66: #{tpu_custom_call.1} parent=11 // pred_check_branch
        %843 = sbr.rel (%p841) target = $region68
      $region67: #{tpu_custom_call.1} parent=11 // pred_region
        _
      $region68: #{tpu_custom_call.1} parent=11 // pred_fallthru
        _
      // Predicated region
      $region69: #{tpu_custom_call.1} parent=11 // pred_check
        %p844 = pneg %p388
      $region70: #{tpu_custom_call.1} parent=11 // pred_check_branch
        %846 = sbr.rel (%p844) target = $region72
      $region71: #{tpu_custom_call.1} parent=11 // pred_region
        _
      $region72: #{tpu_custom_call.1} parent=11 // pred_fallthru
        _
      // Predicated region
      $region73: #{tpu_custom_call.1} parent=11 // pred_check
        %p847 = pneg %p409
      $region74: #{tpu_custom_call.1} parent=11 // pred_check_branch
        %849 = sbr.rel (%p847) target = $region76
      $region75: #{tpu_custom_call.1} parent=11 // pred_region
        _
      $region76: #{tpu_custom_call.1} parent=11 // pred_fallthru
        _
      // Predicated region
      $region77: #{tpu_custom_call.1} parent=11 // pred_check
        %p850 = pneg %p430
      $region78: #{tpu_custom_call.1} parent=11 // pred_check_branch
        %852 = sbr.rel (%p850) target = $region80
      $region79: #{tpu_custom_call.1} parent=11 // pred_region
        _
      $region80: #{tpu_custom_call.1} parent=11 // pred_fallthru
        _
      // Predicated region
      $region81: #{tpu_custom_call.1} parent=11 // pred_check
        %p853 = pneg %p451
      $region82: #{tpu_custom_call.1} parent=11 // pred_check_branch
        %855 = sbr.rel (%p853) target = $region84
      $region83: #{tpu_custom_call.1} parent=11 // pred_region
        _
      $region84: #{tpu_custom_call.1} parent=11 // pred_fallthru
        _
      // Predicated region
      $region85: #{tpu_custom_call.1} parent=11 // pred_check
        %p856 = pneg %p472
      $region86: #{tpu_custom_call.1} parent=11 // pred_check_branch
        %858 = sbr.rel (%p856) target = $region88
      $region87: #{tpu_custom_call.1} parent=11 // pred_region
        _
      $region88: #{tpu_custom_call.1} parent=11 // pred_fallthru
        _
      // Predicated region
      $region89: #{tpu_custom_call.1} parent=11 // pred_check
        %p859 = pneg %p493
      $region90: #{tpu_custom_call.1} parent=11 // pred_check_branch
        %861 = sbr.rel (%p859) target = $region92
      $region91: #{tpu_custom_call.1} parent=11 // pred_region
        _
      $region92: #{tpu_custom_call.1} parent=11 // pred_fallthru
        _
      // Predicated region
      $region93: #{tpu_custom_call.1} parent=11 // pred_check
        %p862 = pneg %p514
      $region94: #{tpu_custom_call.1} parent=11 // pred_check_branch
        %864 = sbr.rel (%p862) target = $region96
      $region95: #{tpu_custom_call.1} parent=11 // pred_region
        _
      $region96: #{tpu_custom_call.1} parent=11 // pred_fallthru
        _
      // Predicated region
      $region97: #{tpu_custom_call.1} parent=11 // pred_check
        %p865 = pneg %p535
      $region98: #{tpu_custom_call.1} parent=11 // pred_check_branch
        %867 = sbr.rel (%p865) target = $region100
      $region99: #{tpu_custom_call.1} parent=11 // pred_region
        _
      $region100: #{tpu_custom_call.1} parent=11 // pred_fallthru
        _
      // Predicated region
      $region101: #{tpu_custom_call.1} parent=11 // pred_check
        %p868 = pneg %p556
      $region102: #{tpu_custom_call.1} parent=11 // pred_check_branch
        %870 = sbr.rel (%p868) target = $region104
      $region103: #{tpu_custom_call.1} parent=11 // pred_region
        _
      $region104: #{tpu_custom_call.1} parent=11 // pred_fallthru
        _
      // Predicated region
      $region105: #{tpu_custom_call.1} parent=11 // pred_check
        %p871 = pneg %p577
      $region106: #{tpu_custom_call.1} parent=11 // pred_check_branch
        %873 = sbr.rel (%p871) target = $region108
      $region107: #{tpu_custom_call.1} parent=11 // pred_region
        _
      $region108: #{tpu_custom_call.1} parent=11 // pred_fallthru
        _
      // Predicated region
      $region109: #{tpu_custom_call.1} parent=11 // pred_check
        %p874 = pneg %p598
      $region110: #{tpu_custom_call.1} parent=11 // pred_check_branch
        %876 = sbr.rel (%p874) target = $region112
      $region111: #{tpu_custom_call.1} parent=11 // pred_region
        _
      $region112: #{tpu_custom_call.1} parent=11 // pred_fallthru
        _
      // Predicated region
      $region113: #{tpu_custom_call.1} parent=11 // pred_check
        %p877 = pneg %p619
      $region114: #{tpu_custom_call.1} parent=11 // pred_check_branch
        %879 = sbr.rel (%p877) target = $region116
      $region115: #{tpu_custom_call.1} parent=11 // pred_region
        _
      $region116: #{tpu_custom_call.1} parent=11 // pred_fallthru
        _
      // Predicated region
      $region117: #{tpu_custom_call.1} parent=11 // pred_check
        %p880 = pneg %p640
      $region118: #{tpu_custom_call.1} parent=11 // pred_check_branch
        %882 = sbr.rel (%p880) target = $region120
      $region119: #{tpu_custom_call.1} parent=11 // pred_region
        _
      $region120: #{tpu_custom_call.1} parent=11 // pred_fallthru
        _
      // Predicated region
      $region121: #{tpu_custom_call.1} parent=11 // pred_check
        %p883 = pneg %p661
      $region122: #{tpu_custom_call.1} parent=11 // pred_check_branch
        %885 = sbr.rel (%p883) target = $region124
      $region123: #{tpu_custom_call.1} parent=11 // pred_region
        _
      $region124: #{tpu_custom_call.1} parent=11 // pred_fallthru
        _
      // Predicated region
      $region125: #{tpu_custom_call.1} parent=11 // pred_check
        %p886 = pneg %p682
      $region126: #{tpu_custom_call.1} parent=11 // pred_check_branch
        %888 = sbr.rel (%p886) target = $region128
      $region127: #{tpu_custom_call.1} parent=11 // pred_region
        _
      $region128: #{tpu_custom_call.1} parent=11 // pred_fallthru
        _
      // Predicated region
      $region129: #{tpu_custom_call.1} parent=11 // pred_check
        %p889 = pneg %p703
      $region130: #{tpu_custom_call.1} parent=11 // pred_check_branch
        %891 = sbr.rel (%p889) target = $region132
      $region131: #{tpu_custom_call.1} parent=11 // pred_region
        _
      $region132: #{tpu_custom_call.1} parent=11 // pred_fallthru
        _
      // Predicated region
      $region133: #{tpu_custom_call.1} parent=11 // pred_check
        %p892 = pneg %p724
      $region134: #{tpu_custom_call.1} parent=11 // pred_check_branch
        %894 = sbr.rel (%p892) target = $region136
      $region135: #{tpu_custom_call.1} parent=11 // pred_region
        _
      $region136: #{tpu_custom_call.1} parent=11 // pred_fallthru
        _
      // Predicated region
      $region137: #{tpu_custom_call.1} parent=11 // pred_check
        %p895 = pneg %p745
      $region138: #{tpu_custom_call.1} parent=11 // pred_check_branch
        %897 = sbr.rel (%p895) target = $region140
      $region139: #{tpu_custom_call.1} parent=11 // pred_region
        _
      $region140: #{tpu_custom_call.1} parent=11 // pred_fallthru
        _
      // Predicated region
      $region141: #{tpu_custom_call.1} parent=11 // pred_check
        %p898 = pneg %p766
      $region142: #{tpu_custom_call.1} parent=11 // pred_check_branch
        %900 = sbr.rel (%p898) target = $region144
      $region143: #{tpu_custom_call.1} parent=11 // pred_region
        _
      $region144: #{tpu_custom_call.1} parent=11 // pred_fallthru
        _
    $region12: #{tpu_custom_call.1} parent=5 // pred_fallthru
      _
    %p901 = scmp.lt.s32.totalorder %s73, 2
    // Predicated region
    $region145: #{tpu_custom_call.1} parent=5 // pred_check
      %p902 = pneg %p901
    $region146: #{tpu_custom_call.1} parent=5 // pred_check_branch
      %904 = sbr.rel (%p902) target = $region148
    $region147: #{tpu_custom_call.1} parent=5 // pred_region
      _
    $region148: #{tpu_custom_call.1} parent=5 // pred_fallthru
      _
    %p905 = scmp.le.s32.totalorder 1, %s73
    %p906 = scmp.lt.s32.totalorder %s73, 3
    %p907 = pnand %p905, %p906
    %p908 = pneg %p907
    // Predicated region
    $region149: #{tpu_custom_call.1} parent=5 // pred_check
      _
    $region150: #{tpu_custom_call.1} parent=5 // pred_check_branch
      %910 = sbr.rel (%p907) target = $region152
    $region151: #{tpu_custom_call.1} parent=5 // pred_region
      %s911 = ssub.s32 %s73, 1
      %p912 = pneg %p94
      %p913 = pneg %p91
      %p914 = pneg %p115
      %p915 = pneg %p112
      %p916 = pneg %p136
      %p917 = pneg %p133
      %p918 = pneg %p157
      %p919 = pneg %p154
      %p920 = pneg %p178
      %p921 = pneg %p175
      %p922 = pneg %p199
      %p923 = pneg %p196
      %p924 = pneg %p220
      %p925 = pneg %p217
      %p926 = pneg %p241
      %p927 = pneg %p238
      %p928 = pneg %p262
      %p929 = pneg %p259
      %p930 = pneg %p283
      %p931 = pneg %p280
      %p932 = pneg %p304
      %p933 = pneg %p301
      %p934 = pneg %p325
      %p935 = pneg %p322
      %p936 = pneg %p346
      %p937 = pneg %p343
      %p938 = pneg %p367
      %p939 = pneg %p364
      %p940 = pneg %p388
      %p941 = pneg %p385
      %p942 = pneg %p409
      %p943 = pneg %p406
      %p944 = pneg %p430
      %p945 = pneg %p427
      %p946 = pneg %p451
      %p947 = pneg %p448
      %p948 = pneg %p472
      %p949 = pneg %p469
      %p950 = pneg %p493
      %p951 = pneg %p490
      %p952 = pneg %p514
      %p953 = pneg %p511
      %p954 = pneg %p535
      %p955 = pneg %p532
      %p956 = pneg %p556
      %p957 = pneg %p553
      %p958 = pneg %p577
      %p959 = pneg %p574
      %p960 = pneg %p598
      %p961 = pneg %p595
      %p962 = pneg %p619
      %p963 = pneg %p616
      %p964 = pneg %p640
      %p965 = pneg %p637
      %p966 = pneg %p661
      %p967 = pneg %p658
      %p968 = pneg %p682
      %p969 = pneg %p679
      %p970 = pneg %p703
      %p971 = pneg %p700
      %p972 = pneg %p724
      %p973 = pneg %p721
      %p974 = pneg %p745
      %p975 = pneg %p742
      %p976 = pneg %p766
      %p977 = pneg %p763
      %p978 = pneg %p787
      %p979 = pneg %p784
      %p980 = scmp.eq.s32.totalorder %s78, 0
      // Predicated region
      $region153: #{tpu_custom_call.1} parent=151 // pred_check
        %p981 = pneg %p980
      $region154: #{tpu_custom_call.1} parent=151 // pred_check_branch
        %983 = sbr.rel (%p981) target = $region156
      $region155: #{tpu_custom_call.1} parent=151 // pred_region
        %984 = vst [vmem:[#allocation2] sm:$0xff] 0.0
        %985 = vst [vmem:[#allocation3] sm:$0xff] 0.0
        %986 = vst [vmem:[#allocation4] sm:$0xff] 0.0
        %987 = vst [vmem:[#allocation5] sm:$0xff] 0.0
        %988 = vst [vmem:[#allocation6] sm:$0xff] 0.0
        %989 = vst [vmem:[#allocation7] sm:$0xff] 0.0
        %990 = vst [vmem:[#allocation7 + $0x8] sm:$0xff] 0.0
        %991 = vst [vmem:[#allocation8] sm:$0xff] 0.0
        %992 = vst [vmem:[#allocation8 + $0x8] sm:$0xff] 0.0
        %vm993 = vcmask 15360
        %994 = vst.msk [vmem:[%s67] sm:$0xff] %vm993, 0.0
        %vm995 = vcmask 9216
        %996 = vst.msk [vmem:[%s67 + $0x8] sm:$0x3] %vm995, 0.0
      $region156: #{tpu_custom_call.1} parent=151 // pred_fallthru
        _
      %v997 = vld [vmem:[%s1] sm:$0xff]
      %998 = vrot.lane.b32.xlu0 %v997, 9
      %v999 = vpop.permute.xlu0 %998
      %v1000 = vld [vmem:[%s31] sm:$0x1]
      %v1002 = vlaneseq
      %v1003 = vshrl.u32 %v1002, 7
      %v1004 = vsub.s32 0, %v1003
      %v1005 = vrot.slane %v1000, %v1004
      %v1007 = vmul.f32 %v999, %v1005
      %1008 = vst [vmem:[#allocation9] sm:$0xff] %v1007
      %1009 = vrot.lane.b32.xlu0 %v997, 8
      %v1010 = vpop.permute.xlu0 %1009
      %s1011 = scalar_lea.vmem %s31, 1
      %v1012 = vld [vmem:[%s1011] sm:$0x1]
      %v1014 = vlaneseq
      %v1015 = vshrl.u32 %v1014, 7
      %v1016 = vsub.s32 0, %v1015
      %v1017 = vrot.slane %v1012, %v1016
      %v1019 = vmul.f32 %v1010, %v1017
      %1020 = vst [vmem:[#allocation9 + $0x8] sm:$0xff] %v1019
      %1021 = vrot.lane.b32.xlu0 %v997, 7
      %v1022 = vpop.permute.xlu0 %1021
      %s1023 = scalar_lea.vmem %s31, 2
      %v1024 = vld [vmem:[%s1023] sm:$0x1]
      %v1026 = vlaneseq
      %v1027 = vshrl.u32 %v1026, 7
      %v1028 = vsub.s32 0, %v1027
      %v1029 = vrot.slane %v1024, %v1028
      %v1031 = vmul.f32 %v1022, %v1029
      %1032 = vst [vmem:[#allocation9 + $0x10] sm:$0xff] %v1031
      %1033 = vrot.lane.b32.xlu0 %v997, 1
      %v1034 = vpop.permute.xlu0 %1033
      %s1035 = scalar_lea.vmem %s31, 3
      %v1036 = vld [vmem:[%s1035] sm:$0x1]
      %v1038 = vlaneseq
      %v1039 = vshrl.u32 %v1038, 7
      %v1040 = vsub.s32 0, %v1039
      %v1041 = vrot.slane %v1036, %v1040
      %v1043 = vmul.f32 %v1034, %v1041
      %1044 = vst [vmem:[#allocation9 + $0x18] sm:$0xff] %v1043
      %1045 = vst [vmem:[#allocation9 + $0x20] sm:$0xff] %v997
      %1046 = vrot.lane.b32.xlu0 %v997, 127
      %v1047 = vpop.permute.xlu0 %1046
      %s1048 = scalar_lea.vmem %s31, 5
      %v1049 = vld [vmem:[%s1048] sm:$0x1]
      %v1051 = vlaneseq
      %v1052 = vshrl.u32 %v1051, 7
      %v1053 = vsub.s32 0, %v1052
      %v1054 = vrot.slane %v1049, %v1053
      %v1056 = vmul.f32 %v1047, %v1054
      %1057 = vst [vmem:[#allocation9 + $0x28] sm:$0xff] %v1056
      %1058 = vrot.lane.b32.xlu0 %v997, 121
      %v1059 = vpop.permute.xlu0 %1058
      %s1060 = scalar_lea.vmem %s31, 6
      %v1061 = vld [vmem:[%s1060] sm:$0x1]
      %v1063 = vlaneseq
      %v1064 = vshrl.u32 %v1063, 7
      %v1065 = vsub.s32 0, %v1064
      %v1066 = vrot.slane %v1061, %v1065
      %v1068 = vmul.f32 %v1059, %v1066
      %1069 = vst [vmem:[#allocation9 + $0x30] sm:$0xff] %v1068
      %1070 = vrot.lane.b32.xlu0 %v997, 120
      %v1071 = vpop.permute.xlu0 %1070
      %s1072 = scalar_lea.vmem %s31, 7
      %v1073 = vld [vmem:[%s1072] sm:$0x1]
      %v1075 = vlaneseq
      %v1076 = vshrl.u32 %v1075, 7
      %v1077 = vsub.s32 0, %v1076
      %v1078 = vrot.slane %v1073, %v1077
      %v1080 = vmul.f32 %v1071, %v1078
      %1081 = vst [vmem:[#allocation9 + $0x38] sm:$0xff] %v1080
      %1082 = vrot.lane.b32.xlu0 %v997, 119
      %v1083 = vpop.permute.xlu0 %1082
      %s1084 = scalar_lea.vmem %s31, 8
      %v1085 = vld [vmem:[%s1084] sm:$0x1]
      %v1087 = vlaneseq
      %v1088 = vshrl.u32 %v1087, 7
      %v1089 = vsub.s32 0, %v1088
      %v1090 = vrot.slane %v1085, %v1089
      %v1092 = vmul.f32 %v1083, %v1090
      %1093 = vst [vmem:[#allocation9 + $0x40] sm:$0xff] %v1092
      %v1094 = vld [vmem:[%s3] sm:$0xff]
      %v1095 = vld [vmem:[#allocation9] sm:$0xff]
      %v1096 = vld [vmem:[#allocation9 + $0x8] sm:$0xff]
      %v1097 = vld [vmem:[#allocation9 + $0x10] sm:$0xff]
      %v1098 = vld [vmem:[#allocation9 + $0x18] sm:$0xff]
      %v1099 = vld [vmem:[#allocation9 + $0x20] sm:$0xff]
      %v1100 = vld [vmem:[#allocation9 + $0x28] sm:$0xff]
      %v1101 = vld [vmem:[#allocation9 + $0x30] sm:$0xff]
      %v1102 = vld [vmem:[#allocation9 + $0x38] sm:$0xff]
      %v1103 = vld [vmem:[#allocation9 + $0x40] sm:$0xff]
      %vm1104 = vcmask 588800
      %v1106 = vsel %vm1104, %v1094, 0
      %1108 = vmatprep.subr.mxu0 0.0
      %1109 = vmatpush1.msra.mxu0 0.0
      %1110 = vmatprep.subr.mxu0 0.0
      %1111 = vmatpush1.msra.mxu0 0.0
      %1112 = vmatprep.subr.mxu0 0.0
      %1113 = vmatpush1.msra.mxu0 0.0
      %1114 = vmatprep.subr.mxu0 0.0
      %1115 = vmatpush1.msra.mxu0 0.0
      %1116 = vmatprep.subr.mxu0 0.0
      %1117 = vmatpush1.msra.mxu0 0.0
      %1118 = vmatprep.subr.mxu0 0.0
      %1119 = vmatpush1.msra.mxu0 0.0
      %1120 = vmatprep.subr.mxu0 0.0
      %1121 = vmatpush1.msra.mxu0 0.0
      %1122 = vmatprep.subr.mxu0 0.0
      %1123 = vmatpush1.msra.mxu0 %v1103
      %1124 = vmatprep.subr.mxu0 0.0
      %1125 = vmatpush1.msra.mxu0 %v1102
      %1126 = vmatprep.subr.mxu0 0.0
      %1127 = vmatpush1.msra.mxu0 %v1101
      %1128 = vmatprep.subr.mxu0 0.0
      %1129 = vmatpush1.msra.mxu0 %v1100
      %1130 = vmatprep.subr.mxu0 0.0
      %1131 = vmatpush1.msra.mxu0 %v1099
      %1132 = vmatprep.subr.mxu0 0.0
      %1133 = vmatpush1.msra.mxu0 %v1098
      %1134 = vmatprep.subr.mxu0 0.0
      %1135 = vmatpush1.msra.mxu0 %v1097
      %1136 = vmatprep.subr.mxu0 0.0
      %1137 = vmatpush1.msra.mxu0 %v1096
      %1138 = vmatprep.subr.mxu0 0.0
      %1139 = vmatpush1.msra.mxu0 %v1095
      %1140 = vmatprep.subr.mxu0 0.0
      %1141 = vmatpush2.msra.mxu0 0.0
      %1142 = vmatprep.subr.mxu0 0.0
      %1143 = vmatpush2.msra.mxu0 0.0
      %1144 = vmatprep.subr.mxu0 0.0
      %1145 = vmatpush2.msra.mxu0 0.0
      %1146 = vmatprep.subr.mxu0 0.0
      %1147 = vmatpush2.msra.mxu0 0.0
      %1148 = vmatprep.subr.mxu0 0.0
      %1149 = vmatpush2.msra.mxu0 0.0
      %1150 = vmatprep.subr.mxu0 0.0
      %1151 = vmatpush2.msra.mxu0 0.0
      %1152 = vmatprep.subr.mxu0 0.0
      %1153 = vmatpush2.msra.mxu0 0.0
      %1154 = vmatprep.subr.mxu0 0.0
      %1155 = vmatpush2.msra.mxu0 0.0
      %1156 = vmatprep.subr.mxu0 0.0
      %1157 = vmatpush2.msra.mxu0 0.0
      %1158 = vmatprep.subr.mxu0 0.0
      %1159 = vmatpush2.msra.mxu0 0.0
      %1160 = vmatprep.subr.mxu0 0.0
      %1161 = vmatpush2.msra.mxu0 0.0
      %1162 = vmatprep.subr.mxu0 0.0
      %1163 = vmatpush2.msra.mxu0 0.0
      %1164 = vmatprep.subr.mxu0 0.0
      %1165 = vmatpush2.msra.mxu0 0.0
      %1166 = vmatprep.subr.mxu0 0.0
      %1167 = vmatpush2.msra.mxu0 0.0
      %1168 = vmatprep.subr.mxu0 0.0
      %1169 = vmatpush2.msra.mxu0 0.0
      %1170 = vmatprep.subr.mxu0 0.0
      %1171 = vmatpush2.msra.mxu0 0.0
      %1172 = vmatprep.mubr.f32.mxu0 0.0
      %1173 = vmatmul.mubr.f32.gmra.mxu0 %v1106
      %v1174 = vpop.f32.mrf.mxu0
      %v1175 = vadd.f32 0.0, %v1174
      %v1176 = vpop.f32.mrf.mxu0
      %1177 = vdwg.mxu0
      %s1178 = smul.u32 %s78, 8
      %s1179 = scalar_lea.vmem %s17, %s1178
      %v1180 = vld [vmem:[%s1179] sm:$0xff]
      %v1181 = vld [vmem:[%s37] sm:$0x3]
      %v1182 = vld [vmem:[%s43] sm:$0xff]
      %v1183 = vld [vmem:[%s43 + $0x8] sm:$0xff]
      %v1184 = vld [vmem:[%s43 + $0x10] sm:$0xff]
      %v1185 = vld [vmem:[%s43 + $0x18] sm:$0xff]
      %v1186 = vld [vmem:[%s43 + $0x20] sm:$0xff]
      %v1187 = vld [vmem:[%s43 + $0x28] sm:$0xff]
      %v1188 = vld [vmem:[%s43 + $0x30] sm:$0xff]
      %v1189 = vld [vmem:[%s43 + $0x38] sm:$0xff]
      %v1190 = vld [vmem:[%s43 + $0x40] sm:$0xff]
      %v1191 = vld [vmem:[%s43 + $0x48] sm:$0xff]
      %v1192 = vld [vmem:[%s43 + $0x50] sm:$0xff]
      %v1193 = vld [vmem:[%s43 + $0x58] sm:$0xff]
      %v1194 = vld [vmem:[%s43 + $0x60] sm:$0xff]
      %v1195 = vld [vmem:[%s43 + $0x68] sm:$0xff]
      %v1196 = vld [vmem:[%s43 + $0x70] sm:$0xff]
      %v1197 = vld [vmem:[%s43 + $0x78] sm:$0xff]
      %v1198 = vrot.slane %v1175, 4
      %v1199 = vadd.f32 %v1175, %v1198
      %v1200 = vrot.slane %v1199, 2
      %v1201 = vadd.f32 %v1199, %v1200
      %v1202 = vrot.slane %v1201, 1
      %v1203 = vadd.f32 %v1201, %v1202
      %1204 = vmatprep.subr.mxu0 0.0
      %1205 = vmatpush1.msra.mxu0 %v1197
      %1206 = vmatprep.subr.mxu0 0.0
      %1207 = vmatpush1.msra.mxu0 %v1196
      %1208 = vmatprep.subr.mxu0 0.0
      %1209 = vmatpush1.msra.mxu0 %v1195
      %1210 = vmatprep.subr.mxu0 0.0
      %1211 = vmatpush1.msra.mxu0 %v1194
      %1212 = vmatprep.subr.mxu0 0.0
      %1213 = vmatpush1.msra.mxu0 %v1193
      %1214 = vmatprep.subr.mxu0 0.0
      %1215 = vmatpush1.msra.mxu0 %v1192
      %1216 = vmatprep.subr.mxu0 0.0
      %1217 = vmatpush1.msra.mxu0 %v1191
      %1218 = vmatprep.subr.mxu0 0.0
      %1219 = vmatpush1.msra.mxu0 %v1190
      %1220 = vmatprep.subr.mxu0 0.0
      %1221 = vmatpush1.msra.mxu0 %v1189
      %1222 = vmatprep.subr.mxu0 0.0
      %1223 = vmatpush1.msra.mxu0 %v1188
      %1224 = vmatprep.subr.mxu0 0.0
      %1225 = vmatpush1.msra.mxu0 %v1187
      %1226 = vmatprep.subr.mxu0 0.0
      %1227 = vmatpush1.msra.mxu0 %v1186
      %1228 = vmatprep.subr.mxu0 0.0
      %1229 = vmatpush1.msra.mxu0 %v1185
      %1230 = vmatprep.subr.mxu0 0.0
      %1231 = vmatpush1.msra.mxu0 %v1184
      %1232 = vmatprep.subr.mxu0 0.0
      %1233 = vmatpush1.msra.mxu0 %v1183
      %1234 = vmatprep.subr.mxu0 0.0
      %1235 = vmatpush1.msra.mxu0 %v1182
      %1236 = vmatprep.subr.mxu0 0.0
      %1237 = vmatpush2.msra.mxu0 0.0
      %1238 = vmatprep.subr.mxu0 0.0
      %1239 = vmatpush2.msra.mxu0 0.0
      %1240 = vmatprep.subr.mxu0 0.0
      %1241 = vmatpush2.msra.mxu0 0.0
      %1242 = vmatprep.subr.mxu0 0.0
      %1243 = vmatpush2.msra.mxu0 0.0
      %1244 = vmatprep.subr.mxu0 0.0
      %1245 = vmatpush2.msra.mxu0 0.0
      %1246 = vmatprep.subr.mxu0 0.0
      %1247 = vmatpush2.msra.mxu0 0.0
      %1248 = vmatprep.subr.mxu0 0.0
      %1249 = vmatpush2.msra.mxu0 0.0
      %1250 = vmatprep.subr.mxu0 0.0
      %1251 = vmatpush2.msra.mxu0 0.0
      %1252 = vmatprep.subr.mxu0 0.0
      %1253 = vmatpush2.msra.mxu0 0.0
      %1254 = vmatprep.subr.mxu0 0.0
      %1255 = vmatpush2.msra.mxu0 0.0
      %1256 = vmatprep.subr.mxu0 0.0
      %1257 = vmatpush2.msra.mxu0 0.0
      %1258 = vmatprep.subr.mxu0 0.0
      %1259 = vmatpush2.msra.mxu0 0.0
      %1260 = vmatprep.subr.mxu0 0.0
      %1261 = vmatpush2.msra.mxu0 0.0
      %1262 = vmatprep.subr.mxu0 0.0
      %1263 = vmatpush2.msra.mxu0 0.0
      %1264 = vmatprep.subr.mxu0 0.0
      %1265 = vmatpush2.msra.mxu0 0.0
      %1266 = vmatprep.subr.mxu0 0.0
      %1267 = vmatpush2.msra.mxu0 0.0
      %1268 = vmatprep.mubr.f32.mxu0 0.0
      %1269 = vmatmul.mubr.f32.gmra.mxu0 %v1203
      %v1270 = vpop.f32.mrf.mxu0
      %v1271 = vadd.f32 0.0, %v1270
      %v1272 = vpop.f32.mrf.mxu0
      %1273 = vdwg.mxu0
      %v1274 = vmul.f32 %v1271, 0.00390625
      %vm1275 = vcmask 15360
      %v1277 = vsel %vm1275, %v1274, 0
      %vm1279 = vcmask 1041408
      %v1281 = vsel %vm1279, %v1181, 0
      %1283 = vmatprep.subr.mxu0 0.0
      %1284 = vmatpush1.msra.mxu0 0.0
      %1285 = vmatprep.subr.mxu0 0.0
      %1286 = vmatpush1.msra.mxu0 0.0
      %1287 = vmatprep.subr.mxu0 0.0
      %1288 = vmatpush1.msra.mxu0 0.0
      %1289 = vmatprep.subr.mxu0 0.0
      %1290 = vmatpush1.msra.mxu0 0.0
      %1291 = vmatprep.subr.mxu0 0.0
      %1292 = vmatpush1.msra.mxu0 0.0
      %1293 = vmatprep.subr.mxu0 0.0
      %1294 = vmatpush1.msra.mxu0 0.0
      %1295 = vmatprep.subr.mxu0 0.0
      %1296 = vmatpush1.msra.mxu0 0.0
      %1297 = vmatprep.subr.mxu0 0.0
      %1298 = vmatpush1.msra.mxu0 0.0
      %1299 = vmatprep.subr.mxu0 0.0
      %1300 = vmatpush1.msra.mxu0 0.0
      %1301 = vmatprep.subr.mxu0 0.0
      %1302 = vmatpush1.msra.mxu0 0.0
      %1303 = vmatprep.subr.mxu0 0.0
      %1304 = vmatpush1.msra.mxu0 0.0
      %1305 = vmatprep.subr.mxu0 0.0
      %1306 = vmatpush1.msra.mxu0 0.0
      %1307 = vmatprep.subr.mxu0 0.0
      %1308 = vmatpush1.msra.mxu0 0.0
      %1309 = vmatprep.subr.mxu0 0.0
      %1310 = vmatpush1.msra.mxu0 0.0
      %1311 = vmatprep.subr.mxu0 0.0
      %1312 = vmatpush1.msra.mxu0 0.0
      %1313 = vmatprep.subr.mxu0 0.0
      %1314 = vmatpush1.msra.mxu0 %v1281
      %1315 = vmatprep.subr.mxu0 0.0
      %1316 = vmatpush2.msra.mxu0 0.0
      %1317 = vmatprep.subr.mxu0 0.0
      %1318 = vmatpush2.msra.mxu0 0.0
      %1319 = vmatprep.subr.mxu0 0.0
      %1320 = vmatpush2.msra.mxu0 0.0
      %1321 = vmatprep.subr.mxu0 0.0
      %1322 = vmatpush2.msra.mxu0 0.0
      %1323 = vmatprep.subr.mxu0 0.0
      %1324 = vmatpush2.msra.mxu0 0.0
      %1325 = vmatprep.subr.mxu0 0.0
      %1326 = vmatpush2.msra.mxu0 0.0
      %1327 = vmatprep.subr.mxu0 0.0
      %1328 = vmatpush2.msra.mxu0 0.0
      %1329 = vmatprep.subr.mxu0 0.0
      %1330 = vmatpush2.msra.mxu0 0.0
      %1331 = vmatprep.subr.mxu0 0.0
      %1332 = vmatpush2.msra.mxu0 0.0
      %1333 = vmatprep.subr.mxu0 0.0
      %1334 = vmatpush2.msra.mxu0 0.0
      %1335 = vmatprep.subr.mxu0 0.0
      %1336 = vmatpush2.msra.mxu0 0.0
      %1337 = vmatprep.subr.mxu0 0.0
      %1338 = vmatpush2.msra.mxu0 0.0
      %1339 = vmatprep.subr.mxu0 0.0
      %1340 = vmatpush2.msra.mxu0 0.0
      %1341 = vmatprep.subr.mxu0 0.0
      %1342 = vmatpush2.msra.mxu0 0.0
      %1343 = vmatprep.subr.mxu0 0.0
      %1344 = vmatpush2.msra.mxu0 0.0
      %1345 = vmatprep.subr.mxu0 0.0
      %1346 = vmatpush2.msra.mxu0 0.0
      %1347 = vmatprep.mubr.f32.mxu0 0.0
      %1348 = vmatmul.mubr.f32.gmra.mxu0 %v1277
      %v1349 = vpop.f32.mrf.mxu0
      %v1350 = vadd.f32 0.0, %v1349
      %v1351 = vpop.f32.mrf.mxu0
      %1352 = vdwg.mxu0
      %v1353 = vlaneseq
      %v1354 = vshrl.u32 %v1353, 7
      %v1355 = vsub.s32 0, %v1354
      %v1356 = vrot.slane %v1350, %v1355
      %v1357 = vsub.f32 %v1175, %v1356
      %v1358 = vmul.f32 %v1357, %v1357
      %vm1359 = vcmask 1043456
      %v1360 = vsel %vm1359, %v1358, 0.0
      %v1361 = vrot.slane %v1360, 4
      %v1362 = vadd.f32 %v1360, %v1361
      %v1363 = vrot.slane %v1362, 2
      %v1364 = vadd.f32 %v1362, %v1363
      %v1365 = vrot.slane %v1364, 1
      %v1366 = vadd.f32 %v1364, %v1365
      %1367 = vmatprep.subr.mxu0 0.0
      %1368 = vmatpush1.msra.mxu0 %v1197
      %1369 = vmatprep.subr.mxu0 0.0
      %1370 = vmatpush1.msra.mxu0 %v1196
      %1371 = vmatprep.subr.mxu0 0.0
      %1372 = vmatpush1.msra.mxu0 %v1195
      %1373 = vmatprep.subr.mxu0 0.0
      %1374 = vmatpush1.msra.mxu0 %v1194
      %1375 = vmatprep.subr.mxu0 0.0
      %1376 = vmatpush1.msra.mxu0 %v1193
      %1377 = vmatprep.subr.mxu0 0.0
      %1378 = vmatpush1.msra.mxu0 %v1192
      %1379 = vmatprep.subr.mxu0 0.0
      %1380 = vmatpush1.msra.mxu0 %v1191
      %1381 = vmatprep.subr.mxu0 0.0
      %1382 = vmatpush1.msra.mxu0 %v1190
      %1383 = vmatprep.subr.mxu0 0.0
      %1384 = vmatpush1.msra.mxu0 %v1189
      %1385 = vmatprep.subr.mxu0 0.0
      %1386 = vmatpush1.msra.mxu0 %v1188
      %1387 = vmatprep.subr.mxu0 0.0
      %1388 = vmatpush1.msra.mxu0 %v1187
      %1389 = vmatprep.subr.mxu0 0.0
      %1390 = vmatpush1.msra.mxu0 %v1186
      %1391 = vmatprep.subr.mxu0 0.0
      %1392 = vmatpush1.msra.mxu0 %v1185
      %1393 = vmatprep.subr.mxu0 0.0
      %1394 = vmatpush1.msra.mxu0 %v1184
      %1395 = vmatprep.subr.mxu0 0.0
      %1396 = vmatpush1.msra.mxu0 %v1183
      %1397 = vmatprep.subr.mxu0 0.0
      %1398 = vmatpush1.msra.mxu0 %v1182
      %1399 = vmatprep.subr.mxu0 0.0
      %1400 = vmatpush2.msra.mxu0 0.0
      %1401 = vmatprep.subr.mxu0 0.0
      %1402 = vmatpush2.msra.mxu0 0.0
      %1403 = vmatprep.subr.mxu0 0.0
      %1404 = vmatpush2.msra.mxu0 0.0
      %1405 = vmatprep.subr.mxu0 0.0
      %1406 = vmatpush2.msra.mxu0 0.0
      %1407 = vmatprep.subr.mxu0 0.0
      %1408 = vmatpush2.msra.mxu0 0.0
      %1409 = vmatprep.subr.mxu0 0.0
      %1410 = vmatpush2.msra.mxu0 0.0
      %1411 = vmatprep.subr.mxu0 0.0
      %1412 = vmatpush2.msra.mxu0 0.0
      %1413 = vmatprep.subr.mxu0 0.0
      %1414 = vmatpush2.msra.mxu0 0.0
      %1415 = vmatprep.subr.mxu0 0.0
      %1416 = vmatpush2.msra.mxu0 0.0
      %1417 = vmatprep.subr.mxu0 0.0
      %1418 = vmatpush2.msra.mxu0 0.0
      %1419 = vmatprep.subr.mxu0 0.0
      %1420 = vmatpush2.msra.mxu0 0.0
      %1421 = vmatprep.subr.mxu0 0.0
      %1422 = vmatpush2.msra.mxu0 0.0
      %1423 = vmatprep.subr.mxu0 0.0
      %1424 = vmatpush2.msra.mxu0 0.0
      %1425 = vmatprep.subr.mxu0 0.0
      %1426 = vmatpush2.msra.mxu0 0.0
      %1427 = vmatprep.subr.mxu0 0.0
      %1428 = vmatpush2.msra.mxu0 0.0
      %1429 = vmatprep.subr.mxu0 0.0
      %1430 = vmatpush2.msra.mxu0 0.0
      %1431 = vmatprep.mubr.f32.mxu0 0.0
      %1432 = vmatmul.mubr.f32.gmra.mxu0 %v1366
      %v1433 = vpop.f32.mrf.mxu0
      %v1434 = vadd.f32 0.0, %v1433
      %v1435 = vpop.f32.mrf.mxu0
      %1436 = vdwg.mxu0
      %v1437 = vmul.f32 %v1434, 0.00390625
      %v1438 = vadd.f32 %v1437, 0.0001
      %v1439 = vrsqrt.pop %v1438
      %v1441 = vsel %vm1275, %v1439, 0
      %1443 = vmatprep.subr.mxu0 0.0
      %1444 = vmatpush1.msra.mxu0 0.0
      %1445 = vmatprep.subr.mxu0 0.0
      %1446 = vmatpush1.msra.mxu0 0.0
      %1447 = vmatprep.subr.mxu0 0.0
      %1448 = vmatpush1.msra.mxu0 0.0
      %1449 = vmatprep.subr.mxu0 0.0
      %1450 = vmatpush1.msra.mxu0 0.0
      %1451 = vmatprep.subr.mxu0 0.0
      %1452 = vmatpush1.msra.mxu0 0.0
      %1453 = vmatprep.subr.mxu0 0.0
      %1454 = vmatpush1.msra.mxu0 0.0
      %1455 = vmatprep.subr.mxu0 0.0
      %1456 = vmatpush1.msra.mxu0 0.0
      %1457 = vmatprep.subr.mxu0 0.0
      %1458 = vmatpush1.msra.mxu0 0.0
      %1459 = vmatprep.subr.mxu0 0.0
      %1460 = vmatpush1.msra.mxu0 0.0
      %1461 = vmatprep.subr.mxu0 0.0
      %1462 = vmatpush1.msra.mxu0 0.0
      %1463 = vmatprep.subr.mxu0 0.0
      %1464 = vmatpush1.msra.mxu0 0.0
      %1465 = vmatprep.subr.mxu0 0.0
      %1466 = vmatpush1.msra.mxu0 0.0
      %1467 = vmatprep.subr.mxu0 0.0
      %1468 = vmatpush1.msra.mxu0 0.0
      %1469 = vmatprep.subr.mxu0 0.0
      %1470 = vmatpush1.msra.mxu0 0.0
      %1471 = vmatprep.subr.mxu0 0.0
      %1472 = vmatpush1.msra.mxu0 0.0
      %1473 = vmatprep.subr.mxu0 0.0
      %1474 = vmatpush1.msra.mxu0 %v1281
      %1475 = vmatprep.subr.mxu0 0.0
      %1476 = vmatpush2.msra.mxu0 0.0
      %1477 = vmatprep.subr.mxu0 0.0
      %1478 = vmatpush2.msra.mxu0 0.0
      %1479 = vmatprep.subr.mxu0 0.0
      %1480 = vmatpush2.msra.mxu0 0.0
      %1481 = vmatprep.subr.mxu0 0.0
      %1482 = vmatpush2.msra.mxu0 0.0
      %1483 = vmatprep.subr.mxu0 0.0
      %1484 = vmatpush2.msra.mxu0 0.0
      %1485 = vmatprep.subr.mxu0 0.0
      %1486 = vmatpush2.msra.mxu0 0.0
      %1487 = vmatprep.subr.mxu0 0.0
      %1488 = vmatpush2.msra.mxu0 0.0
      %1489 = vmatprep.subr.mxu0 0.0
      %1490 = vmatpush2.msra.mxu0 0.0
      %1491 = vmatprep.subr.mxu0 0.0
      %1492 = vmatpush2.msra.mxu0 0.0
      %1493 = vmatprep.subr.mxu0 0.0
      %1494 = vmatpush2.msra.mxu0 0.0
      %1495 = vmatprep.subr.mxu0 0.0
      %1496 = vmatpush2.msra.mxu0 0.0
      %1497 = vmatprep.subr.mxu0 0.0
      %1498 = vmatpush2.msra.mxu0 0.0
      %1499 = vmatprep.subr.mxu0 0.0
      %1500 = vmatpush2.msra.mxu0 0.0
      %1501 = vmatprep.subr.mxu0 0.0
      %1502 = vmatpush2.msra.mxu0 0.0
      %1503 = vmatprep.subr.mxu0 0.0
      %1504 = vmatpush2.msra.mxu0 0.0
      %1505 = vmatprep.subr.mxu0 0.0
      %1506 = vmatpush2.msra.mxu0 0.0
      %1507 = vmatprep.mubr.f32.mxu0 0.0
      %1508 = vmatmul.mubr.f32.gmra.mxu0 %v1441
      %v1509 = vpop.f32.mrf.mxu0
      %v1510 = vadd.f32 0.0, %v1509
      %v1511 = vpop.f32.mrf.mxu0
      %1512 = vdwg.mxu0
      %v1513 = vlaneseq
      %v1514 = vshrl.u32 %v1513, 7
      %v1515 = vsub.s32 0, %v1514
      %v1516 = vrot.slane %v1510, %v1515
      %v1517 = vmul.f32 %v1357, %v1516
      %1519 = vset.pattern.permute.xlu0 0
      %1520 = vperm.xlu0 %1519, %v1180
      %v1521 = vpop.permute.xlu0 %1520
      %v1523 = vmul.f32 %v1517, %v1521
      %v1524 = vld [vmem:[#allocation2] sm:$0xff]
      %v1525 = vmul.f32 %v1524, 0.95
      %v1526 = vadd.f32 %v1525, %v1523
      %v1527 = vsub.f32 %v1526, 1.0
      %vm1528 = vcmp.gt.f32.partialorder %v1527, 0.0
      %v1529 = vsel %vm1528, 1, 0
      %v1530 = vcvt.s32.f32 %v1529
      %v1531 = vsub.f32 %v1526, %v1530
      %1532 = vst [vmem:[#allocation2] sm:$0xff] %v1531
      %1533 = vrot.lane.b32.xlu0 %v1530, 9
      %v1534 = vpop.permute.xlu0 %1533
      %v1535 = vld [vmem:[%s31] sm:$0x1]
      %v1537 = vlaneseq
      %v1538 = vshrl.u32 %v1537, 7
      %v1539 = vsub.s32 0, %v1538
      %v1540 = vrot.slane %v1535, %v1539
      %v1542 = vmul.f32 %v1534, %v1540
      %1543 = vst [vmem:[#allocation9] sm:$0xff] %v1542
      %1544 = vrot.lane.b32.xlu0 %v1530, 8
      %v1545 = vpop.permute.xlu0 %1544
      %v1546 = vld [vmem:[%s1011] sm:$0x1]
      %v1548 = vlaneseq
      %v1549 = vshrl.u32 %v1548, 7
      %v1550 = vsub.s32 0, %v1549
      %v1551 = vrot.slane %v1546, %v1550
      %v1553 = vmul.f32 %v1545, %v1551
      %1554 = vst [vmem:[#allocation9 + $0x8] sm:$0xff] %v1553
      %1555 = vrot.lane.b32.xlu0 %v1530, 7
      %v1556 = vpop.permute.xlu0 %1555
      %v1557 = vld [vmem:[%s1023] sm:$0x1]
      %v1559 = vlaneseq
      %v1560 = vshrl.u32 %v1559, 7
      %v1561 = vsub.s32 0, %v1560
      %v1562 = vrot.slane %v1557, %v1561
      %v1564 = vmul.f32 %v1556, %v1562
      %1565 = vst [vmem:[#allocation9 + $0x10] sm:$0xff] %v1564
      %1566 = vrot.lane.b32.xlu0 %v1530, 1
      %v1567 = vpop.permute.xlu0 %1566
      %v1568 = vld [vmem:[%s1035] sm:$0x1]
      %v1570 = vlaneseq
      %v1571 = vshrl.u32 %v1570, 7
      %v1572 = vsub.s32 0, %v1571
      %v1573 = vrot.slane %v1568, %v1572
      %v1575 = vmul.f32 %v1567, %v1573
      %1576 = vst [vmem:[#allocation9 + $0x18] sm:$0xff] %v1575
      %1577 = vst [vmem:[#allocation9 + $0x20] sm:$0xff] %v1530
      %1578 = vrot.lane.b32.xlu0 %v1530, 127
      %v1579 = vpop.permute.xlu0 %1578
      %v1580 = vld [vmem:[%s1048] sm:$0x1]
      %v1582 = vlaneseq
      %v1583 = vshrl.u32 %v1582, 7
      %v1584 = vsub.s32 0, %v1583
      %v1585 = vrot.slane %v1580, %v1584
      %v1587 = vmul.f32 %v1579, %v1585
      %1588 = vst [vmem:[#allocation9 + $0x28] sm:$0xff] %v1587
      %1589 = vrot.lane.b32.xlu0 %v1530, 121
      %v1590 = vpop.permute.xlu0 %1589
      %v1591 = vld [vmem:[%s1060] sm:$0x1]
      %v1593 = vlaneseq
      %v1594 = vshrl.u32 %v1593, 7
      %v1595 = vsub.s32 0, %v1594
      %v1596 = vrot.slane %v1591, %v1595
      %v1598 = vmul.f32 %v1590, %v1596
      %1599 = vst [vmem:[#allocation9 + $0x30] sm:$0xff] %v1598
      %1600 = vrot.lane.b32.xlu0 %v1530, 120
      %v1601 = vpop.permute.xlu0 %1600
      %v1602 = vld [vmem:[%s1072] sm:$0x1]
      %v1604 = vlaneseq
      %v1605 = vshrl.u32 %v1604, 7
      %v1606 = vsub.s32 0, %v1605
      %v1607 = vrot.slane %v1602, %v1606
      %v1609 = vmul.f32 %v1601, %v1607
      %1610 = vst [vmem:[#allocation9 + $0x38] sm:$0xff] %v1609
      %1611 = vrot.lane.b32.xlu0 %v1530, 119
      %v1612 = vpop.permute.xlu0 %1611
      %v1613 = vld [vmem:[%s1084] sm:$0x1]
      %v1615 = vlaneseq
      %v1616 = vshrl.u32 %v1615, 7
      %v1617 = vsub.s32 0, %v1616
      %v1618 = vrot.slane %v1613, %v1617
      %v1620 = vmul.f32 %v1612, %v1618
      %1621 = vst [vmem:[#allocation9 + $0x40] sm:$0xff] %v1620
      %v1622 = vld [vmem:[%s5] sm:$0xff]
      %v1623 = vld [vmem:[#allocation9] sm:$0xff]
      %v1624 = vld [vmem:[#allocation9 + $0x8] sm:$0xff]
      %v1625 = vld [vmem:[#allocation9 + $0x10] sm:$0xff]
      %v1626 = vld [vmem:[#allocation9 + $0x18] sm:$0xff]
      %v1627 = vld [vmem:[#allocation9 + $0x20] sm:$0xff]
      %v1628 = vld [vmem:[#allocation9 + $0x28] sm:$0xff]
      %v1629 = vld [vmem:[#allocation9 + $0x30] sm:$0xff]
      %v1630 = vld [vmem:[#allocation9 + $0x38] sm:$0xff]
      %v1631 = vld [vmem:[#allocation9 + $0x40] sm:$0xff]
      %v1633 = vsel %vm1104, %v1622, 0
      %1635 = vmatprep.subr.mxu0 0.0
      %1636 = vmatpush1.msra.mxu0 0.0
      %1637 = vmatprep.subr.mxu0 0.0
      %1638 = vmatpush1.msra.mxu0 0.0
      %1639 = vmatprep.subr.mxu0 0.0
      %1640 = vmatpush1.msra.mxu0 0.0
      %1641 = vmatprep.subr.mxu0 0.0
      %1642 = vmatpush1.msra.mxu0 0.0
      %1643 = vmatprep.subr.mxu0 0.0
      %1644 = vmatpush1.msra.mxu0 0.0
      %1645 = vmatprep.subr.mxu0 0.0
      %1646 = vmatpush1.msra.mxu0 0.0
      %1647 = vmatprep.subr.mxu0 0.0
      %1648 = vmatpush1.msra.mxu0 0.0
      %1649 = vmatprep.subr.mxu0 0.0
      %1650 = vmatpush1.msra.mxu0 %v1631
      %1651 = vmatprep.subr.mxu0 0.0
      %1652 = vmatpush1.msra.mxu0 %v1630
      %1653 = vmatprep.subr.mxu0 0.0
      %1654 = vmatpush1.msra.mxu0 %v1629
      %1655 = vmatprep.subr.mxu0 0.0
      %1656 = vmatpush1.msra.mxu0 %v1628
      %1657 = vmatprep.subr.mxu0 0.0
      %1658 = vmatpush1.msra.mxu0 %v1627
      %1659 = vmatprep.subr.mxu0 0.0
      %1660 = vmatpush1.msra.mxu0 %v1626
      %1661 = vmatprep.subr.mxu0 0.0
      %1662 = vmatpush1.msra.mxu0 %v1625
      %1663 = vmatprep.subr.mxu0 0.0
      %1664 = vmatpush1.msra.mxu0 %v1624
      %1665 = vmatprep.subr.mxu0 0.0
      %1666 = vmatpush1.msra.mxu0 %v1623
      %1667 = vmatprep.subr.mxu0 0.0
      %1668 = vmatpush2.msra.mxu0 0.0
      %1669 = vmatprep.subr.mxu0 0.0
      %1670 = vmatpush2.msra.mxu0 0.0
      %1671 = vmatprep.subr.mxu0 0.0
      %1672 = vmatpush2.msra.mxu0 0.0
      %1673 = vmatprep.subr.mxu0 0.0
      %1674 = vmatpush2.msra.mxu0 0.0
      %1675 = vmatprep.subr.mxu0 0.0
      %1676 = vmatpush2.msra.mxu0 0.0
      %1677 = vmatprep.subr.mxu0 0.0
      %1678 = vmatpush2.msra.mxu0 0.0
      %1679 = vmatprep.subr.mxu0 0.0
      %1680 = vmatpush2.msra.mxu0 0.0
      %1681 = vmatprep.subr.mxu0 0.0
      %1682 = vmatpush2.msra.mxu0 0.0
      %1683 = vmatprep.subr.mxu0 0.0
      %1684 = vmatpush2.msra.mxu0 0.0
      %1685 = vmatprep.subr.mxu0 0.0
      %1686 = vmatpush2.msra.mxu0 0.0
      %1687 = vmatprep.subr.mxu0 0.0
      %1688 = vmatpush2.msra.mxu0 0.0
      %1689 = vmatprep.subr.mxu0 0.0
      %1690 = vmatpush2.msra.mxu0 0.0
      %1691 = vmatprep.subr.mxu0 0.0
      %1692 = vmatpush2.msra.mxu0 0.0
      %1693 = vmatprep.subr.mxu0 0.0
      %1694 = vmatpush2.msra.mxu0 0.0
      %1695 = vmatprep.subr.mxu0 0.0
      %1696 = vmatpush2.msra.mxu0 0.0
      %1697 = vmatprep.subr.mxu0 0.0
      %1698 = vmatpush2.msra.mxu0 0.0
      %1699 = vmatprep.mubr.f32.mxu0 0.0
      %1700 = vmatmul.mubr.f32.gmra.mxu0 %v1633
      %v1701 = vpop.f32.mrf.mxu0
      %v1702 = vadd.f32 0.0, %v1701
      %v1703 = vpop.f32.mrf.mxu0
      %1704 = vdwg.mxu0
      %s1705 = scalar_lea.vmem %s19, %s1178
      %v1706 = vld [vmem:[%s1705] sm:$0xff]
      %v1707 = vld [vmem:[%s37] sm:$0x3]
      %v1708 = vld [vmem:[%s43] sm:$0xff]
      %v1709 = vld [vmem:[%s43 + $0x8] sm:$0xff]
      %v1710 = vld [vmem:[%s43 + $0x10] sm:$0xff]
      %v1711 = vld [vmem:[%s43 + $0x18] sm:$0xff]
      %v1712 = vld [vmem:[%s43 + $0x20] sm:$0xff]
      %v1713 = vld [vmem:[%s43 + $0x28] sm:$0xff]
      %v1714 = vld [vmem:[%s43 + $0x30] sm:$0xff]
      %v1715 = vld [vmem:[%s43 + $0x38] sm:$0xff]
      %v1716 = vld [vmem:[%s43 + $0x40] sm:$0xff]
      %v1717 = vld [vmem:[%s43 + $0x48] sm:$0xff]
      %v1718 = vld [vmem:[%s43 + $0x50] sm:$0xff]
      %v1719 = vld [vmem:[%s43 + $0x58] sm:$0xff]
      %v1720 = vld [vmem:[%s43 + $0x60] sm:$0xff]
      %v1721 = vld [vmem:[%s43 + $0x68] sm:$0xff]
      %v1722 = vld [vmem:[%s43 + $0x70] sm:$0xff]
      %v1723 = vld [vmem:[%s43 + $0x78] sm:$0xff]
      %v1724 = vrot.slane %v1702, 4
      %v1725 = vadd.f32 %v1702, %v1724
      %v1726 = vrot.slane %v1725, 2
      %v1727 = vadd.f32 %v1725, %v1726
      %v1728 = vrot.slane %v1727, 1
      %v1729 = vadd.f32 %v1727, %v1728
      %1730 = vmatprep.subr.mxu0 0.0
      %1731 = vmatpush1.msra.mxu0 %v1723
      %1732 = vmatprep.subr.mxu0 0.0
      %1733 = vmatpush1.msra.mxu0 %v1722
      %1734 = vmatprep.subr.mxu0 0.0
      %1735 = vmatpush1.msra.mxu0 %v1721
      %1736 = vmatprep.subr.mxu0 0.0
      %1737 = vmatpush1.msra.mxu0 %v1720
      %1738 = vmatprep.subr.mxu0 0.0
      %1739 = vmatpush1.msra.mxu0 %v1719
      %1740 = vmatprep.subr.mxu0 0.0
      %1741 = vmatpush1.msra.mxu0 %v1718
      %1742 = vmatprep.subr.mxu0 0.0
      %1743 = vmatpush1.msra.mxu0 %v1717
      %1744 = vmatprep.subr.mxu0 0.0
      %1745 = vmatpush1.msra.mxu0 %v1716
      %1746 = vmatprep.subr.mxu0 0.0
      %1747 = vmatpush1.msra.mxu0 %v1715
      %1748 = vmatprep.subr.mxu0 0.0
      %1749 = vmatpush1.msra.mxu0 %v1714
      %1750 = vmatprep.subr.mxu0 0.0
      %1751 = vmatpush1.msra.mxu0 %v1713
      %1752 = vmatprep.subr.mxu0 0.0
      %1753 = vmatpush1.msra.mxu0 %v1712
      %1754 = vmatprep.subr.mxu0 0.0
      %1755 = vmatpush1.msra.mxu0 %v1711
      %1756 = vmatprep.subr.mxu0 0.0
      %1757 = vmatpush1.msra.mxu0 %v1710
      %1758 = vmatprep.subr.mxu0 0.0
      %1759 = vmatpush1.msra.mxu0 %v1709
      %1760 = vmatprep.subr.mxu0 0.0
      %1761 = vmatpush1.msra.mxu0 %v1708
      %1762 = vmatprep.subr.mxu0 0.0
      %1763 = vmatpush2.msra.mxu0 0.0
      %1764 = vmatprep.subr.mxu0 0.0
      %1765 = vmatpush2.msra.mxu0 0.0
      %1766 = vmatprep.subr.mxu0 0.0
      %1767 = vmatpush2.msra.mxu0 0.0
      %1768 = vmatprep.subr.mxu0 0.0
      %1769 = vmatpush2.msra.mxu0 0.0
      %1770 = vmatprep.subr.mxu0 0.0
      %1771 = vmatpush2.msra.mxu0 0.0
      %1772 = vmatprep.subr.mxu0 0.0
      %1773 = vmatpush2.msra.mxu0 0.0
      %1774 = vmatprep.subr.mxu0 0.0
      %1775 = vmatpush2.msra.mxu0 0.0
      %1776 = vmatprep.subr.mxu0 0.0
      %1777 = vmatpush2.msra.mxu0 0.0
      %1778 = vmatprep.subr.mxu0 0.0
      %1779 = vmatpush2.msra.mxu0 0.0
      %1780 = vmatprep.subr.mxu0 0.0
      %1781 = vmatpush2.msra.mxu0 0.0
      %1782 = vmatprep.subr.mxu0 0.0
      %1783 = vmatpush2.msra.mxu0 0.0
      %1784 = vmatprep.subr.mxu0 0.0
      %1785 = vmatpush2.msra.mxu0 0.0
      %1786 = vmatprep.subr.mxu0 0.0
      %1787 = vmatpush2.msra.mxu0 0.0
      %1788 = vmatprep.subr.mxu0 0.0
      %1789 = vmatpush2.msra.mxu0 0.0
      %1790 = vmatprep.subr.mxu0 0.0
      %1791 = vmatpush2.msra.mxu0 0.0
      %1792 = vmatprep.subr.mxu0 0.0
      %1793 = vmatpush2.msra.mxu0 0.0
      %1794 = vmatprep.mubr.f32.mxu0 0.0
      %1795 = vmatmul.mubr.f32.gmra.mxu0 %v1729
      %v1796 = vpop.f32.mrf.mxu0
      %v1797 = vadd.f32 0.0, %v1796
      %v1798 = vpop.f32.mrf.mxu0
      %1799 = vdwg.mxu0
      %v1800 = vmul.f32 %v1797, 0.00390625
      %v1802 = vsel %vm1275, %v1800, 0
      %v1805 = vsel %vm1279, %v1707, 0
      %1807 = vmatprep.subr.mxu0 0.0
      %1808 = vmatpush1.msra.mxu0 0.0
      %1809 = vmatprep.subr.mxu0 0.0
      %1810 = vmatpush1.msra.mxu0 0.0
      %1811 = vmatprep.subr.mxu0 0.0
      %1812 = vmatpush1.msra.mxu0 0.0
      %1813 = vmatprep.subr.mxu0 0.0
      %1814 = vmatpush1.msra.mxu0 0.0
      %1815 = vmatprep.subr.mxu0 0.0
      %1816 = vmatpush1.msra.mxu0 0.0
      %1817 = vmatprep.subr.mxu0 0.0
      %1818 = vmatpush1.msra.mxu0 0.0
      %1819 = vmatprep.subr.mxu0 0.0
      %1820 = vmatpush1.msra.mxu0 0.0
      %1821 = vmatprep.subr.mxu0 0.0
      %1822 = vmatpush1.msra.mxu0 0.0
      %1823 = vmatprep.subr.mxu0 0.0
      %1824 = vmatpush1.msra.mxu0 0.0
      %1825 = vmatprep.subr.mxu0 0.0
      %1826 = vmatpush1.msra.mxu0 0.0
      %1827 = vmatprep.subr.mxu0 0.0
      %1828 = vmatpush1.msra.mxu0 0.0
      %1829 = vmatprep.subr.mxu0 0.0
      %1830 = vmatpush1.msra.mxu0 0.0
      %1831 = vmatprep.subr.mxu0 0.0
      %1832 = vmatpush1.msra.mxu0 0.0
      %1833 = vmatprep.subr.mxu0 0.0
      %1834 = vmatpush1.msra.mxu0 0.0
      %1835 = vmatprep.subr.mxu0 0.0
      %1836 = vmatpush1.msra.mxu0 0.0
      %1837 = vmatprep.subr.mxu0 0.0
      %1838 = vmatpush1.msra.mxu0 %v1805
      %1839 = vmatprep.subr.mxu0 0.0
      %1840 = vmatpush2.msra.mxu0 0.0
      %1841 = vmatprep.subr.mxu0 0.0
      %1842 = vmatpush2.msra.mxu0 0.0
      %1843 = vmatprep.subr.mxu0 0.0
      %1844 = vmatpush2.msra.mxu0 0.0
      %1845 = vmatprep.subr.mxu0 0.0
      %1846 = vmatpush2.msra.mxu0 0.0
      %1847 = vmatprep.subr.mxu0 0.0
      %1848 = vmatpush2.msra.mxu0 0.0
      %1849 = vmatprep.subr.mxu0 0.0
      %1850 = vmatpush2.msra.mxu0 0.0
      %1851 = vmatprep.subr.mxu0 0.0
      %1852 = vmatpush2.msra.mxu0 0.0
      %1853 = vmatprep.subr.mxu0 0.0
      %1854 = vmatpush2.msra.mxu0 0.0
      %1855 = vmatprep.subr.mxu0 0.0
      %1856 = vmatpush2.msra.mxu0 0.0
      %1857 = vmatprep.subr.mxu0 0.0
      %1858 = vmatpush2.msra.mxu0 0.0
      %1859 = vmatprep.subr.mxu0 0.0
      %1860 = vmatpush2.msra.mxu0 0.0
      %1861 = vmatprep.subr.mxu0 0.0
      %1862 = vmatpush2.msra.mxu0 0.0
      %1863 = vmatprep.subr.mxu0 0.0
      %1864 = vmatpush2.msra.mxu0 0.0
      %1865 = vmatprep.subr.mxu0 0.0
      %1866 = vmatpush2.msra.mxu0 0.0
      %1867 = vmatprep.subr.mxu0 0.0
      %1868 = vmatpush2.msra.mxu0 0.0
      %1869 = vmatprep.subr.mxu0 0.0
      %1870 = vmatpush2.msra.mxu0 0.0
      %1871 = vmatprep.mubr.f32.mxu0 0.0
      %1872 = vmatmul.mubr.f32.gmra.mxu0 %v1802
      %v1873 = vpop.f32.mrf.mxu0
      %v1874 = vadd.f32 0.0, %v1873
      %v1875 = vpop.f32.mrf.mxu0
      %1876 = vdwg.mxu0
      %v1877 = vlaneseq
      %v1878 = vshrl.u32 %v1877, 7
      %v1879 = vsub.s32 0, %v1878
      %v1880 = vrot.slane %v1874, %v1879
      %v1881 = vsub.f32 %v1702, %v1880
      %v1882 = vmul.f32 %v1881, %v1881
      %v1883 = vsel %vm1359, %v1882, 0.0
      %v1884 = vrot.slane %v1883, 4
      %v1885 = vadd.f32 %v1883, %v1884
      %v1886 = vrot.slane %v1885, 2
      %v1887 = vadd.f32 %v1885, %v1886
      %v1888 = vrot.slane %v1887, 1
      %v1889 = vadd.f32 %v1887, %v1888
      %1890 = vmatprep.subr.mxu0 0.0
      %1891 = vmatpush1.msra.mxu0 %v1723
      %1892 = vmatprep.subr.mxu0 0.0
      %1893 = vmatpush1.msra.mxu0 %v1722
      %1894 = vmatprep.subr.mxu0 0.0
      %1895 = vmatpush1.msra.mxu0 %v1721
      %1896 = vmatprep.subr.mxu0 0.0
      %1897 = vmatpush1.msra.mxu0 %v1720
      %1898 = vmatprep.subr.mxu0 0.0
      %1899 = vmatpush1.msra.mxu0 %v1719
      %1900 = vmatprep.subr.mxu0 0.0
      %1901 = vmatpush1.msra.mxu0 %v1718
      %1902 = vmatprep.subr.mxu0 0.0
      %1903 = vmatpush1.msra.mxu0 %v1717
      %1904 = vmatprep.subr.mxu0 0.0
      %1905 = vmatpush1.msra.mxu0 %v1716
      %1906 = vmatprep.subr.mxu0 0.0
      %1907 = vmatpush1.msra.mxu0 %v1715
      %1908 = vmatprep.subr.mxu0 0.0
      %1909 = vmatpush1.msra.mxu0 %v1714
      %1910 = vmatprep.subr.mxu0 0.0
      %1911 = vmatpush1.msra.mxu0 %v1713
      %1912 = vmatprep.subr.mxu0 0.0
      %1913 = vmatpush1.msra.mxu0 %v1712
      %1914 = vmatprep.subr.mxu0 0.0
      %1915 = vmatpush1.msra.mxu0 %v1711
      %1916 = vmatprep.subr.mxu0 0.0
      %1917 = vmatpush1.msra.mxu0 %v1710
      %1918 = vmatprep.subr.mxu0 0.0
      %1919 = vmatpush1.msra.mxu0 %v1709
      %1920 = vmatprep.subr.mxu0 0.0
      %1921 = vmatpush1.msra.mxu0 %v1708
      %1922 = vmatprep.subr.mxu0 0.0
      %1923 = vmatpush2.msra.mxu0 0.0
      %1924 = vmatprep.subr.mxu0 0.0
      %1925 = vmatpush2.msra.mxu0 0.0
      %1926 = vmatprep.subr.mxu0 0.0
      %1927 = vmatpush2.msra.mxu0 0.0
      %1928 = vmatprep.subr.mxu0 0.0
      %1929 = vmatpush2.msra.mxu0 0.0
      %1930 = vmatprep.subr.mxu0 0.0
      %1931 = vmatpush2.msra.mxu0 0.0
      %1932 = vmatprep.subr.mxu0 0.0
      %1933 = vmatpush2.msra.mxu0 0.0
      %1934 = vmatprep.subr.mxu0 0.0
      %1935 = vmatpush2.msra.mxu0 0.0
      %1936 = vmatprep.subr.mxu0 0.0
      %1937 = vmatpush2.msra.mxu0 0.0
      %1938 = vmatprep.subr.mxu0 0.0
      %1939 = vmatpush2.msra.mxu0 0.0
      %1940 = vmatprep.subr.mxu0 0.0
      %1941 = vmatpush2.msra.mxu0 0.0
      %1942 = vmatprep.subr.mxu0 0.0
      %1943 = vmatpush2.msra.mxu0 0.0
      %1944 = vmatprep.subr.mxu0 0.0
      %1945 = vmatpush2.msra.mxu0 0.0
      %1946 = vmatprep.subr.mxu0 0.0
      %1947 = vmatpush2.msra.mxu0 0.0
      %1948 = vmatprep.subr.mxu0 0.0
      %1949 = vmatpush2.msra.mxu0 0.0
      %1950 = vmatprep.subr.mxu0 0.0
      %1951 = vmatpush2.msra.mxu0 0.0
      %1952 = vmatprep.subr.mxu0 0.0
      %1953 = vmatpush2.msra.mxu0 0.0
      %1954 = vmatprep.mubr.f32.mxu0 0.0
      %1955 = vmatmul.mubr.f32.gmra.mxu0 %v1889
      %v1956 = vpop.f32.mrf.mxu0
      %v1957 = vadd.f32 0.0, %v1956
      %v1958 = vpop.f32.mrf.mxu0
      %1959 = vdwg.mxu0
      %v1960 = vmul.f32 %v1957, 0.00390625
      %v1961 = vadd.f32 %v1960, 0.0001
      %v1962 = vrsqrt.pop %v1961
      %v1964 = vsel %vm1275, %v1962, 0
      %1966 = vmatprep.subr.mxu0 0.0
      %1967 = vmatpush1.msra.mxu0 0.0
      %1968 = vmatprep.subr.mxu0 0.0
      %1969 = vmatpush1.msra.mxu0 0.0
      %1970 = vmatprep.subr.mxu0 0.0
      %1971 = vmatpush1.msra.mxu0 0.0
      %1972 = vmatprep.subr.mxu0 0.0
      %1973 = vmatpush1.msra.mxu0 0.0
      %1974 = vmatprep.subr.mxu0 0.0
      %1975 = vmatpush1.msra.mxu0 0.0
      %1976 = vmatprep.subr.mxu0 0.0
      %1977 = vmatpush1.msra.mxu0 0.0
      %1978 = vmatprep.subr.mxu0 0.0
      %1979 = vmatpush1.msra.mxu0 0.0
      %1980 = vmatprep.subr.mxu0 0.0
      %1981 = vmatpush1.msra.mxu0 0.0
      %1982 = vmatprep.subr.mxu0 0.0
      %1983 = vmatpush1.msra.mxu0 0.0
      %1984 = vmatprep.subr.mxu0 0.0
      %1985 = vmatpush1.msra.mxu0 0.0
      %1986 = vmatprep.subr.mxu0 0.0
      %1987 = vmatpush1.msra.mxu0 0.0
      %1988 = vmatprep.subr.mxu0 0.0
      %1989 = vmatpush1.msra.mxu0 0.0
      %1990 = vmatprep.subr.mxu0 0.0
      %1991 = vmatpush1.msra.mxu0 0.0
      %1992 = vmatprep.subr.mxu0 0.0
      %1993 = vmatpush1.msra.mxu0 0.0
      %1994 = vmatprep.subr.mxu0 0.0
      %1995 = vmatpush1.msra.mxu0 0.0
      %1996 = vmatprep.subr.mxu0 0.0
      %1997 = vmatpush1.msra.mxu0 %v1805
      %1998 = vmatprep.subr.mxu0 0.0
      %1999 = vmatpush2.msra.mxu0 0.0
      %2000 = vmatprep.subr.mxu0 0.0
      %2001 = vmatpush2.msra.mxu0 0.0
      %2002 = vmatprep.subr.mxu0 0.0
      %2003 = vmatpush2.msra.mxu0 0.0
      %2004 = vmatprep.subr.mxu0 0.0
      %2005 = vmatpush2.msra.mxu0 0.0
      %2006 = vmatprep.subr.mxu0 0.0
      %2007 = vmatpush2.msra.mxu0 0.0
      %2008 = vmatprep.subr.mxu0 0.0
      %2009 = vmatpush2.msra.mxu0 0.0
      %2010 = vmatprep.subr.mxu0 0.0
      %2011 = vmatpush2.msra.mxu0 0.0
      %2012 = vmatprep.subr.mxu0 0.0
      %2013 = vmatpush2.msra.mxu0 0.0
      %2014 = vmatprep.subr.mxu0 0.0
      %2015 = vmatpush2.msra.mxu0 0.0
      %2016 = vmatprep.subr.mxu0 0.0
      %2017 = vmatpush2.msra.mxu0 0.0
      %2018 = vmatprep.subr.mxu0 0.0
      %2019 = vmatpush2.msra.mxu0 0.0
      %2020 = vmatprep.subr.mxu0 0.0
      %2021 = vmatpush2.msra.mxu0 0.0
      %2022 = vmatprep.subr.mxu0 0.0
      %2023 = vmatpush2.msra.mxu0 0.0
      %2024 = vmatprep.subr.mxu0 0.0
      %2025 = vmatpush2.msra.mxu0 0.0
      %2026 = vmatprep.subr.mxu0 0.0
      %2027 = vmatpush2.msra.mxu0 0.0
      %2028 = vmatprep.subr.mxu0 0.0
      %2029 = vmatpush2.msra.mxu0 0.0
      %2030 = vmatprep.mubr.f32.mxu0 0.0
      %2031 = vmatmul.mubr.f32.gmra.mxu0 %v1964
      %v2032 = vpop.f32.mrf.mxu0
      %v2033 = vadd.f32 0.0, %v2032
      %v2034 = vpop.f32.mrf.mxu0
      %2035 = vdwg.mxu0
      %v2036 = vlaneseq
      %v2037 = vshrl.u32 %v2036, 7
      %v2038 = vsub.s32 0, %v2037
      %v2039 = vrot.slane %v2033, %v2038
      %v2040 = vmul.f32 %v1881, %v2039
      %2042 = vset.pattern.permute.xlu0 0
      %2043 = vperm.xlu0 %2042, %v1706
      %v2044 = vpop.permute.xlu0 %2043
      %v2046 = vmul.f32 %v2040, %v2044
      %v2047 = vld [vmem:[#allocation3] sm:$0xff]
      %v2048 = vmul.f32 %v2047, 0.95
      %v2049 = vadd.f32 %v2048, %v2046
      %v2050 = vsub.f32 %v2049, 1.0
      %vm2051 = vcmp.gt.f32.partialorder %v2050, 0.0
      %v2052 = vsel %vm2051, 1, 0
      %v2053 = vcvt.s32.f32 %v2052
      %v2054 = vsub.f32 %v2049, %v2053
      %2055 = vst [vmem:[#allocation3] sm:$0xff] %v2054
      %2056 = vrot.lane.b32.xlu0 %v2053, 9
      %v2057 = vpop.permute.xlu0 %2056
      %v2058 = vld [vmem:[%s31] sm:$0x1]
      %v2060 = vlaneseq
      %v2061 = vshrl.u32 %v2060, 7
      %v2062 = vsub.s32 0, %v2061
      %v2063 = vrot.slane %v2058, %v2062
      %v2065 = vmul.f32 %v2057, %v2063
      %2066 = vst [vmem:[#allocation9] sm:$0xff] %v2065
      %2067 = vrot.lane.b32.xlu0 %v2053, 8
      %v2068 = vpop.permute.xlu0 %2067
      %v2069 = vld [vmem:[%s1011] sm:$0x1]
      %v2071 = vlaneseq
      %v2072 = vshrl.u32 %v2071, 7
      %v2073 = vsub.s32 0, %v2072
      %v2074 = vrot.slane %v2069, %v2073
      %v2076 = vmul.f32 %v2068, %v2074
      %2077 = vst [vmem:[#allocation9 + $0x8] sm:$0xff] %v2076
      %2078 = vrot.lane.b32.xlu0 %v2053, 7
      %v2079 = vpop.permute.xlu0 %2078
      %v2080 = vld [vmem:[%s1023] sm:$0x1]
      %v2082 = vlaneseq
      %v2083 = vshrl.u32 %v2082, 7
      %v2084 = vsub.s32 0, %v2083
      %v2085 = vrot.slane %v2080, %v2084
      %v2087 = vmul.f32 %v2079, %v2085
      %2088 = vst [vmem:[#allocation9 + $0x10] sm:$0xff] %v2087
      %2089 = vrot.lane.b32.xlu0 %v2053, 1
      %v2090 = vpop.permute.xlu0 %2089
      %v2091 = vld [vmem:[%s1035] sm:$0x1]
      %v2093 = vlaneseq
      %v2094 = vshrl.u32 %v2093, 7
      %v2095 = vsub.s32 0, %v2094
      %v2096 = vrot.slane %v2091, %v2095
      %v2098 = vmul.f32 %v2090, %v2096
      %2099 = vst [vmem:[#allocation9 + $0x18] sm:$0xff] %v2098
      %2100 = vst [vmem:[#allocation9 + $0x20] sm:$0xff] %v2053
      %2101 = vrot.lane.b32.xlu0 %v2053, 127
      %v2102 = vpop.permute.xlu0 %2101
      %v2103 = vld [vmem:[%s1048] sm:$0x1]
      %v2105 = vlaneseq
      %v2106 = vshrl.u32 %v2105, 7
      %v2107 = vsub.s32 0, %v2106
      %v2108 = vrot.slane %v2103, %v2107
      %v2110 = vmul.f32 %v2102, %v2108
      %2111 = vst [vmem:[#allocation9 + $0x28] sm:$0xff] %v2110
      %2112 = vrot.lane.b32.xlu0 %v2053, 121
      %v2113 = vpop.permute.xlu0 %2112
      %v2114 = vld [vmem:[%s1060] sm:$0x1]
      %v2116 = vlaneseq
      %v2117 = vshrl.u32 %v2116, 7
      %v2118 = vsub.s32 0, %v2117
      %v2119 = vrot.slane %v2114, %v2118
      %v2121 = vmul.f32 %v2113, %v2119
      %2122 = vst [vmem:[#allocation9 + $0x30] sm:$0xff] %v2121
      %2123 = vrot.lane.b32.xlu0 %v2053, 120
      %v2124 = vpop.permute.xlu0 %2123
      %v2125 = vld [vmem:[%s1072] sm:$0x1]
      %v2127 = vlaneseq
      %v2128 = vshrl.u32 %v2127, 7
      %v2129 = vsub.s32 0, %v2128
      %v2130 = vrot.slane %v2125, %v2129
      %v2132 = vmul.f32 %v2124, %v2130
      %2133 = vst [vmem:[#allocation9 + $0x38] sm:$0xff] %v2132
      %2134 = vrot.lane.b32.xlu0 %v2053, 119
      %v2135 = vpop.permute.xlu0 %2134
      %v2136 = vld [vmem:[%s1084] sm:$0x1]
      %v2138 = vlaneseq
      %v2139 = vshrl.u32 %v2138, 7
      %v2140 = vsub.s32 0, %v2139
      %v2141 = vrot.slane %v2136, %v2140
      %v2143 = vmul.f32 %v2135, %v2141
      %2144 = vst [vmem:[#allocation9 + $0x40] sm:$0xff] %v2143
      %v2145 = vld [vmem:[%s7] sm:$0xff]
      %v2146 = vld [vmem:[#allocation9] sm:$0xff]
      %v2147 = vld [vmem:[#allocation9 + $0x8] sm:$0xff]
      %v2148 = vld [vmem:[#allocation9 + $0x10] sm:$0xff]
      %v2149 = vld [vmem:[#allocation9 + $0x18] sm:$0xff]
      %v2150 = vld [vmem:[#allocation9 + $0x20] sm:$0xff]
      %v2151 = vld [vmem:[#allocation9 + $0x28] sm:$0xff]
      %v2152 = vld [vmem:[#allocation9 + $0x30] sm:$0xff]
      %v2153 = vld [vmem:[#allocation9 + $0x38] sm:$0xff]
      %v2154 = vld [vmem:[#allocation9 + $0x40] sm:$0xff]
      %v2156 = vsel %vm1104, %v2145, 0
      %2158 = vmatprep.subr.mxu0 0.0
      %2159 = vmatpush1.msra.mxu0 0.0
      %2160 = vmatprep.subr.mxu0 0.0
      %2161 = vmatpush1.msra.mxu0 0.0
      %2162 = vmatprep.subr.mxu0 0.0
      %2163 = vmatpush1.msra.mxu0 0.0
      %2164 = vmatprep.subr.mxu0 0.0
      %2165 = vmatpush1.msra.mxu0 0.0
      %2166 = vmatprep.subr.mxu0 0.0
      %2167 = vmatpush1.msra.mxu0 0.0
      %2168 = vmatprep.subr.mxu0 0.0
      %2169 = vmatpush1.msra.mxu0 0.0
      %2170 = vmatprep.subr.mxu0 0.0
      %2171 = vmatpush1.msra.mxu0 0.0
      %2172 = vmatprep.subr.mxu0 0.0
      %2173 = vmatpush1.msra.mxu0 %v2154
      %2174 = vmatprep.subr.mxu0 0.0
      %2175 = vmatpush1.msra.mxu0 %v2153
      %2176 = vmatprep.subr.mxu0 0.0
      %2177 = vmatpush1.msra.mxu0 %v2152
      %2178 = vmatprep.subr.mxu0 0.0
      %2179 = vmatpush1.msra.mxu0 %v2151
      %2180 = vmatprep.subr.mxu0 0.0
      %2181 = vmatpush1.msra.mxu0 %v2150
      %2182 = vmatprep.subr.mxu0 0.0
      %2183 = vmatpush1.msra.mxu0 %v2149
      %2184 = vmatprep.subr.mxu0 0.0
      %2185 = vmatpush1.msra.mxu0 %v2148
      %2186 = vmatprep.subr.mxu0 0.0
      %2187 = vmatpush1.msra.mxu0 %v2147
      %2188 = vmatprep.subr.mxu0 0.0
      %2189 = vmatpush1.msra.mxu0 %v2146
      %2190 = vmatprep.subr.mxu0 0.0
      %2191 = vmatpush2.msra.mxu0 0.0
      %2192 = vmatprep.subr.mxu0 0.0
      %2193 = vmatpush2.msra.mxu0 0.0
      %2194 = vmatprep.subr.mxu0 0.0
      %2195 = vmatpush2.msra.mxu0 0.0
      %2196 = vmatprep.subr.mxu0 0.0
      %2197 = vmatpush2.msra.mxu0 0.0
      %2198 = vmatprep.subr.mxu0 0.0
      %2199 = vmatpush2.msra.mxu0 0.0
      %2200 = vmatprep.subr.mxu0 0.0
      %2201 = vmatpush2.msra.mxu0 0.0
      %2202 = vmatprep.subr.mxu0 0.0
      %2203 = vmatpush2.msra.mxu0 0.0
      %2204 = vmatprep.subr.mxu0 0.0
      %2205 = vmatpush2.msra.mxu0 0.0
      %2206 = vmatprep.subr.mxu0 0.0
      %2207 = vmatpush2.msra.mxu0 0.0
      %2208 = vmatprep.subr.mxu0 0.0
      %2209 = vmatpush2.msra.mxu0 0.0
      %2210 = vmatprep.subr.mxu0 0.0
      %2211 = vmatpush2.msra.mxu0 0.0
      %2212 = vmatprep.subr.mxu0 0.0
      %2213 = vmatpush2.msra.mxu0 0.0
      %2214 = vmatprep.subr.mxu0 0.0
      %2215 = vmatpush2.msra.mxu0 0.0
      %2216 = vmatprep.subr.mxu0 0.0
      %2217 = vmatpush2.msra.mxu0 0.0
      %2218 = vmatprep.subr.mxu0 0.0
      %2219 = vmatpush2.msra.mxu0 0.0
      %2220 = vmatprep.subr.mxu0 0.0
      %2221 = vmatpush2.msra.mxu0 0.0
      %2222 = vmatprep.mubr.f32.mxu0 0.0
      %2223 = vmatmul.mubr.f32.gmra.mxu0 %v2156
      %v2224 = vpop.f32.mrf.mxu0
      %v2225 = vadd.f32 0.0, %v2224
      %v2226 = vpop.f32.mrf.mxu0
      %2227 = vdwg.mxu0
      %s2228 = scalar_lea.vmem %s21, %s1178
      %v2229 = vld [vmem:[%s2228] sm:$0xff]
      %v2230 = vld [vmem:[%s37] sm:$0x3]
      %v2231 = vld [vmem:[%s43] sm:$0xff]
      %v2232 = vld [vmem:[%s43 + $0x8] sm:$0xff]
      %v2233 = vld [vmem:[%s43 + $0x10] sm:$0xff]
      %v2234 = vld [vmem:[%s43 + $0x18] sm:$0xff]
      %v2235 = vld [vmem:[%s43 + $0x20] sm:$0xff]
      %v2236 = vld [vmem:[%s43 + $0x28] sm:$0xff]
      %v2237 = vld [vmem:[%s43 + $0x30] sm:$0xff]
      %v2238 = vld [vmem:[%s43 + $0x38] sm:$0xff]
      %v2239 = vld [vmem:[%s43 + $0x40] sm:$0xff]
      %v2240 = vld [vmem:[%s43 + $0x48] sm:$0xff]
      %v2241 = vld [vmem:[%s43 + $0x50] sm:$0xff]
      %v2242 = vld [vmem:[%s43 + $0x58] sm:$0xff]
      %v2243 = vld [vmem:[%s43 + $0x60] sm:$0xff]
      %v2244 = vld [vmem:[%s43 + $0x68] sm:$0xff]
      %v2245 = vld [vmem:[%s43 + $0x70] sm:$0xff]
      %v2246 = vld [vmem:[%s43 + $0x78] sm:$0xff]
      %v2247 = vrot.slane %v2225, 4
      %v2248 = vadd.f32 %v2225, %v2247
      %v2249 = vrot.slane %v2248, 2
      %v2250 = vadd.f32 %v2248, %v2249
      %v2251 = vrot.slane %v2250, 1
      %v2252 = vadd.f32 %v2250, %v2251
      %2253 = vmatprep.subr.mxu0 0.0
      %2254 = vmatpush1.msra.mxu0 %v2246
      %2255 = vmatprep.subr.mxu0 0.0
      %2256 = vmatpush1.msra.mxu0 %v2245
      %2257 = vmatprep.subr.mxu0 0.0
      %2258 = vmatpush1.msra.mxu0 %v2244
      %2259 = vmatprep.subr.mxu0 0.0
      %2260 = vmatpush1.msra.mxu0 %v2243
      %2261 = vmatprep.subr.mxu0 0.0
      %2262 = vmatpush1.msra.mxu0 %v2242
      %2263 = vmatprep.subr.mxu0 0.0
      %2264 = vmatpush1.msra.mxu0 %v2241
      %2265 = vmatprep.subr.mxu0 0.0
      %2266 = vmatpush1.msra.mxu0 %v2240
      %2267 = vmatprep.subr.mxu0 0.0
      %2268 = vmatpush1.msra.mxu0 %v2239
      %2269 = vmatprep.subr.mxu0 0.0
      %2270 = vmatpush1.msra.mxu0 %v2238
      %2271 = vmatprep.subr.mxu0 0.0
      %2272 = vmatpush1.msra.mxu0 %v2237
      %2273 = vmatprep.subr.mxu0 0.0
      %2274 = vmatpush1.msra.mxu0 %v2236
      %2275 = vmatprep.subr.mxu0 0.0
      %2276 = vmatpush1.msra.mxu0 %v2235
      %2277 = vmatprep.subr.mxu0 0.0
      %2278 = vmatpush1.msra.mxu0 %v2234
      %2279 = vmatprep.subr.mxu0 0.0
      %2280 = vmatpush1.msra.mxu0 %v2233
      %2281 = vmatprep.subr.mxu0 0.0
      %2282 = vmatpush1.msra.mxu0 %v2232
      %2283 = vmatprep.subr.mxu0 0.0
      %2284 = vmatpush1.msra.mxu0 %v2231
      %2285 = vmatprep.subr.mxu0 0.0
      %2286 = vmatpush2.msra.mxu0 0.0
      %2287 = vmatprep.subr.mxu0 0.0
      %2288 = vmatpush2.msra.mxu0 0.0
      %2289 = vmatprep.subr.mxu0 0.0
      %2290 = vmatpush2.msra.mxu0 0.0
      %2291 = vmatprep.subr.mxu0 0.0
      %2292 = vmatpush2.msra.mxu0 0.0
      %2293 = vmatprep.subr.mxu0 0.0
      %2294 = vmatpush2.msra.mxu0 0.0
      %2295 = vmatprep.subr.mxu0 0.0
      %2296 = vmatpush2.msra.mxu0 0.0
      %2297 = vmatprep.subr.mxu0 0.0
      %2298 = vmatpush2.msra.mxu0 0.0
      %2299 = vmatprep.subr.mxu0 0.0
      %2300 = vmatpush2.msra.mxu0 0.0
      %2301 = vmatprep.subr.mxu0 0.0
      %2302 = vmatpush2.msra.mxu0 0.0
      %2303 = vmatprep.subr.mxu0 0.0
      %2304 = vmatpush2.msra.mxu0 0.0
      %2305 = vmatprep.subr.mxu0 0.0
      %2306 = vmatpush2.msra.mxu0 0.0
      %2307 = vmatprep.subr.mxu0 0.0
      %2308 = vmatpush2.msra.mxu0 0.0
      %2309 = vmatprep.subr.mxu0 0.0
      %2310 = vmatpush2.msra.mxu0 0.0
      %2311 = vmatprep.subr.mxu0 0.0
      %2312 = vmatpush2.msra.mxu0 0.0
      %2313 = vmatprep.subr.mxu0 0.0
      %2314 = vmatpush2.msra.mxu0 0.0
      %2315 = vmatprep.subr.mxu0 0.0
      %2316 = vmatpush2.msra.mxu0 0.0
      %2317 = vmatprep.mubr.f32.mxu0 0.0
      %2318 = vmatmul.mubr.f32.gmra.mxu0 %v2252
      %v2319 = vpop.f32.mrf.mxu0
      %v2320 = vadd.f32 0.0, %v2319
      %v2321 = vpop.f32.mrf.mxu0
      %2322 = vdwg.mxu0
      %v2323 = vmul.f32 %v2320, 0.00390625
      %v2325 = vsel %vm1275, %v2323, 0
      %v2328 = vsel %vm1279, %v2230, 0
      %2330 = vmatprep.subr.mxu0 0.0
      %2331 = vmatpush1.msra.mxu0 0.0
      %2332 = vmatprep.subr.mxu0 0.0
      %2333 = vmatpush1.msra.mxu0 0.0
      %2334 = vmatprep.subr.mxu0 0.0
      %2335 = vmatpush1.msra.mxu0 0.0
      %2336 = vmatprep.subr.mxu0 0.0
      %2337 = vmatpush1.msra.mxu0 0.0
      %2338 = vmatprep.subr.mxu0 0.0
      %2339 = vmatpush1.msra.mxu0 0.0
      %2340 = vmatprep.subr.mxu0 0.0
      %2341 = vmatpush1.msra.mxu0 0.0
      %2342 = vmatprep.subr.mxu0 0.0
      %2343 = vmatpush1.msra.mxu0 0.0
      %2344 = vmatprep.subr.mxu0 0.0
      %2345 = vmatpush1.msra.mxu0 0.0
      %2346 = vmatprep.subr.mxu0 0.0
      %2347 = vmatpush1.msra.mxu0 0.0
      %2348 = vmatprep.subr.mxu0 0.0
      %2349 = vmatpush1.msra.mxu0 0.0
      %2350 = vmatprep.subr.mxu0 0.0
      %2351 = vmatpush1.msra.mxu0 0.0
      %2352 = vmatprep.subr.mxu0 0.0
      %2353 = vmatpush1.msra.mxu0 0.0
      %2354 = vmatprep.subr.mxu0 0.0
      %2355 = vmatpush1.msra.mxu0 0.0
      %2356 = vmatprep.subr.mxu0 0.0
      %2357 = vmatpush1.msra.mxu0 0.0
      %2358 = vmatprep.subr.mxu0 0.0
      %2359 = vmatpush1.msra.mxu0 0.0
      %2360 = vmatprep.subr.mxu0 0.0
      %2361 = vmatpush1.msra.mxu0 %v2328
      %2362 = vmatprep.subr.mxu0 0.0
      %2363 = vmatpush2.msra.mxu0 0.0
      %2364 = vmatprep.subr.mxu0 0.0
      %2365 = vmatpush2.msra.mxu0 0.0
      %2366 = vmatprep.subr.mxu0 0.0
      %2367 = vmatpush2.msra.mxu0 0.0
      %2368 = vmatprep.subr.mxu0 0.0
      %2369 = vmatpush2.msra.mxu0 0.0
      %2370 = vmatprep.subr.mxu0 0.0
      %2371 = vmatpush2.msra.mxu0 0.0
      %2372 = vmatprep.subr.mxu0 0.0
      %2373 = vmatpush2.msra.mxu0 0.0
      %2374 = vmatprep.subr.mxu0 0.0
      %2375 = vmatpush2.msra.mxu0 0.0
      %2376 = vmatprep.subr.mxu0 0.0
      %2377 = vmatpush2.msra.mxu0 0.0
      %2378 = vmatprep.subr.mxu0 0.0
      %2379 = vmatpush2.msra.mxu0 0.0
      %2380 = vmatprep.subr.mxu0 0.0
      %2381 = vmatpush2.msra.mxu0 0.0
      %2382 = vmatprep.subr.mxu0 0.0
      %2383 = vmatpush2.msra.mxu0 0.0
      %2384 = vmatprep.subr.mxu0 0.0
      %2385 = vmatpush2.msra.mxu0 0.0
      %2386 = vmatprep.subr.mxu0 0.0
      %2387 = vmatpush2.msra.mxu0 0.0
      %2388 = vmatprep.subr.mxu0 0.0
      %2389 = vmatpush2.msra.mxu0 0.0
      %2390 = vmatprep.subr.mxu0 0.0
      %2391 = vmatpush2.msra.mxu0 0.0
      %2392 = vmatprep.subr.mxu0 0.0
      %2393 = vmatpush2.msra.mxu0 0.0
      %2394 = vmatprep.mubr.f32.mxu0 0.0
      %2395 = vmatmul.mubr.f32.gmra.mxu0 %v2325
      %v2396 = vpop.f32.mrf.mxu0
      %v2397 = vadd.f32 0.0, %v2396
      %v2398 = vpop.f32.mrf.mxu0
      %2399 = vdwg.mxu0
      %v2400 = vlaneseq
      %v2401 = vshrl.u32 %v2400, 7
      %v2402 = vsub.s32 0, %v2401
      %v2403 = vrot.slane %v2397, %v2402
      %v2404 = vsub.f32 %v2225, %v2403
      %v2405 = vmul.f32 %v2404, %v2404
      %v2406 = vsel %vm1359, %v2405, 0.0
      %v2407 = vrot.slane %v2406, 4
      %v2408 = vadd.f32 %v2406, %v2407
      %v2409 = vrot.slane %v2408, 2
      %v2410 = vadd.f32 %v2408, %v2409
      %v2411 = vrot.slane %v2410, 1
      %v2412 = vadd.f32 %v2410, %v2411
      %2413 = vmatprep.subr.mxu0 0.0
      %2414 = vmatpush1.msra.mxu0 %v2246
      %2415 = vmatprep.subr.mxu0 0.0
      %2416 = vmatpush1.msra.mxu0 %v2245
      %2417 = vmatprep.subr.mxu0 0.0
      %2418 = vmatpush1.msra.mxu0 %v2244
      %2419 = vmatprep.subr.mxu0 0.0
      %2420 = vmatpush1.msra.mxu0 %v2243
      %2421 = vmatprep.subr.mxu0 0.0
      %2422 = vmatpush1.msra.mxu0 %v2242
      %2423 = vmatprep.subr.mxu0 0.0
      %2424 = vmatpush1.msra.mxu0 %v2241
      %2425 = vmatprep.subr.mxu0 0.0
      %2426 = vmatpush1.msra.mxu0 %v2240
      %2427 = vmatprep.subr.mxu0 0.0
      %2428 = vmatpush1.msra.mxu0 %v2239
      %2429 = vmatprep.subr.mxu0 0.0
      %2430 = vmatpush1.msra.mxu0 %v2238
      %2431 = vmatprep.subr.mxu0 0.0
      %2432 = vmatpush1.msra.mxu0 %v2237
      %2433 = vmatprep.subr.mxu0 0.0
      %2434 = vmatpush1.msra.mxu0 %v2236
      %2435 = vmatprep.subr.mxu0 0.0
      %2436 = vmatpush1.msra.mxu0 %v2235
      %2437 = vmatprep.subr.mxu0 0.0
      %2438 = vmatpush1.msra.mxu0 %v2234
      %2439 = vmatprep.subr.mxu0 0.0
      %2440 = vmatpush1.msra.mxu0 %v2233
      %2441 = vmatprep.subr.mxu0 0.0
      %2442 = vmatpush1.msra.mxu0 %v2232
      %2443 = vmatprep.subr.mxu0 0.0
      %2444 = vmatpush1.msra.mxu0 %v2231
      %2445 = vmatprep.subr.mxu0 0.0
      %2446 = vmatpush2.msra.mxu0 0.0
      %2447 = vmatprep.subr.mxu0 0.0
      %2448 = vmatpush2.msra.mxu0 0.0
      %2449 = vmatprep.subr.mxu0 0.0
      %2450 = vmatpush2.msra.mxu0 0.0
      %2451 = vmatprep.subr.mxu0 0.0
      %2452 = vmatpush2.msra.mxu0 0.0
      %2453 = vmatprep.subr.mxu0 0.0
      %2454 = vmatpush2.msra.mxu0 0.0
      %2455 = vmatprep.subr.mxu0 0.0
      %2456 = vmatpush2.msra.mxu0 0.0
      %2457 = vmatprep.subr.mxu0 0.0
      %2458 = vmatpush2.msra.mxu0 0.0
      %2459 = vmatprep.subr.mxu0 0.0
      %2460 = vmatpush2.msra.mxu0 0.0
      %2461 = vmatprep.subr.mxu0 0.0
      %2462 = vmatpush2.msra.mxu0 0.0
      %2463 = vmatprep.subr.mxu0 0.0
      %2464 = vmatpush2.msra.mxu0 0.0
      %2465 = vmatprep.subr.mxu0 0.0
      %2466 = vmatpush2.msra.mxu0 0.0
      %2467 = vmatprep.subr.mxu0 0.0
      %2468 = vmatpush2.msra.mxu0 0.0
      %2469 = vmatprep.subr.mxu0 0.0
      %2470 = vmatpush2.msra.mxu0 0.0
      %2471 = vmatprep.subr.mxu0 0.0
      %2472 = vmatpush2.msra.mxu0 0.0
      %2473 = vmatprep.subr.mxu0 0.0
      %2474 = vmatpush2.msra.mxu0 0.0
      %2475 = vmatprep.subr.mxu0 0.0
      %2476 = vmatpush2.msra.mxu0 0.0
      %2477 = vmatprep.mubr.f32.mxu0 0.0
      %2478 = vmatmul.mubr.f32.gmra.mxu0 %v2412
      %v2479 = vpop.f32.mrf.mxu0
      %v2480 = vadd.f32 0.0, %v2479
      %v2481 = vpop.f32.mrf.mxu0
      %2482 = vdwg.mxu0
      %v2483 = vmul.f32 %v2480, 0.00390625
      %v2484 = vadd.f32 %v2483, 0.0001
      %v2485 = vrsqrt.pop %v2484
      %v2487 = vsel %vm1275, %v2485, 0
      %2489 = vmatprep.subr.mxu0 0.0
      %2490 = vmatpush1.msra.mxu0 0.0
      %2491 = vmatprep.subr.mxu0 0.0
      %2492 = vmatpush1.msra.mxu0 0.0
      %2493 = vmatprep.subr.mxu0 0.0
      %2494 = vmatpush1.msra.mxu0 0.0
      %2495 = vmatprep.subr.mxu0 0.0
      %2496 = vmatpush1.msra.mxu0 0.0
      %2497 = vmatprep.subr.mxu0 0.0
      %2498 = vmatpush1.msra.mxu0 0.0
      %2499 = vmatprep.subr.mxu0 0.0
      %2500 = vmatpush1.msra.mxu0 0.0
      %2501 = vmatprep.subr.mxu0 0.0
      %2502 = vmatpush1.msra.mxu0 0.0
      %2503 = vmatprep.subr.mxu0 0.0
      %2504 = vmatpush1.msra.mxu0 0.0
      %2505 = vmatprep.subr.mxu0 0.0
      %2506 = vmatpush1.msra.mxu0 0.0
      %2507 = vmatprep.subr.mxu0 0.0
      %2508 = vmatpush1.msra.mxu0 0.0
      %2509 = vmatprep.subr.mxu0 0.0
      %2510 = vmatpush1.msra.mxu0 0.0
      %2511 = vmatprep.subr.mxu0 0.0
      %2512 = vmatpush1.msra.mxu0 0.0
      %2513 = vmatprep.subr.mxu0 0.0
      %2514 = vmatpush1.msra.mxu0 0.0
      %2515 = vmatprep.subr.mxu0 0.0
      %2516 = vmatpush1.msra.mxu0 0.0
      %2517 = vmatprep.subr.mxu0 0.0
      %2518 = vmatpush1.msra.mxu0 0.0
      %2519 = vmatprep.subr.mxu0 0.0
      %2520 = vmatpush1.msra.mxu0 %v2328
      %2521 = vmatprep.subr.mxu0 0.0
      %2522 = vmatpush2.msra.mxu0 0.0
      %2523 = vmatprep.subr.mxu0 0.0
      %2524 = vmatpush2.msra.mxu0 0.0
      %2525 = vmatprep.subr.mxu0 0.0
      %2526 = vmatpush2.msra.mxu0 0.0
      %2527 = vmatprep.subr.mxu0 0.0
      %2528 = vmatpush2.msra.mxu0 0.0
      %2529 = vmatprep.subr.mxu0 0.0
      %2530 = vmatpush2.msra.mxu0 0.0
      %2531 = vmatprep.subr.mxu0 0.0
      %2532 = vmatpush2.msra.mxu0 0.0
      %2533 = vmatprep.subr.mxu0 0.0
      %2534 = vmatpush2.msra.mxu0 0.0
      %2535 = vmatprep.subr.mxu0 0.0
      %2536 = vmatpush2.msra.mxu0 0.0
      %2537 = vmatprep.subr.mxu0 0.0
      %2538 = vmatpush2.msra.mxu0 0.0
      %2539 = vmatprep.subr.mxu0 0.0
      %2540 = vmatpush2.msra.mxu0 0.0
      %2541 = vmatprep.subr.mxu0 0.0
      %2542 = vmatpush2.msra.mxu0 0.0
      %2543 = vmatprep.subr.mxu0 0.0
      %2544 = vmatpush2.msra.mxu0 0.0
      %2545 = vmatprep.subr.mxu0 0.0
      %2546 = vmatpush2.msra.mxu0 0.0
      %2547 = vmatprep.subr.mxu0 0.0
      %2548 = vmatpush2.msra.mxu0 0.0
      %2549 = vmatprep.subr.mxu0 0.0
      %2550 = vmatpush2.msra.mxu0 0.0
      %2551 = vmatprep.subr.mxu0 0.0
      %2552 = vmatpush2.msra.mxu0 0.0
      %2553 = vmatprep.mubr.f32.mxu0 0.0
      %2554 = vmatmul.mubr.f32.gmra.mxu0 %v2487
      %v2555 = vpop.f32.mrf.mxu0
      %v2556 = vadd.f32 0.0, %v2555
      %v2557 = vpop.f32.mrf.mxu0
      %2558 = vdwg.mxu0
      %v2559 = vlaneseq
      %v2560 = vshrl.u32 %v2559, 7
      %v2561 = vsub.s32 0, %v2560
      %v2562 = vrot.slane %v2556, %v2561
      %v2563 = vmul.f32 %v2404, %v2562
      %2565 = vset.pattern.permute.xlu0 0
      %2566 = vperm.xlu0 %2565, %v2229
      %v2567 = vpop.permute.xlu0 %2566
      %v2569 = vmul.f32 %v2563, %v2567
      %v2570 = vld [vmem:[#allocation4] sm:$0xff]
      %v2571 = vmul.f32 %v2570, 0.95
      %v2572 = vadd.f32 %v2571, %v2569
      %v2573 = vsub.f32 %v2572, 1.0
      %vm2574 = vcmp.gt.f32.partialorder %v2573, 0.0
      %v2575 = vsel %vm2574, 1, 0
      %v2576 = vcvt.s32.f32 %v2575
      %v2577 = vsub.f32 %v2572, %v2576
      %2578 = vst [vmem:[#allocation4] sm:$0xff] %v2577
      %v2579 = vadd.f32 %v2576, %v1530
      %2580 = vrot.lane.b32.xlu0 %v2579, 9
      %v2581 = vpop.permute.xlu0 %2580
      %v2582 = vld [vmem:[%s31] sm:$0x1]
      %v2584 = vlaneseq
      %v2585 = vshrl.u32 %v2584, 7
      %v2586 = vsub.s32 0, %v2585
      %v2587 = vrot.slane %v2582, %v2586
      %v2589 = vmul.f32 %v2581, %v2587
      %2590 = vst [vmem:[#allocation9] sm:$0xff] %v2589
      %2591 = vrot.lane.b32.xlu0 %v2579, 8
      %v2592 = vpop.permute.xlu0 %2591
      %v2593 = vld [vmem:[%s1011] sm:$0x1]
      %v2595 = vlaneseq
      %v2596 = vshrl.u32 %v2595, 7
      %v2597 = vsub.s32 0, %v2596
      %v2598 = vrot.slane %v2593, %v2597
      %v2600 = vmul.f32 %v2592, %v2598
      %2601 = vst [vmem:[#allocation9 + $0x8] sm:$0xff] %v2600
      %2602 = vrot.lane.b32.xlu0 %v2579, 7
      %v2603 = vpop.permute.xlu0 %2602
      %v2604 = vld [vmem:[%s1023] sm:$0x1]
      %v2606 = vlaneseq
      %v2607 = vshrl.u32 %v2606, 7
      %v2608 = vsub.s32 0, %v2607
      %v2609 = vrot.slane %v2604, %v2608
      %v2611 = vmul.f32 %v2603, %v2609
      %2612 = vst [vmem:[#allocation9 + $0x10] sm:$0xff] %v2611
      %2613 = vrot.lane.b32.xlu0 %v2579, 1
      %v2614 = vpop.permute.xlu0 %2613
      %v2615 = vld [vmem:[%s1035] sm:$0x1]
      %v2617 = vlaneseq
      %v2618 = vshrl.u32 %v2617, 7
      %v2619 = vsub.s32 0, %v2618
      %v2620 = vrot.slane %v2615, %v2619
      %v2622 = vmul.f32 %v2614, %v2620
      %2623 = vst [vmem:[#allocation9 + $0x18] sm:$0xff] %v2622
      %2624 = vst [vmem:[#allocation9 + $0x20] sm:$0xff] %v2579
      %2625 = vrot.lane.b32.xlu0 %v2579, 127
      %v2626 = vpop.permute.xlu0 %2625
      %v2627 = vld [vmem:[%s1048] sm:$0x1]
      %v2629 = vlaneseq
      %v2630 = vshrl.u32 %v2629, 7
      %v2631 = vsub.s32 0, %v2630
      %v2632 = vrot.slane %v2627, %v2631
      %v2634 = vmul.f32 %v2626, %v2632
      %2635 = vst [vmem:[#allocation9 + $0x28] sm:$0xff] %v2634
      %2636 = vrot.lane.b32.xlu0 %v2579, 121
      %v2637 = vpop.permute.xlu0 %2636
      %v2638 = vld [vmem:[%s1060] sm:$0x1]
      %v2640 = vlaneseq
      %v2641 = vshrl.u32 %v2640, 7
      %v2642 = vsub.s32 0, %v2641
      %v2643 = vrot.slane %v2638, %v2642
      %v2645 = vmul.f32 %v2637, %v2643
      %2646 = vst [vmem:[#allocation9 + $0x30] sm:$0xff] %v2645
      %2647 = vrot.lane.b32.xlu0 %v2579, 120
      %v2648 = vpop.permute.xlu0 %2647
      %v2649 = vld [vmem:[%s1072] sm:$0x1]
      %v2651 = vlaneseq
      %v2652 = vshrl.u32 %v2651, 7
      %v2653 = vsub.s32 0, %v2652
      %v2654 = vrot.slane %v2649, %v2653
      %v2656 = vmul.f32 %v2648, %v2654
      %2657 = vst [vmem:[#allocation9 + $0x38] sm:$0xff] %v2656
      %2658 = vrot.lane.b32.xlu0 %v2579, 119
      %v2659 = vpop.permute.xlu0 %2658
      %v2660 = vld [vmem:[%s1084] sm:$0x1]
      %v2662 = vlaneseq
      %v2663 = vshrl.u32 %v2662, 7
      %v2664 = vsub.s32 0, %v2663
      %v2665 = vrot.slane %v2660, %v2664
      %v2667 = vmul.f32 %v2659, %v2665
      %2668 = vst [vmem:[#allocation9 + $0x40] sm:$0xff] %v2667
      %v2669 = vld [vmem:[%s9] sm:$0xff]
      %v2670 = vld [vmem:[#allocation9] sm:$0xff]
      %v2671 = vld [vmem:[#allocation9 + $0x8] sm:$0xff]
      %v2672 = vld [vmem:[#allocation9 + $0x10] sm:$0xff]
      %v2673 = vld [vmem:[#allocation9 + $0x18] sm:$0xff]
      %v2674 = vld [vmem:[#allocation9 + $0x20] sm:$0xff]
      %v2675 = vld [vmem:[#allocation9 + $0x28] sm:$0xff]
      %v2676 = vld [vmem:[#allocation9 + $0x30] sm:$0xff]
      %v2677 = vld [vmem:[#allocation9 + $0x38] sm:$0xff]
      %v2678 = vld [vmem:[#allocation9 + $0x40] sm:$0xff]
      %v2680 = vsel %vm1104, %v2669, 0
      %2682 = vmatprep.subr.mxu0 0.0
      %2683 = vmatpush1.msra.mxu0 0.0
      %2684 = vmatprep.subr.mxu0 0.0
      %2685 = vmatpush1.msra.mxu0 0.0
      %2686 = vmatprep.subr.mxu0 0.0
      %2687 = vmatpush1.msra.mxu0 0.0
      %2688 = vmatprep.subr.mxu0 0.0
      %2689 = vmatpush1.msra.mxu0 0.0
      %2690 = vmatprep.subr.mxu0 0.0
      %2691 = vmatpush1.msra.mxu0 0.0
      %2692 = vmatprep.subr.mxu0 0.0
      %2693 = vmatpush1.msra.mxu0 0.0
      %2694 = vmatprep.subr.mxu0 0.0
      %2695 = vmatpush1.msra.mxu0 0.0
      %2696 = vmatprep.subr.mxu0 0.0
      %2697 = vmatpush1.msra.mxu0 %v2678
      %2698 = vmatprep.subr.mxu0 0.0
      %2699 = vmatpush1.msra.mxu0 %v2677
      %2700 = vmatprep.subr.mxu0 0.0
      %2701 = vmatpush1.msra.mxu0 %v2676
      %2702 = vmatprep.subr.mxu0 0.0
      %2703 = vmatpush1.msra.mxu0 %v2675
      %2704 = vmatprep.subr.mxu0 0.0
      %2705 = vmatpush1.msra.mxu0 %v2674
      %2706 = vmatprep.subr.mxu0 0.0
      %2707 = vmatpush1.msra.mxu0 %v2673
      %2708 = vmatprep.subr.mxu0 0.0
      %2709 = vmatpush1.msra.mxu0 %v2672
      %2710 = vmatprep.subr.mxu0 0.0
      %2711 = vmatpush1.msra.mxu0 %v2671
      %2712 = vmatprep.subr.mxu0 0.0
      %2713 = vmatpush1.msra.mxu0 %v2670
      %2714 = vmatprep.subr.mxu0 0.0
      %2715 = vmatpush2.msra.mxu0 0.0
      %2716 = vmatprep.subr.mxu0 0.0
      %2717 = vmatpush2.msra.mxu0 0.0
      %2718 = vmatprep.subr.mxu0 0.0
      %2719 = vmatpush2.msra.mxu0 0.0
      %2720 = vmatprep.subr.mxu0 0.0
      %2721 = vmatpush2.msra.mxu0 0.0
      %2722 = vmatprep.subr.mxu0 0.0
      %2723 = vmatpush2.msra.mxu0 0.0
      %2724 = vmatprep.subr.mxu0 0.0
      %2725 = vmatpush2.msra.mxu0 0.0
      %2726 = vmatprep.subr.mxu0 0.0
      %2727 = vmatpush2.msra.mxu0 0.0
      %2728 = vmatprep.subr.mxu0 0.0
      %2729 = vmatpush2.msra.mxu0 0.0
      %2730 = vmatprep.subr.mxu0 0.0
      %2731 = vmatpush2.msra.mxu0 0.0
      %2732 = vmatprep.subr.mxu0 0.0
      %2733 = vmatpush2.msra.mxu0 0.0
      %2734 = vmatprep.subr.mxu0 0.0
      %2735 = vmatpush2.msra.mxu0 0.0
      %2736 = vmatprep.subr.mxu0 0.0
      %2737 = vmatpush2.msra.mxu0 0.0
      %2738 = vmatprep.subr.mxu0 0.0
      %2739 = vmatpush2.msra.mxu0 0.0
      %2740 = vmatprep.subr.mxu0 0.0
      %2741 = vmatpush2.msra.mxu0 0.0
      %2742 = vmatprep.subr.mxu0 0.0
      %2743 = vmatpush2.msra.mxu0 0.0
      %2744 = vmatprep.subr.mxu0 0.0
      %2745 = vmatpush2.msra.mxu0 0.0
      %2746 = vmatprep.mubr.f32.mxu0 0.0
      %2747 = vmatmul.mubr.f32.gmra.mxu0 %v2680
      %v2748 = vpop.f32.mrf.mxu0
      %v2749 = vadd.f32 0.0, %v2748
      %v2750 = vpop.f32.mrf.mxu0
      %2751 = vdwg.mxu0
      %v2752 = vld [vmem:[%s49] sm:$0xff]
      %v2753 = vld [vmem:[%s49 + $0x8] sm:$0xff]
      %v2754 = vld [vmem:[%s49 + $0x10] sm:$0xff]
      %v2755 = vld [vmem:[%s49 + $0x18] sm:$0xff]
      %v2756 = vld [vmem:[%s49 + $0x20] sm:$0xff]
      %v2757 = vld [vmem:[%s49 + $0x28] sm:$0xff]
      %v2758 = vld [vmem:[%s49 + $0x30] sm:$0xff]
      %v2759 = vld [vmem:[%s49 + $0x38] sm:$0xff]
      %v2760 = vld [vmem:[%s49 + $0x40] sm:$0xff]
      %v2761 = vld [vmem:[%s49 + $0x48] sm:$0xff]
      %v2762 = vld [vmem:[%s49 + $0x50] sm:$0xff]
      %v2763 = vld [vmem:[%s49 + $0x58] sm:$0xff]
      %v2764 = vld [vmem:[%s49 + $0x60] sm:$0xff]
      %v2765 = vld [vmem:[%s49 + $0x68] sm:$0xff]
      %v2766 = vld [vmem:[%s49 + $0x70] sm:$0xff]
      %v2767 = vld [vmem:[%s49 + $0x78] sm:$0xff]
      %2768 = vmatprep.subr.mxu0 0.0
      %2769 = vmatpush1.msra.mxu0 %v2767
      %2770 = vmatprep.subr.mxu0 0.0
      %2771 = vmatpush1.msra.mxu0 %v2766
      %2772 = vmatprep.subr.mxu0 0.0
      %2773 = vmatpush1.msra.mxu0 %v2765
      %2774 = vmatprep.subr.mxu0 0.0
      %2775 = vmatpush1.msra.mxu0 %v2764
      %2776 = vmatprep.subr.mxu0 0.0
      %2777 = vmatpush1.msra.mxu0 %v2763
      %2778 = vmatprep.subr.mxu0 0.0
      %2779 = vmatpush1.msra.mxu0 %v2762
      %2780 = vmatprep.subr.mxu0 0.0
      %2781 = vmatpush1.msra.mxu0 %v2761
      %2782 = vmatprep.subr.mxu0 0.0
      %2783 = vmatpush1.msra.mxu0 %v2760
      %2784 = vmatprep.subr.mxu0 0.0
      %2785 = vmatpush1.msra.mxu0 %v2759
      %2786 = vmatprep.subr.mxu0 0.0
      %2787 = vmatpush1.msra.mxu0 %v2758
      %2788 = vmatprep.subr.mxu0 0.0
      %2789 = vmatpush1.msra.mxu0 %v2757
      %2790 = vmatprep.subr.mxu0 0.0
      %2791 = vmatpush1.msra.mxu0 %v2756
      %2792 = vmatprep.subr.mxu0 0.0
      %2793 = vmatpush1.msra.mxu0 %v2755
      %2794 = vmatprep.subr.mxu0 0.0
      %2795 = vmatpush1.msra.mxu0 %v2754
      %2796 = vmatprep.subr.mxu0 0.0
      %2797 = vmatpush1.msra.mxu0 %v2753
      %2798 = vmatprep.subr.mxu0 0.0
      %2799 = vmatpush1.msra.mxu0 %v2752
      %2800 = vmatprep.subr.mxu0 0.0
      %2801 = vmatpush2.msra.mxu0 0.0
      %2802 = vmatprep.subr.mxu0 0.0
      %2803 = vmatpush2.msra.mxu0 0.0
      %2804 = vmatprep.subr.mxu0 0.0
      %2805 = vmatpush2.msra.mxu0 0.0
      %2806 = vmatprep.subr.mxu0 0.0
      %2807 = vmatpush2.msra.mxu0 0.0
      %2808 = vmatprep.subr.mxu0 0.0
      %2809 = vmatpush2.msra.mxu0 0.0
      %2810 = vmatprep.subr.mxu0 0.0
      %2811 = vmatpush2.msra.mxu0 0.0
      %2812 = vmatprep.subr.mxu0 0.0
      %2813 = vmatpush2.msra.mxu0 0.0
      %2814 = vmatprep.subr.mxu0 0.0
      %2815 = vmatpush2.msra.mxu0 0.0
      %2816 = vmatprep.subr.mxu0 0.0
      %2817 = vmatpush2.msra.mxu0 0.0
      %2818 = vmatprep.subr.mxu0 0.0
      %2819 = vmatpush2.msra.mxu0 0.0
      %2820 = vmatprep.subr.mxu0 0.0
      %2821 = vmatpush2.msra.mxu0 0.0
      %2822 = vmatprep.subr.mxu0 0.0
      %2823 = vmatpush2.msra.mxu0 0.0
      %2824 = vmatprep.subr.mxu0 0.0
      %2825 = vmatpush2.msra.mxu0 0.0
      %2826 = vmatprep.subr.mxu0 0.0
      %2827 = vmatpush2.msra.mxu0 0.0
      %2828 = vmatprep.subr.mxu0 0.0
      %2829 = vmatpush2.msra.mxu0 0.0
      %2830 = vmatprep.subr.mxu0 0.0
      %2831 = vmatpush2.msra.mxu0 0.0
      %2832 = vmatprep.mubr.f32.mxu0 0.0
      %2833 = vmatmul.mubr.f32.gmra.mxu0 %v2749
      %v2834 = vpop.f32.mrf.mxu0
      %v2835 = vadd.f32 0.0, %v2834
      %v2836 = vpop.f32.mrf.mxu0
      %2837 = vdwg.mxu0
      %s2838 = scalar_lea.vmem %s23, %s1178
      %v2839 = vld [vmem:[%s2838] sm:$0xff]
      %v2840 = vld [vmem:[%s39] sm:$0x3]
      %v2841 = vld [vmem:[%s45] sm:$0xff]
      %v2842 = vld [vmem:[%s45 + $0x8] sm:$0xff]
      %v2843 = vld [vmem:[%s45 + $0x10] sm:$0xff]
      %v2844 = vld [vmem:[%s45 + $0x18] sm:$0xff]
      %v2845 = vld [vmem:[%s45 + $0x20] sm:$0xff]
      %v2846 = vld [vmem:[%s45 + $0x28] sm:$0xff]
      %v2847 = vld [vmem:[%s45 + $0x30] sm:$0xff]
      %v2848 = vld [vmem:[%s45 + $0x38] sm:$0xff]
      %v2849 = vld [vmem:[%s45 + $0x40] sm:$0xff]
      %v2850 = vld [vmem:[%s45 + $0x48] sm:$0xff]
      %v2851 = vld [vmem:[%s45 + $0x50] sm:$0xff]
      %v2852 = vld [vmem:[%s45 + $0x58] sm:$0xff]
      %v2853 = vld [vmem:[%s45 + $0x60] sm:$0xff]
      %v2854 = vld [vmem:[%s45 + $0x68] sm:$0xff]
      %v2855 = vld [vmem:[%s45 + $0x70] sm:$0xff]
      %v2856 = vld [vmem:[%s45 + $0x78] sm:$0xff]
      %v2857 = vrot.slane %v2835, 4
      %v2858 = vadd.f32 %v2835, %v2857
      %v2859 = vrot.slane %v2858, 2
      %v2860 = vadd.f32 %v2858, %v2859
      %v2861 = vrot.slane %v2860, 1
      %v2862 = vadd.f32 %v2860, %v2861
      %2863 = vmatprep.subr.mxu0 0.0
      %2864 = vmatpush1.msra.mxu0 %v2856
      %2865 = vmatprep.subr.mxu0 0.0
      %2866 = vmatpush1.msra.mxu0 %v2855
      %2867 = vmatprep.subr.mxu0 0.0
      %2868 = vmatpush1.msra.mxu0 %v2854
      %2869 = vmatprep.subr.mxu0 0.0
      %2870 = vmatpush1.msra.mxu0 %v2853
      %2871 = vmatprep.subr.mxu0 0.0
      %2872 = vmatpush1.msra.mxu0 %v2852
      %2873 = vmatprep.subr.mxu0 0.0
      %2874 = vmatpush1.msra.mxu0 %v2851
      %2875 = vmatprep.subr.mxu0 0.0
      %2876 = vmatpush1.msra.mxu0 %v2850
      %2877 = vmatprep.subr.mxu0 0.0
      %2878 = vmatpush1.msra.mxu0 %v2849
      %2879 = vmatprep.subr.mxu0 0.0
      %2880 = vmatpush1.msra.mxu0 %v2848
      %2881 = vmatprep.subr.mxu0 0.0
      %2882 = vmatpush1.msra.mxu0 %v2847
      %2883 = vmatprep.subr.mxu0 0.0
      %2884 = vmatpush1.msra.mxu0 %v2846
      %2885 = vmatprep.subr.mxu0 0.0
      %2886 = vmatpush1.msra.mxu0 %v2845
      %2887 = vmatprep.subr.mxu0 0.0
      %2888 = vmatpush1.msra.mxu0 %v2844
      %2889 = vmatprep.subr.mxu0 0.0
      %2890 = vmatpush1.msra.mxu0 %v2843
      %2891 = vmatprep.subr.mxu0 0.0
      %2892 = vmatpush1.msra.mxu0 %v2842
      %2893 = vmatprep.subr.mxu0 0.0
      %2894 = vmatpush1.msra.mxu0 %v2841
      %2895 = vmatprep.subr.mxu0 0.0
      %2896 = vmatpush2.msra.mxu0 0.0
      %2897 = vmatprep.subr.mxu0 0.0
      %2898 = vmatpush2.msra.mxu0 0.0
      %2899 = vmatprep.subr.mxu0 0.0
      %2900 = vmatpush2.msra.mxu0 0.0
      %2901 = vmatprep.subr.mxu0 0.0
      %2902 = vmatpush2.msra.mxu0 0.0
      %2903 = vmatprep.subr.mxu0 0.0
      %2904 = vmatpush2.msra.mxu0 0.0
      %2905 = vmatprep.subr.mxu0 0.0
      %2906 = vmatpush2.msra.mxu0 0.0
      %2907 = vmatprep.subr.mxu0 0.0
      %2908 = vmatpush2.msra.mxu0 0.0
      %2909 = vmatprep.subr.mxu0 0.0
      %2910 = vmatpush2.msra.mxu0 0.0
      %2911 = vmatprep.subr.mxu0 0.0
      %2912 = vmatpush2.msra.mxu0 0.0
      %2913 = vmatprep.subr.mxu0 0.0
      %2914 = vmatpush2.msra.mxu0 0.0
      %2915 = vmatprep.subr.mxu0 0.0
      %2916 = vmatpush2.msra.mxu0 0.0
      %2917 = vmatprep.subr.mxu0 0.0
      %2918 = vmatpush2.msra.mxu0 0.0
      %2919 = vmatprep.subr.mxu0 0.0
      %2920 = vmatpush2.msra.mxu0 0.0
      %2921 = vmatprep.subr.mxu0 0.0
      %2922 = vmatpush2.msra.mxu0 0.0
      %2923 = vmatprep.subr.mxu0 0.0
      %2924 = vmatpush2.msra.mxu0 0.0
      %2925 = vmatprep.subr.mxu0 0.0
      %2926 = vmatpush2.msra.mxu0 0.0
      %2927 = vmatprep.mubr.f32.mxu0 0.0
      %2928 = vmatmul.mubr.f32.gmra.mxu0 %v2862
      %v2929 = vpop.f32.mrf.mxu0
      %v2930 = vadd.f32 0.0, %v2929
      %v2931 = vpop.f32.mrf.mxu0
      %2932 = vdwg.mxu0
      %v2933 = vmul.f32 %v2930, 0.0078125
      %v2935 = vsel %vm1275, %v2933, 0
      %v2938 = vsel %vm1279, %v2840, 0
      %2940 = vmatprep.subr.mxu0 0.0
      %2941 = vmatpush1.msra.mxu0 0.0
      %2942 = vmatprep.subr.mxu0 0.0
      %2943 = vmatpush1.msra.mxu0 0.0
      %2944 = vmatprep.subr.mxu0 0.0
      %2945 = vmatpush1.msra.mxu0 0.0
      %2946 = vmatprep.subr.mxu0 0.0
      %2947 = vmatpush1.msra.mxu0 0.0
      %2948 = vmatprep.subr.mxu0 0.0
      %2949 = vmatpush1.msra.mxu0 0.0
      %2950 = vmatprep.subr.mxu0 0.0
      %2951 = vmatpush1.msra.mxu0 0.0
      %2952 = vmatprep.subr.mxu0 0.0
      %2953 = vmatpush1.msra.mxu0 0.0
      %2954 = vmatprep.subr.mxu0 0.0
      %2955 = vmatpush1.msra.mxu0 0.0
      %2956 = vmatprep.subr.mxu0 0.0
      %2957 = vmatpush1.msra.mxu0 0.0
      %2958 = vmatprep.subr.mxu0 0.0
      %2959 = vmatpush1.msra.mxu0 0.0
      %2960 = vmatprep.subr.mxu0 0.0
      %2961 = vmatpush1.msra.mxu0 0.0
      %2962 = vmatprep.subr.mxu0 0.0
      %2963 = vmatpush1.msra.mxu0 0.0
      %2964 = vmatprep.subr.mxu0 0.0
      %2965 = vmatpush1.msra.mxu0 0.0
      %2966 = vmatprep.subr.mxu0 0.0
      %2967 = vmatpush1.msra.mxu0 0.0
      %2968 = vmatprep.subr.mxu0 0.0
      %2969 = vmatpush1.msra.mxu0 0.0
      %2970 = vmatprep.subr.mxu0 0.0
      %2971 = vmatpush1.msra.mxu0 %v2938
      %2972 = vmatprep.subr.mxu0 0.0
      %2973 = vmatpush2.msra.mxu0 0.0
      %2974 = vmatprep.subr.mxu0 0.0
      %2975 = vmatpush2.msra.mxu0 0.0
      %2976 = vmatprep.subr.mxu0 0.0
      %2977 = vmatpush2.msra.mxu0 0.0
      %2978 = vmatprep.subr.mxu0 0.0
      %2979 = vmatpush2.msra.mxu0 0.0
      %2980 = vmatprep.subr.mxu0 0.0
      %2981 = vmatpush2.msra.mxu0 0.0
      %2982 = vmatprep.subr.mxu0 0.0
      %2983 = vmatpush2.msra.mxu0 0.0
      %2984 = vmatprep.subr.mxu0 0.0
      %2985 = vmatpush2.msra.mxu0 0.0
      %2986 = vmatprep.subr.mxu0 0.0
      %2987 = vmatpush2.msra.mxu0 0.0
      %2988 = vmatprep.subr.mxu0 0.0
      %2989 = vmatpush2.msra.mxu0 0.0
      %2990 = vmatprep.subr.mxu0 0.0
      %2991 = vmatpush2.msra.mxu0 0.0
      %2992 = vmatprep.subr.mxu0 0.0
      %2993 = vmatpush2.msra.mxu0 0.0
      %2994 = vmatprep.subr.mxu0 0.0
      %2995 = vmatpush2.msra.mxu0 0.0
      %2996 = vmatprep.subr.mxu0 0.0
      %2997 = vmatpush2.msra.mxu0 0.0
      %2998 = vmatprep.subr.mxu0 0.0
      %2999 = vmatpush2.msra.mxu0 0.0
      %3000 = vmatprep.subr.mxu0 0.0
      %3001 = vmatpush2.msra.mxu0 0.0
      %3002 = vmatprep.subr.mxu0 0.0
      %3003 = vmatpush2.msra.mxu0 0.0
      %3004 = vmatprep.mubr.f32.mxu0 0.0
      %3005 = vmatmul.mubr.f32.gmra.mxu0 %v2935
      %v3006 = vpop.f32.mrf.mxu0
      %v3007 = vadd.f32 0.0, %v3006
      %v3008 = vpop.f32.mrf.mxu0
      %3009 = vdwg.mxu0
      %v3010 = vlaneseq
      %v3011 = vshrl.u32 %v3010, 7
      %v3012 = vsub.s32 0, %v3011
      %v3013 = vrot.slane %v3007, %v3012
      %v3014 = vsub.f32 %v2835, %v3013
      %v3015 = vmul.f32 %v3014, %v3014
      %v3016 = vrot.slane %v3015, 4
      %v3017 = vadd.f32 %v3015, %v3016
      %v3018 = vrot.slane %v3017, 2
      %v3019 = vadd.f32 %v3017, %v3018
      %v3020 = vrot.slane %v3019, 1
      %v3021 = vadd.f32 %v3019, %v3020
      %3022 = vmatprep.subr.mxu0 0.0
      %3023 = vmatpush1.msra.mxu0 %v2856
      %3024 = vmatprep.subr.mxu0 0.0
      %3025 = vmatpush1.msra.mxu0 %v2855
      %3026 = vmatprep.subr.mxu0 0.0
      %3027 = vmatpush1.msra.mxu0 %v2854
      %3028 = vmatprep.subr.mxu0 0.0
      %3029 = vmatpush1.msra.mxu0 %v2853
      %3030 = vmatprep.subr.mxu0 0.0
      %3031 = vmatpush1.msra.mxu0 %v2852
      %3032 = vmatprep.subr.mxu0 0.0
      %3033 = vmatpush1.msra.mxu0 %v2851
      %3034 = vmatprep.subr.mxu0 0.0
      %3035 = vmatpush1.msra.mxu0 %v2850
      %3036 = vmatprep.subr.mxu0 0.0
      %3037 = vmatpush1.msra.mxu0 %v2849
      %3038 = vmatprep.subr.mxu0 0.0
      %3039 = vmatpush1.msra.mxu0 %v2848
      %3040 = vmatprep.subr.mxu0 0.0
      %3041 = vmatpush1.msra.mxu0 %v2847
      %3042 = vmatprep.subr.mxu0 0.0
      %3043 = vmatpush1.msra.mxu0 %v2846
      %3044 = vmatprep.subr.mxu0 0.0
      %3045 = vmatpush1.msra.mxu0 %v2845
      %3046 = vmatprep.subr.mxu0 0.0
      %3047 = vmatpush1.msra.mxu0 %v2844
      %3048 = vmatprep.subr.mxu0 0.0
      %3049 = vmatpush1.msra.mxu0 %v2843
      %3050 = vmatprep.subr.mxu0 0.0
      %3051 = vmatpush1.msra.mxu0 %v2842
      %3052 = vmatprep.subr.mxu0 0.0
      %3053 = vmatpush1.msra.mxu0 %v2841
      %3054 = vmatprep.subr.mxu0 0.0
      %3055 = vmatpush2.msra.mxu0 0.0
      %3056 = vmatprep.subr.mxu0 0.0
      %3057 = vmatpush2.msra.mxu0 0.0
      %3058 = vmatprep.subr.mxu0 0.0
      %3059 = vmatpush2.msra.mxu0 0.0
      %3060 = vmatprep.subr.mxu0 0.0
      %3061 = vmatpush2.msra.mxu0 0.0
      %3062 = vmatprep.subr.mxu0 0.0
      %3063 = vmatpush2.msra.mxu0 0.0
      %3064 = vmatprep.subr.mxu0 0.0
      %3065 = vmatpush2.msra.mxu0 0.0
      %3066 = vmatprep.subr.mxu0 0.0
      %3067 = vmatpush2.msra.mxu0 0.0
      %3068 = vmatprep.subr.mxu0 0.0
      %3069 = vmatpush2.msra.mxu0 0.0
      %3070 = vmatprep.subr.mxu0 0.0
      %3071 = vmatpush2.msra.mxu0 0.0
      %3072 = vmatprep.subr.mxu0 0.0
      %3073 = vmatpush2.msra.mxu0 0.0
      %3074 = vmatprep.subr.mxu0 0.0
      %3075 = vmatpush2.msra.mxu0 0.0
      %3076 = vmatprep.subr.mxu0 0.0
      %3077 = vmatpush2.msra.mxu0 0.0
      %3078 = vmatprep.subr.mxu0 0.0
      %3079 = vmatpush2.msra.mxu0 0.0
      %3080 = vmatprep.subr.mxu0 0.0
      %3081 = vmatpush2.msra.mxu0 0.0
      %3082 = vmatprep.subr.mxu0 0.0
      %3083 = vmatpush2.msra.mxu0 0.0
      %3084 = vmatprep.subr.mxu0 0.0
      %3085 = vmatpush2.msra.mxu0 0.0
      %3086 = vmatprep.mubr.f32.mxu0 0.0
      %3087 = vmatmul.mubr.f32.gmra.mxu0 %v3021
      %v3088 = vpop.f32.mrf.mxu0
      %v3089 = vadd.f32 0.0, %v3088
      %v3090 = vpop.f32.mrf.mxu0
      %3091 = vdwg.mxu0
      %v3092 = vmul.f32 %v3089, 0.0078125
      %v3093 = vadd.f32 %v3092, 0.0001
      %v3094 = vrsqrt.pop %v3093
      %v3096 = vsel %vm1275, %v3094, 0
      %3098 = vmatprep.subr.mxu0 0.0
      %3099 = vmatpush1.msra.mxu0 0.0
      %3100 = vmatprep.subr.mxu0 0.0
      %3101 = vmatpush1.msra.mxu0 0.0
      %3102 = vmatprep.subr.mxu0 0.0
      %3103 = vmatpush1.msra.mxu0 0.0
      %3104 = vmatprep.subr.mxu0 0.0
      %3105 = vmatpush1.msra.mxu0 0.0
      %3106 = vmatprep.subr.mxu0 0.0
      %3107 = vmatpush1.msra.mxu0 0.0
      %3108 = vmatprep.subr.mxu0 0.0
      %3109 = vmatpush1.msra.mxu0 0.0
      %3110 = vmatprep.subr.mxu0 0.0
      %3111 = vmatpush1.msra.mxu0 0.0
      %3112 = vmatprep.subr.mxu0 0.0
      %3113 = vmatpush1.msra.mxu0 0.0
      %3114 = vmatprep.subr.mxu0 0.0
      %3115 = vmatpush1.msra.mxu0 0.0
      %3116 = vmatprep.subr.mxu0 0.0
      %3117 = vmatpush1.msra.mxu0 0.0
      %3118 = vmatprep.subr.mxu0 0.0
      %3119 = vmatpush1.msra.mxu0 0.0
      %3120 = vmatprep.subr.mxu0 0.0
      %3121 = vmatpush1.msra.mxu0 0.0
      %3122 = vmatprep.subr.mxu0 0.0
      %3123 = vmatpush1.msra.mxu0 0.0
      %3124 = vmatprep.subr.mxu0 0.0
      %3125 = vmatpush1.msra.mxu0 0.0
      %3126 = vmatprep.subr.mxu0 0.0
      %3127 = vmatpush1.msra.mxu0 0.0
      %3128 = vmatprep.subr.mxu0 0.0
      %3129 = vmatpush1.msra.mxu0 %v2938
      %3130 = vmatprep.subr.mxu0 0.0
      %3131 = vmatpush2.msra.mxu0 0.0
      %3132 = vmatprep.subr.mxu0 0.0
      %3133 = vmatpush2.msra.mxu0 0.0
      %3134 = vmatprep.subr.mxu0 0.0
      %3135 = vmatpush2.msra.mxu0 0.0
      %3136 = vmatprep.subr.mxu0 0.0
      %3137 = vmatpush2.msra.mxu0 0.0
      %3138 = vmatprep.subr.mxu0 0.0
      %3139 = vmatpush2.msra.mxu0 0.0
      %3140 = vmatprep.subr.mxu0 0.0
      %3141 = vmatpush2.msra.mxu0 0.0
      %3142 = vmatprep.subr.mxu0 0.0
      %3143 = vmatpush2.msra.mxu0 0.0
      %3144 = vmatprep.subr.mxu0 0.0
      %3145 = vmatpush2.msra.mxu0 0.0
      %3146 = vmatprep.subr.mxu0 0.0
      %3147 = vmatpush2.msra.mxu0 0.0
      %3148 = vmatprep.subr.mxu0 0.0
      %3149 = vmatpush2.msra.mxu0 0.0
      %3150 = vmatprep.subr.mxu0 0.0
      %3151 = vmatpush2.msra.mxu0 0.0
      %3152 = vmatprep.subr.mxu0 0.0
      %3153 = vmatpush2.msra.mxu0 0.0
      %3154 = vmatprep.subr.mxu0 0.0
      %3155 = vmatpush2.msra.mxu0 0.0
      %3156 = vmatprep.subr.mxu0 0.0
      %3157 = vmatpush2.msra.mxu0 0.0
      %3158 = vmatprep.subr.mxu0 0.0
      %3159 = vmatpush2.msra.mxu0 0.0
      %3160 = vmatprep.subr.mxu0 0.0
      %3161 = vmatpush2.msra.mxu0 0.0
      %3162 = vmatprep.mubr.f32.mxu0 0.0
      %3163 = vmatmul.mubr.f32.gmra.mxu0 %v3096
      %v3164 = vpop.f32.mrf.mxu0
      %v3165 = vadd.f32 0.0, %v3164
      %v3166 = vpop.f32.mrf.mxu0
      %3167 = vdwg.mxu0
      %v3168 = vlaneseq
      %v3169 = vshrl.u32 %v3168, 7
      %v3170 = vsub.s32 0, %v3169
      %v3171 = vrot.slane %v3165, %v3170
      %v3172 = vmul.f32 %v3014, %v3171
      %3174 = vset.pattern.permute.xlu0 0
      %3175 = vperm.xlu0 %3174, %v2839
      %v3176 = vpop.permute.xlu0 %3175
      %v3178 = vmul.f32 %v3172, %v3176
      %v3179 = vld [vmem:[#allocation5] sm:$0xff]
      %v3180 = vmul.f32 %v3179, 0.95
      %v3181 = vadd.f32 %v3180, %v3178
      %v3182 = vsub.f32 %v3181, 1.0
      %vm3183 = vcmp.gt.f32.partialorder %v3182, 0.0
      %v3184 = vsel %vm3183, 1, 0
      %v3185 = vcvt.s32.f32 %v3184
      %v3186 = vsub.f32 %v3181, %v3185
      %3187 = vst [vmem:[#allocation5] sm:$0xff] %v3186
      %3188 = vrot.lane.b32.xlu0 %v3185, 5
      %v3189 = vpop.permute.xlu0 %3188
      %v3190 = vld [vmem:[%s33] sm:$0x1]
      %v3192 = vlaneseq
      %v3193 = vshrl.u32 %v3192, 7
      %v3194 = vsub.s32 0, %v3193
      %v3195 = vrot.slane %v3190, %v3194
      %v3197 = vmul.f32 %v3189, %v3195
      %3198 = vst [vmem:[#allocation9] sm:$0xff] %v3197
      %3199 = vrot.lane.b32.xlu0 %v3185, 4
      %v3200 = vpop.permute.xlu0 %3199
      %s3201 = scalar_lea.vmem %s33, 1
      %v3202 = vld [vmem:[%s3201] sm:$0x1]
      %v3204 = vlaneseq
      %v3205 = vshrl.u32 %v3204, 7
      %v3206 = vsub.s32 0, %v3205
      %v3207 = vrot.slane %v3202, %v3206
      %v3209 = vmul.f32 %v3200, %v3207
      %3210 = vst [vmem:[#allocation9 + $0x8] sm:$0xff] %v3209
      %3211 = vrot.lane.b32.xlu0 %v3185, 3
      %v3212 = vpop.permute.xlu0 %3211
      %s3213 = scalar_lea.vmem %s33, 2
      %v3214 = vld [vmem:[%s3213] sm:$0x1]
      %v3216 = vlaneseq
      %v3217 = vshrl.u32 %v3216, 7
      %v3218 = vsub.s32 0, %v3217
      %v3219 = vrot.slane %v3214, %v3218
      %v3221 = vmul.f32 %v3212, %v3219
      %3222 = vst [vmem:[#allocation9 + $0x10] sm:$0xff] %v3221
      %3223 = vrot.lane.b32.xlu0 %v3185, 1
      %v3224 = vpop.permute.xlu0 %3223
      %s3225 = scalar_lea.vmem %s33, 3
      %v3226 = vld [vmem:[%s3225] sm:$0x1]
      %v3228 = vlaneseq
      %v3229 = vshrl.u32 %v3228, 7
      %v3230 = vsub.s32 0, %v3229
      %v3231 = vrot.slane %v3226, %v3230
      %v3233 = vmul.f32 %v3224, %v3231
      %3234 = vst [vmem:[#allocation9 + $0x18] sm:$0xff] %v3233
      %3235 = vst [vmem:[#allocation9 + $0x20] sm:$0xff] %v3185
      %3236 = vrot.lane.b32.xlu0 %v3185, 127
      %v3237 = vpop.permute.xlu0 %3236
      %s3238 = scalar_lea.vmem %s33, 5
      %v3239 = vld [vmem:[%s3238] sm:$0x1]
      %v3241 = vlaneseq
      %v3242 = vshrl.u32 %v3241, 7
      %v3243 = vsub.s32 0, %v3242
      %v3244 = vrot.slane %v3239, %v3243
      %v3246 = vmul.f32 %v3237, %v3244
      %3247 = vst [vmem:[#allocation9 + $0x28] sm:$0xff] %v3246
      %3248 = vrot.lane.b32.xlu0 %v3185, 125
      %v3249 = vpop.permute.xlu0 %3248
      %s3250 = scalar_lea.vmem %s33, 6
      %v3251 = vld [vmem:[%s3250] sm:$0x1]
      %v3253 = vlaneseq
      %v3254 = vshrl.u32 %v3253, 7
      %v3255 = vsub.s32 0, %v3254
      %v3256 = vrot.slane %v3251, %v3255
      %v3258 = vmul.f32 %v3249, %v3256
      %3259 = vst [vmem:[#allocation9 + $0x30] sm:$0xff] %v3258
      %3260 = vrot.lane.b32.xlu0 %v3185, 124
      %v3261 = vpop.permute.xlu0 %3260
      %s3262 = scalar_lea.vmem %s33, 7
      %v3263 = vld [vmem:[%s3262] sm:$0x1]
      %v3265 = vlaneseq
      %v3266 = vshrl.u32 %v3265, 7
      %v3267 = vsub.s32 0, %v3266
      %v3268 = vrot.slane %v3263, %v3267
      %v3270 = vmul.f32 %v3261, %v3268
      %3271 = vst [vmem:[#allocation9 + $0x38] sm:$0xff] %v3270
      %3272 = vrot.lane.b32.xlu0 %v3185, 123
      %v3273 = vpop.permute.xlu0 %3272
      %s3274 = scalar_lea.vmem %s33, 8
      %v3275 = vld [vmem:[%s3274] sm:$0x1]
      %v3277 = vlaneseq
      %v3278 = vshrl.u32 %v3277, 7
      %v3279 = vsub.s32 0, %v3278
      %v3280 = vrot.slane %v3275, %v3279
      %v3282 = vmul.f32 %v3273, %v3280
      %3283 = vst [vmem:[#allocation9 + $0x40] sm:$0xff] %v3282
      %v3284 = vld [vmem:[%s11] sm:$0xff]
      %v3285 = vld [vmem:[#allocation9] sm:$0xff]
      %v3286 = vld [vmem:[#allocation9 + $0x8] sm:$0xff]
      %v3287 = vld [vmem:[#allocation9 + $0x10] sm:$0xff]
      %v3288 = vld [vmem:[#allocation9 + $0x18] sm:$0xff]
      %v3289 = vld [vmem:[#allocation9 + $0x20] sm:$0xff]
      %v3290 = vld [vmem:[#allocation9 + $0x28] sm:$0xff]
      %v3291 = vld [vmem:[#allocation9 + $0x30] sm:$0xff]
      %v3292 = vld [vmem:[#allocation9 + $0x38] sm:$0xff]
      %v3293 = vld [vmem:[#allocation9 + $0x40] sm:$0xff]
      %v3295 = vsel %vm1104, %v3284, 0
      %3297 = vmatprep.subr.mxu0 0.0
      %3298 = vmatpush1.msra.mxu0 0.0
      %3299 = vmatprep.subr.mxu0 0.0
      %3300 = vmatpush1.msra.mxu0 0.0
      %3301 = vmatprep.subr.mxu0 0.0
      %3302 = vmatpush1.msra.mxu0 0.0
      %3303 = vmatprep.subr.mxu0 0.0
      %3304 = vmatpush1.msra.mxu0 0.0
      %3305 = vmatprep.subr.mxu0 0.0
      %3306 = vmatpush1.msra.mxu0 0.0
      %3307 = vmatprep.subr.mxu0 0.0
      %3308 = vmatpush1.msra.mxu0 0.0
      %3309 = vmatprep.subr.mxu0 0.0
      %3310 = vmatpush1.msra.mxu0 0.0
      %3311 = vmatprep.subr.mxu0 0.0
      %3312 = vmatpush1.msra.mxu0 %v3293
      %3313 = vmatprep.subr.mxu0 0.0
      %3314 = vmatpush1.msra.mxu0 %v3292
      %3315 = vmatprep.subr.mxu0 0.0
      %3316 = vmatpush1.msra.mxu0 %v3291
      %3317 = vmatprep.subr.mxu0 0.0
      %3318 = vmatpush1.msra.mxu0 %v3290
      %3319 = vmatprep.subr.mxu0 0.0
      %3320 = vmatpush1.msra.mxu0 %v3289
      %3321 = vmatprep.subr.mxu0 0.0
      %3322 = vmatpush1.msra.mxu0 %v3288
      %3323 = vmatprep.subr.mxu0 0.0
      %3324 = vmatpush1.msra.mxu0 %v3287
      %3325 = vmatprep.subr.mxu0 0.0
      %3326 = vmatpush1.msra.mxu0 %v3286
      %3327 = vmatprep.subr.mxu0 0.0
      %3328 = vmatpush1.msra.mxu0 %v3285
      %3329 = vmatprep.subr.mxu0 0.0
      %3330 = vmatpush2.msra.mxu0 0.0
      %3331 = vmatprep.subr.mxu0 0.0
      %3332 = vmatpush2.msra.mxu0 0.0
      %3333 = vmatprep.subr.mxu0 0.0
      %3334 = vmatpush2.msra.mxu0 0.0
      %3335 = vmatprep.subr.mxu0 0.0
      %3336 = vmatpush2.msra.mxu0 0.0
      %3337 = vmatprep.subr.mxu0 0.0
      %3338 = vmatpush2.msra.mxu0 0.0
      %3339 = vmatprep.subr.mxu0 0.0
      %3340 = vmatpush2.msra.mxu0 0.0
      %3341 = vmatprep.subr.mxu0 0.0
      %3342 = vmatpush2.msra.mxu0 0.0
      %3343 = vmatprep.subr.mxu0 0.0
      %3344 = vmatpush2.msra.mxu0 0.0
      %3345 = vmatprep.subr.mxu0 0.0
      %3346 = vmatpush2.msra.mxu0 0.0
      %3347 = vmatprep.subr.mxu0 0.0
      %3348 = vmatpush2.msra.mxu0 0.0
      %3349 = vmatprep.subr.mxu0 0.0
      %3350 = vmatpush2.msra.mxu0 0.0
      %3351 = vmatprep.subr.mxu0 0.0
      %3352 = vmatpush2.msra.mxu0 0.0
      %3353 = vmatprep.subr.mxu0 0.0
      %3354 = vmatpush2.msra.mxu0 0.0
      %3355 = vmatprep.subr.mxu0 0.0
      %3356 = vmatpush2.msra.mxu0 0.0
      %3357 = vmatprep.subr.mxu0 0.0
      %3358 = vmatpush2.msra.mxu0 0.0
      %3359 = vmatprep.subr.mxu0 0.0
      %3360 = vmatpush2.msra.mxu0 0.0
      %3361 = vmatprep.mubr.f32.mxu0 0.0
      %3362 = vmatmul.mubr.f32.gmra.mxu0 %v3295
      %v3363 = vpop.f32.mrf.mxu0
      %v3364 = vadd.f32 0.0, %v3363
      %v3365 = vpop.f32.mrf.mxu0
      %3366 = vdwg.mxu0
      %s3367 = scalar_lea.vmem %s25, %s1178
      %v3368 = vld [vmem:[%s3367] sm:$0xff]
      %v3369 = vld [vmem:[%s39] sm:$0x3]
      %v3370 = vld [vmem:[%s45] sm:$0xff]
      %v3371 = vld [vmem:[%s45 + $0x8] sm:$0xff]
      %v3372 = vld [vmem:[%s45 + $0x10] sm:$0xff]
      %v3373 = vld [vmem:[%s45 + $0x18] sm:$0xff]
      %v3374 = vld [vmem:[%s45 + $0x20] sm:$0xff]
      %v3375 = vld [vmem:[%s45 + $0x28] sm:$0xff]
      %v3376 = vld [vmem:[%s45 + $0x30] sm:$0xff]
      %v3377 = vld [vmem:[%s45 + $0x38] sm:$0xff]
      %v3378 = vld [vmem:[%s45 + $0x40] sm:$0xff]
      %v3379 = vld [vmem:[%s45 + $0x48] sm:$0xff]
      %v3380 = vld [vmem:[%s45 + $0x50] sm:$0xff]
      %v3381 = vld [vmem:[%s45 + $0x58] sm:$0xff]
      %v3382 = vld [vmem:[%s45 + $0x60] sm:$0xff]
      %v3383 = vld [vmem:[%s45 + $0x68] sm:$0xff]
      %v3384 = vld [vmem:[%s45 + $0x70] sm:$0xff]
      %v3385 = vld [vmem:[%s45 + $0x78] sm:$0xff]
      %v3386 = vrot.slane %v3364, 4
      %v3387 = vadd.f32 %v3364, %v3386
      %v3388 = vrot.slane %v3387, 2
      %v3389 = vadd.f32 %v3387, %v3388
      %v3390 = vrot.slane %v3389, 1
      %v3391 = vadd.f32 %v3389, %v3390
      %3392 = vmatprep.subr.mxu0 0.0
      %3393 = vmatpush1.msra.mxu0 %v3385
      %3394 = vmatprep.subr.mxu0 0.0
      %3395 = vmatpush1.msra.mxu0 %v3384
      %3396 = vmatprep.subr.mxu0 0.0
      %3397 = vmatpush1.msra.mxu0 %v3383
      %3398 = vmatprep.subr.mxu0 0.0
      %3399 = vmatpush1.msra.mxu0 %v3382
      %3400 = vmatprep.subr.mxu0 0.0
      %3401 = vmatpush1.msra.mxu0 %v3381
      %3402 = vmatprep.subr.mxu0 0.0
      %3403 = vmatpush1.msra.mxu0 %v3380
      %3404 = vmatprep.subr.mxu0 0.0
      %3405 = vmatpush1.msra.mxu0 %v3379
      %3406 = vmatprep.subr.mxu0 0.0
      %3407 = vmatpush1.msra.mxu0 %v3378
      %3408 = vmatprep.subr.mxu0 0.0
      %3409 = vmatpush1.msra.mxu0 %v3377
      %3410 = vmatprep.subr.mxu0 0.0
      %3411 = vmatpush1.msra.mxu0 %v3376
      %3412 = vmatprep.subr.mxu0 0.0
      %3413 = vmatpush1.msra.mxu0 %v3375
      %3414 = vmatprep.subr.mxu0 0.0
      %3415 = vmatpush1.msra.mxu0 %v3374
      %3416 = vmatprep.subr.mxu0 0.0
      %3417 = vmatpush1.msra.mxu0 %v3373
      %3418 = vmatprep.subr.mxu0 0.0
      %3419 = vmatpush1.msra.mxu0 %v3372
      %3420 = vmatprep.subr.mxu0 0.0
      %3421 = vmatpush1.msra.mxu0 %v3371
      %3422 = vmatprep.subr.mxu0 0.0
      %3423 = vmatpush1.msra.mxu0 %v3370
      %3424 = vmatprep.subr.mxu0 0.0
      %3425 = vmatpush2.msra.mxu0 0.0
      %3426 = vmatprep.subr.mxu0 0.0
      %3427 = vmatpush2.msra.mxu0 0.0
      %3428 = vmatprep.subr.mxu0 0.0
      %3429 = vmatpush2.msra.mxu0 0.0
      %3430 = vmatprep.subr.mxu0 0.0
      %3431 = vmatpush2.msra.mxu0 0.0
      %3432 = vmatprep.subr.mxu0 0.0
      %3433 = vmatpush2.msra.mxu0 0.0
      %3434 = vmatprep.subr.mxu0 0.0
      %3435 = vmatpush2.msra.mxu0 0.0
      %3436 = vmatprep.subr.mxu0 0.0
      %3437 = vmatpush2.msra.mxu0 0.0
      %3438 = vmatprep.subr.mxu0 0.0
      %3439 = vmatpush2.msra.mxu0 0.0
      %3440 = vmatprep.subr.mxu0 0.0
      %3441 = vmatpush2.msra.mxu0 0.0
      %3442 = vmatprep.subr.mxu0 0.0
      %3443 = vmatpush2.msra.mxu0 0.0
      %3444 = vmatprep.subr.mxu0 0.0
      %3445 = vmatpush2.msra.mxu0 0.0
      %3446 = vmatprep.subr.mxu0 0.0
      %3447 = vmatpush2.msra.mxu0 0.0
      %3448 = vmatprep.subr.mxu0 0.0
      %3449 = vmatpush2.msra.mxu0 0.0
      %3450 = vmatprep.subr.mxu0 0.0
      %3451 = vmatpush2.msra.mxu0 0.0
      %3452 = vmatprep.subr.mxu0 0.0
      %3453 = vmatpush2.msra.mxu0 0.0
      %3454 = vmatprep.subr.mxu0 0.0
      %3455 = vmatpush2.msra.mxu0 0.0
      %3456 = vmatprep.mubr.f32.mxu0 0.0
      %3457 = vmatmul.mubr.f32.gmra.mxu0 %v3391
      %v3458 = vpop.f32.mrf.mxu0
      %v3459 = vadd.f32 0.0, %v3458
      %v3460 = vpop.f32.mrf.mxu0
      %3461 = vdwg.mxu0
      %v3462 = vmul.f32 %v3459, 0.0078125
      %v3464 = vsel %vm1275, %v3462, 0
      %v3467 = vsel %vm1279, %v3369, 0
      %3469 = vmatprep.subr.mxu0 0.0
      %3470 = vmatpush1.msra.mxu0 0.0
      %3471 = vmatprep.subr.mxu0 0.0
      %3472 = vmatpush1.msra.mxu0 0.0
      %3473 = vmatprep.subr.mxu0 0.0
      %3474 = vmatpush1.msra.mxu0 0.0
      %3475 = vmatprep.subr.mxu0 0.0
      %3476 = vmatpush1.msra.mxu0 0.0
      %3477 = vmatprep.subr.mxu0 0.0
      %3478 = vmatpush1.msra.mxu0 0.0
      %3479 = vmatprep.subr.mxu0 0.0
      %3480 = vmatpush1.msra.mxu0 0.0
      %3481 = vmatprep.subr.mxu0 0.0
      %3482 = vmatpush1.msra.mxu0 0.0
      %3483 = vmatprep.subr.mxu0 0.0
      %3484 = vmatpush1.msra.mxu0 0.0
      %3485 = vmatprep.subr.mxu0 0.0
      %3486 = vmatpush1.msra.mxu0 0.0
      %3487 = vmatprep.subr.mxu0 0.0
      %3488 = vmatpush1.msra.mxu0 0.0
      %3489 = vmatprep.subr.mxu0 0.0
      %3490 = vmatpush1.msra.mxu0 0.0
      %3491 = vmatprep.subr.mxu0 0.0
      %3492 = vmatpush1.msra.mxu0 0.0
      %3493 = vmatprep.subr.mxu0 0.0
      %3494 = vmatpush1.msra.mxu0 0.0
      %3495 = vmatprep.subr.mxu0 0.0
      %3496 = vmatpush1.msra.mxu0 0.0
      %3497 = vmatprep.subr.mxu0 0.0
      %3498 = vmatpush1.msra.mxu0 0.0
      %3499 = vmatprep.subr.mxu0 0.0
      %3500 = vmatpush1.msra.mxu0 %v3467
      %3501 = vmatprep.subr.mxu0 0.0
      %3502 = vmatpush2.msra.mxu0 0.0
      %3503 = vmatprep.subr.mxu0 0.0
      %3504 = vmatpush2.msra.mxu0 0.0
      %3505 = vmatprep.subr.mxu0 0.0
      %3506 = vmatpush2.msra.mxu0 0.0
      %3507 = vmatprep.subr.mxu0 0.0
      %3508 = vmatpush2.msra.mxu0 0.0
      %3509 = vmatprep.subr.mxu0 0.0
      %3510 = vmatpush2.msra.mxu0 0.0
      %3511 = vmatprep.subr.mxu0 0.0
      %3512 = vmatpush2.msra.mxu0 0.0
      %3513 = vmatprep.subr.mxu0 0.0
      %3514 = vmatpush2.msra.mxu0 0.0
      %3515 = vmatprep.subr.mxu0 0.0
      %3516 = vmatpush2.msra.mxu0 0.0
      %3517 = vmatprep.subr.mxu0 0.0
      %3518 = vmatpush2.msra.mxu0 0.0
      %3519 = vmatprep.subr.mxu0 0.0
      %3520 = vmatpush2.msra.mxu0 0.0
      %3521 = vmatprep.subr.mxu0 0.0
      %3522 = vmatpush2.msra.mxu0 0.0
      %3523 = vmatprep.subr.mxu0 0.0
      %3524 = vmatpush2.msra.mxu0 0.0
      %3525 = vmatprep.subr.mxu0 0.0
      %3526 = vmatpush2.msra.mxu0 0.0
      %3527 = vmatprep.subr.mxu0 0.0
      %3528 = vmatpush2.msra.mxu0 0.0
      %3529 = vmatprep.subr.mxu0 0.0
      %3530 = vmatpush2.msra.mxu0 0.0
      %3531 = vmatprep.subr.mxu0 0.0
      %3532 = vmatpush2.msra.mxu0 0.0
      %3533 = vmatprep.mubr.f32.mxu0 0.0
      %3534 = vmatmul.mubr.f32.gmra.mxu0 %v3464
      %v3535 = vpop.f32.mrf.mxu0
      %v3536 = vadd.f32 0.0, %v3535
      %v3537 = vpop.f32.mrf.mxu0
      %3538 = vdwg.mxu0
      %v3539 = vlaneseq
      %v3540 = vshrl.u32 %v3539, 7
      %v3541 = vsub.s32 0, %v3540
      %v3542 = vrot.slane %v3536, %v3541
      %v3543 = vsub.f32 %v3364, %v3542
      %v3544 = vmul.f32 %v3543, %v3543
      %v3545 = vrot.slane %v3544, 4
      %v3546 = vadd.f32 %v3544, %v3545
      %v3547 = vrot.slane %v3546, 2
      %v3548 = vadd.f32 %v3546, %v3547
      %v3549 = vrot.slane %v3548, 1
      %v3550 = vadd.f32 %v3548, %v3549
      %3551 = vmatprep.subr.mxu0 0.0
      %3552 = vmatpush1.msra.mxu0 %v3385
      %3553 = vmatprep.subr.mxu0 0.0
      %3554 = vmatpush1.msra.mxu0 %v3384
      %3555 = vmatprep.subr.mxu0 0.0
      %3556 = vmatpush1.msra.mxu0 %v3383
      %3557 = vmatprep.subr.mxu0 0.0
      %3558 = vmatpush1.msra.mxu0 %v3382
      %3559 = vmatprep.subr.mxu0 0.0
      %3560 = vmatpush1.msra.mxu0 %v3381
      %3561 = vmatprep.subr.mxu0 0.0
      %3562 = vmatpush1.msra.mxu0 %v3380
      %3563 = vmatprep.subr.mxu0 0.0
      %3564 = vmatpush1.msra.mxu0 %v3379
      %3565 = vmatprep.subr.mxu0 0.0
      %3566 = vmatpush1.msra.mxu0 %v3378
      %3567 = vmatprep.subr.mxu0 0.0
      %3568 = vmatpush1.msra.mxu0 %v3377
      %3569 = vmatprep.subr.mxu0 0.0
      %3570 = vmatpush1.msra.mxu0 %v3376
      %3571 = vmatprep.subr.mxu0 0.0
      %3572 = vmatpush1.msra.mxu0 %v3375
      %3573 = vmatprep.subr.mxu0 0.0
      %3574 = vmatpush1.msra.mxu0 %v3374
      %3575 = vmatprep.subr.mxu0 0.0
      %3576 = vmatpush1.msra.mxu0 %v3373
      %3577 = vmatprep.subr.mxu0 0.0
      %3578 = vmatpush1.msra.mxu0 %v3372
      %3579 = vmatprep.subr.mxu0 0.0
      %3580 = vmatpush1.msra.mxu0 %v3371
      %3581 = vmatprep.subr.mxu0 0.0
      %3582 = vmatpush1.msra.mxu0 %v3370
      %3583 = vmatprep.subr.mxu0 0.0
      %3584 = vmatpush2.msra.mxu0 0.0
      %3585 = vmatprep.subr.mxu0 0.0
      %3586 = vmatpush2.msra.mxu0 0.0
      %3587 = vmatprep.subr.mxu0 0.0
      %3588 = vmatpush2.msra.mxu0 0.0
      %3589 = vmatprep.subr.mxu0 0.0
      %3590 = vmatpush2.msra.mxu0 0.0
      %3591 = vmatprep.subr.mxu0 0.0
      %3592 = vmatpush2.msra.mxu0 0.0
      %3593 = vmatprep.subr.mxu0 0.0
      %3594 = vmatpush2.msra.mxu0 0.0
      %3595 = vmatprep.subr.mxu0 0.0
      %3596 = vmatpush2.msra.mxu0 0.0
      %3597 = vmatprep.subr.mxu0 0.0
      %3598 = vmatpush2.msra.mxu0 0.0
      %3599 = vmatprep.subr.mxu0 0.0
      %3600 = vmatpush2.msra.mxu0 0.0
      %3601 = vmatprep.subr.mxu0 0.0
      %3602 = vmatpush2.msra.mxu0 0.0
      %3603 = vmatprep.subr.mxu0 0.0
      %3604 = vmatpush2.msra.mxu0 0.0
      %3605 = vmatprep.subr.mxu0 0.0
      %3606 = vmatpush2.msra.mxu0 0.0
      %3607 = vmatprep.subr.mxu0 0.0
      %3608 = vmatpush2.msra.mxu0 0.0
      %3609 = vmatprep.subr.mxu0 0.0
      %3610 = vmatpush2.msra.mxu0 0.0
      %3611 = vmatprep.subr.mxu0 0.0
      %3612 = vmatpush2.msra.mxu0 0.0
      %3613 = vmatprep.subr.mxu0 0.0
      %3614 = vmatpush2.msra.mxu0 0.0
      %3615 = vmatprep.mubr.f32.mxu0 0.0
      %3616 = vmatmul.mubr.f32.gmra.mxu0 %v3550
      %v3617 = vpop.f32.mrf.mxu0
      %v3618 = vadd.f32 0.0, %v3617
      %v3619 = vpop.f32.mrf.mxu0
      %3620 = vdwg.mxu0
      %v3621 = vmul.f32 %v3618, 0.0078125
      %v3622 = vadd.f32 %v3621, 0.0001
      %v3623 = vrsqrt.pop %v3622
      %v3625 = vsel %vm1275, %v3623, 0
      %3627 = vmatprep.subr.mxu0 0.0
      %3628 = vmatpush1.msra.mxu0 0.0
      %3629 = vmatprep.subr.mxu0 0.0
      %3630 = vmatpush1.msra.mxu0 0.0
      %3631 = vmatprep.subr.mxu0 0.0
      %3632 = vmatpush1.msra.mxu0 0.0
      %3633 = vmatprep.subr.mxu0 0.0
      %3634 = vmatpush1.msra.mxu0 0.0
      %3635 = vmatprep.subr.mxu0 0.0
      %3636 = vmatpush1.msra.mxu0 0.0
      %3637 = vmatprep.subr.mxu0 0.0
      %3638 = vmatpush1.msra.mxu0 0.0
      %3639 = vmatprep.subr.mxu0 0.0
      %3640 = vmatpush1.msra.mxu0 0.0
      %3641 = vmatprep.subr.mxu0 0.0
      %3642 = vmatpush1.msra.mxu0 0.0
      %3643 = vmatprep.subr.mxu0 0.0
      %3644 = vmatpush1.msra.mxu0 0.0
      %3645 = vmatprep.subr.mxu0 0.0
      %3646 = vmatpush1.msra.mxu0 0.0
      %3647 = vmatprep.subr.mxu0 0.0
      %3648 = vmatpush1.msra.mxu0 0.0
      %3649 = vmatprep.subr.mxu0 0.0
      %3650 = vmatpush1.msra.mxu0 0.0
      %3651 = vmatprep.subr.mxu0 0.0
      %3652 = vmatpush1.msra.mxu0 0.0
      %3653 = vmatprep.subr.mxu0 0.0
      %3654 = vmatpush1.msra.mxu0 0.0
      %3655 = vmatprep.subr.mxu0 0.0
      %3656 = vmatpush1.msra.mxu0 0.0
      %3657 = vmatprep.subr.mxu0 0.0
      %3658 = vmatpush1.msra.mxu0 %v3467
      %3659 = vmatprep.subr.mxu0 0.0
      %3660 = vmatpush2.msra.mxu0 0.0
      %3661 = vmatprep.subr.mxu0 0.0
      %3662 = vmatpush2.msra.mxu0 0.0
      %3663 = vmatprep.subr.mxu0 0.0
      %3664 = vmatpush2.msra.mxu0 0.0
      %3665 = vmatprep.subr.mxu0 0.0
      %3666 = vmatpush2.msra.mxu0 0.0
      %3667 = vmatprep.subr.mxu0 0.0
      %3668 = vmatpush2.msra.mxu0 0.0
      %3669 = vmatprep.subr.mxu0 0.0
      %3670 = vmatpush2.msra.mxu0 0.0
      %3671 = vmatprep.subr.mxu0 0.0
      %3672 = vmatpush2.msra.mxu0 0.0
      %3673 = vmatprep.subr.mxu0 0.0
      %3674 = vmatpush2.msra.mxu0 0.0
      %3675 = vmatprep.subr.mxu0 0.0
      %3676 = vmatpush2.msra.mxu0 0.0
      %3677 = vmatprep.subr.mxu0 0.0
      %3678 = vmatpush2.msra.mxu0 0.0
      %3679 = vmatprep.subr.mxu0 0.0
      %3680 = vmatpush2.msra.mxu0 0.0
      %3681 = vmatprep.subr.mxu0 0.0
      %3682 = vmatpush2.msra.mxu0 0.0
      %3683 = vmatprep.subr.mxu0 0.0
      %3684 = vmatpush2.msra.mxu0 0.0
      %3685 = vmatprep.subr.mxu0 0.0
      %3686 = vmatpush2.msra.mxu0 0.0
      %3687 = vmatprep.subr.mxu0 0.0
      %3688 = vmatpush2.msra.mxu0 0.0
      %3689 = vmatprep.subr.mxu0 0.0
      %3690 = vmatpush2.msra.mxu0 0.0
      %3691 = vmatprep.mubr.f32.mxu0 0.0
      %3692 = vmatmul.mubr.f32.gmra.mxu0 %v3625
      %v3693 = vpop.f32.mrf.mxu0
      %v3694 = vadd.f32 0.0, %v3693
      %v3695 = vpop.f32.mrf.mxu0
      %3696 = vdwg.mxu0
      %v3697 = vlaneseq
      %v3698 = vshrl.u32 %v3697, 7
      %v3699 = vsub.s32 0, %v3698
      %v3700 = vrot.slane %v3694, %v3699
      %v3701 = vmul.f32 %v3543, %v3700
      %3703 = vset.pattern.permute.xlu0 0
      %3704 = vperm.xlu0 %3703, %v3368
      %v3705 = vpop.permute.xlu0 %3704
      %v3707 = vmul.f32 %v3701, %v3705
      %v3708 = vld [vmem:[#allocation6] sm:$0xff]
      %v3709 = vmul.f32 %v3708, 0.95
      %v3710 = vadd.f32 %v3709, %v3707
      %v3711 = vsub.f32 %v3710, 1.0
      %vm3712 = vcmp.gt.f32.partialorder %v3711, 0.0
      %v3713 = vsel %vm3712, 1, 0
      %v3714 = vcvt.s32.f32 %v3713
      %v3715 = vsub.f32 %v3710, %v3714
      %3716 = vst [vmem:[#allocation6] sm:$0xff] %v3715
      %v3717 = vld [vmem:[%s49] sm:$0xff]
      %v3718 = vld [vmem:[%s49 + $0x8] sm:$0xff]
      %v3719 = vld [vmem:[%s49 + $0x10] sm:$0xff]
      %v3720 = vld [vmem:[%s49 + $0x18] sm:$0xff]
      %v3721 = vld [vmem:[%s49 + $0x20] sm:$0xff]
      %v3722 = vld [vmem:[%s49 + $0x28] sm:$0xff]
      %v3723 = vld [vmem:[%s49 + $0x30] sm:$0xff]
      %v3724 = vld [vmem:[%s49 + $0x38] sm:$0xff]
      %v3725 = vld [vmem:[%s49 + $0x40] sm:$0xff]
      %v3726 = vld [vmem:[%s49 + $0x48] sm:$0xff]
      %v3727 = vld [vmem:[%s49 + $0x50] sm:$0xff]
      %v3728 = vld [vmem:[%s49 + $0x58] sm:$0xff]
      %v3729 = vld [vmem:[%s49 + $0x60] sm:$0xff]
      %v3730 = vld [vmem:[%s49 + $0x68] sm:$0xff]
      %v3731 = vld [vmem:[%s49 + $0x70] sm:$0xff]
      %v3732 = vld [vmem:[%s49 + $0x78] sm:$0xff]
      %3733 = vmatprep.subr.mxu0 0.0
      %3734 = vmatpush1.msra.mxu0 %v3732
      %3735 = vmatprep.subr.mxu0 0.0
      %3736 = vmatpush1.msra.mxu0 %v3731
      %3737 = vmatprep.subr.mxu0 0.0
      %3738 = vmatpush1.msra.mxu0 %v3730
      %3739 = vmatprep.subr.mxu0 0.0
      %3740 = vmatpush1.msra.mxu0 %v3729
      %3741 = vmatprep.subr.mxu0 0.0
      %3742 = vmatpush1.msra.mxu0 %v3728
      %3743 = vmatprep.subr.mxu0 0.0
      %3744 = vmatpush1.msra.mxu0 %v3727
      %3745 = vmatprep.subr.mxu0 0.0
      %3746 = vmatpush1.msra.mxu0 %v3726
      %3747 = vmatprep.subr.mxu0 0.0
      %3748 = vmatpush1.msra.mxu0 %v3725
      %3749 = vmatprep.subr.mxu0 0.0
      %3750 = vmatpush1.msra.mxu0 %v3724
      %3751 = vmatprep.subr.mxu0 0.0
      %3752 = vmatpush1.msra.mxu0 %v3723
      %3753 = vmatprep.subr.mxu0 0.0
      %3754 = vmatpush1.msra.mxu0 %v3722
      %3755 = vmatprep.subr.mxu0 0.0
      %3756 = vmatpush1.msra.mxu0 %v3721
      %3757 = vmatprep.subr.mxu0 0.0
      %3758 = vmatpush1.msra.mxu0 %v3720
      %3759 = vmatprep.subr.mxu0 0.0
      %3760 = vmatpush1.msra.mxu0 %v3719
      %3761 = vmatprep.subr.mxu0 0.0
      %3762 = vmatpush1.msra.mxu0 %v3718
      %3763 = vmatprep.subr.mxu0 0.0
      %3764 = vmatpush1.msra.mxu0 %v3717
      %3765 = vmatprep.subr.mxu0 0.0
      %3766 = vmatpush2.msra.mxu0 0.0
      %3767 = vmatprep.subr.mxu0 0.0
      %3768 = vmatpush2.msra.mxu0 0.0
      %3769 = vmatprep.subr.mxu0 0.0
      %3770 = vmatpush2.msra.mxu0 0.0
      %3771 = vmatprep.subr.mxu0 0.0
      %3772 = vmatpush2.msra.mxu0 0.0
      %3773 = vmatprep.subr.mxu0 0.0
      %3774 = vmatpush2.msra.mxu0 0.0
      %3775 = vmatprep.subr.mxu0 0.0
      %3776 = vmatpush2.msra.mxu0 0.0
      %3777 = vmatprep.subr.mxu0 0.0
      %3778 = vmatpush2.msra.mxu0 0.0
      %3779 = vmatprep.subr.mxu0 0.0
      %3780 = vmatpush2.msra.mxu0 0.0
      %3781 = vmatprep.subr.mxu0 0.0
      %3782 = vmatpush2.msra.mxu0 0.0
      %3783 = vmatprep.subr.mxu0 0.0
      %3784 = vmatpush2.msra.mxu0 0.0
      %3785 = vmatprep.subr.mxu0 0.0
      %3786 = vmatpush2.msra.mxu0 0.0
      %3787 = vmatprep.subr.mxu0 0.0
      %3788 = vmatpush2.msra.mxu0 0.0
      %3789 = vmatprep.subr.mxu0 0.0
      %3790 = vmatpush2.msra.mxu0 0.0
      %3791 = vmatprep.subr.mxu0 0.0
      %3792 = vmatpush2.msra.mxu0 0.0
      %3793 = vmatprep.subr.mxu0 0.0
      %3794 = vmatpush2.msra.mxu0 0.0
      %3795 = vmatprep.subr.mxu0 0.0
      %3796 = vmatpush2.msra.mxu0 0.0
      %3797 = vmatprep.mubr.f32.mxu0 0.0
      %3798 = vmatmul.mubr.f32.gmra.mxu0 %v2579
      %v3799 = vpop.f32.mrf.mxu0
      %v3800 = vadd.f32 0.0, %v3799
      %v3801 = vpop.f32.mrf.mxu0
      %3802 = vdwg.mxu0
      %v3803 = vld [vmem:[%s53] sm:$0xff]
      %vm3804 = vcmask 64512
      %v3806 = vsel %vm3804, %v3803, 0
      %3808 = vmatprep.subr.mxu0 0.0
      %3809 = vmatpush1.msra.mxu0 0.0
      %3810 = vmatprep.subr.mxu0 0.0
      %3811 = vmatpush1.msra.mxu0 0.0
      %3812 = vmatprep.subr.mxu0 0.0
      %3813 = vmatpush1.msra.mxu0 0.0
      %3814 = vmatprep.subr.mxu0 0.0
      %3815 = vmatpush1.msra.mxu0 0.0
      %3816 = vmatprep.subr.mxu0 0.0
      %3817 = vmatpush1.msra.mxu0 0.0
      %3818 = vmatprep.subr.mxu0 0.0
      %3819 = vmatpush1.msra.mxu0 0.0
      %3820 = vmatprep.subr.mxu0 0.0
      %3821 = vmatpush1.msra.mxu0 0.0
      %3822 = vmatprep.subr.mxu0 0.0
      %3823 = vmatpush1.msra.mxu0 0.0
      %3824 = vmatprep.subr.mxu0 0.0
      %3825 = vmatpush1.msra.mxu0 0.0
      %3826 = vmatprep.subr.mxu0 0.0
      %3827 = vmatpush1.msra.mxu0 0.0
      %3828 = vmatprep.subr.mxu0 0.0
      %3829 = vmatpush1.msra.mxu0 0.0
      %3830 = vmatprep.subr.mxu0 0.0
      %3831 = vmatpush1.msra.mxu0 0.0
      %3832 = vmatprep.subr.mxu0 0.0
      %3833 = vmatpush1.msra.mxu0 0.0
      %3834 = vmatprep.subr.mxu0 0.0
      %3835 = vmatpush1.msra.mxu0 0.0
      %3836 = vmatprep.subr.mxu0 0.0
      %3837 = vmatpush1.msra.mxu0 0.0
      %3838 = vmatprep.subr.mxu0 0.0
      %3839 = vmatpush1.msra.mxu0 %v3800
      %3840 = vmatprep.subr.mxu0 0.0
      %3841 = vmatpush2.msra.mxu0 0.0
      %3842 = vmatprep.subr.mxu0 0.0
      %3843 = vmatpush2.msra.mxu0 0.0
      %3844 = vmatprep.subr.mxu0 0.0
      %3845 = vmatpush2.msra.mxu0 0.0
      %3846 = vmatprep.subr.mxu0 0.0
      %3847 = vmatpush2.msra.mxu0 0.0
      %3848 = vmatprep.subr.mxu0 0.0
      %3849 = vmatpush2.msra.mxu0 0.0
      %3850 = vmatprep.subr.mxu0 0.0
      %3851 = vmatpush2.msra.mxu0 0.0
      %3852 = vmatprep.subr.mxu0 0.0
      %3853 = vmatpush2.msra.mxu0 0.0
      %3854 = vmatprep.subr.mxu0 0.0
      %3855 = vmatpush2.msra.mxu0 0.0
      %3856 = vmatprep.subr.mxu0 0.0
      %3857 = vmatpush2.msra.mxu0 0.0
      %3858 = vmatprep.subr.mxu0 0.0
      %3859 = vmatpush2.msra.mxu0 0.0
      %3860 = vmatprep.subr.mxu0 0.0
      %3861 = vmatpush2.msra.mxu0 0.0
      %3862 = vmatprep.subr.mxu0 0.0
      %3863 = vmatpush2.msra.mxu0 0.0
      %3864 = vmatprep.subr.mxu0 0.0
      %3865 = vmatpush2.msra.mxu0 0.0
      %3866 = vmatprep.subr.mxu0 0.0
      %3867 = vmatpush2.msra.mxu0 0.0
      %3868 = vmatprep.subr.mxu0 0.0
      %3869 = vmatpush2.msra.mxu0 0.0
      %3870 = vmatprep.subr.mxu0 0.0
      %3871 = vmatpush2.msra.mxu0 0.0
      %3872 = vmatprep.mubr.f32.mxu0 0.0
      %3873 = vmatmul.mubr.f32.gmra.mxu0 %v3806
      %v3874 = vpop.f32.mrf.mxu0
      %v3875 = vadd.f32 0.0, %v3874
      %v3876 = vpop.f32.mrf.mxu0
      %3877 = vdwg.mxu0
      %s3878 = scalar_lea.vmem %s57, %s1178
      %v3879 = vld [vmem:[%s3878] sm:$0xff]
      %s3880 = scalar_lea.vmem %s61, %s1178
      %v3881 = vld [vmem:[%s3880] sm:$0xff]
      %v3882 = vld [vmem:[%s39] sm:$0x3]
      %v3883 = vld [vmem:[%s45] sm:$0xff]
      %v3884 = vld [vmem:[%s45 + $0x8] sm:$0xff]
      %v3885 = vld [vmem:[%s45 + $0x10] sm:$0xff]
      %v3886 = vld [vmem:[%s45 + $0x18] sm:$0xff]
      %v3887 = vld [vmem:[%s45 + $0x20] sm:$0xff]
      %v3888 = vld [vmem:[%s45 + $0x28] sm:$0xff]
      %v3889 = vld [vmem:[%s45 + $0x30] sm:$0xff]
      %v3890 = vld [vmem:[%s45 + $0x38] sm:$0xff]
      %v3891 = vld [vmem:[%s45 + $0x40] sm:$0xff]
      %v3892 = vld [vmem:[%s45 + $0x48] sm:$0xff]
      %v3893 = vld [vmem:[%s45 + $0x50] sm:$0xff]
      %v3894 = vld [vmem:[%s45 + $0x58] sm:$0xff]
      %v3895 = vld [vmem:[%s45 + $0x60] sm:$0xff]
      %v3896 = vld [vmem:[%s45 + $0x68] sm:$0xff]
      %v3897 = vld [vmem:[%s45 + $0x70] sm:$0xff]
      %v3898 = vld [vmem:[%s45 + $0x78] sm:$0xff]
      %v3899 = vrot.slane %v3875, 4
      %v3900 = vadd.f32 %v3875, %v3899
      %v3901 = vrot.slane %v3900, 2
      %v3902 = vadd.f32 %v3900, %v3901
      %v3903 = vrot.slane %v3902, 1
      %v3904 = vadd.f32 %v3902, %v3903
      %3905 = vmatprep.subr.mxu0 0.0
      %3906 = vmatpush1.msra.mxu0 %v3898
      %3907 = vmatprep.subr.mxu0 0.0
      %3908 = vmatpush1.msra.mxu0 %v3897
      %3909 = vmatprep.subr.mxu0 0.0
      %3910 = vmatpush1.msra.mxu0 %v3896
      %3911 = vmatprep.subr.mxu0 0.0
      %3912 = vmatpush1.msra.mxu0 %v3895
      %3913 = vmatprep.subr.mxu0 0.0
      %3914 = vmatpush1.msra.mxu0 %v3894
      %3915 = vmatprep.subr.mxu0 0.0
      %3916 = vmatpush1.msra.mxu0 %v3893
      %3917 = vmatprep.subr.mxu0 0.0
      %3918 = vmatpush1.msra.mxu0 %v3892
      %3919 = vmatprep.subr.mxu0 0.0
      %3920 = vmatpush1.msra.mxu0 %v3891
      %3921 = vmatprep.subr.mxu0 0.0
      %3922 = vmatpush1.msra.mxu0 %v3890
      %3923 = vmatprep.subr.mxu0 0.0
      %3924 = vmatpush1.msra.mxu0 %v3889
      %3925 = vmatprep.subr.mxu0 0.0
      %3926 = vmatpush1.msra.mxu0 %v3888
      %3927 = vmatprep.subr.mxu0 0.0
      %3928 = vmatpush1.msra.mxu0 %v3887
      %3929 = vmatprep.subr.mxu0 0.0
      %3930 = vmatpush1.msra.mxu0 %v3886
      %3931 = vmatprep.subr.mxu0 0.0
      %3932 = vmatpush1.msra.mxu0 %v3885
      %3933 = vmatprep.subr.mxu0 0.0
      %3934 = vmatpush1.msra.mxu0 %v3884
      %3935 = vmatprep.subr.mxu0 0.0
      %3936 = vmatpush1.msra.mxu0 %v3883
      %3937 = vmatprep.subr.mxu0 0.0
      %3938 = vmatpush2.msra.mxu0 0.0
      %3939 = vmatprep.subr.mxu0 0.0
      %3940 = vmatpush2.msra.mxu0 0.0
      %3941 = vmatprep.subr.mxu0 0.0
      %3942 = vmatpush2.msra.mxu0 0.0
      %3943 = vmatprep.subr.mxu0 0.0
      %3944 = vmatpush2.msra.mxu0 0.0
      %3945 = vmatprep.subr.mxu0 0.0
      %3946 = vmatpush2.msra.mxu0 0.0
      %3947 = vmatprep.subr.mxu0 0.0
      %3948 = vmatpush2.msra.mxu0 0.0
      %3949 = vmatprep.subr.mxu0 0.0
      %3950 = vmatpush2.msra.mxu0 0.0
      %3951 = vmatprep.subr.mxu0 0.0
      %3952 = vmatpush2.msra.mxu0 0.0
      %3953 = vmatprep.subr.mxu0 0.0
      %3954 = vmatpush2.msra.mxu0 0.0
      %3955 = vmatprep.subr.mxu0 0.0
      %3956 = vmatpush2.msra.mxu0 0.0
      %3957 = vmatprep.subr.mxu0 0.0
      %3958 = vmatpush2.msra.mxu0 0.0
      %3959 = vmatprep.subr.mxu0 0.0
      %3960 = vmatpush2.msra.mxu0 0.0
      %3961 = vmatprep.subr.mxu0 0.0
      %3962 = vmatpush2.msra.mxu0 0.0
      %3963 = vmatprep.subr.mxu0 0.0
      %3964 = vmatpush2.msra.mxu0 0.0
      %3965 = vmatprep.subr.mxu0 0.0
      %3966 = vmatpush2.msra.mxu0 0.0
      %3967 = vmatprep.subr.mxu0 0.0
      %3968 = vmatpush2.msra.mxu0 0.0
      %3969 = vmatprep.mubr.f32.mxu0 0.0
      %3970 = vmatmul.mubr.f32.gmra.mxu0 %v3904
      %v3971 = vpop.f32.mrf.mxu0
      %v3972 = vadd.f32 0.0, %v3971
      %v3973 = vpop.f32.mrf.mxu0
      %3974 = vdwg.mxu0
      %v3975 = vmul.f32 %v3972, 0.0078125
      %v3977 = vsel %vm1275, %v3975, 0
      %v3980 = vsel %vm1279, %v3882, 0
      %3982 = vmatprep.subr.mxu0 0.0
      %3983 = vmatpush1.msra.mxu0 0.0
      %3984 = vmatprep.subr.mxu0 0.0
      %3985 = vmatpush1.msra.mxu0 0.0
      %3986 = vmatprep.subr.mxu0 0.0
      %3987 = vmatpush1.msra.mxu0 0.0
      %3988 = vmatprep.subr.mxu0 0.0
      %3989 = vmatpush1.msra.mxu0 0.0
      %3990 = vmatprep.subr.mxu0 0.0
      %3991 = vmatpush1.msra.mxu0 0.0
      %3992 = vmatprep.subr.mxu0 0.0
      %3993 = vmatpush1.msra.mxu0 0.0
      %3994 = vmatprep.subr.mxu0 0.0
      %3995 = vmatpush1.msra.mxu0 0.0
      %3996 = vmatprep.subr.mxu0 0.0
      %3997 = vmatpush1.msra.mxu0 0.0
      %3998 = vmatprep.subr.mxu0 0.0
      %3999 = vmatpush1.msra.mxu0 0.0
      %4000 = vmatprep.subr.mxu0 0.0
      %4001 = vmatpush1.msra.mxu0 0.0
      %4002 = vmatprep.subr.mxu0 0.0
      %4003 = vmatpush1.msra.mxu0 0.0
      %4004 = vmatprep.subr.mxu0 0.0
      %4005 = vmatpush1.msra.mxu0 0.0
      %4006 = vmatprep.subr.mxu0 0.0
      %4007 = vmatpush1.msra.mxu0 0.0
      %4008 = vmatprep.subr.mxu0 0.0
      %4009 = vmatpush1.msra.mxu0 0.0
      %4010 = vmatprep.subr.mxu0 0.0
      %4011 = vmatpush1.msra.mxu0 0.0
      %4012 = vmatprep.subr.mxu0 0.0
      %4013 = vmatpush1.msra.mxu0 %v3980
      %4014 = vmatprep.subr.mxu0 0.0
      %4015 = vmatpush2.msra.mxu0 0.0
      %4016 = vmatprep.subr.mxu0 0.0
      %4017 = vmatpush2.msra.mxu0 0.0
      %4018 = vmatprep.subr.mxu0 0.0
      %4019 = vmatpush2.msra.mxu0 0.0
      %4020 = vmatprep.subr.mxu0 0.0
      %4021 = vmatpush2.msra.mxu0 0.0
      %4022 = vmatprep.subr.mxu0 0.0
      %4023 = vmatpush2.msra.mxu0 0.0
      %4024 = vmatprep.subr.mxu0 0.0
      %4025 = vmatpush2.msra.mxu0 0.0
      %4026 = vmatprep.subr.mxu0 0.0
      %4027 = vmatpush2.msra.mxu0 0.0
      %4028 = vmatprep.subr.mxu0 0.0
      %4029 = vmatpush2.msra.mxu0 0.0
      %4030 = vmatprep.subr.mxu0 0.0
      %4031 = vmatpush2.msra.mxu0 0.0
      %4032 = vmatprep.subr.mxu0 0.0
      %4033 = vmatpush2.msra.mxu0 0.0
      %4034 = vmatprep.subr.mxu0 0.0
      %4035 = vmatpush2.msra.mxu0 0.0
      %4036 = vmatprep.subr.mxu0 0.0
      %4037 = vmatpush2.msra.mxu0 0.0
      %4038 = vmatprep.subr.mxu0 0.0
      %4039 = vmatpush2.msra.mxu0 0.0
      %4040 = vmatprep.subr.mxu0 0.0
      %4041 = vmatpush2.msra.mxu0 0.0
      %4042 = vmatprep.subr.mxu0 0.0
      %4043 = vmatpush2.msra.mxu0 0.0
      %4044 = vmatprep.subr.mxu0 0.0
      %4045 = vmatpush2.msra.mxu0 0.0
      %4046 = vmatprep.mubr.f32.mxu0 0.0
      %4047 = vmatmul.mubr.f32.gmra.mxu0 %v3977
      %v4048 = vpop.f32.mrf.mxu0
      %v4049 = vadd.f32 0.0, %v4048
      %v4050 = vpop.f32.mrf.mxu0
      %4051 = vdwg.mxu0
      %v4052 = vlaneseq
      %v4053 = vshrl.u32 %v4052, 7
      %v4054 = vsub.s32 0, %v4053
      %v4055 = vrot.slane %v4049, %v4054
      %v4056 = vsub.f32 %v3875, %v4055
      %v4057 = vmul.f32 %v4056, %v4056
      %v4058 = vrot.slane %v4057, 4
      %v4059 = vadd.f32 %v4057, %v4058
      %v4060 = vrot.slane %v4059, 2
      %v4061 = vadd.f32 %v4059, %v4060
      %v4062 = vrot.slane %v4061, 1
      %v4063 = vadd.f32 %v4061, %v4062
      %4064 = vmatprep.subr.mxu0 0.0
      %4065 = vmatpush1.msra.mxu0 %v3898
      %4066 = vmatprep.subr.mxu0 0.0
      %4067 = vmatpush1.msra.mxu0 %v3897
      %4068 = vmatprep.subr.mxu0 0.0
      %4069 = vmatpush1.msra.mxu0 %v3896
      %4070 = vmatprep.subr.mxu0 0.0
      %4071 = vmatpush1.msra.mxu0 %v3895
      %4072 = vmatprep.subr.mxu0 0.0
      %4073 = vmatpush1.msra.mxu0 %v3894
      %4074 = vmatprep.subr.mxu0 0.0
      %4075 = vmatpush1.msra.mxu0 %v3893
      %4076 = vmatprep.subr.mxu0 0.0
      %4077 = vmatpush1.msra.mxu0 %v3892
      %4078 = vmatprep.subr.mxu0 0.0
      %4079 = vmatpush1.msra.mxu0 %v3891
      %4080 = vmatprep.subr.mxu0 0.0
      %4081 = vmatpush1.msra.mxu0 %v3890
      %4082 = vmatprep.subr.mxu0 0.0
      %4083 = vmatpush1.msra.mxu0 %v3889
      %4084 = vmatprep.subr.mxu0 0.0
      %4085 = vmatpush1.msra.mxu0 %v3888
      %4086 = vmatprep.subr.mxu0 0.0
      %4087 = vmatpush1.msra.mxu0 %v3887
      %4088 = vmatprep.subr.mxu0 0.0
      %4089 = vmatpush1.msra.mxu0 %v3886
      %4090 = vmatprep.subr.mxu0 0.0
      %4091 = vmatpush1.msra.mxu0 %v3885
      %4092 = vmatprep.subr.mxu0 0.0
      %4093 = vmatpush1.msra.mxu0 %v3884
      %4094 = vmatprep.subr.mxu0 0.0
      %4095 = vmatpush1.msra.mxu0 %v3883
      %4096 = vmatprep.subr.mxu0 0.0
      %4097 = vmatpush2.msra.mxu0 0.0
      %4098 = vmatprep.subr.mxu0 0.0
      %4099 = vmatpush2.msra.mxu0 0.0
      %4100 = vmatprep.subr.mxu0 0.0
      %4101 = vmatpush2.msra.mxu0 0.0
      %4102 = vmatprep.subr.mxu0 0.0
      %4103 = vmatpush2.msra.mxu0 0.0
      %4104 = vmatprep.subr.mxu0 0.0
      %4105 = vmatpush2.msra.mxu0 0.0
      %4106 = vmatprep.subr.mxu0 0.0
      %4107 = vmatpush2.msra.mxu0 0.0
      %4108 = vmatprep.subr.mxu0 0.0
      %4109 = vmatpush2.msra.mxu0 0.0
      %4110 = vmatprep.subr.mxu0 0.0
      %4111 = vmatpush2.msra.mxu0 0.0
      %4112 = vmatprep.subr.mxu0 0.0
      %4113 = vmatpush2.msra.mxu0 0.0
      %4114 = vmatprep.subr.mxu0 0.0
      %4115 = vmatpush2.msra.mxu0 0.0
      %4116 = vmatprep.subr.mxu0 0.0
      %4117 = vmatpush2.msra.mxu0 0.0
      %4118 = vmatprep.subr.mxu0 0.0
      %4119 = vmatpush2.msra.mxu0 0.0
      %4120 = vmatprep.subr.mxu0 0.0
      %4121 = vmatpush2.msra.mxu0 0.0
      %4122 = vmatprep.subr.mxu0 0.0
      %4123 = vmatpush2.msra.mxu0 0.0
      %4124 = vmatprep.subr.mxu0 0.0
      %4125 = vmatpush2.msra.mxu0 0.0
      %4126 = vmatprep.subr.mxu0 0.0
      %4127 = vmatpush2.msra.mxu0 0.0
      %4128 = vmatprep.mubr.f32.mxu0 0.0
      %4129 = vmatmul.mubr.f32.gmra.mxu0 %v4063
      %v4130 = vpop.f32.mrf.mxu0
      %v4131 = vadd.f32 0.0, %v4130
      %v4132 = vpop.f32.mrf.mxu0
      %4133 = vdwg.mxu0
      %v4134 = vmul.f32 %v4131, 0.0078125
      %v4135 = vadd.f32 %v4134, 0.0001
      %v4136 = vrsqrt.pop %v4135
      %v4138 = vsel %vm1275, %v4136, 0
      %4140 = vmatprep.subr.mxu0 0.0
      %4141 = vmatpush1.msra.mxu0 0.0
      %4142 = vmatprep.subr.mxu0 0.0
      %4143 = vmatpush1.msra.mxu0 0.0
      %4144 = vmatprep.subr.mxu0 0.0
      %4145 = vmatpush1.msra.mxu0 0.0
      %4146 = vmatprep.subr.mxu0 0.0
      %4147 = vmatpush1.msra.mxu0 0.0
      %4148 = vmatprep.subr.mxu0 0.0
      %4149 = vmatpush1.msra.mxu0 0.0
      %4150 = vmatprep.subr.mxu0 0.0
      %4151 = vmatpush1.msra.mxu0 0.0
      %4152 = vmatprep.subr.mxu0 0.0
      %4153 = vmatpush1.msra.mxu0 0.0
      %4154 = vmatprep.subr.mxu0 0.0
      %4155 = vmatpush1.msra.mxu0 0.0
      %4156 = vmatprep.subr.mxu0 0.0
      %4157 = vmatpush1.msra.mxu0 0.0
      %4158 = vmatprep.subr.mxu0 0.0
      %4159 = vmatpush1.msra.mxu0 0.0
      %4160 = vmatprep.subr.mxu0 0.0
      %4161 = vmatpush1.msra.mxu0 0.0
      %4162 = vmatprep.subr.mxu0 0.0
      %4163 = vmatpush1.msra.mxu0 0.0
      %4164 = vmatprep.subr.mxu0 0.0
      %4165 = vmatpush1.msra.mxu0 0.0
      %4166 = vmatprep.subr.mxu0 0.0
      %4167 = vmatpush1.msra.mxu0 0.0
      %4168 = vmatprep.subr.mxu0 0.0
      %4169 = vmatpush1.msra.mxu0 0.0
      %4170 = vmatprep.subr.mxu0 0.0
      %4171 = vmatpush1.msra.mxu0 %v3980
      %4172 = vmatprep.subr.mxu0 0.0
      %4173 = vmatpush2.msra.mxu0 0.0
      %4174 = vmatprep.subr.mxu0 0.0
      %4175 = vmatpush2.msra.mxu0 0.0
      %4176 = vmatprep.subr.mxu0 0.0
      %4177 = vmatpush2.msra.mxu0 0.0
      %4178 = vmatprep.subr.mxu0 0.0
      %4179 = vmatpush2.msra.mxu0 0.0
      %4180 = vmatprep.subr.mxu0 0.0
      %4181 = vmatpush2.msra.mxu0 0.0
      %4182 = vmatprep.subr.mxu0 0.0
      %4183 = vmatpush2.msra.mxu0 0.0
      %4184 = vmatprep.subr.mxu0 0.0
      %4185 = vmatpush2.msra.mxu0 0.0
      %4186 = vmatprep.subr.mxu0 0.0
      %4187 = vmatpush2.msra.mxu0 0.0
      %4188 = vmatprep.subr.mxu0 0.0
      %4189 = vmatpush2.msra.mxu0 0.0
      %4190 = vmatprep.subr.mxu0 0.0
      %4191 = vmatpush2.msra.mxu0 0.0
      %4192 = vmatprep.subr.mxu0 0.0
      %4193 = vmatpush2.msra.mxu0 0.0
      %4194 = vmatprep.subr.mxu0 0.0
      %4195 = vmatpush2.msra.mxu0 0.0
      %4196 = vmatprep.subr.mxu0 0.0
      %4197 = vmatpush2.msra.mxu0 0.0
      %4198 = vmatprep.subr.mxu0 0.0
      %4199 = vmatpush2.msra.mxu0 0.0
      %4200 = vmatprep.subr.mxu0 0.0
      %4201 = vmatpush2.msra.mxu0 0.0
      %4202 = vmatprep.subr.mxu0 0.0
      %4203 = vmatpush2.msra.mxu0 0.0
      %4204 = vmatprep.mubr.f32.mxu0 0.0
      %4205 = vmatmul.mubr.f32.gmra.mxu0 %v4138
      %v4206 = vpop.f32.mrf.mxu0
      %v4207 = vadd.f32 0.0, %v4206
      %v4208 = vpop.f32.mrf.mxu0
      %4209 = vdwg.mxu0
      %v4210 = vlaneseq
      %v4211 = vshrl.u32 %v4210, 7
      %v4212 = vsub.s32 0, %v4211
      %v4213 = vrot.slane %v4207, %v4212
      %v4214 = vmul.f32 %v4056, %v4213
      %4216 = vset.pattern.permute.xlu0 0
      %4217 = vperm.xlu0 %4216, %v3879
      %v4218 = vpop.permute.xlu0 %4217
      %v4220 = vmul.f32 %v4214, %v4218
      %4222 = vset.pattern.permute.xlu0 0
      %4223 = vperm.xlu0 %4222, %v3881
      %v4224 = vpop.permute.xlu0 %4223
      %v4226 = vadd.f32 %v4220, %v4224
      %v4227 = vadd.f32 %v3714, %v4226
      %4228 = vrot.lane.b32.xlu0 %v4227, 5
      %v4229 = vpop.permute.xlu0 %4228
      %v4230 = vld [vmem:[%s33] sm:$0x1]
      %v4232 = vlaneseq
      %v4233 = vshrl.u32 %v4232, 7
      %v4234 = vsub.s32 0, %v4233
      %v4235 = vrot.slane %v4230, %v4234
      %v4237 = vmul.f32 %v4229, %v4235
      %4238 = vst [vmem:[#allocation9] sm:$0xff] %v4237
      %4239 = vrot.lane.b32.xlu0 %v4227, 4
      %v4240 = vpop.permute.xlu0 %4239
      %v4241 = vld [vmem:[%s3201] sm:$0x1]
      %v4243 = vlaneseq
      %v4244 = vshrl.u32 %v4243, 7
      %v4245 = vsub.s32 0, %v4244
      %v4246 = vrot.slane %v4241, %v4245
      %v4248 = vmul.f32 %v4240, %v4246
      %4249 = vst [vmem:[#allocation9 + $0x8] sm:$0xff] %v4248
      %4250 = vrot.lane.b32.xlu0 %v4227, 3
      %v4251 = vpop.permute.xlu0 %4250
      %v4252 = vld [vmem:[%s3213] sm:$0x1]
      %v4254 = vlaneseq
      %v4255 = vshrl.u32 %v4254, 7
      %v4256 = vsub.s32 0, %v4255
      %v4257 = vrot.slane %v4252, %v4256
      %v4259 = vmul.f32 %v4251, %v4257
      %4260 = vst [vmem:[#allocation9 + $0x10] sm:$0xff] %v4259
      %4261 = vrot.lane.b32.xlu0 %v4227, 1
      %v4262 = vpop.permute.xlu0 %4261
      %v4263 = vld [vmem:[%s3225] sm:$0x1]
      %v4265 = vlaneseq
      %v4266 = vshrl.u32 %v4265, 7
      %v4267 = vsub.s32 0, %v4266
      %v4268 = vrot.slane %v4263, %v4267
      %v4270 = vmul.f32 %v4262, %v4268
      %4271 = vst [vmem:[#allocation9 + $0x18] sm:$0xff] %v4270
      %4272 = vst [vmem:[#allocation9 + $0x20] sm:$0xff] %v4227
      %4273 = vrot.lane.b32.xlu0 %v4227, 127
      %v4274 = vpop.permute.xlu0 %4273
      %v4275 = vld [vmem:[%s3238] sm:$0x1]
      %v4277 = vlaneseq
      %v4278 = vshrl.u32 %v4277, 7
      %v4279 = vsub.s32 0, %v4278
      %v4280 = vrot.slane %v4275, %v4279
      %v4282 = vmul.f32 %v4274, %v4280
      %4283 = vst [vmem:[#allocation9 + $0x28] sm:$0xff] %v4282
      %4284 = vrot.lane.b32.xlu0 %v4227, 125
      %v4285 = vpop.permute.xlu0 %4284
      %v4286 = vld [vmem:[%s3250] sm:$0x1]
      %v4288 = vlaneseq
      %v4289 = vshrl.u32 %v4288, 7
      %v4290 = vsub.s32 0, %v4289
      %v4291 = vrot.slane %v4286, %v4290
      %v4293 = vmul.f32 %v4285, %v4291
      %4294 = vst [vmem:[#allocation9 + $0x30] sm:$0xff] %v4293
      %4295 = vrot.lane.b32.xlu0 %v4227, 124
      %v4296 = vpop.permute.xlu0 %4295
      %v4297 = vld [vmem:[%s3262] sm:$0x1]
      %v4299 = vlaneseq
      %v4300 = vshrl.u32 %v4299, 7
      %v4301 = vsub.s32 0, %v4300
      %v4302 = vrot.slane %v4297, %v4301
      %v4304 = vmul.f32 %v4296, %v4302
      %4305 = vst [vmem:[#allocation9 + $0x38] sm:$0xff] %v4304
      %4306 = vrot.lane.b32.xlu0 %v4227, 123
      %v4307 = vpop.permute.xlu0 %4306
      %v4308 = vld [vmem:[%s3274] sm:$0x1]
      %v4310 = vlaneseq
      %v4311 = vshrl.u32 %v4310, 7
      %v4312 = vsub.s32 0, %v4311
      %v4313 = vrot.slane %v4308, %v4312
      %v4315 = vmul.f32 %v4307, %v4313
      %4316 = vst [vmem:[#allocation9 + $0x40] sm:$0xff] %v4315
      %v4317 = vld [vmem:[%s13] sm:$0xff]
      %v4318 = vld [vmem:[%s13 + $0x8] sm:$0xff]
      %v4319 = vld [vmem:[#allocation9] sm:$0xff]
      %v4320 = vld [vmem:[#allocation9 + $0x8] sm:$0xff]
      %v4321 = vld [vmem:[#allocation9 + $0x10] sm:$0xff]
      %v4322 = vld [vmem:[#allocation9 + $0x18] sm:$0xff]
      %v4323 = vld [vmem:[#allocation9 + $0x20] sm:$0xff]
      %v4324 = vld [vmem:[#allocation9 + $0x28] sm:$0xff]
      %v4325 = vld [vmem:[#allocation9 + $0x30] sm:$0xff]
      %v4326 = vld [vmem:[#allocation9 + $0x38] sm:$0xff]
      %v4327 = vld [vmem:[#allocation9 + $0x40] sm:$0xff]
      %v4329 = vsel %vm1104, %v4317, 0
      %v4332 = vsel %vm1104, %v4318, 0
      %4334 = vmatprep.subr.mxu0 0.0
      %4335 = vmatpush1.msra.mxu0 0.0
      %4336 = vmatprep.subr.mxu0 0.0
      %4337 = vmatpush1.msra.mxu0 0.0
      %4338 = vmatprep.subr.mxu0 0.0
      %4339 = vmatpush1.msra.mxu0 0.0
      %4340 = vmatprep.subr.mxu0 0.0
      %4341 = vmatpush1.msra.mxu0 0.0
      %4342 = vmatprep.subr.mxu0 0.0
      %4343 = vmatpush1.msra.mxu0 0.0
      %4344 = vmatprep.subr.mxu0 0.0
      %4345 = vmatpush1.msra.mxu0 0.0
      %4346 = vmatprep.subr.mxu0 0.0
      %4347 = vmatpush1.msra.mxu0 0.0
      %4348 = vmatprep.subr.mxu0 0.0
      %4349 = vmatpush1.msra.mxu0 %v4327
      %4350 = vmatprep.subr.mxu0 0.0
      %4351 = vmatpush1.msra.mxu0 %v4326
      %4352 = vmatprep.subr.mxu0 0.0
      %4353 = vmatpush1.msra.mxu0 %v4325
      %4354 = vmatprep.subr.mxu0 0.0
      %4355 = vmatpush1.msra.mxu0 %v4324
      %4356 = vmatprep.subr.mxu0 0.0
      %4357 = vmatpush1.msra.mxu0 %v4323
      %4358 = vmatprep.subr.mxu0 0.0
      %4359 = vmatpush1.msra.mxu0 %v4322
      %4360 = vmatprep.subr.mxu0 0.0
      %4361 = vmatpush1.msra.mxu0 %v4321
      %4362 = vmatprep.subr.mxu0 0.0
      %4363 = vmatpush1.msra.mxu0 %v4320
      %4364 = vmatprep.subr.mxu0 0.0
      %4365 = vmatpush1.msra.mxu0 %v4319
      %4366 = vmatprep.subr.mxu0 0.0
      %4367 = vmatpush2.msra.mxu0 0.0
      %4368 = vmatprep.subr.mxu0 0.0
      %4369 = vmatpush2.msra.mxu0 0.0
      %4370 = vmatprep.subr.mxu0 0.0
      %4371 = vmatpush2.msra.mxu0 0.0
      %4372 = vmatprep.subr.mxu0 0.0
      %4373 = vmatpush2.msra.mxu0 0.0
      %4374 = vmatprep.subr.mxu0 0.0
      %4375 = vmatpush2.msra.mxu0 0.0
      %4376 = vmatprep.subr.mxu0 0.0
      %4377 = vmatpush2.msra.mxu0 0.0
      %4378 = vmatprep.subr.mxu0 0.0
      %4379 = vmatpush2.msra.mxu0 0.0
      %4380 = vmatprep.subr.mxu0 0.0
      %4381 = vmatpush2.msra.mxu0 0.0
      %4382 = vmatprep.subr.mxu0 0.0
      %4383 = vmatpush2.msra.mxu0 0.0
      %4384 = vmatprep.subr.mxu0 0.0
      %4385 = vmatpush2.msra.mxu0 0.0
      %4386 = vmatprep.subr.mxu0 0.0
      %4387 = vmatpush2.msra.mxu0 0.0
      %4388 = vmatprep.subr.mxu0 0.0
      %4389 = vmatpush2.msra.mxu0 0.0
      %4390 = vmatprep.subr.mxu0 0.0
      %4391 = vmatpush2.msra.mxu0 0.0
      %4392 = vmatprep.subr.mxu0 0.0
      %4393 = vmatpush2.msra.mxu0 0.0
      %4394 = vmatprep.subr.mxu0 0.0
      %4395 = vmatpush2.msra.mxu0 0.0
      %4396 = vmatprep.subr.mxu0 0.0
      %4397 = vmatpush2.msra.mxu0 0.0
      %4398 = vmatprep.mubr.f32.mxu0 0.0
      %4399 = vmatmul.mubr.f32.gmra.mxu0 %v4329
      %v4400 = vpop.f32.mrf.mxu0
      %v4401 = vadd.f32 0.0, %v4400
      %v4402 = vpop.f32.mrf.mxu0
      %4403 = vmatprep.mubr.f32.mxu0 0.0
      %4404 = vmatmul.mubr.f32.gmra.mxu0 %v4332
      %v4405 = vpop.f32.mrf.mxu0
      %v4406 = vadd.f32 0.0, %v4405
      %v4407 = vpop.f32.mrf.mxu0
      %4408 = vdwg.mxu0
      %v4409 = vld [vmem:[%s51] sm:$0xff]
      %v4410 = vld [vmem:[%s51 + $0x8] sm:$0xff]
      %v4411 = vld [vmem:[%s51 + $0x10] sm:$0xff]
      %v4412 = vld [vmem:[%s51 + $0x18] sm:$0xff]
      %v4413 = vld [vmem:[%s51 + $0x20] sm:$0xff]
      %v4414 = vld [vmem:[%s51 + $0x28] sm:$0xff]
      %v4415 = vld [vmem:[%s51 + $0x30] sm:$0xff]
      %v4416 = vld [vmem:[%s51 + $0x38] sm:$0xff]
      %v4417 = vld [vmem:[%s51 + $0x40] sm:$0xff]
      %v4418 = vld [vmem:[%s51 + $0x48] sm:$0xff]
      %v4419 = vld [vmem:[%s51 + $0x50] sm:$0xff]
      %v4420 = vld [vmem:[%s51 + $0x58] sm:$0xff]
      %v4421 = vld [vmem:[%s51 + $0x60] sm:$0xff]
      %v4422 = vld [vmem:[%s51 + $0x68] sm:$0xff]
      %v4423 = vld [vmem:[%s51 + $0x70] sm:$0xff]
      %v4424 = vld [vmem:[%s51 + $0x78] sm:$0xff]
      %4425 = vmatprep.subr.mxu0 0.0
      %4426 = vmatpush1.msra.mxu0 %v4424
      %4427 = vmatprep.subr.mxu0 0.0
      %4428 = vmatpush1.msra.mxu0 %v4423
      %4429 = vmatprep.subr.mxu0 0.0
      %4430 = vmatpush1.msra.mxu0 %v4422
      %4431 = vmatprep.subr.mxu0 0.0
      %4432 = vmatpush1.msra.mxu0 %v4421
      %4433 = vmatprep.subr.mxu0 0.0
      %4434 = vmatpush1.msra.mxu0 %v4420
      %4435 = vmatprep.subr.mxu0 0.0
      %4436 = vmatpush1.msra.mxu0 %v4419
      %4437 = vmatprep.subr.mxu0 0.0
      %4438 = vmatpush1.msra.mxu0 %v4418
      %4439 = vmatprep.subr.mxu0 0.0
      %4440 = vmatpush1.msra.mxu0 %v4417
      %4441 = vmatprep.subr.mxu0 0.0
      %4442 = vmatpush1.msra.mxu0 %v4416
      %4443 = vmatprep.subr.mxu0 0.0
      %4444 = vmatpush1.msra.mxu0 %v4415
      %4445 = vmatprep.subr.mxu0 0.0
      %4446 = vmatpush1.msra.mxu0 %v4414
      %4447 = vmatprep.subr.mxu0 0.0
      %4448 = vmatpush1.msra.mxu0 %v4413
      %4449 = vmatprep.subr.mxu0 0.0
      %4450 = vmatpush1.msra.mxu0 %v4412
      %4451 = vmatprep.subr.mxu0 0.0
      %4452 = vmatpush1.msra.mxu0 %v4411
      %4453 = vmatprep.subr.mxu0 0.0
      %4454 = vmatpush1.msra.mxu0 %v4410
      %4455 = vmatprep.subr.mxu0 0.0
      %4456 = vmatpush1.msra.mxu0 %v4409
      %4457 = vmatprep.subr.mxu0 0.0
      %4458 = vmatpush2.msra.mxu0 0.0
      %4459 = vmatprep.subr.mxu0 0.0
      %4460 = vmatpush2.msra.mxu0 0.0
      %4461 = vmatprep.subr.mxu0 0.0
      %4462 = vmatpush2.msra.mxu0 0.0
      %4463 = vmatprep.subr.mxu0 0.0
      %4464 = vmatpush2.msra.mxu0 0.0
      %4465 = vmatprep.subr.mxu0 0.0
      %4466 = vmatpush2.msra.mxu0 0.0
      %4467 = vmatprep.subr.mxu0 0.0
      %4468 = vmatpush2.msra.mxu0 0.0
      %4469 = vmatprep.subr.mxu0 0.0
      %4470 = vmatpush2.msra.mxu0 0.0
      %4471 = vmatprep.subr.mxu0 0.0
      %4472 = vmatpush2.msra.mxu0 0.0
      %4473 = vmatprep.subr.mxu0 0.0
      %4474 = vmatpush2.msra.mxu0 0.0
      %4475 = vmatprep.subr.mxu0 0.0
      %4476 = vmatpush2.msra.mxu0 0.0
      %4477 = vmatprep.subr.mxu0 0.0
      %4478 = vmatpush2.msra.mxu0 0.0
      %4479 = vmatprep.subr.mxu0 0.0
      %4480 = vmatpush2.msra.mxu0 0.0
      %4481 = vmatprep.subr.mxu0 0.0
      %4482 = vmatpush2.msra.mxu0 0.0
      %4483 = vmatprep.subr.mxu0 0.0
      %4484 = vmatpush2.msra.mxu0 0.0
      %4485 = vmatprep.subr.mxu0 0.0
      %4486 = vmatpush2.msra.mxu0 0.0
      %4487 = vmatprep.subr.mxu0 0.0
      %4488 = vmatpush2.msra.mxu0 0.0
      %4489 = vmatprep.mubr.f32.mxu0 0.0
      %4490 = vmatmul.mubr.f32.gmra.mxu0 %v4401
      %v4491 = vpop.f32.mrf.mxu0
      %v4492 = vadd.f32 0.0, %v4491
      %v4493 = vpop.f32.mrf.mxu0
      %4494 = vmatprep.mubr.f32.mxu0 0.0
      %4495 = vmatmul.mubr.f32.gmra.mxu0 %v4406
      %v4496 = vpop.f32.mrf.mxu0
      %v4497 = vadd.f32 0.0, %v4496
      %v4498 = vpop.f32.mrf.mxu0
      %4499 = vdwg.mxu0
      %s4500 = smul.u32 %s78, 16
      %s4501 = scalar_lea.vmem %s27, %s4500
      %v4502 = vld [vmem:[%s4501] sm:$0xff]
      %v4503 = vld [vmem:[%s4501 + $0x8] sm:$0xff]
      %v4504 = vld [vmem:[%s41] sm:$0x3]
      %v4505 = vld [vmem:[%s47] sm:$0xff]
      %v4506 = vld [vmem:[%s47 + $0x8] sm:$0xff]
      %v4507 = vld [vmem:[%s47 + $0x10] sm:$0xff]
      %v4508 = vld [vmem:[%s47 + $0x18] sm:$0xff]
      %v4509 = vld [vmem:[%s47 + $0x20] sm:$0xff]
      %v4510 = vld [vmem:[%s47 + $0x28] sm:$0xff]
      %v4511 = vld [vmem:[%s47 + $0x30] sm:$0xff]
      %v4512 = vld [vmem:[%s47 + $0x38] sm:$0xff]
      %v4513 = vld [vmem:[%s47 + $0x40] sm:$0xff]
      %v4514 = vld [vmem:[%s47 + $0x48] sm:$0xff]
      %v4515 = vld [vmem:[%s47 + $0x50] sm:$0xff]
      %v4516 = vld [vmem:[%s47 + $0x58] sm:$0xff]
      %v4517 = vld [vmem:[%s47 + $0x60] sm:$0xff]
      %v4518 = vld [vmem:[%s47 + $0x68] sm:$0xff]
      %v4519 = vld [vmem:[%s47 + $0x70] sm:$0xff]
      %v4520 = vld [vmem:[%s47 + $0x78] sm:$0xff]
      %v4521 = vadd.f32 %v4492, %v4497
      %v4522 = vrot.slane %v4521, 4
      %v4523 = vadd.f32 %v4521, %v4522
      %v4524 = vrot.slane %v4523, 2
      %v4525 = vadd.f32 %v4523, %v4524
      %v4526 = vrot.slane %v4525, 1
      %v4527 = vadd.f32 %v4525, %v4526
      %4528 = vmatprep.subr.mxu0 0.0
      %4529 = vmatpush1.msra.mxu0 %v4520
      %4530 = vmatprep.subr.mxu0 0.0
      %4531 = vmatpush1.msra.mxu0 %v4519
      %4532 = vmatprep.subr.mxu0 0.0
      %4533 = vmatpush1.msra.mxu0 %v4518
      %4534 = vmatprep.subr.mxu0 0.0
      %4535 = vmatpush1.msra.mxu0 %v4517
      %4536 = vmatprep.subr.mxu0 0.0
      %4537 = vmatpush1.msra.mxu0 %v4516
      %4538 = vmatprep.subr.mxu0 0.0
      %4539 = vmatpush1.msra.mxu0 %v4515
      %4540 = vmatprep.subr.mxu0 0.0
      %4541 = vmatpush1.msra.mxu0 %v4514
      %4542 = vmatprep.subr.mxu0 0.0
      %4543 = vmatpush1.msra.mxu0 %v4513
      %4544 = vmatprep.subr.mxu0 0.0
      %4545 = vmatpush1.msra.mxu0 %v4512
      %4546 = vmatprep.subr.mxu0 0.0
      %4547 = vmatpush1.msra.mxu0 %v4511
      %4548 = vmatprep.subr.mxu0 0.0
      %4549 = vmatpush1.msra.mxu0 %v4510
      %4550 = vmatprep.subr.mxu0 0.0
      %4551 = vmatpush1.msra.mxu0 %v4509
      %4552 = vmatprep.subr.mxu0 0.0
      %4553 = vmatpush1.msra.mxu0 %v4508
      %4554 = vmatprep.subr.mxu0 0.0
      %4555 = vmatpush1.msra.mxu0 %v4507
      %4556 = vmatprep.subr.mxu0 0.0
      %4557 = vmatpush1.msra.mxu0 %v4506
      %4558 = vmatprep.subr.mxu0 0.0
      %4559 = vmatpush1.msra.mxu0 %v4505
      %4560 = vmatprep.subr.mxu0 0.0
      %4561 = vmatpush2.msra.mxu0 0.0
      %4562 = vmatprep.subr.mxu0 0.0
      %4563 = vmatpush2.msra.mxu0 0.0
      %4564 = vmatprep.subr.mxu0 0.0
      %4565 = vmatpush2.msra.mxu0 0.0
      %4566 = vmatprep.subr.mxu0 0.0
      %4567 = vmatpush2.msra.mxu0 0.0
      %4568 = vmatprep.subr.mxu0 0.0
      %4569 = vmatpush2.msra.mxu0 0.0
      %4570 = vmatprep.subr.mxu0 0.0
      %4571 = vmatpush2.msra.mxu0 0.0
      %4572 = vmatprep.subr.mxu0 0.0
      %4573 = vmatpush2.msra.mxu0 0.0
      %4574 = vmatprep.subr.mxu0 0.0
      %4575 = vmatpush2.msra.mxu0 0.0
      %4576 = vmatprep.subr.mxu0 0.0
      %4577 = vmatpush2.msra.mxu0 0.0
      %4578 = vmatprep.subr.mxu0 0.0
      %4579 = vmatpush2.msra.mxu0 0.0
      %4580 = vmatprep.subr.mxu0 0.0
      %4581 = vmatpush2.msra.mxu0 0.0
      %4582 = vmatprep.subr.mxu0 0.0
      %4583 = vmatpush2.msra.mxu0 0.0
      %4584 = vmatprep.subr.mxu0 0.0
      %4585 = vmatpush2.msra.mxu0 0.0
      %4586 = vmatprep.subr.mxu0 0.0
      %4587 = vmatpush2.msra.mxu0 0.0
      %4588 = vmatprep.subr.mxu0 0.0
      %4589 = vmatpush2.msra.mxu0 0.0
      %4590 = vmatprep.subr.mxu0 0.0
      %4591 = vmatpush2.msra.mxu0 0.0
      %4592 = vmatprep.mubr.f32.mxu0 0.0
      %4593 = vmatmul.mubr.f32.gmra.mxu0 %v4527
      %v4594 = vpop.f32.mrf.mxu0
      %v4595 = vadd.f32 0.0, %v4594
      %v4596 = vpop.f32.mrf.mxu0
      %4597 = vdwg.mxu0
      %v4598 = vmul.f32 %v4595, 0.015625
      %v4600 = vsel %vm1275, %v4598, 0
      %v4603 = vsel %vm1279, %v4504, 0
      %4605 = vmatprep.subr.mxu0 0.0
      %4606 = vmatpush1.msra.mxu0 0.0
      %4607 = vmatprep.subr.mxu0 0.0
      %4608 = vmatpush1.msra.mxu0 0.0
      %4609 = vmatprep.subr.mxu0 0.0
      %4610 = vmatpush1.msra.mxu0 0.0
      %4611 = vmatprep.subr.mxu0 0.0
      %4612 = vmatpush1.msra.mxu0 0.0
      %4613 = vmatprep.subr.mxu0 0.0
      %4614 = vmatpush1.msra.mxu0 0.0
      %4615 = vmatprep.subr.mxu0 0.0
      %4616 = vmatpush1.msra.mxu0 0.0
      %4617 = vmatprep.subr.mxu0 0.0
      %4618 = vmatpush1.msra.mxu0 0.0
      %4619 = vmatprep.subr.mxu0 0.0
      %4620 = vmatpush1.msra.mxu0 0.0
      %4621 = vmatprep.subr.mxu0 0.0
      %4622 = vmatpush1.msra.mxu0 0.0
      %4623 = vmatprep.subr.mxu0 0.0
      %4624 = vmatpush1.msra.mxu0 0.0
      %4625 = vmatprep.subr.mxu0 0.0
      %4626 = vmatpush1.msra.mxu0 0.0
      %4627 = vmatprep.subr.mxu0 0.0
      %4628 = vmatpush1.msra.mxu0 0.0
      %4629 = vmatprep.subr.mxu0 0.0
      %4630 = vmatpush1.msra.mxu0 0.0
      %4631 = vmatprep.subr.mxu0 0.0
      %4632 = vmatpush1.msra.mxu0 0.0
      %4633 = vmatprep.subr.mxu0 0.0
      %4634 = vmatpush1.msra.mxu0 0.0
      %4635 = vmatprep.subr.mxu0 0.0
      %4636 = vmatpush1.msra.mxu0 %v4603
      %4637 = vmatprep.subr.mxu0 0.0
      %4638 = vmatpush2.msra.mxu0 0.0
      %4639 = vmatprep.subr.mxu0 0.0
      %4640 = vmatpush2.msra.mxu0 0.0
      %4641 = vmatprep.subr.mxu0 0.0
      %4642 = vmatpush2.msra.mxu0 0.0
      %4643 = vmatprep.subr.mxu0 0.0
      %4644 = vmatpush2.msra.mxu0 0.0
      %4645 = vmatprep.subr.mxu0 0.0
      %4646 = vmatpush2.msra.mxu0 0.0
      %4647 = vmatprep.subr.mxu0 0.0
      %4648 = vmatpush2.msra.mxu0 0.0
      %4649 = vmatprep.subr.mxu0 0.0
      %4650 = vmatpush2.msra.mxu0 0.0
      %4651 = vmatprep.subr.mxu0 0.0
      %4652 = vmatpush2.msra.mxu0 0.0
      %4653 = vmatprep.subr.mxu0 0.0
      %4654 = vmatpush2.msra.mxu0 0.0
      %4655 = vmatprep.subr.mxu0 0.0
      %4656 = vmatpush2.msra.mxu0 0.0
      %4657 = vmatprep.subr.mxu0 0.0
      %4658 = vmatpush2.msra.mxu0 0.0
      %4659 = vmatprep.subr.mxu0 0.0
      %4660 = vmatpush2.msra.mxu0 0.0
      %4661 = vmatprep.subr.mxu0 0.0
      %4662 = vmatpush2.msra.mxu0 0.0
      %4663 = vmatprep.subr.mxu0 0.0
      %4664 = vmatpush2.msra.mxu0 0.0
      %4665 = vmatprep.subr.mxu0 0.0
      %4666 = vmatpush2.msra.mxu0 0.0
      %4667 = vmatprep.subr.mxu0 0.0
      %4668 = vmatpush2.msra.mxu0 0.0
      %4669 = vmatprep.mubr.f32.mxu0 0.0
      %4670 = vmatmul.mubr.f32.gmra.mxu0 %v4600
      %v4671 = vpop.f32.mrf.mxu0
      %v4672 = vadd.f32 0.0, %v4671
      %v4673 = vpop.f32.mrf.mxu0
      %4674 = vdwg.mxu0
      %v4675 = vlaneseq
      %v4676 = vshrl.u32 %v4675, 7
      %v4677 = vsub.s32 0, %v4676
      %v4678 = vrot.slane %v4672, %v4677
      %v4679 = vsub.f32 %v4492, %v4678
      %v4680 = vsub.f32 %v4497, %v4678
      %v4681 = vmul.f32 %v4679, %v4679
      %v4682 = vmul.f32 %v4680, %v4680
      %v4683 = vadd.f32 %v4681, %v4682
      %v4684 = vrot.slane %v4683, 4
      %v4685 = vadd.f32 %v4683, %v4684
      %v4686 = vrot.slane %v4685, 2
      %v4687 = vadd.f32 %v4685, %v4686
      %v4688 = vrot.slane %v4687, 1
      %v4689 = vadd.f32 %v4687, %v4688
      %4690 = vmatprep.subr.mxu0 0.0
      %4691 = vmatpush1.msra.mxu0 %v4520
      %4692 = vmatprep.subr.mxu0 0.0
      %4693 = vmatpush1.msra.mxu0 %v4519
      %4694 = vmatprep.subr.mxu0 0.0
      %4695 = vmatpush1.msra.mxu0 %v4518
      %4696 = vmatprep.subr.mxu0 0.0
      %4697 = vmatpush1.msra.mxu0 %v4517
      %4698 = vmatprep.subr.mxu0 0.0
      %4699 = vmatpush1.msra.mxu0 %v4516
      %4700 = vmatprep.subr.mxu0 0.0
      %4701 = vmatpush1.msra.mxu0 %v4515
      %4702 = vmatprep.subr.mxu0 0.0
      %4703 = vmatpush1.msra.mxu0 %v4514
      %4704 = vmatprep.subr.mxu0 0.0
      %4705 = vmatpush1.msra.mxu0 %v4513
      %4706 = vmatprep.subr.mxu0 0.0
      %4707 = vmatpush1.msra.mxu0 %v4512
      %4708 = vmatprep.subr.mxu0 0.0
      %4709 = vmatpush1.msra.mxu0 %v4511
      %4710 = vmatprep.subr.mxu0 0.0
      %4711 = vmatpush1.msra.mxu0 %v4510
      %4712 = vmatprep.subr.mxu0 0.0
      %4713 = vmatpush1.msra.mxu0 %v4509
      %4714 = vmatprep.subr.mxu0 0.0
      %4715 = vmatpush1.msra.mxu0 %v4508
      %4716 = vmatprep.subr.mxu0 0.0
      %4717 = vmatpush1.msra.mxu0 %v4507
      %4718 = vmatprep.subr.mxu0 0.0
      %4719 = vmatpush1.msra.mxu0 %v4506
      %4720 = vmatprep.subr.mxu0 0.0
      %4721 = vmatpush1.msra.mxu0 %v4505
      %4722 = vmatprep.subr.mxu0 0.0
      %4723 = vmatpush2.msra.mxu0 0.0
      %4724 = vmatprep.subr.mxu0 0.0
      %4725 = vmatpush2.msra.mxu0 0.0
      %4726 = vmatprep.subr.mxu0 0.0
      %4727 = vmatpush2.msra.mxu0 0.0
      %4728 = vmatprep.subr.mxu0 0.0
      %4729 = vmatpush2.msra.mxu0 0.0
      %4730 = vmatprep.subr.mxu0 0.0
      %4731 = vmatpush2.msra.mxu0 0.0
      %4732 = vmatprep.subr.mxu0 0.0
      %4733 = vmatpush2.msra.mxu0 0.0
      %4734 = vmatprep.subr.mxu0 0.0
      %4735 = vmatpush2.msra.mxu0 0.0
      %4736 = vmatprep.subr.mxu0 0.0
      %4737 = vmatpush2.msra.mxu0 0.0
      %4738 = vmatprep.subr.mxu0 0.0
      %4739 = vmatpush2.msra.mxu0 0.0
      %4740 = vmatprep.subr.mxu0 0.0
      %4741 = vmatpush2.msra.mxu0 0.0
      %4742 = vmatprep.subr.mxu0 0.0
      %4743 = vmatpush2.msra.mxu0 0.0
      %4744 = vmatprep.subr.mxu0 0.0
      %4745 = vmatpush2.msra.mxu0 0.0
      %4746 = vmatprep.subr.mxu0 0.0
      %4747 = vmatpush2.msra.mxu0 0.0
      %4748 = vmatprep.subr.mxu0 0.0
      %4749 = vmatpush2.msra.mxu0 0.0
      %4750 = vmatprep.subr.mxu0 0.0
      %4751 = vmatpush2.msra.mxu0 0.0
      %4752 = vmatprep.subr.mxu0 0.0
      %4753 = vmatpush2.msra.mxu0 0.0
      %4754 = vmatprep.mubr.f32.mxu0 0.0
      %4755 = vmatmul.mubr.f32.gmra.mxu0 %v4689
      %v4756 = vpop.f32.mrf.mxu0
      %v4757 = vadd.f32 0.0, %v4756
      %v4758 = vpop.f32.mrf.mxu0
      %4759 = vdwg.mxu0
      %v4760 = vmul.f32 %v4757, 0.015625
      %v4761 = vadd.f32 %v4760, 0.0001
      %v4762 = vrsqrt.pop %v4761
      %v4764 = vsel %vm1275, %v4762, 0
      %4766 = vmatprep.subr.mxu0 0.0
      %4767 = vmatpush1.msra.mxu0 0.0
      %4768 = vmatprep.subr.mxu0 0.0
      %4769 = vmatpush1.msra.mxu0 0.0
      %4770 = vmatprep.subr.mxu0 0.0
      %4771 = vmatpush1.msra.mxu0 0.0
      %4772 = vmatprep.subr.mxu0 0.0
      %4773 = vmatpush1.msra.mxu0 0.0
      %4774 = vmatprep.subr.mxu0 0.0
      %4775 = vmatpush1.msra.mxu0 0.0
      %4776 = vmatprep.subr.mxu0 0.0
      %4777 = vmatpush1.msra.mxu0 0.0
      %4778 = vmatprep.subr.mxu0 0.0
      %4779 = vmatpush1.msra.mxu0 0.0
      %4780 = vmatprep.subr.mxu0 0.0
      %4781 = vmatpush1.msra.mxu0 0.0
      %4782 = vmatprep.subr.mxu0 0.0
      %4783 = vmatpush1.msra.mxu0 0.0
      %4784 = vmatprep.subr.mxu0 0.0
      %4785 = vmatpush1.msra.mxu0 0.0
      %4786 = vmatprep.subr.mxu0 0.0
      %4787 = vmatpush1.msra.mxu0 0.0
      %4788 = vmatprep.subr.mxu0 0.0
      %4789 = vmatpush1.msra.mxu0 0.0
      %4790 = vmatprep.subr.mxu0 0.0
      %4791 = vmatpush1.msra.mxu0 0.0
      %4792 = vmatprep.subr.mxu0 0.0
      %4793 = vmatpush1.msra.mxu0 0.0
      %4794 = vmatprep.subr.mxu0 0.0
      %4795 = vmatpush1.msra.mxu0 0.0
      %4796 = vmatprep.subr.mxu0 0.0
      %4797 = vmatpush1.msra.mxu0 %v4603
      %4798 = vmatprep.subr.mxu0 0.0
      %4799 = vmatpush2.msra.mxu0 0.0
      %4800 = vmatprep.subr.mxu0 0.0
      %4801 = vmatpush2.msra.mxu0 0.0
      %4802 = vmatprep.subr.mxu0 0.0
      %4803 = vmatpush2.msra.mxu0 0.0
      %4804 = vmatprep.subr.mxu0 0.0
      %4805 = vmatpush2.msra.mxu0 0.0
      %4806 = vmatprep.subr.mxu0 0.0
      %4807 = vmatpush2.msra.mxu0 0.0
      %4808 = vmatprep.subr.mxu0 0.0
      %4809 = vmatpush2.msra.mxu0 0.0
      %4810 = vmatprep.subr.mxu0 0.0
      %4811 = vmatpush2.msra.mxu0 0.0
      %4812 = vmatprep.subr.mxu0 0.0
      %4813 = vmatpush2.msra.mxu0 0.0
      %4814 = vmatprep.subr.mxu0 0.0
      %4815 = vmatpush2.msra.mxu0 0.0
      %4816 = vmatprep.subr.mxu0 0.0
      %4817 = vmatpush2.msra.mxu0 0.0
      %4818 = vmatprep.subr.mxu0 0.0
      %4819 = vmatpush2.msra.mxu0 0.0
      %4820 = vmatprep.subr.mxu0 0.0
      %4821 = vmatpush2.msra.mxu0 0.0
      %4822 = vmatprep.subr.mxu0 0.0
      %4823 = vmatpush2.msra.mxu0 0.0
      %4824 = vmatprep.subr.mxu0 0.0
      %4825 = vmatpush2.msra.mxu0 0.0
      %4826 = vmatprep.subr.mxu0 0.0
      %4827 = vmatpush2.msra.mxu0 0.0
      %4828 = vmatprep.subr.mxu0 0.0
      %4829 = vmatpush2.msra.mxu0 0.0
      %4830 = vmatprep.mubr.f32.mxu0 0.0
      %4831 = vmatmul.mubr.f32.gmra.mxu0 %v4764
      %v4832 = vpop.f32.mrf.mxu0
      %v4833 = vadd.f32 0.0, %v4832
      %v4834 = vpop.f32.mrf.mxu0
      %4835 = vdwg.mxu0
      %v4836 = vlaneseq
      %v4837 = vshrl.u32 %v4836, 7
      %v4838 = vsub.s32 0, %v4837
      %v4839 = vrot.slane %v4833, %v4838
      %v4840 = vmul.f32 %v4679, %v4839
      %v4841 = vmul.f32 %v4680, %v4839
      %4843 = vset.pattern.permute.xlu0 0
      %4844 = vperm.xlu0 %4843, %v4502
      %v4845 = vpop.permute.xlu0 %4844
      %4848 = vset.pattern.permute.xlu0 0
      %4849 = vperm.xlu0 %4848, %v4503
      %v4850 = vpop.permute.xlu0 %4849
      %v4852 = vmul.f32 %v4840, %v4845
      %v4853 = vmul.f32 %v4841, %v4850
      %v4854 = vld [vmem:[#allocation7] sm:$0xff]
      %v4855 = vld [vmem:[#allocation7 + $0x8] sm:$0xff]
      %v4856 = vmul.f32 %v4854, 0.95
      %v4857 = vmul.f32 %v4855, 0.95
      %v4858 = vadd.f32 %v4856, %v4852
      %v4859 = vadd.f32 %v4857, %v4853
      %v4860 = vsub.f32 %v4858, 1.0
      %v4861 = vsub.f32 %v4859, 1.0
      %vm4862 = vcmp.gt.f32.partialorder %v4860, 0.0
      %vm4863 = vcmp.gt.f32.partialorder %v4861, 0.0
      %v4864 = vsel %vm4862, 1, 0
      %v4865 = vsel %vm4863, 1, 0
      %v4866 = vcvt.s32.f32 %v4864
      %v4867 = vcvt.s32.f32 %v4865
      %v4868 = vsub.f32 %v4858, %v4866
      %v4869 = vsub.f32 %v4859, %v4867
      %4870 = vst [vmem:[#allocation7] sm:$0xff] %v4868
      %4871 = vst [vmem:[#allocation7 + $0x8] sm:$0xff] %v4869
      %4872 = vrot.lane.b32.xlu0 %v4866, 3
      %v4873 = vpop.permute.xlu0 %4872
      %4874 = vrot.lane.b32.xlu0 %v4867, 3
      %v4875 = vpop.permute.xlu0 %4874
      %v4876 = vld [vmem:[%s35] sm:$0x1]
      %v4878 = vlaneseq
      %v4879 = vshrl.u32 %v4878, 7
      %v4880 = vsub.s32 0, %v4879
      %v4881 = vrot.slane %v4876, %v4880
      %v4883 = vmul.f32 %v4873, %v4881
      %v4884 = vmul.f32 %v4875, %v4881
      %4885 = vst [vmem:[#allocation9] sm:$0xff] %v4883
      %4886 = vst [vmem:[#allocation9 + $0x8] sm:$0xff] %v4884
      %4887 = vrot.lane.b32.xlu0 %v4866, 2
      %v4888 = vpop.permute.xlu0 %4887
      %4889 = vrot.lane.b32.xlu0 %v4867, 2
      %v4890 = vpop.permute.xlu0 %4889
      %s4891 = scalar_lea.vmem %s35, 1
      %v4892 = vld [vmem:[%s4891] sm:$0x1]
      %v4894 = vlaneseq
      %v4895 = vshrl.u32 %v4894, 7
      %v4896 = vsub.s32 0, %v4895
      %v4897 = vrot.slane %v4892, %v4896
      %v4899 = vmul.f32 %v4888, %v4897
      %v4900 = vmul.f32 %v4890, %v4897
      %4901 = vst [vmem:[#allocation9 + $0x10] sm:$0xff] %v4899
      %4902 = vst [vmem:[#allocation9 + $0x18] sm:$0xff] %v4900
      %4903 = vrot.lane.b32.xlu0 %v4866, 1
      %v4904 = vpop.permute.xlu0 %4903
      %4905 = vrot.lane.b32.xlu0 %v4867, 1
      %v4906 = vpop.permute.xlu0 %4905
      %s4907 = scalar_lea.vmem %s35, 2
      %v4908 = vld [vmem:[%s4907] sm:$0x1]
      %v4910 = vlaneseq
      %v4911 = vshrl.u32 %v4910, 7
      %v4912 = vsub.s32 0, %v4911
      %v4913 = vrot.slane %v4908, %v4912
      %v4915 = vmul.f32 %v4904, %v4913
      %v4916 = vmul.f32 %v4906, %v4913
      %4917 = vst [vmem:[#allocation9 + $0x20] sm:$0xff] %v4915
      %4918 = vst [vmem:[#allocation9 + $0x28] sm:$0xff] %v4916
      %s4919 = scalar_lea.vmem %s35, 3
      %v4920 = vld [vmem:[%s4919] sm:$0x1]
      %v4922 = vlaneseq
      %v4923 = vshrl.u32 %v4922, 7
      %v4924 = vsub.s32 0, %v4923
      %v4925 = vrot.slane %v4920, %v4924
      %v4927 = vmul.f32 %v4904, %v4925
      %v4928 = vmul.f32 %v4906, %v4925
      %4929 = vst [vmem:[#allocation9 + $0x30] sm:$0xff] %v4927
      %4930 = vst [vmem:[#allocation9 + $0x38] sm:$0xff] %v4928
      %4931 = vst [vmem:[#allocation9 + $0x40] sm:$0xff] %v4866
      %4932 = vst [vmem:[#allocation9 + $0x48] sm:$0xff] %v4867
      %4933 = vrot.lane.b32.xlu0 %v4866, 127
      %v4934 = vpop.permute.xlu0 %4933
      %4935 = vrot.lane.b32.xlu0 %v4867, 127
      %v4936 = vpop.permute.xlu0 %4935
      %s4937 = scalar_lea.vmem %s35, 5
      %v4938 = vld [vmem:[%s4937] sm:$0x1]
      %v4940 = vlaneseq
      %v4941 = vshrl.u32 %v4940, 7
      %v4942 = vsub.s32 0, %v4941
      %v4943 = vrot.slane %v4938, %v4942
      %v4945 = vmul.f32 %v4934, %v4943
      %v4946 = vmul.f32 %v4936, %v4943
      %4947 = vst [vmem:[#allocation9 + $0x50] sm:$0xff] %v4945
      %4948 = vst [vmem:[#allocation9 + $0x58] sm:$0xff] %v4946
      %s4949 = scalar_lea.vmem %s35, 6
      %v4950 = vld [vmem:[%s4949] sm:$0x1]
      %v4952 = vlaneseq
      %v4953 = vshrl.u32 %v4952, 7
      %v4954 = vsub.s32 0, %v4953
      %v4955 = vrot.slane %v4950, %v4954
      %v4957 = vmul.f32 %v4934, %v4955
      %v4958 = vmul.f32 %v4936, %v4955
      %4959 = vst [vmem:[#allocation9 + $0x60] sm:$0xff] %v4957
      %4960 = vst [vmem:[#allocation9 + $0x68] sm:$0xff] %v4958
      %4961 = vrot.lane.b32.xlu0 %v4866, 126
      %v4962 = vpop.permute.xlu0 %4961
      %4963 = vrot.lane.b32.xlu0 %v4867, 126
      %v4964 = vpop.permute.xlu0 %4963
      %s4965 = scalar_lea.vmem %s35, 7
      %v4966 = vld [vmem:[%s4965] sm:$0x1]
      %v4968 = vlaneseq
      %v4969 = vshrl.u32 %v4968, 7
      %v4970 = vsub.s32 0, %v4969
      %v4971 = vrot.slane %v4966, %v4970
      %v4973 = vmul.f32 %v4962, %v4971
      %v4974 = vmul.f32 %v4964, %v4971
      %4975 = vst [vmem:[#allocation9 + $0x70] sm:$0xff] %v4973
      %4976 = vst [vmem:[#allocation9 + $0x78] sm:$0xff] %v4974
      %4977 = vrot.lane.b32.xlu0 %v4866, 125
      %v4978 = vpop.permute.xlu0 %4977
      %4979 = vrot.lane.b32.xlu0 %v4867, 125
      %v4980 = vpop.permute.xlu0 %4979
      %s4981 = scalar_lea.vmem %s35, 8
      %v4982 = vld [vmem:[%s4981] sm:$0x1]
      %v4984 = vlaneseq
      %v4985 = vshrl.u32 %v4984, 7
      %v4986 = vsub.s32 0, %v4985
      %v4987 = vrot.slane %v4982, %v4986
      %v4989 = vmul.f32 %v4978, %v4987
      %v4990 = vmul.f32 %v4980, %v4987
      %4991 = vst [vmem:[#allocation9 + $0x80] sm:$0xff] %v4989
      %4992 = vst [vmem:[#allocation9 + $0x88] sm:$0xff] %v4990
      %v4993 = vld [vmem:[%s15] sm:$0xff]
      %v4994 = vld [vmem:[%s15 + $0x8] sm:$0xff]
      %v4995 = vld [vmem:[%s15 + $0x10] sm:$0xff]
      %v4996 = vld [vmem:[%s15 + $0x18] sm:$0xff]
      %v4997 = vld [vmem:[#allocation9] sm:$0xff]
      %v4998 = vld [vmem:[#allocation9 + $0x8] sm:$0xff]
      %v4999 = vld [vmem:[#allocation9 + $0x10] sm:$0xff]
      %v5000 = vld [vmem:[#allocation9 + $0x18] sm:$0xff]
      %v5001 = vld [vmem:[#allocation9 + $0x20] sm:$0xff]
      %v5002 = vld [vmem:[#allocation9 + $0x28] sm:$0xff]
      %v5003 = vld [vmem:[#allocation9 + $0x30] sm:$0xff]
      %v5004 = vld [vmem:[#allocation9 + $0x38] sm:$0xff]
      %v5005 = vld [vmem:[#allocation9 + $0x40] sm:$0xff]
      %v5006 = vld [vmem:[#allocation9 + $0x48] sm:$0xff]
      %v5007 = vld [vmem:[#allocation9 + $0x50] sm:$0xff]
      %v5008 = vld [vmem:[#allocation9 + $0x58] sm:$0xff]
      %v5009 = vld [vmem:[#allocation9 + $0x60] sm:$0xff]
      %v5010 = vld [vmem:[#allocation9 + $0x68] sm:$0xff]
      %v5011 = vld [vmem:[#allocation9 + $0x70] sm:$0xff]
      %v5012 = vld [vmem:[#allocation9 + $0x78] sm:$0xff]
      %v5013 = vld [vmem:[#allocation9 + $0x80] sm:$0xff]
      %v5014 = vld [vmem:[#allocation9 + $0x88] sm:$0xff]
      %vm5015 = vcmask 130048
      %v5017 = vsel %vm5015, %v4994, 0
      %v5020 = vsel %vm5015, %v4996, 0
      %5022 = vmatprep.subr.mxu0 0.0
      %5023 = vmatpush1.msra.mxu0 %v5012
      %5024 = vmatprep.subr.mxu0 0.0
      %5025 = vmatpush1.msra.mxu0 %v5011
      %5026 = vmatprep.subr.mxu0 0.0
      %5027 = vmatpush1.msra.mxu0 %v5010
      %5028 = vmatprep.subr.mxu0 0.0
      %5029 = vmatpush1.msra.mxu0 %v5009
      %5030 = vmatprep.subr.mxu0 0.0
      %5031 = vmatpush1.msra.mxu0 %v5008
      %5032 = vmatprep.subr.mxu0 0.0
      %5033 = vmatpush1.msra.mxu0 %v5007
      %5034 = vmatprep.subr.mxu0 0.0
      %5035 = vmatpush1.msra.mxu0 %v5006
      %5036 = vmatprep.subr.mxu0 0.0
      %5037 = vmatpush1.msra.mxu0 %v5005
      %5038 = vmatprep.subr.mxu0 0.0
      %5039 = vmatpush1.msra.mxu0 %v5004
      %5040 = vmatprep.subr.mxu0 0.0
      %5041 = vmatpush1.msra.mxu0 %v5003
      %5042 = vmatprep.subr.mxu0 0.0
      %5043 = vmatpush1.msra.mxu0 %v5002
      %5044 = vmatprep.subr.mxu0 0.0
      %5045 = vmatpush1.msra.mxu0 %v5001
      %5046 = vmatprep.subr.mxu0 0.0
      %5047 = vmatpush1.msra.mxu0 %v5000
      %5048 = vmatprep.subr.mxu0 0.0
      %5049 = vmatpush1.msra.mxu0 %v4999
      %5050 = vmatprep.subr.mxu0 0.0
      %5051 = vmatpush1.msra.mxu0 %v4998
      %5052 = vmatprep.subr.mxu0 0.0
      %5053 = vmatpush1.msra.mxu0 %v4997
      %5054 = vmatprep.subr.mxu0 0.0
      %5055 = vmatpush2.msra.mxu0 0.0
      %5056 = vmatprep.subr.mxu0 0.0
      %5057 = vmatpush2.msra.mxu0 0.0
      %5058 = vmatprep.subr.mxu0 0.0
      %5059 = vmatpush2.msra.mxu0 0.0
      %5060 = vmatprep.subr.mxu0 0.0
      %5061 = vmatpush2.msra.mxu0 0.0
      %5062 = vmatprep.subr.mxu0 0.0
      %5063 = vmatpush2.msra.mxu0 0.0
      %5064 = vmatprep.subr.mxu0 0.0
      %5065 = vmatpush2.msra.mxu0 0.0
      %5066 = vmatprep.subr.mxu0 0.0
      %5067 = vmatpush2.msra.mxu0 0.0
      %5068 = vmatprep.subr.mxu0 0.0
      %5069 = vmatpush2.msra.mxu0 0.0
      %5070 = vmatprep.subr.mxu0 0.0
      %5071 = vmatpush2.msra.mxu0 0.0
      %5072 = vmatprep.subr.mxu0 0.0
      %5073 = vmatpush2.msra.mxu0 0.0
      %5074 = vmatprep.subr.mxu0 0.0
      %5075 = vmatpush2.msra.mxu0 0.0
      %5076 = vmatprep.subr.mxu0 0.0
      %5077 = vmatpush2.msra.mxu0 0.0
      %5078 = vmatprep.subr.mxu0 0.0
      %5079 = vmatpush2.msra.mxu0 0.0
      %5080 = vmatprep.subr.mxu0 0.0
      %5081 = vmatpush2.msra.mxu0 0.0
      %5082 = vmatprep.subr.mxu0 0.0
      %5083 = vmatpush2.msra.mxu0 %v5014
      %5084 = vmatprep.subr.mxu0 0.0
      %5085 = vmatpush2.msra.mxu0 %v5013
      %5086 = vmatprep.mubr.f32.mxu0 %v5017
      %5087 = vmatmul.mubr.f32.gmra.mxu0 %v4993
      %v5088 = vpop.f32.mrf.mxu0
      %v5089 = vadd.f32 0.0, %v5088
      %v5090 = vpop.f32.mrf.mxu0
      %5091 = vmatprep.mubr.f32.mxu0 %v5020
      %5092 = vmatmul.mubr.f32.gmra.mxu0 %v4995
      %v5093 = vpop.f32.mrf.mxu0
      %v5094 = vadd.f32 0.0, %v5093
      %v5095 = vpop.f32.mrf.mxu0
      %5096 = vdwg.mxu0
      %s5097 = scalar_lea.vmem %s29, %s4500
      %v5098 = vld [vmem:[%s5097] sm:$0xff]
      %v5099 = vld [vmem:[%s5097 + $0x8] sm:$0xff]
      %v5100 = vld [vmem:[%s41] sm:$0x3]
      %v5101 = vld [vmem:[%s47] sm:$0xff]
      %v5102 = vld [vmem:[%s47 + $0x8] sm:$0xff]
      %v5103 = vld [vmem:[%s47 + $0x10] sm:$0xff]
      %v5104 = vld [vmem:[%s47 + $0x18] sm:$0xff]
      %v5105 = vld [vmem:[%s47 + $0x20] sm:$0xff]
      %v5106 = vld [vmem:[%s47 + $0x28] sm:$0xff]
      %v5107 = vld [vmem:[%s47 + $0x30] sm:$0xff]
      %v5108 = vld [vmem:[%s47 + $0x38] sm:$0xff]
      %v5109 = vld [vmem:[%s47 + $0x40] sm:$0xff]
      %v5110 = vld [vmem:[%s47 + $0x48] sm:$0xff]
      %v5111 = vld [vmem:[%s47 + $0x50] sm:$0xff]
      %v5112 = vld [vmem:[%s47 + $0x58] sm:$0xff]
      %v5113 = vld [vmem:[%s47 + $0x60] sm:$0xff]
      %v5114 = vld [vmem:[%s47 + $0x68] sm:$0xff]
      %v5115 = vld [vmem:[%s47 + $0x70] sm:$0xff]
      %v5116 = vld [vmem:[%s47 + $0x78] sm:$0xff]
      %v5117 = vadd.f32 %v5089, %v5094
      %v5118 = vrot.slane %v5117, 4
      %v5119 = vadd.f32 %v5117, %v5118
      %v5120 = vrot.slane %v5119, 2
      %v5121 = vadd.f32 %v5119, %v5120
      %v5122 = vrot.slane %v5121, 1
      %v5123 = vadd.f32 %v5121, %v5122
      %5124 = vmatprep.subr.mxu0 0.0
      %5125 = vmatpush1.msra.mxu0 %v5116
      %5126 = vmatprep.subr.mxu0 0.0
      %5127 = vmatpush1.msra.mxu0 %v5115
      %5128 = vmatprep.subr.mxu0 0.0
      %5129 = vmatpush1.msra.mxu0 %v5114
      %5130 = vmatprep.subr.mxu0 0.0
      %5131 = vmatpush1.msra.mxu0 %v5113
      %5132 = vmatprep.subr.mxu0 0.0
      %5133 = vmatpush1.msra.mxu0 %v5112
      %5134 = vmatprep.subr.mxu0 0.0
      %5135 = vmatpush1.msra.mxu0 %v5111
      %5136 = vmatprep.subr.mxu0 0.0
      %5137 = vmatpush1.msra.mxu0 %v5110
      %5138 = vmatprep.subr.mxu0 0.0
      %5139 = vmatpush1.msra.mxu0 %v5109
      %5140 = vmatprep.subr.mxu0 0.0
      %5141 = vmatpush1.msra.mxu0 %v5108
      %5142 = vmatprep.subr.mxu0 0.0
      %5143 = vmatpush1.msra.mxu0 %v5107
      %5144 = vmatprep.subr.mxu0 0.0
      %5145 = vmatpush1.msra.mxu0 %v5106
      %5146 = vmatprep.subr.mxu0 0.0
      %5147 = vmatpush1.msra.mxu0 %v5105
      %5148 = vmatprep.subr.mxu0 0.0
      %5149 = vmatpush1.msra.mxu0 %v5104
      %5150 = vmatprep.subr.mxu0 0.0
      %5151 = vmatpush1.msra.mxu0 %v5103
      %5152 = vmatprep.subr.mxu0 0.0
      %5153 = vmatpush1.msra.mxu0 %v5102
      %5154 = vmatprep.subr.mxu0 0.0
      %5155 = vmatpush1.msra.mxu0 %v5101
      %5156 = vmatprep.subr.mxu0 0.0
      %5157 = vmatpush2.msra.mxu0 0.0
      %5158 = vmatprep.subr.mxu0 0.0
      %5159 = vmatpush2.msra.mxu0 0.0
      %5160 = vmatprep.subr.mxu0 0.0
      %5161 = vmatpush2.msra.mxu0 0.0
      %5162 = vmatprep.subr.mxu0 0.0
      %5163 = vmatpush2.msra.mxu0 0.0
      %5164 = vmatprep.subr.mxu0 0.0
      %5165 = vmatpush2.msra.mxu0 0.0
      %5166 = vmatprep.subr.mxu0 0.0
      %5167 = vmatpush2.msra.mxu0 0.0
      %5168 = vmatprep.subr.mxu0 0.0
      %5169 = vmatpush2.msra.mxu0 0.0
      %5170 = vmatprep.subr.mxu0 0.0
      %5171 = vmatpush2.msra.mxu0 0.0
      %5172 = vmatprep.subr.mxu0 0.0
      %5173 = vmatpush2.msra.mxu0 0.0
      %5174 = vmatprep.subr.mxu0 0.0
      %5175 = vmatpush2.msra.mxu0 0.0
      %5176 = vmatprep.subr.mxu0 0.0
      %5177 = vmatpush2.msra.mxu0 0.0
      %5178 = vmatprep.subr.mxu0 0.0
      %5179 = vmatpush2.msra.mxu0 0.0
      %5180 = vmatprep.subr.mxu0 0.0
      %5181 = vmatpush2.msra.mxu0 0.0
      %5182 = vmatprep.subr.mxu0 0.0
      %5183 = vmatpush2.msra.mxu0 0.0
      %5184 = vmatprep.subr.mxu0 0.0
      %5185 = vmatpush2.msra.mxu0 0.0
      %5186 = vmatprep.subr.mxu0 0.0
      %5187 = vmatpush2.msra.mxu0 0.0
      %5188 = vmatprep.mubr.f32.mxu0 0.0
      %5189 = vmatmul.mubr.f32.gmra.mxu0 %v5123
      %v5190 = vpop.f32.mrf.mxu0
      %v5191 = vadd.f32 0.0, %v5190
      %v5192 = vpop.f32.mrf.mxu0
      %5193 = vdwg.mxu0
      %v5194 = vmul.f32 %v5191, 0.015625
      %v5196 = vsel %vm1275, %v5194, 0
      %v5199 = vsel %vm1279, %v5100, 0
      %5201 = vmatprep.subr.mxu0 0.0
      %5202 = vmatpush1.msra.mxu0 0.0
      %5203 = vmatprep.subr.mxu0 0.0
      %5204 = vmatpush1.msra.mxu0 0.0
      %5205 = vmatprep.subr.mxu0 0.0
      %5206 = vmatpush1.msra.mxu0 0.0
      %5207 = vmatprep.subr.mxu0 0.0
      %5208 = vmatpush1.msra.mxu0 0.0
      %5209 = vmatprep.subr.mxu0 0.0
      %5210 = vmatpush1.msra.mxu0 0.0
      %5211 = vmatprep.subr.mxu0 0.0
      %5212 = vmatpush1.msra.mxu0 0.0
      %5213 = vmatprep.subr.mxu0 0.0
      %5214 = vmatpush1.msra.mxu0 0.0
      %5215 = vmatprep.subr.mxu0 0.0
      %5216 = vmatpush1.msra.mxu0 0.0
      %5217 = vmatprep.subr.mxu0 0.0
      %5218 = vmatpush1.msra.mxu0 0.0
      %5219 = vmatprep.subr.mxu0 0.0
      %5220 = vmatpush1.msra.mxu0 0.0
      %5221 = vmatprep.subr.mxu0 0.0
      %5222 = vmatpush1.msra.mxu0 0.0
      %5223 = vmatprep.subr.mxu0 0.0
      %5224 = vmatpush1.msra.mxu0 0.0
      %5225 = vmatprep.subr.mxu0 0.0
      %5226 = vmatpush1.msra.mxu0 0.0
      %5227 = vmatprep.subr.mxu0 0.0
      %5228 = vmatpush1.msra.mxu0 0.0
      %5229 = vmatprep.subr.mxu0 0.0
      %5230 = vmatpush1.msra.mxu0 0.0
      %5231 = vmatprep.subr.mxu0 0.0
      %5232 = vmatpush1.msra.mxu0 %v5199
      %5233 = vmatprep.subr.mxu0 0.0
      %5234 = vmatpush2.msra.mxu0 0.0
      %5235 = vmatprep.subr.mxu0 0.0
      %5236 = vmatpush2.msra.mxu0 0.0
      %5237 = vmatprep.subr.mxu0 0.0
      %5238 = vmatpush2.msra.mxu0 0.0
      %5239 = vmatprep.subr.mxu0 0.0
      %5240 = vmatpush2.msra.mxu0 0.0
      %5241 = vmatprep.subr.mxu0 0.0
      %5242 = vmatpush2.msra.mxu0 0.0
      %5243 = vmatprep.subr.mxu0 0.0
      %5244 = vmatpush2.msra.mxu0 0.0
      %5245 = vmatprep.subr.mxu0 0.0
      %5246 = vmatpush2.msra.mxu0 0.0
      %5247 = vmatprep.subr.mxu0 0.0
      %5248 = vmatpush2.msra.mxu0 0.0
      %5249 = vmatprep.subr.mxu0 0.0
      %5250 = vmatpush2.msra.mxu0 0.0
      %5251 = vmatprep.subr.mxu0 0.0
      %5252 = vmatpush2.msra.mxu0 0.0
      %5253 = vmatprep.subr.mxu0 0.0
      %5254 = vmatpush2.msra.mxu0 0.0
      %5255 = vmatprep.subr.mxu0 0.0
      %5256 = vmatpush2.msra.mxu0 0.0
      %5257 = vmatprep.subr.mxu0 0.0
      %5258 = vmatpush2.msra.mxu0 0.0
      %5259 = vmatprep.subr.mxu0 0.0
      %5260 = vmatpush2.msra.mxu0 0.0
      %5261 = vmatprep.subr.mxu0 0.0
      %5262 = vmatpush2.msra.mxu0 0.0
      %5263 = vmatprep.subr.mxu0 0.0
      %5264 = vmatpush2.msra.mxu0 0.0
      %5265 = vmatprep.mubr.f32.mxu0 0.0
      %5266 = vmatmul.mubr.f32.gmra.mxu0 %v5196
      %v5267 = vpop.f32.mrf.mxu0
      %v5268 = vadd.f32 0.0, %v5267
      %v5269 = vpop.f32.mrf.mxu0
      %5270 = vdwg.mxu0
      %v5271 = vlaneseq
      %v5272 = vshrl.u32 %v5271, 7
      %v5273 = vsub.s32 0, %v5272
      %v5274 = vrot.slane %v5268, %v5273
      %v5275 = vsub.f32 %v5089, %v5274
      %v5276 = vsub.f32 %v5094, %v5274
      %v5277 = vmul.f32 %v5275, %v5275
      %v5278 = vmul.f32 %v5276, %v5276
      %v5279 = vadd.f32 %v5277, %v5278
      %v5280 = vrot.slane %v5279, 4
      %v5281 = vadd.f32 %v5279, %v5280
      %v5282 = vrot.slane %v5281, 2
      %v5283 = vadd.f32 %v5281, %v5282
      %v5284 = vrot.slane %v5283, 1
      %v5285 = vadd.f32 %v5283, %v5284
      %5286 = vmatprep.subr.mxu0 0.0
      %5287 = vmatpush1.msra.mxu0 %v5116
      %5288 = vmatprep.subr.mxu0 0.0
      %5289 = vmatpush1.msra.mxu0 %v5115
      %5290 = vmatprep.subr.mxu0 0.0
      %5291 = vmatpush1.msra.mxu0 %v5114
      %5292 = vmatprep.subr.mxu0 0.0
      %5293 = vmatpush1.msra.mxu0 %v5113
      %5294 = vmatprep.subr.mxu0 0.0
      %5295 = vmatpush1.msra.mxu0 %v5112
      %5296 = vmatprep.subr.mxu0 0.0
      %5297 = vmatpush1.msra.mxu0 %v5111
      %5298 = vmatprep.subr.mxu0 0.0
      %5299 = vmatpush1.msra.mxu0 %v5110
      %5300 = vmatprep.subr.mxu0 0.0
      %5301 = vmatpush1.msra.mxu0 %v5109
      %5302 = vmatprep.subr.mxu0 0.0
      %5303 = vmatpush1.msra.mxu0 %v5108
      %5304 = vmatprep.subr.mxu0 0.0
      %5305 = vmatpush1.msra.mxu0 %v5107
      %5306 = vmatprep.subr.mxu0 0.0
      %5307 = vmatpush1.msra.mxu0 %v5106
      %5308 = vmatprep.subr.mxu0 0.0
      %5309 = vmatpush1.msra.mxu0 %v5105
      %5310 = vmatprep.subr.mxu0 0.0
      %5311 = vmatpush1.msra.mxu0 %v5104
      %5312 = vmatprep.subr.mxu0 0.0
      %5313 = vmatpush1.msra.mxu0 %v5103
      %5314 = vmatprep.subr.mxu0 0.0
      %5315 = vmatpush1.msra.mxu0 %v5102
      %5316 = vmatprep.subr.mxu0 0.0
      %5317 = vmatpush1.msra.mxu0 %v5101
      %5318 = vmatprep.subr.mxu0 0.0
      %5319 = vmatpush2.msra.mxu0 0.0
      %5320 = vmatprep.subr.mxu0 0.0
      %5321 = vmatpush2.msra.mxu0 0.0
      %5322 = vmatprep.subr.mxu0 0.0
      %5323 = vmatpush2.msra.mxu0 0.0
      %5324 = vmatprep.subr.mxu0 0.0
      %5325 = vmatpush2.msra.mxu0 0.0
      %5326 = vmatprep.subr.mxu0 0.0
      %5327 = vmatpush2.msra.mxu0 0.0
      %5328 = vmatprep.subr.mxu0 0.0
      %5329 = vmatpush2.msra.mxu0 0.0
      %5330 = vmatprep.subr.mxu0 0.0
      %5331 = vmatpush2.msra.mxu0 0.0
      %5332 = vmatprep.subr.mxu0 0.0
      %5333 = vmatpush2.msra.mxu0 0.0
      %5334 = vmatprep.subr.mxu0 0.0
      %5335 = vmatpush2.msra.mxu0 0.0
      %5336 = vmatprep.subr.mxu0 0.0
      %5337 = vmatpush2.msra.mxu0 0.0
      %5338 = vmatprep.subr.mxu0 0.0
      %5339 = vmatpush2.msra.mxu0 0.0
      %5340 = vmatprep.subr.mxu0 0.0
      %5341 = vmatpush2.msra.mxu0 0.0
      %5342 = vmatprep.subr.mxu0 0.0
      %5343 = vmatpush2.msra.mxu0 0.0
      %5344 = vmatprep.subr.mxu0 0.0
      %5345 = vmatpush2.msra.mxu0 0.0
      %5346 = vmatprep.subr.mxu0 0.0
      %5347 = vmatpush2.msra.mxu0 0.0
      %5348 = vmatprep.subr.mxu0 0.0
      %5349 = vmatpush2.msra.mxu0 0.0
      %5350 = vmatprep.mubr.f32.mxu0 0.0
      %5351 = vmatmul.mubr.f32.gmra.mxu0 %v5285
      %v5352 = vpop.f32.mrf.mxu0
      %v5353 = vadd.f32 0.0, %v5352
      %v5354 = vpop.f32.mrf.mxu0
      %5355 = vdwg.mxu0
      %v5356 = vmul.f32 %v5353, 0.015625
      %v5357 = vadd.f32 %v5356, 0.0001
      %v5358 = vrsqrt.pop %v5357
      %v5360 = vsel %vm1275, %v5358, 0
      %5362 = vmatprep.subr.mxu0 0.0
      %5363 = vmatpush1.msra.mxu0 0.0
      %5364 = vmatprep.subr.mxu0 0.0
      %5365 = vmatpush1.msra.mxu0 0.0
      %5366 = vmatprep.subr.mxu0 0.0
      %5367 = vmatpush1.msra.mxu0 0.0
      %5368 = vmatprep.subr.mxu0 0.0
      %5369 = vmatpush1.msra.mxu0 0.0
      %5370 = vmatprep.subr.mxu0 0.0
      %5371 = vmatpush1.msra.mxu0 0.0
      %5372 = vmatprep.subr.mxu0 0.0
      %5373 = vmatpush1.msra.mxu0 0.0
      %5374 = vmatprep.subr.mxu0 0.0
      %5375 = vmatpush1.msra.mxu0 0.0
      %5376 = vmatprep.subr.mxu0 0.0
      %5377 = vmatpush1.msra.mxu0 0.0
      %5378 = vmatprep.subr.mxu0 0.0
      %5379 = vmatpush1.msra.mxu0 0.0
      %5380 = vmatprep.subr.mxu0 0.0
      %5381 = vmatpush1.msra.mxu0 0.0
      %5382 = vmatprep.subr.mxu0 0.0
      %5383 = vmatpush1.msra.mxu0 0.0
      %5384 = vmatprep.subr.mxu0 0.0
      %5385 = vmatpush1.msra.mxu0 0.0
      %5386 = vmatprep.subr.mxu0 0.0
      %5387 = vmatpush1.msra.mxu0 0.0
      %5388 = vmatprep.subr.mxu0 0.0
      %5389 = vmatpush1.msra.mxu0 0.0
      %5390 = vmatprep.subr.mxu0 0.0
      %5391 = vmatpush1.msra.mxu0 0.0
      %5392 = vmatprep.subr.mxu0 0.0
      %5393 = vmatpush1.msra.mxu0 %v5199
      %5394 = vmatprep.subr.mxu0 0.0
      %5395 = vmatpush2.msra.mxu0 0.0
      %5396 = vmatprep.subr.mxu0 0.0
      %5397 = vmatpush2.msra.mxu0 0.0
      %5398 = vmatprep.subr.mxu0 0.0
      %5399 = vmatpush2.msra.mxu0 0.0
      %5400 = vmatprep.subr.mxu0 0.0
      %5401 = vmatpush2.msra.mxu0 0.0
      %5402 = vmatprep.subr.mxu0 0.0
      %5403 = vmatpush2.msra.mxu0 0.0
      %5404 = vmatprep.subr.mxu0 0.0
      %5405 = vmatpush2.msra.mxu0 0.0
      %5406 = vmatprep.subr.mxu0 0.0
      %5407 = vmatpush2.msra.mxu0 0.0
      %5408 = vmatprep.subr.mxu0 0.0
      %5409 = vmatpush2.msra.mxu0 0.0
      %5410 = vmatprep.subr.mxu0 0.0
      %5411 = vmatpush2.msra.mxu0 0.0
      %5412 = vmatprep.subr.mxu0 0.0
      %5413 = vmatpush2.msra.mxu0 0.0
      %5414 = vmatprep.subr.mxu0 0.0
      %5415 = vmatpush2.msra.mxu0 0.0
      %5416 = vmatprep.subr.mxu0 0.0
      %5417 = vmatpush2.msra.mxu0 0.0
      %5418 = vmatprep.subr.mxu0 0.0
      %5419 = vmatpush2.msra.mxu0 0.0
      %5420 = vmatprep.subr.mxu0 0.0
      %5421 = vmatpush2.msra.mxu0 0.0
      %5422 = vmatprep.subr.mxu0 0.0
      %5423 = vmatpush2.msra.mxu0 0.0
      %5424 = vmatprep.subr.mxu0 0.0
      %5425 = vmatpush2.msra.mxu0 0.0
      %5426 = vmatprep.mubr.f32.mxu0 0.0
      %5427 = vmatmul.mubr.f32.gmra.mxu0 %v5360
      %v5428 = vpop.f32.mrf.mxu0
      %v5429 = vadd.f32 0.0, %v5428
      %v5430 = vpop.f32.mrf.mxu0
      %5431 = vdwg.mxu0
      %v5432 = vlaneseq
      %v5433 = vshrl.u32 %v5432, 7
      %v5434 = vsub.s32 0, %v5433
      %v5435 = vrot.slane %v5429, %v5434
      %v5436 = vmul.f32 %v5275, %v5435
      %v5437 = vmul.f32 %v5276, %v5435
      %5439 = vset.pattern.permute.xlu0 0
      %5440 = vperm.xlu0 %5439, %v5098
      %v5441 = vpop.permute.xlu0 %5440
      %5444 = vset.pattern.permute.xlu0 0
      %5445 = vperm.xlu0 %5444, %v5099
      %v5446 = vpop.permute.xlu0 %5445
      %v5448 = vmul.f32 %v5436, %v5441
      %v5449 = vmul.f32 %v5437, %v5446
      %v5450 = vld [vmem:[#allocation8] sm:$0xff]
      %v5451 = vld [vmem:[#allocation8 + $0x8] sm:$0xff]
      %v5452 = vmul.f32 %v5450, 0.95
      %v5453 = vmul.f32 %v5451, 0.95
      %v5454 = vadd.f32 %v5452, %v5448
      %v5455 = vadd.f32 %v5453, %v5449
      %v5456 = vsub.f32 %v5454, 1.0
      %v5457 = vsub.f32 %v5455, 1.0
      %vm5458 = vcmp.gt.f32.partialorder %v5456, 0.0
      %vm5459 = vcmp.gt.f32.partialorder %v5457, 0.0
      %v5460 = vsel %vm5458, 1, 0
      %v5461 = vsel %vm5459, 1, 0
      %v5462 = vcvt.s32.f32 %v5460
      %v5463 = vcvt.s32.f32 %v5461
      %v5464 = vsub.f32 %v5454, %v5462
      %v5465 = vsub.f32 %v5455, %v5463
      %5466 = vst [vmem:[#allocation8] sm:$0xff] %v5464
      %5467 = vst [vmem:[#allocation8 + $0x8] sm:$0xff] %v5465
      %v5468 = vld [vmem:[%s51] sm:$0xff]
      %v5469 = vld [vmem:[%s51 + $0x8] sm:$0xff]
      %v5470 = vld [vmem:[%s51 + $0x10] sm:$0xff]
      %v5471 = vld [vmem:[%s51 + $0x18] sm:$0xff]
      %v5472 = vld [vmem:[%s51 + $0x20] sm:$0xff]
      %v5473 = vld [vmem:[%s51 + $0x28] sm:$0xff]
      %v5474 = vld [vmem:[%s51 + $0x30] sm:$0xff]
      %v5475 = vld [vmem:[%s51 + $0x38] sm:$0xff]
      %v5476 = vld [vmem:[%s51 + $0x40] sm:$0xff]
      %v5477 = vld [vmem:[%s51 + $0x48] sm:$0xff]
      %v5478 = vld [vmem:[%s51 + $0x50] sm:$0xff]
      %v5479 = vld [vmem:[%s51 + $0x58] sm:$0xff]
      %v5480 = vld [vmem:[%s51 + $0x60] sm:$0xff]
      %v5481 = vld [vmem:[%s51 + $0x68] sm:$0xff]
      %v5482 = vld [vmem:[%s51 + $0x70] sm:$0xff]
      %v5483 = vld [vmem:[%s51 + $0x78] sm:$0xff]
      %5484 = vmatprep.subr.mxu0 0.0
      %5485 = vmatpush1.msra.mxu0 %v5483
      %5486 = vmatprep.subr.mxu0 0.0
      %5487 = vmatpush1.msra.mxu0 %v5482
      %5488 = vmatprep.subr.mxu0 0.0
      %5489 = vmatpush1.msra.mxu0 %v5481
      %5490 = vmatprep.subr.mxu0 0.0
      %5491 = vmatpush1.msra.mxu0 %v5480
      %5492 = vmatprep.subr.mxu0 0.0
      %5493 = vmatpush1.msra.mxu0 %v5479
      %5494 = vmatprep.subr.mxu0 0.0
      %5495 = vmatpush1.msra.mxu0 %v5478
      %5496 = vmatprep.subr.mxu0 0.0
      %5497 = vmatpush1.msra.mxu0 %v5477
      %5498 = vmatprep.subr.mxu0 0.0
      %5499 = vmatpush1.msra.mxu0 %v5476
      %5500 = vmatprep.subr.mxu0 0.0
      %5501 = vmatpush1.msra.mxu0 %v5475
      %5502 = vmatprep.subr.mxu0 0.0
      %5503 = vmatpush1.msra.mxu0 %v5474
      %5504 = vmatprep.subr.mxu0 0.0
      %5505 = vmatpush1.msra.mxu0 %v5473
      %5506 = vmatprep.subr.mxu0 0.0
      %5507 = vmatpush1.msra.mxu0 %v5472
      %5508 = vmatprep.subr.mxu0 0.0
      %5509 = vmatpush1.msra.mxu0 %v5471
      %5510 = vmatprep.subr.mxu0 0.0
      %5511 = vmatpush1.msra.mxu0 %v5470
      %5512 = vmatprep.subr.mxu0 0.0
      %5513 = vmatpush1.msra.mxu0 %v5469
      %5514 = vmatprep.subr.mxu0 0.0
      %5515 = vmatpush1.msra.mxu0 %v5468
      %5516 = vmatprep.subr.mxu0 0.0
      %5517 = vmatpush2.msra.mxu0 0.0
      %5518 = vmatprep.subr.mxu0 0.0
      %5519 = vmatpush2.msra.mxu0 0.0
      %5520 = vmatprep.subr.mxu0 0.0
      %5521 = vmatpush2.msra.mxu0 0.0
      %5522 = vmatprep.subr.mxu0 0.0
      %5523 = vmatpush2.msra.mxu0 0.0
      %5524 = vmatprep.subr.mxu0 0.0
      %5525 = vmatpush2.msra.mxu0 0.0
      %5526 = vmatprep.subr.mxu0 0.0
      %5527 = vmatpush2.msra.mxu0 0.0
      %5528 = vmatprep.subr.mxu0 0.0
      %5529 = vmatpush2.msra.mxu0 0.0
      %5530 = vmatprep.subr.mxu0 0.0
      %5531 = vmatpush2.msra.mxu0 0.0
      %5532 = vmatprep.subr.mxu0 0.0
      %5533 = vmatpush2.msra.mxu0 0.0
      %5534 = vmatprep.subr.mxu0 0.0
      %5535 = vmatpush2.msra.mxu0 0.0
      %5536 = vmatprep.subr.mxu0 0.0
      %5537 = vmatpush2.msra.mxu0 0.0
      %5538 = vmatprep.subr.mxu0 0.0
      %5539 = vmatpush2.msra.mxu0 0.0
      %5540 = vmatprep.subr.mxu0 0.0
      %5541 = vmatpush2.msra.mxu0 0.0
      %5542 = vmatprep.subr.mxu0 0.0
      %5543 = vmatpush2.msra.mxu0 0.0
      %5544 = vmatprep.subr.mxu0 0.0
      %5545 = vmatpush2.msra.mxu0 0.0
      %5546 = vmatprep.subr.mxu0 0.0
      %5547 = vmatpush2.msra.mxu0 0.0
      %5548 = vmatprep.mubr.f32.mxu0 0.0
      %5549 = vmatmul.mubr.f32.gmra.mxu0 %v4227
      %v5550 = vpop.f32.mrf.mxu0
      %v5551 = vadd.f32 0.0, %v5550
      %v5552 = vpop.f32.mrf.mxu0
      %5553 = vdwg.mxu0
      %v5554 = vld [vmem:[%s55] sm:$0xff]
      %v5555 = vld [vmem:[%s55 + $0x8] sm:$0xff]
      %v5557 = vsel %vm3804, %v5554, 0
      %v5560 = vsel %vm3804, %v5555, 0
      %5562 = vmatprep.subr.mxu0 0.0
      %5563 = vmatpush1.msra.mxu0 0.0
      %5564 = vmatprep.subr.mxu0 0.0
      %5565 = vmatpush1.msra.mxu0 0.0
      %5566 = vmatprep.subr.mxu0 0.0
      %5567 = vmatpush1.msra.mxu0 0.0
      %5568 = vmatprep.subr.mxu0 0.0
      %5569 = vmatpush1.msra.mxu0 0.0
      %5570 = vmatprep.subr.mxu0 0.0
      %5571 = vmatpush1.msra.mxu0 0.0
      %5572 = vmatprep.subr.mxu0 0.0
      %5573 = vmatpush1.msra.mxu0 0.0
      %5574 = vmatprep.subr.mxu0 0.0
      %5575 = vmatpush1.msra.mxu0 0.0
      %5576 = vmatprep.subr.mxu0 0.0
      %5577 = vmatpush1.msra.mxu0 0.0
      %5578 = vmatprep.subr.mxu0 0.0
      %5579 = vmatpush1.msra.mxu0 0.0
      %5580 = vmatprep.subr.mxu0 0.0
      %5581 = vmatpush1.msra.mxu0 0.0
      %5582 = vmatprep.subr.mxu0 0.0
      %5583 = vmatpush1.msra.mxu0 0.0
      %5584 = vmatprep.subr.mxu0 0.0
      %5585 = vmatpush1.msra.mxu0 0.0
      %5586 = vmatprep.subr.mxu0 0.0
      %5587 = vmatpush1.msra.mxu0 0.0
      %5588 = vmatprep.subr.mxu0 0.0
      %5589 = vmatpush1.msra.mxu0 0.0
      %5590 = vmatprep.subr.mxu0 0.0
      %5591 = vmatpush1.msra.mxu0 0.0
      %5592 = vmatprep.subr.mxu0 0.0
      %5593 = vmatpush1.msra.mxu0 %v5551
      %5594 = vmatprep.subr.mxu0 0.0
      %5595 = vmatpush2.msra.mxu0 0.0
      %5596 = vmatprep.subr.mxu0 0.0
      %5597 = vmatpush2.msra.mxu0 0.0
      %5598 = vmatprep.subr.mxu0 0.0
      %5599 = vmatpush2.msra.mxu0 0.0
      %5600 = vmatprep.subr.mxu0 0.0
      %5601 = vmatpush2.msra.mxu0 0.0
      %5602 = vmatprep.subr.mxu0 0.0
      %5603 = vmatpush2.msra.mxu0 0.0
      %5604 = vmatprep.subr.mxu0 0.0
      %5605 = vmatpush2.msra.mxu0 0.0
      %5606 = vmatprep.subr.mxu0 0.0
      %5607 = vmatpush2.msra.mxu0 0.0
      %5608 = vmatprep.subr.mxu0 0.0
      %5609 = vmatpush2.msra.mxu0 0.0
      %5610 = vmatprep.subr.mxu0 0.0
      %5611 = vmatpush2.msra.mxu0 0.0
      %5612 = vmatprep.subr.mxu0 0.0
      %5613 = vmatpush2.msra.mxu0 0.0
      %5614 = vmatprep.subr.mxu0 0.0
      %5615 = vmatpush2.msra.mxu0 0.0
      %5616 = vmatprep.subr.mxu0 0.0
      %5617 = vmatpush2.msra.mxu0 0.0
      %5618 = vmatprep.subr.mxu0 0.0
      %5619 = vmatpush2.msra.mxu0 0.0
      %5620 = vmatprep.subr.mxu0 0.0
      %5621 = vmatpush2.msra.mxu0 0.0
      %5622 = vmatprep.subr.mxu0 0.0
      %5623 = vmatpush2.msra.mxu0 0.0
      %5624 = vmatprep.subr.mxu0 0.0
      %5625 = vmatpush2.msra.mxu0 0.0
      %5626 = vmatprep.mubr.f32.mxu0 0.0
      %5627 = vmatmul.mubr.f32.gmra.mxu0 %v5557
      %v5628 = vpop.f32.mrf.mxu0
      %v5629 = vadd.f32 0.0, %v5628
      %v5630 = vpop.f32.mrf.mxu0
      %5631 = vmatprep.mubr.f32.mxu0 0.0
      %5632 = vmatmul.mubr.f32.gmra.mxu0 %v5560
      %v5633 = vpop.f32.mrf.mxu0
      %v5634 = vadd.f32 0.0, %v5633
      %v5635 = vpop.f32.mrf.mxu0
      %5636 = vdwg.mxu0
      %s5637 = scalar_lea.vmem %s59, %s4500
      %v5638 = vld [vmem:[%s5637] sm:$0xff]
      %v5639 = vld [vmem:[%s5637 + $0x8] sm:$0xff]
      %s5640 = scalar_lea.vmem %s63, %s4500
      %v5641 = vld [vmem:[%s5640] sm:$0xff]
      %v5642 = vld [vmem:[%s5640 + $0x8] sm:$0xff]
      %v5643 = vld [vmem:[%s41] sm:$0x3]
      %v5644 = vld [vmem:[%s47] sm:$0xff]
      %v5645 = vld [vmem:[%s47 + $0x8] sm:$0xff]
      %v5646 = vld [vmem:[%s47 + $0x10] sm:$0xff]
      %v5647 = vld [vmem:[%s47 + $0x18] sm:$0xff]
      %v5648 = vld [vmem:[%s47 + $0x20] sm:$0xff]
      %v5649 = vld [vmem:[%s47 + $0x28] sm:$0xff]
      %v5650 = vld [vmem:[%s47 + $0x30] sm:$0xff]
      %v5651 = vld [vmem:[%s47 + $0x38] sm:$0xff]
      %v5652 = vld [vmem:[%s47 + $0x40] sm:$0xff]
      %v5653 = vld [vmem:[%s47 + $0x48] sm:$0xff]
      %v5654 = vld [vmem:[%s47 + $0x50] sm:$0xff]
      %v5655 = vld [vmem:[%s47 + $0x58] sm:$0xff]
      %v5656 = vld [vmem:[%s47 + $0x60] sm:$0xff]
      %v5657 = vld [vmem:[%s47 + $0x68] sm:$0xff]
      %v5658 = vld [vmem:[%s47 + $0x70] sm:$0xff]
      %v5659 = vld [vmem:[%s47 + $0x78] sm:$0xff]
      %v5660 = vadd.f32 %v5629, %v5634
      %v5661 = vrot.slane %v5660, 4
      %v5662 = vadd.f32 %v5660, %v5661
      %v5663 = vrot.slane %v5662, 2
      %v5664 = vadd.f32 %v5662, %v5663
      %v5665 = vrot.slane %v5664, 1
      %v5666 = vadd.f32 %v5664, %v5665
      %5667 = vmatprep.subr.mxu0 0.0
      %5668 = vmatpush1.msra.mxu0 %v5659
      %5669 = vmatprep.subr.mxu0 0.0
      %5670 = vmatpush1.msra.mxu0 %v5658
      %5671 = vmatprep.subr.mxu0 0.0
      %5672 = vmatpush1.msra.mxu0 %v5657
      %5673 = vmatprep.subr.mxu0 0.0
      %5674 = vmatpush1.msra.mxu0 %v5656
      %5675 = vmatprep.subr.mxu0 0.0
      %5676 = vmatpush1.msra.mxu0 %v5655
      %5677 = vmatprep.subr.mxu0 0.0
      %5678 = vmatpush1.msra.mxu0 %v5654
      %5679 = vmatprep.subr.mxu0 0.0
      %5680 = vmatpush1.msra.mxu0 %v5653
      %5681 = vmatprep.subr.mxu0 0.0
      %5682 = vmatpush1.msra.mxu0 %v5652
      %5683 = vmatprep.subr.mxu0 0.0
      %5684 = vmatpush1.msra.mxu0 %v5651
      %5685 = vmatprep.subr.mxu0 0.0
      %5686 = vmatpush1.msra.mxu0 %v5650
      %5687 = vmatprep.subr.mxu0 0.0
      %5688 = vmatpush1.msra.mxu0 %v5649
      %5689 = vmatprep.subr.mxu0 0.0
      %5690 = vmatpush1.msra.mxu0 %v5648
      %5691 = vmatprep.subr.mxu0 0.0
      %5692 = vmatpush1.msra.mxu0 %v5647
      %5693 = vmatprep.subr.mxu0 0.0
      %5694 = vmatpush1.msra.mxu0 %v5646
      %5695 = vmatprep.subr.mxu0 0.0
      %5696 = vmatpush1.msra.mxu0 %v5645
      %5697 = vmatprep.subr.mxu0 0.0
      %5698 = vmatpush1.msra.mxu0 %v5644
      %5699 = vmatprep.subr.mxu0 0.0
      %5700 = vmatpush2.msra.mxu0 0.0
      %5701 = vmatprep.subr.mxu0 0.0
      %5702 = vmatpush2.msra.mxu0 0.0
      %5703 = vmatprep.subr.mxu0 0.0
      %5704 = vmatpush2.msra.mxu0 0.0
      %5705 = vmatprep.subr.mxu0 0.0
      %5706 = vmatpush2.msra.mxu0 0.0
      %5707 = vmatprep.subr.mxu0 0.0
      %5708 = vmatpush2.msra.mxu0 0.0
      %5709 = vmatprep.subr.mxu0 0.0
      %5710 = vmatpush2.msra.mxu0 0.0
      %5711 = vmatprep.subr.mxu0 0.0
      %5712 = vmatpush2.msra.mxu0 0.0
      %5713 = vmatprep.subr.mxu0 0.0
      %5714 = vmatpush2.msra.mxu0 0.0
      %5715 = vmatprep.subr.mxu0 0.0
      %5716 = vmatpush2.msra.mxu0 0.0
      %5717 = vmatprep.subr.mxu0 0.0
      %5718 = vmatpush2.msra.mxu0 0.0
      %5719 = vmatprep.subr.mxu0 0.0
      %5720 = vmatpush2.msra.mxu0 0.0
      %5721 = vmatprep.subr.mxu0 0.0
      %5722 = vmatpush2.msra.mxu0 0.0
      %5723 = vmatprep.subr.mxu0 0.0
      %5724 = vmatpush2.msra.mxu0 0.0
      %5725 = vmatprep.subr.mxu0 0.0
      %5726 = vmatpush2.msra.mxu0 0.0
      %5727 = vmatprep.subr.mxu0 0.0
      %5728 = vmatpush2.msra.mxu0 0.0
      %5729 = vmatprep.subr.mxu0 0.0
      %5730 = vmatpush2.msra.mxu0 0.0
      %5731 = vmatprep.mubr.f32.mxu0 0.0
      %5732 = vmatmul.mubr.f32.gmra.mxu0 %v5666
      %v5733 = vpop.f32.mrf.mxu0
      %v5734 = vadd.f32 0.0, %v5733
      %v5735 = vpop.f32.mrf.mxu0
      %5736 = vdwg.mxu0
      %v5737 = vmul.f32 %v5734, 0.015625
      %v5739 = vsel %vm1275, %v5737, 0
      %v5742 = vsel %vm1279, %v5643, 0
      %5744 = vmatprep.subr.mxu0 0.0
      %5745 = vmatpush1.msra.mxu0 0.0
      %5746 = vmatprep.subr.mxu0 0.0
      %5747 = vmatpush1.msra.mxu0 0.0
      %5748 = vmatprep.subr.mxu0 0.0
      %5749 = vmatpush1.msra.mxu0 0.0
      %5750 = vmatprep.subr.mxu0 0.0
      %5751 = vmatpush1.msra.mxu0 0.0
      %5752 = vmatprep.subr.mxu0 0.0
      %5753 = vmatpush1.msra.mxu0 0.0
      %5754 = vmatprep.subr.mxu0 0.0
      %5755 = vmatpush1.msra.mxu0 0.0
      %5756 = vmatprep.subr.mxu0 0.0
      %5757 = vmatpush1.msra.mxu0 0.0
      %5758 = vmatprep.subr.mxu0 0.0
      %5759 = vmatpush1.msra.mxu0 0.0
      %5760 = vmatprep.subr.mxu0 0.0
      %5761 = vmatpush1.msra.mxu0 0.0
      %5762 = vmatprep.subr.mxu0 0.0
      %5763 = vmatpush1.msra.mxu0 0.0
      %5764 = vmatprep.subr.mxu0 0.0
      %5765 = vmatpush1.msra.mxu0 0.0
      %5766 = vmatprep.subr.mxu0 0.0
      %5767 = vmatpush1.msra.mxu0 0.0
      %5768 = vmatprep.subr.mxu0 0.0
      %5769 = vmatpush1.msra.mxu0 0.0
      %5770 = vmatprep.subr.mxu0 0.0
      %5771 = vmatpush1.msra.mxu0 0.0
      %5772 = vmatprep.subr.mxu0 0.0
      %5773 = vmatpush1.msra.mxu0 0.0
      %5774 = vmatprep.subr.mxu0 0.0
      %5775 = vmatpush1.msra.mxu0 %v5742
      %5776 = vmatprep.subr.mxu0 0.0
      %5777 = vmatpush2.msra.mxu0 0.0
      %5778 = vmatprep.subr.mxu0 0.0
      %5779 = vmatpush2.msra.mxu0 0.0
      %5780 = vmatprep.subr.mxu0 0.0
      %5781 = vmatpush2.msra.mxu0 0.0
      %5782 = vmatprep.subr.mxu0 0.0
      %5783 = vmatpush2.msra.mxu0 0.0
      %5784 = vmatprep.subr.mxu0 0.0
      %5785 = vmatpush2.msra.mxu0 0.0
      %5786 = vmatprep.subr.mxu0 0.0
      %5787 = vmatpush2.msra.mxu0 0.0
      %5788 = vmatprep.subr.mxu0 0.0
      %5789 = vmatpush2.msra.mxu0 0.0
      %5790 = vmatprep.subr.mxu0 0.0
      %5791 = vmatpush2.msra.mxu0 0.0
      %5792 = vmatprep.subr.mxu0 0.0
      %5793 = vmatpush2.msra.mxu0 0.0
      %5794 = vmatprep.subr.mxu0 0.0
      %5795 = vmatpush2.msra.mxu0 0.0
      %5796 = vmatprep.subr.mxu0 0.0
      %5797 = vmatpush2.msra.mxu0 0.0
      %5798 = vmatprep.subr.mxu0 0.0
      %5799 = vmatpush2.msra.mxu0 0.0
      %5800 = vmatprep.subr.mxu0 0.0
      %5801 = vmatpush2.msra.mxu0 0.0
      %5802 = vmatprep.subr.mxu0 0.0
      %5803 = vmatpush2.msra.mxu0 0.0
      %5804 = vmatprep.subr.mxu0 0.0
      %5805 = vmatpush2.msra.mxu0 0.0
      %5806 = vmatprep.subr.mxu0 0.0
      %5807 = vmatpush2.msra.mxu0 0.0
      %5808 = vmatprep.mubr.f32.mxu0 0.0
      %5809 = vmatmul.mubr.f32.gmra.mxu0 %v5739
      %v5810 = vpop.f32.mrf.mxu0
      %v5811 = vadd.f32 0.0, %v5810
      %v5812 = vpop.f32.mrf.mxu0
      %5813 = vdwg.mxu0
      %v5814 = vlaneseq
      %v5815 = vshrl.u32 %v5814, 7
      %v5816 = vsub.s32 0, %v5815
      %v5817 = vrot.slane %v5811, %v5816
      %v5818 = vsub.f32 %v5629, %v5817
      %v5819 = vsub.f32 %v5634, %v5817
      %v5820 = vmul.f32 %v5818, %v5818
      %v5821 = vmul.f32 %v5819, %v5819
      %v5822 = vadd.f32 %v5820, %v5821
      %v5823 = vrot.slane %v5822, 4
      %v5824 = vadd.f32 %v5822, %v5823
      %v5825 = vrot.slane %v5824, 2
      %v5826 = vadd.f32 %v5824, %v5825
      %v5827 = vrot.slane %v5826, 1
      %v5828 = vadd.f32 %v5826, %v5827
      %5829 = vmatprep.subr.mxu0 0.0
      %5830 = vmatpush1.msra.mxu0 %v5659
      %5831 = vmatprep.subr.mxu0 0.0
      %5832 = vmatpush1.msra.mxu0 %v5658
      %5833 = vmatprep.subr.mxu0 0.0
      %5834 = vmatpush1.msra.mxu0 %v5657
      %5835 = vmatprep.subr.mxu0 0.0
      %5836 = vmatpush1.msra.mxu0 %v5656
      %5837 = vmatprep.subr.mxu0 0.0
      %5838 = vmatpush1.msra.mxu0 %v5655
      %5839 = vmatprep.subr.mxu0 0.0
      %5840 = vmatpush1.msra.mxu0 %v5654
      %5841 = vmatprep.subr.mxu0 0.0
      %5842 = vmatpush1.msra.mxu0 %v5653
      %5843 = vmatprep.subr.mxu0 0.0
      %5844 = vmatpush1.msra.mxu0 %v5652
      %5845 = vmatprep.subr.mxu0 0.0
      %5846 = vmatpush1.msra.mxu0 %v5651
      %5847 = vmatprep.subr.mxu0 0.0
      %5848 = vmatpush1.msra.mxu0 %v5650
      %5849 = vmatprep.subr.mxu0 0.0
      %5850 = vmatpush1.msra.mxu0 %v5649
      %5851 = vmatprep.subr.mxu0 0.0
      %5852 = vmatpush1.msra.mxu0 %v5648
      %5853 = vmatprep.subr.mxu0 0.0
      %5854 = vmatpush1.msra.mxu0 %v5647
      %5855 = vmatprep.subr.mxu0 0.0
      %5856 = vmatpush1.msra.mxu0 %v5646
      %5857 = vmatprep.subr.mxu0 0.0
      %5858 = vmatpush1.msra.mxu0 %v5645
      %5859 = vmatprep.subr.mxu0 0.0
      %5860 = vmatpush1.msra.mxu0 %v5644
      %5861 = vmatprep.subr.mxu0 0.0
      %5862 = vmatpush2.msra.mxu0 0.0
      %5863 = vmatprep.subr.mxu0 0.0
      %5864 = vmatpush2.msra.mxu0 0.0
      %5865 = vmatprep.subr.mxu0 0.0
      %5866 = vmatpush2.msra.mxu0 0.0
      %5867 = vmatprep.subr.mxu0 0.0
      %5868 = vmatpush2.msra.mxu0 0.0
      %5869 = vmatprep.subr.mxu0 0.0
      %5870 = vmatpush2.msra.mxu0 0.0
      %5871 = vmatprep.subr.mxu0 0.0
      %5872 = vmatpush2.msra.mxu0 0.0
      %5873 = vmatprep.subr.mxu0 0.0
      %5874 = vmatpush2.msra.mxu0 0.0
      %5875 = vmatprep.subr.mxu0 0.0
      %5876 = vmatpush2.msra.mxu0 0.0
      %5877 = vmatprep.subr.mxu0 0.0
      %5878 = vmatpush2.msra.mxu0 0.0
      %5879 = vmatprep.subr.mxu0 0.0
      %5880 = vmatpush2.msra.mxu0 0.0
      %5881 = vmatprep.subr.mxu0 0.0
      %5882 = vmatpush2.msra.mxu0 0.0
      %5883 = vmatprep.subr.mxu0 0.0
      %5884 = vmatpush2.msra.mxu0 0.0
      %5885 = vmatprep.subr.mxu0 0.0
      %5886 = vmatpush2.msra.mxu0 0.0
      %5887 = vmatprep.subr.mxu0 0.0
      %5888 = vmatpush2.msra.mxu0 0.0
      %5889 = vmatprep.subr.mxu0 0.0
      %5890 = vmatpush2.msra.mxu0 0.0
      %5891 = vmatprep.subr.mxu0 0.0
      %5892 = vmatpush2.msra.mxu0 0.0
      %5893 = vmatprep.mubr.f32.mxu0 0.0
      %5894 = vmatmul.mubr.f32.gmra.mxu0 %v5828
      %v5895 = vpop.f32.mrf.mxu0
      %v5896 = vadd.f32 0.0, %v5895
      %v5897 = vpop.f32.mrf.mxu0
      %5898 = vdwg.mxu0
      %v5899 = vmul.f32 %v5896, 0.015625
      %v5900 = vadd.f32 %v5899, 0.0001
      %v5901 = vrsqrt.pop %v5900
      %v5903 = vsel %vm1275, %v5901, 0
      %5905 = vmatprep.subr.mxu0 0.0
      %5906 = vmatpush1.msra.mxu0 0.0
      %5907 = vmatprep.subr.mxu0 0.0
      %5908 = vmatpush1.msra.mxu0 0.0
      %5909 = vmatprep.subr.mxu0 0.0
      %5910 = vmatpush1.msra.mxu0 0.0
      %5911 = vmatprep.subr.mxu0 0.0
      %5912 = vmatpush1.msra.mxu0 0.0
      %5913 = vmatprep.subr.mxu0 0.0
      %5914 = vmatpush1.msra.mxu0 0.0
      %5915 = vmatprep.subr.mxu0 0.0
      %5916 = vmatpush1.msra.mxu0 0.0
      %5917 = vmatprep.subr.mxu0 0.0
      %5918 = vmatpush1.msra.mxu0 0.0
      %5919 = vmatprep.subr.mxu0 0.0
      %5920 = vmatpush1.msra.mxu0 0.0
      %5921 = vmatprep.subr.mxu0 0.0
      %5922 = vmatpush1.msra.mxu0 0.0
      %5923 = vmatprep.subr.mxu0 0.0
      %5924 = vmatpush1.msra.mxu0 0.0
      %5925 = vmatprep.subr.mxu0 0.0
      %5926 = vmatpush1.msra.mxu0 0.0
      %5927 = vmatprep.subr.mxu0 0.0
      %5928 = vmatpush1.msra.mxu0 0.0
      %5929 = vmatprep.subr.mxu0 0.0
      %5930 = vmatpush1.msra.mxu0 0.0
      %5931 = vmatprep.subr.mxu0 0.0
      %5932 = vmatpush1.msra.mxu0 0.0
      %5933 = vmatprep.subr.mxu0 0.0
      %5934 = vmatpush1.msra.mxu0 0.0
      %5935 = vmatprep.subr.mxu0 0.0
      %5936 = vmatpush1.msra.mxu0 %v5742
      %5937 = vmatprep.subr.mxu0 0.0
      %5938 = vmatpush2.msra.mxu0 0.0
      %5939 = vmatprep.subr.mxu0 0.0
      %5940 = vmatpush2.msra.mxu0 0.0
      %5941 = vmatprep.subr.mxu0 0.0
      %5942 = vmatpush2.msra.mxu0 0.0
      %5943 = vmatprep.subr.mxu0 0.0
      %5944 = vmatpush2.msra.mxu0 0.0
      %5945 = vmatprep.subr.mxu0 0.0
      %5946 = vmatpush2.msra.mxu0 0.0
      %5947 = vmatprep.subr.mxu0 0.0
      %5948 = vmatpush2.msra.mxu0 0.0
      %5949 = vmatprep.subr.mxu0 0.0
      %5950 = vmatpush2.msra.mxu0 0.0
      %5951 = vmatprep.subr.mxu0 0.0
      %5952 = vmatpush2.msra.mxu0 0.0
      %5953 = vmatprep.subr.mxu0 0.0
      %5954 = vmatpush2.msra.mxu0 0.0
      %5955 = vmatprep.subr.mxu0 0.0
      %5956 = vmatpush2.msra.mxu0 0.0
      %5957 = vmatprep.subr.mxu0 0.0
      %5958 = vmatpush2.msra.mxu0 0.0
      %5959 = vmatprep.subr.mxu0 0.0
      %5960 = vmatpush2.msra.mxu0 0.0
      %5961 = vmatprep.subr.mxu0 0.0
      %5962 = vmatpush2.msra.mxu0 0.0
      %5963 = vmatprep.subr.mxu0 0.0
      %5964 = vmatpush2.msra.mxu0 0.0
      %5965 = vmatprep.subr.mxu0 0.0
      %5966 = vmatpush2.msra.mxu0 0.0
      %5967 = vmatprep.subr.mxu0 0.0
      %5968 = vmatpush2.msra.mxu0 0.0
      %5969 = vmatprep.mubr.f32.mxu0 0.0
      %5970 = vmatmul.mubr.f32.gmra.mxu0 %v5903
      %v5971 = vpop.f32.mrf.mxu0
      %v5972 = vadd.f32 0.0, %v5971
      %v5973 = vpop.f32.mrf.mxu0
      %5974 = vdwg.mxu0
      %v5975 = vlaneseq
      %v5976 = vshrl.u32 %v5975, 7
      %v5977 = vsub.s32 0, %v5976
      %v5978 = vrot.slane %v5972, %v5977
      %v5979 = vmul.f32 %v5818, %v5978
      %v5980 = vmul.f32 %v5819, %v5978
      %5982 = vset.pattern.permute.xlu0 0
      %5983 = vperm.xlu0 %5982, %v5638
      %v5984 = vpop.permute.xlu0 %5983
      %5987 = vset.pattern.permute.xlu0 0
      %5988 = vperm.xlu0 %5987, %v5639
      %v5989 = vpop.permute.xlu0 %5988
      %v5991 = vmul.f32 %v5979, %v5984
      %v5992 = vmul.f32 %v5980, %v5989
      %5994 = vset.pattern.permute.xlu0 0
      %5995 = vperm.xlu0 %5994, %v5641
      %v5996 = vpop.permute.xlu0 %5995
      %5999 = vset.pattern.permute.xlu0 0
      %6000 = vperm.xlu0 %5999, %v5642
      %v6001 = vpop.permute.xlu0 %6000
      %v6003 = vadd.f32 %v5991, %v5996
      %v6004 = vadd.f32 %v5992, %v6001
      %v6005 = vadd.f32 %v5462, %v6003
      %v6006 = vadd.f32 %v5463, %v6004
      %6007 = vmatprep.subr.mxu0 0.0
      %6008 = vmatpush1.msra.mxu0 %v5659
      %6009 = vmatprep.subr.mxu0 0.0
      %6010 = vmatpush1.msra.mxu0 %v5658
      %6011 = vmatprep.subr.mxu0 0.0
      %6012 = vmatpush1.msra.mxu0 %v5657
      %6013 = vmatprep.subr.mxu0 0.0
      %6014 = vmatpush1.msra.mxu0 %v5656
      %6015 = vmatprep.subr.mxu0 0.0
      %6016 = vmatpush1.msra.mxu0 %v5655
      %6017 = vmatprep.subr.mxu0 0.0
      %6018 = vmatpush1.msra.mxu0 %v5654
      %6019 = vmatprep.subr.mxu0 0.0
      %6020 = vmatpush1.msra.mxu0 %v5653
      %6021 = vmatprep.subr.mxu0 0.0
      %6022 = vmatpush1.msra.mxu0 %v5652
      %6023 = vmatprep.subr.mxu0 0.0
      %6024 = vmatpush1.msra.mxu0 %v5651
      %6025 = vmatprep.subr.mxu0 0.0
      %6026 = vmatpush1.msra.mxu0 %v5650
      %6027 = vmatprep.subr.mxu0 0.0
      %6028 = vmatpush1.msra.mxu0 %v5649
      %6029 = vmatprep.subr.mxu0 0.0
      %6030 = vmatpush1.msra.mxu0 %v5648
      %6031 = vmatprep.subr.mxu0 0.0
      %6032 = vmatpush1.msra.mxu0 %v5647
      %6033 = vmatprep.subr.mxu0 0.0
      %6034 = vmatpush1.msra.mxu0 %v5646
      %6035 = vmatprep.subr.mxu0 0.0
      %6036 = vmatpush1.msra.mxu0 %v5645
      %6037 = vmatprep.subr.mxu0 0.0
      %6038 = vmatpush1.msra.mxu0 %v5644
      %6039 = vmatprep.subr.mxu0 0.0
      %6040 = vmatpush2.msra.mxu0 0.0
      %6041 = vmatprep.subr.mxu0 0.0
      %6042 = vmatpush2.msra.mxu0 0.0
      %6043 = vmatprep.subr.mxu0 0.0
      %6044 = vmatpush2.msra.mxu0 0.0
      %6045 = vmatprep.subr.mxu0 0.0
      %6046 = vmatpush2.msra.mxu0 0.0
      %6047 = vmatprep.subr.mxu0 0.0
      %6048 = vmatpush2.msra.mxu0 0.0
      %6049 = vmatprep.subr.mxu0 0.0
      %6050 = vmatpush2.msra.mxu0 0.0
      %6051 = vmatprep.subr.mxu0 0.0
      %6052 = vmatpush2.msra.mxu0 0.0
      %6053 = vmatprep.subr.mxu0 0.0
      %6054 = vmatpush2.msra.mxu0 0.0
      %6055 = vmatprep.subr.mxu0 0.0
      %6056 = vmatpush2.msra.mxu0 0.0
      %6057 = vmatprep.subr.mxu0 0.0
      %6058 = vmatpush2.msra.mxu0 0.0
      %6059 = vmatprep.subr.mxu0 0.0
      %6060 = vmatpush2.msra.mxu0 0.0
      %6061 = vmatprep.subr.mxu0 0.0
      %6062 = vmatpush2.msra.mxu0 0.0
      %6063 = vmatprep.subr.mxu0 0.0
      %6064 = vmatpush2.msra.mxu0 0.0
      %6065 = vmatprep.subr.mxu0 0.0
      %6066 = vmatpush2.msra.mxu0 0.0
      %6067 = vmatprep.subr.mxu0 0.0
      %6068 = vmatpush2.msra.mxu0 0.0
      %6069 = vmatprep.subr.mxu0 0.0
      %6070 = vmatpush2.msra.mxu0 0.0
      %6071 = vmatprep.mubr.f32.mxu0 0.0
      %6072 = vmatmul.mubr.f32.gmra.mxu0 %v6005
      %v6073 = vpop.f32.mrf.mxu0
      %v6074 = vadd.f32 0.0, %v6073
      %v6075 = vpop.f32.mrf.mxu0
      %6076 = vmatprep.mubr.f32.mxu0 0.0
      %6077 = vmatmul.mubr.f32.gmra.mxu0 %v6006
      %v6078 = vpop.f32.mrf.mxu0
      %v6079 = vadd.f32 0.0, %v6078
      %v6080 = vpop.f32.mrf.mxu0
      %6081 = vdwg.mxu0
      %v6082 = vmul.f32 %v6074, 0.25
      %v6083 = vmul.f32 %v6079, 0.25
      %v6084 = vld [vmem:[%s65] sm:$0xff]
      %v6085 = vld [vmem:[%s65 + $0x8] sm:$0x3]
      %v6087 = vsel %vm5015, %v6084, 0
      %v6090 = vsel %vm5015, %v6085, 0
      %6092 = vmatprep.subr.mxu0 0.0
      %6093 = vmatpush1.msra.mxu0 0.0
      %6094 = vmatprep.subr.mxu0 0.0
      %6095 = vmatpush1.msra.mxu0 0.0
      %6096 = vmatprep.subr.mxu0 0.0
      %6097 = vmatpush1.msra.mxu0 0.0
      %6098 = vmatprep.subr.mxu0 0.0
      %6099 = vmatpush1.msra.mxu0 0.0
      %6100 = vmatprep.subr.mxu0 0.0
      %6101 = vmatpush1.msra.mxu0 0.0
      %6102 = vmatprep.subr.mxu0 0.0
      %6103 = vmatpush1.msra.mxu0 0.0
      %6104 = vmatprep.subr.mxu0 0.0
      %6105 = vmatpush1.msra.mxu0 0.0
      %6106 = vmatprep.subr.mxu0 0.0
      %6107 = vmatpush1.msra.mxu0 0.0
      %6108 = vmatprep.subr.mxu0 0.0
      %6109 = vmatpush1.msra.mxu0 0.0
      %6110 = vmatprep.subr.mxu0 0.0
      %6111 = vmatpush1.msra.mxu0 0.0
      %6112 = vmatprep.subr.mxu0 0.0
      %6113 = vmatpush1.msra.mxu0 0.0
      %6114 = vmatprep.subr.mxu0 0.0
      %6115 = vmatpush1.msra.mxu0 0.0
      %6116 = vmatprep.subr.mxu0 0.0
      %6117 = vmatpush1.msra.mxu0 0.0
      %6118 = vmatprep.subr.mxu0 0.0
      %6119 = vmatpush1.msra.mxu0 0.0
      %6120 = vmatprep.subr.mxu0 0.0
      %6121 = vmatpush1.msra.mxu0 %v6083
      %6122 = vmatprep.subr.mxu0 0.0
      %6123 = vmatpush1.msra.mxu0 %v6082
      %6124 = vmatprep.subr.mxu0 0.0
      %6125 = vmatpush2.msra.mxu0 0.0
      %6126 = vmatprep.subr.mxu0 0.0
      %6127 = vmatpush2.msra.mxu0 0.0
      %6128 = vmatprep.subr.mxu0 0.0
      %6129 = vmatpush2.msra.mxu0 0.0
      %6130 = vmatprep.subr.mxu0 0.0
      %6131 = vmatpush2.msra.mxu0 0.0
      %6132 = vmatprep.subr.mxu0 0.0
      %6133 = vmatpush2.msra.mxu0 0.0
      %6134 = vmatprep.subr.mxu0 0.0
      %6135 = vmatpush2.msra.mxu0 0.0
      %6136 = vmatprep.subr.mxu0 0.0
      %6137 = vmatpush2.msra.mxu0 0.0
      %6138 = vmatprep.subr.mxu0 0.0
      %6139 = vmatpush2.msra.mxu0 0.0
      %6140 = vmatprep.subr.mxu0 0.0
      %6141 = vmatpush2.msra.mxu0 0.0
      %6142 = vmatprep.subr.mxu0 0.0
      %6143 = vmatpush2.msra.mxu0 0.0
      %6144 = vmatprep.subr.mxu0 0.0
      %6145 = vmatpush2.msra.mxu0 0.0
      %6146 = vmatprep.subr.mxu0 0.0
      %6147 = vmatpush2.msra.mxu0 0.0
      %6148 = vmatprep.subr.mxu0 0.0
      %6149 = vmatpush2.msra.mxu0 0.0
      %6150 = vmatprep.subr.mxu0 0.0
      %6151 = vmatpush2.msra.mxu0 0.0
      %6152 = vmatprep.subr.mxu0 0.0
      %6153 = vmatpush2.msra.mxu0 0.0
      %6154 = vmatprep.subr.mxu0 0.0
      %6155 = vmatpush2.msra.mxu0 0.0
      %6156 = vmatprep.mubr.f32.mxu0 0.0
      %6157 = vmatmul.mubr.f32.gmra.mxu0 %v6087
      %v6158 = vpop.f32.mrf.mxu0
      %v6159 = vadd.f32 0.0, %v6158
      %v6160 = vpop.f32.mrf.mxu0
      %6161 = vmatprep.mubr.f32.mxu0 0.0
      %6162 = vmatmul.mubr.f32.gmra.mxu0 %v6090
      %v6163 = vpop.f32.mrf.mxu0
      %v6164 = vadd.f32 0.0, %v6163
      %v6165 = vpop.f32.mrf.mxu0
      %6166 = vdwg.mxu0
      %v6167 = vld [vmem:[%s67] sm:$0xff]
      %v6168 = vld [vmem:[%s67 + $0x8] sm:$0x3]
      %v6169 = vmul.f32 %v6159, 0.5
      %v6170 = vmul.f32 %v6164, 0.5
      %v6171 = vadd.f32 %v6167, %v6169
      %v6172 = vadd.f32 %v6168, %v6170
      %6173 = vst.msk [vmem:[%s67] sm:$0xff] %vm1275, %v6171
      %vm6174 = vcmask 9216
      %6175 = vst.msk [vmem:[%s67 + $0x8] sm:$0x3] %vm6174, %v6172
      // Predicated region
      $region157: #{tpu_custom_call.1} parent=151 // pred_check
        %p6176 = pneg %p784
      $region158: #{tpu_custom_call.1} parent=151 // pred_check_branch
        %6178 = sbr.rel (%p6176) target = $region160
      $region159: #{tpu_custom_call.1} parent=151 // pred_region
        _
      $region160: #{tpu_custom_call.1} parent=151 // pred_fallthru
        _
      // Predicated region
      $region161: #{tpu_custom_call.1} parent=151 // pred_check
        %p6179 = pneg %p784
      $region162: #{tpu_custom_call.1} parent=151 // pred_check_branch
        %6181 = sbr.rel (%p6179) target = $region164
      $region163: #{tpu_custom_call.1} parent=151 // pred_region
        _
      $region164: #{tpu_custom_call.1} parent=151 // pred_fallthru
        _
    $region152: #{tpu_custom_call.1} parent=5 // pred_fallthru
      _
    %p6182 = scmp.le.s32.totalorder 2, %s73
    // Predicated region
    $region165: #{tpu_custom_call.1} parent=5 // pred_check
      %p6183 = pneg %p6182
    $region166: #{tpu_custom_call.1} parent=5 // pred_check_branch
      %6185 = sbr.rel (%p6183) target = $region168
    $region167: #{tpu_custom_call.1} parent=5 // pred_region
      %s6186 = ssub.s32 %s73, 2
    $region168: #{tpu_custom_call.1} parent=5 // pred_fallthru
      _
  $region6: #{tpu_custom_call.1} parent=0 // loop_footer
    %s77 = sadd.s32 1, %s73
  $region7: #{tpu_custom_call.1} parent=0 // loop_footer_branch
    %72 = sbr.rel target = $region3
  $region8: #{tpu_custom_call.1} parent=0 // loop_exit
    _

</llo_original>
